<compile_context>
chip_gen: v7x
topology: tpu7x:2x2x1
jax: 0.10.0
libtpu: 0.0.40
codegen_flags: <defaults>
</compile_context>

<pallas_src>
import numpy as np
import jax
import jax.numpy as jnp
from jax.experimental import pallas as pl
from jax.experimental.pallas import tpu as pltpu

# ------------------------- model hyper-parameters --------------------------
CAT_SIZES = (5, 7, 4)          # cat_sizes
EMB_SIZES = (3, 4, 2)          # emb_sizes
NUM_NUMERICALS = 7
NUM_TREES = 32                 # ODST(num_trees=32)
DEPTH = 6                      # ODST default depth
NUM_LEAVES = 2 ** DEPTH        # 64
TREE_DIM = 1                   # tree_output_dim=1
EMB_DIM = sum(EMB_SIZES)
IN_FEATURES = EMB_DIM + NUM_NUMERICALS   # 9 + 7 = 16
GROUP = 128                    # lanes per depth group in the bins layout
LEAF_COLS = NUM_TREES * NUM_LEAVES       # 2048


# ----------------------------- plain-JAX glue -------------------------------
def sparsemax(logits, axis):
    """Sparsemax (Martins & Astudillo) along `axis` — parameter preprocessing."""
    z = jnp.moveaxis(logits, axis, -1)
    k_dim = z.shape[-1]
    z_sorted = -jnp.sort(-z, axis=-1)                       # descending
    k = jnp.arange(1, k_dim + 1, dtype=z.dtype)
    z_cumsum = jnp.cumsum(z_sorted, axis=-1)
    support = (1.0 + k * z_sorted) > z_cumsum
    k_support = jnp.sum(support.astype(jnp.int32), axis=-1)
    tau_sum = jnp.take_along_axis(z_cumsum, (k_support - 1)[..., None], axis=-1)[..., 0]
    tau = (tau_sum - 1.0) / k_support.astype(z.dtype)
    out = jnp.maximum(z - tau[..., None], 0.0)
    return jnp.moveaxis(out, -1, axis)


def init_params(key):
    keys = jax.random.split(key, 7)
    emb_keys = jax.random.split(keys[0], len(CAT_SIZES))
    emb_tables = [
        jax.random.normal(emb_keys[i], (cs, es), jnp.float32)
        for i, (cs, es) in enumerate(zip(CAT_SIZES, EMB_SIZES))
    ]
    fsl = jax.random.uniform(keys[1], (IN_FEATURES, NUM_TREES, DEPTH), jnp.float32)
    thr = jax.random.normal(keys[2], (NUM_TREES, DEPTH), jnp.float32) * 0.5
    logt = jax.random.normal(keys[3], (NUM_TREES, DEPTH), jnp.float32) * 0.1
    resp = jax.random.normal(keys[4], (NUM_TREES, TREE_DIM, NUM_LEAVES), jnp.float32) * 0.1
    lin_w = jax.random.normal(keys[5], (1, NUM_TREES), jnp.float32) / np.sqrt(NUM_TREES)
    lin_b = jax.random.normal(keys[6], (1,), jnp.float32) * 0.1
    # oblivious-tree binary leaf codes: codes[d, c] = (c // 2**d) % 2
    idx = np.arange(NUM_LEAVES)
    off = 2 ** np.arange(DEPTH)
    codes = ((idx[None, :] // off[:, None]) % 2).astype(np.float32)     # [DEPTH, NUM_LEAVES]
    return dict(emb_tables=emb_tables, feature_selection_logits=fsl,
                feature_thresholds=thr, log_temperatures=logt, response=resp,
                linear_w=lin_w, linear_b=lin_b, bin_codes=jnp.asarray(codes))


def _embed_and_concat(params, x_cat, x_num):
    # TODO(synk): nn.Embedding gathers + torch.cat stay in plain JAX (one-time
    # glue; a data-dependent gather adds nothing inside this compute-bound kernel).
    embs = [params["emb_tables"][i][x_cat[:, i]] for i in range(len(CAT_SIZES))]
    return jnp.concatenate(embs + [x_num.astype(jnp.float32)], axis=1)   # [B, D]


def _round_up(v, m):
    return ((v + m - 1) // m) * m


# ------------------------------ Pallas kernel -------------------------------
def _basic_node_kernel(x_ref, fsw_ref, bbias_ref, smat_ref, resp_ref,
                       w_ref, b_ref, o_ref):
    x = x_ref[...]                                                       # [BT, 16] f32

    # sparsemoid bins for all depths in one small f32 matmul; thresholds,
    # temperatures and the 0.5 scale are folded into fsw / bbias.  Lane-dense
    # layout: column d*128+t (t<32) is tree t's bin at depth d, column d*128+32
    # is the constant 1 that feeds the folded leaf offsets, rest is zero padding.
    bins = jnp.dot(x, fsw_ref[...], preferred_element_type=jnp.float32)  # [BT, 768]
    bins = jnp.clip(bins + bbias_ref[...], 0.0, 1.0).astype(jnp.bfloat16)

    # per-depth leaf blend on the MXU (bf16 operands, f32 accumulate):
    #   bm_d[b, t*64+c] = sign[d,c] * bins_d[b,t] + codes[d,c]
    # The codes[d] offset row is part of smat, so no broadcast-add on the
    # 2048-wide result; bins slices are 128-lane aligned.
    def depth_bm(dd):
        bins_d = bins[:, dd * GROUP:(dd + 1) * GROUP]                    # [BT, 128] bf16
        s_d = smat_ref[dd * GROUP:(dd + 1) * GROUP, :]                   # [128, 2048] bf16
        return jnp.dot(bins_d, s_d,
                       preferred_element_type=jnp.float32).astype(jnp.bfloat16)

    rw = depth_bm(0)
    for dd in range(1, DEPTH):
        rw = rw * depth_bm(dd)                                           # bf16 [BT, 2048]

    # leaf reduction on the MXU: tree_out[b, t] = sum_c rw[b, t*64+c] * resp[t, c]
    tree_out = jnp.dot(rw, resp_ref[...],
                       preferred_element_type=jnp.float32)               # [BT, 32] f32

    # exact (erf-based) GELU, then Linear(32, 1), then Sigmoid
    inv_sqrt2 = np.float32(1.0 / np.sqrt(2.0))
    h = 0.5 * tree_out * (1.0 + jax.lax.erf(tree_out * inv_sqrt2))
    logits = jnp.sum(h * w_ref[...], axis=-1, keepdims=True) + b_ref[...]
    o_ref[...] = jax.nn.sigmoid(logits)


def _const_spec(arr):
    nd = arr.ndim
    return pl.BlockSpec(arr.shape, lambda i, _nd=nd: (0,) * _nd)


def basic_node_pallas(params, x_cat, x_num, *, block_b=1024):
    x = _embed_and_concat(params, x_cat, x_num)                          # [B, 16] f32
    b, d = x.shape

    # ----- batch tiling: pad instead of asserting divisibility; cap the tile at
    # ceil(B/2) (rounded to 8) so the "parallel" batch axis always has >= 2 grid
    # steps and can be split across v7x's two TensorCores -----
    half = _round_up(max((b + 1) // 2, 1), 8)
    block_b = max(8, min(_round_up(int(block_b), 8), half))
    b_pad = _round_up(b, block_b)
    if b_pad != b:
        x = jnp.pad(x, ((0, b_pad - b), (0, 0)))
    grid = (b_pad // block_b,)

    # ----- parameter preprocessing (one-time glue, plain JAX) -----
    fs = sparsemax(params["feature_selection_logits"], axis=0)           # [16, T, DEPTH]
    invt = jnp.exp(-params["log_temperatures"])                          # [T, DEPTH]
    thr = params["feature_thresholds"]                                   # [T, DEPTH]

    # bins = clip(x @ fsw + bbias, 0, 1); 0.5 sparsemoid scale + temperature
    # folded into fsw, threshold into bbias; column d*128+32 is the "ones" col.
    fsw = jnp.zeros((d, DEPTH, GROUP), jnp.float32)
    fsw = fsw.at[:, :, :NUM_TREES].set(
        jnp.transpose(fs * (0.5 * invt)[None], (0, 2, 1)))               # [16, DEPTH, T]
    fsw = fsw.reshape(d, DEPTH * GROUP)
    bbias = jnp.zeros((DEPTH, GROUP), jnp.float32)
    bbias = bbias.at[:, :NUM_TREES].set((0.5 - 0.5 * thr * invt).T)
    bbias = bbias.at[:, NUM_TREES].set(1.0)
    bbias = bbias.reshape(1, DEPTH * GROUP)

    codes = params["bin_codes"]                                          # [DEPTH, 64]
    sign = 1.0 - 2.0 * codes                                             # +1 if code==0 else -1
    eye_t = jnp.eye(NUM_TREES, dtype=jnp.float32)
    # smat[d*128 + t,  t*64 + c] = sign[d, c]   (block-diagonal over trees)
    # smat[d*128 + 32, t*64 + c] = codes[d, c]  (folded leaf offset row)
    blk = (eye_t[None, :, :, None] * sign[:, None, None, :]).reshape(
        DEPTH, NUM_TREES, LEAF_COLS)
    smat = jnp.zeros((DEPTH, GROUP, LEAF_COLS), jnp.float32)
    smat = smat.at[:, :NUM_TREES, :].set(blk)
    smat = smat.at[:, NUM_TREES, :].set(jnp.tile(codes, (1, NUM_TREES)))
    smat = smat.reshape(DEPTH * GROUP, LEAF_COLS).astype(jnp.bfloat16)   # +-1/0/1: exact

    # resp_bd[t*64 + c, t'] = (t == t') * response[t, 0, c]
    resp = params["response"][:, 0, :]                                   # [T, 64]
    resp_bd = (eye_t[:, None, :] * resp[:, :, None]).reshape(
        LEAF_COLS, NUM_TREES).astype(jnp.bfloat16)                       # [2048, 32]

    w = params["linear_w"]                                               # [1, 32]
    bias = params["linear_b"].reshape(1, 1)                              # [1, 1]

    # VMEM budget: ~7 MiB of (double-buffered) constants (dominated by smat)
    # + ~28 KiB/row of bf16/f32 intermediates; capped at 48 MiB so there is
    # headroom on v7x's 64 MiB per-core VMEM.
    vmem_bytes = int(min(48 << 20, (12 << 20) + block_b * 28 * 1024))

    out = pl.pallas_call(
        _basic_node_kernel,
        out_shape=jax.ShapeDtypeStruct((b_pad, 1), jnp.float32),
        grid=grid,
        in_specs=[
            pl.BlockSpec((block_b, d), lambda i: (i, 0)),
            _const_spec(fsw), _const_spec(bbias), _const_spec(smat),
            _const_spec(resp_bd), _const_spec(w), _const_spec(bias),
        ],
        out_specs=pl.BlockSpec((block_b, 1), lambda i: (i, 0)),
        compiler_params=pltpu.CompilerParams(
            dimension_semantics=("parallel",),
            vmem_limit_bytes=vmem_bytes),
    )(x, fsw, bbias, smat, resp_bd, w, bias)
    return out[:b]


# --------------------------- pure-JAX reference -----------------------------
def reference_forward(params, x_cat, x_num):
    x = _embed_and_concat(params, x_cat, x_num)
    fs = sparsemax(params["feature_selection_logits"], axis=0)           # [D, T, DEPTH]
    fv = jnp.einsum("bi,ind->bnd", x, fs)                                # [B, T, DEPTH]
    tl = (fv - params["feature_thresholds"][None]) * jnp.exp(-params["log_temperatures"])[None]
    tls = jnp.stack([-tl, tl], axis=-1)
    bins = jnp.clip(0.5 * tls + 0.5, 0.0, 1.0)                           # sparsemoid
    codes_1hot = jnp.stack([params["bin_codes"], 1.0 - params["bin_codes"]], axis=-1)
    bm = jnp.einsum("btds,dcs->btdc", bins, codes_1hot)
    rw = jnp.prod(bm, axis=-2)                                           # [B, T, C]
    resp = jnp.einsum("bnd,ncd->bnc", rw, params["response"])            # [B, T, 1]
    tree_out = resp.reshape(resp.shape[0], -1)                           # [B, 32]
    h = jax.nn.gelu(tree_out, approximate=False)
    logits = h @ params["linear_w"].T + params["linear_b"][None, :]
    return jax.nn.sigmoid(logits)


# ----------------------------------- main ------------------------------------
if __name__ == "__main__":
    key = jax.random.PRNGKey(0)
    pkey, ckey, nkey = jax.random.split(key, 3)
    params = init_params(pkey)

    B = 20   # not a multiple of 8: exercises padding AND the >=2-grid-step path
    cat_keys = jax.random.split(ckey, len(CAT_SIZES))
    x_cat = jnp.concatenate(
        [jax.random.randint(cat_keys[i], (B, 1), 0, cs, dtype=jnp.int32)
         for i, cs in enumerate(CAT_SIZES)], axis=1)                     # [B, 3] int32
    x_num = jax.random.normal(nkey, (B, NUM_NUMERICALS), jnp.float32)    # [B, 7] f32

    out = basic_node_pallas(params, x_cat, x_num)
    out = jax.block_until_ready(out)

    ref = reference_forward(params, x_cat, x_num)
    assert out.shape == (B, 1)
    np.testing.assert_allclose(np.asarray(out), np.asarray(ref), rtol=2e-2, atol=2e-2)
    print("KERNEL_OK")
</pallas_src>

<mosaic_0001>
module attributes {stable_mosaic.version = 11 : i64} {
  func.func @_basic_node_kernel(%arg0: i32, %arg1: memref<16x16xf32, #tpu.memory_space<vmem>>, %arg2: memref<16x768xf32, #tpu.memory_space<vmem>>, %arg3: memref<1x768xf32, #tpu.memory_space<vmem>>, %arg4: memref<768x2048xbf16, #tpu.memory_space<vmem>>, %arg5: memref<2048x32xbf16, #tpu.memory_space<vmem>>, %arg6: memref<1x32xf32, #tpu.memory_space<vmem>>, %arg7: memref<1x1xf32, #tpu.memory_space<vmem>>, %arg8: memref<16x1xf32, #tpu.memory_space<vmem>>) attributes {dimension_semantics = [#tpu.dimension_semantics<parallel>], iteration_bounds = array<i64: 2>, scalar_prefetch = 0 : i64, scratch_operands = 0 : i64, tpu.core_type = #tpu.core_type<tc>, window_params = [{transform_indices = @transform_0, window_bounds = array<i64: 16, 16>}, {pipeline_mode = #tpu.pipeline_mode<synchronous>, transform_indices = @transform_1, window_bounds = array<i64: 16, 768>}, {pipeline_mode = #tpu.pipeline_mode<synchronous>, transform_indices = @transform_2, window_bounds = array<i64: 1, 768>}, {pipeline_mode = #tpu.pipeline_mode<synchronous>, transform_indices = @transform_3, window_bounds = array<i64: 768, 2048>}, {pipeline_mode = #tpu.pipeline_mode<synchronous>, transform_indices = @transform_4, window_bounds = array<i64: 2048, 32>}, {pipeline_mode = #tpu.pipeline_mode<synchronous>, transform_indices = @transform_5, window_bounds = array<i64: 1, 32>}, {pipeline_mode = #tpu.pipeline_mode<synchronous>, transform_indices = @transform_6, window_bounds = array<i64: 1, 1>}, {transform_indices = @transform_7, window_bounds = array<i64: 16, 1>}]} {
    %c0 = arith.constant 0 : index
    %c0_0 = arith.constant 0 : index
    %0 = vector.load %arg1[%c0, %c0_0] : memref<16x16xf32, #tpu.memory_space<vmem>>, vector<16x16xf32>
    %c0_1 = arith.constant 0 : index
    %c0_2 = arith.constant 0 : index
    %1 = vector.load %arg2[%c0_1, %c0_2] : memref<16x768xf32, #tpu.memory_space<vmem>>, vector<16x768xf32>
    %cst = arith.constant dense<0.000000e+00> : vector<16x768xf32>
    %2 = tpu.matmul %0, %1, %cst {dimension_numbers = #tpu.dot_dimension_numbers<[1], [0], [0], [1], [0, 0, 1, 1], [], []>} : vector<16x16xf32>, vector<16x768xf32>, vector<16x768xf32> -> vector<16x768xf32>
    %c0_3 = arith.constant 0 : index
    %c0_4 = arith.constant 0 : index
    %3 = vector.load %arg3[%c0_3, %c0_4] : memref<1x768xf32, #tpu.memory_space<vmem>>, vector<1x768xf32>
    %4 = vector.broadcast %3 : vector<1x768xf32> to vector<16x768xf32>
    %5 = arith.addf %2, %4 : vector<16x768xf32>
    %cst_5 = arith.constant 0.000000e+00 : f32
    %cst_6 = arith.constant 1.000000e+00 : f32
    %6 = vector.broadcast %cst_5 : f32 to vector<16x768xf32>
    %7 = arith.maximumf %6, %5 : vector<16x768xf32>
    %8 = vector.broadcast %cst_6 : f32 to vector<16x768xf32>
    %9 = arith.minimumf %8, %7 : vector<16x768xf32>
    %10 = arith.truncf %9 : vector<16x768xf32> to vector<16x768xbf16>
    %11 = vector.extract_strided_slice %10 {offsets = [0, 0], sizes = [16, 128], strides = [1, 1]} : vector<16x768xbf16> to vector<16x128xbf16>
    %c0_7 = arith.constant 0 : index
    %c0_8 = arith.constant 0 : index
    %12 = vector.load %arg4[%c0_7, %c0_8] : memref<768x2048xbf16, #tpu.memory_space<vmem>>, vector<128x2048xbf16>
    %cst_9 = arith.constant dense<0.000000e+00> : vector<16x2048xf32>
    %13 = tpu.matmul %11, %12, %cst_9 {dimension_numbers = #tpu.dot_dimension_numbers<[1], [0], [0], [1], [0, 0, 1, 1], [], []>} : vector<16x128xbf16>, vector<128x2048xbf16>, vector<16x2048xf32> -> vector<16x2048xf32>
    %14 = arith.truncf %13 : vector<16x2048xf32> to vector<16x2048xbf16>
    %15 = vector.extract_strided_slice %10 {offsets = [0, 128], sizes = [16, 128], strides = [1, 1]} : vector<16x768xbf16> to vector<16x128xbf16>
    %c128 = arith.constant 128 : index
    %c0_10 = arith.constant 0 : index
    %16 = vector.load %arg4[%c128, %c0_10] : memref<768x2048xbf16, #tpu.memory_space<vmem>>, vector<128x2048xbf16>
    %cst_11 = arith.constant dense<0.000000e+00> : vector<16x2048xf32>
    %17 = tpu.matmul %15, %16, %cst_11 {dimension_numbers = #tpu.dot_dimension_numbers<[1], [0], [0], [1], [0, 0, 1, 1], [], []>} : vector<16x128xbf16>, vector<128x2048xbf16>, vector<16x2048xf32> -> vector<16x2048xf32>
    %18 = arith.truncf %17 : vector<16x2048xf32> to vector<16x2048xbf16>
    %19 = arith.mulf %14, %18 : vector<16x2048xbf16>
    %20 = vector.extract_strided_slice %10 {offsets = [0, 256], sizes = [16, 128], strides = [1, 1]} : vector<16x768xbf16> to vector<16x128xbf16>
    %c256 = arith.constant 256 : index
    %c0_12 = arith.constant 0 : index
    %21 = vector.load %arg4[%c256, %c0_12] : memref<768x2048xbf16, #tpu.memory_space<vmem>>, vector<128x2048xbf16>
    %cst_13 = arith.constant dense<0.000000e+00> : vector<16x2048xf32>
    %22 = tpu.matmul %20, %21, %cst_13 {dimension_numbers = #tpu.dot_dimension_numbers<[1], [0], [0], [1], [0, 0, 1, 1], [], []>} : vector<16x128xbf16>, vector<128x2048xbf16>, vector<16x2048xf32> -> vector<16x2048xf32>
    %23 = arith.truncf %22 : vector<16x2048xf32> to vector<16x2048xbf16>
    %24 = arith.mulf %19, %23 : vector<16x2048xbf16>
    %25 = vector.extract_strided_slice %10 {offsets = [0, 384], sizes = [16, 128], strides = [1, 1]} : vector<16x768xbf16> to vector<16x128xbf16>
    %c384 = arith.constant 384 : index
    %c0_14 = arith.constant 0 : index
    %26 = vector.load %arg4[%c384, %c0_14] : memref<768x2048xbf16, #tpu.memory_space<vmem>>, vector<128x2048xbf16>
    %cst_15 = arith.constant dense<0.000000e+00> : vector<16x2048xf32>
    %27 = tpu.matmul %25, %26, %cst_15 {dimension_numbers = #tpu.dot_dimension_numbers<[1], [0], [0], [1], [0, 0, 1, 1], [], []>} : vector<16x128xbf16>, vector<128x2048xbf16>, vector<16x2048xf32> -> vector<16x2048xf32>
    %28 = arith.truncf %27 : vector<16x2048xf32> to vector<16x2048xbf16>
    %29 = arith.mulf %24, %28 : vector<16x2048xbf16>
    %30 = vector.extract_strided_slice %10 {offsets = [0, 512], sizes = [16, 128], strides = [1, 1]} : vector<16x768xbf16> to vector<16x128xbf16>
    %c512 = arith.constant 512 : index
    %c0_16 = arith.constant 0 : index
    %31 = vector.load %arg4[%c512, %c0_16] : memref<768x2048xbf16, #tpu.memory_space<vmem>>, vector<128x2048xbf16>
    %cst_17 = arith.constant dense<0.000000e+00> : vector<16x2048xf32>
    %32 = tpu.matmul %30, %31, %cst_17 {dimension_numbers = #tpu.dot_dimension_numbers<[1], [0], [0], [1], [0, 0, 1, 1], [], []>} : vector<16x128xbf16>, vector<128x2048xbf16>, vector<16x2048xf32> -> vector<16x2048xf32>
    %33 = arith.truncf %32 : vector<16x2048xf32> to vector<16x2048xbf16>
    %34 = arith.mulf %29, %33 : vector<16x2048xbf16>
    %35 = vector.extract_strided_slice %10 {offsets = [0, 640], sizes = [16, 128], strides = [1, 1]} : vector<16x768xbf16> to vector<16x128xbf16>
    %c640 = arith.constant 640 : index
    %c0_18 = arith.constant 0 : index
    %36 = vector.load %arg4[%c640, %c0_18] : memref<768x2048xbf16, #tpu.memory_space<vmem>>, vector<128x2048xbf16>
    %cst_19 = arith.constant dense<0.000000e+00> : vector<16x2048xf32>
    %37 = tpu.matmul %35, %36, %cst_19 {dimension_numbers = #tpu.dot_dimension_numbers<[1], [0], [0], [1], [0, 0, 1, 1], [], []>} : vector<16x128xbf16>, vector<128x2048xbf16>, vector<16x2048xf32> -> vector<16x2048xf32>
    %38 = arith.truncf %37 : vector<16x2048xf32> to vector<16x2048xbf16>
    %39 = arith.mulf %34, %38 : vector<16x2048xbf16>
    %c0_20 = arith.constant 0 : index
    %c0_21 = arith.constant 0 : index
    %40 = vector.load %arg5[%c0_20, %c0_21] : memref<2048x32xbf16, #tpu.memory_space<vmem>>, vector<2048x32xbf16>
    %cst_22 = arith.constant dense<0.000000e+00> : vector<16x32xf32>
    %41 = tpu.matmul %39, %40, %cst_22 {dimension_numbers = #tpu.dot_dimension_numbers<[1], [0], [0], [1], [0, 0, 1, 1], [], []>} : vector<16x2048xbf16>, vector<2048x32xbf16>, vector<16x32xf32> -> vector<16x32xf32>
    %cst_23 = arith.constant 5.000000e-01 : f32
    %42 = vector.broadcast %cst_23 : f32 to vector<16x32xf32>
    %43 = arith.mulf %42, %41 : vector<16x32xf32>
    %cst_24 = arith.constant 0.707106769 : f32
    %44 = vector.broadcast %cst_24 : f32 to vector<16x32xf32>
    %45 = arith.mulf %41, %44 : vector<16x32xf32>
    %46 = math.erf %45 : vector<16x32xf32>
    %cst_25 = arith.constant 1.000000e+00 : f32
    %47 = vector.broadcast %cst_25 : f32 to vector<16x32xf32>
    %48 = arith.addf %47, %46 : vector<16x32xf32>
    %49 = arith.mulf %43, %48 : vector<16x32xf32>
    %c0_26 = arith.constant 0 : index
    %c0_27 = arith.constant 0 : index
    %50 = vector.load %arg6[%c0_26, %c0_27] : memref<1x32xf32, #tpu.memory_space<vmem>>, vector<1x32xf32>
    %51 = vector.broadcast %50 : vector<1x32xf32> to vector<16x32xf32>
    %52 = arith.mulf %49, %51 : vector<16x32xf32>
    %cst_28 = arith.constant dense<0.000000e+00> : vector<16xf32>
    %53 = vector.multi_reduction <add>, %52, %cst_28 [1] : vector<16x32xf32> to vector<16xf32>
    %54 = vector.shape_cast %53 : vector<16xf32> to vector<16x1xf32>
    %c0_29 = arith.constant 0 : index
    %c0_30 = arith.constant 0 : index
    %55 = vector.load %arg7[%c0_29, %c0_30] : memref<1x1xf32, #tpu.memory_space<vmem>>, vector<1x1xf32>
    %56 = vector.broadcast %55 : vector<1x1xf32> to vector<16x1xf32>
    %57 = arith.addf %54, %56 : vector<16x1xf32>
    %58 = arith.negf %57 : vector<16x1xf32>
    %59 = math.exp %58 : vector<16x1xf32>
    %cst_31 = arith.constant 1.000000e+00 : f32
    %60 = vector.broadcast %cst_31 : f32 to vector<16x1xf32>
    %61 = arith.addf %60, %59 : vector<16x1xf32>
    %62 = arith.divf %60, %61 : vector<16x1xf32>
    %c0_32 = arith.constant 0 : index
    %c0_33 = arith.constant 0 : index
    %63 = vector.load %arg8[%c0_32, %c0_33] : memref<16x1xf32, #tpu.memory_space<vmem>>, vector<16x1xf32>
    tpu.vector_store %arg8[%c0_32, %c0_33], %62 {strides = array<i32>} : memref<16x1xf32, #tpu.memory_space<vmem>>, vector<16x1xf32>,
    return
  }
  func.func @transform_0(%arg0: i32) -> (i32, i32) {
    %c0_i32 = arith.constant 0 : i32
    %c0_i32_0 = arith.constant 0 : i32
    return %arg0, %c0_i32 : i32, i32
  }
  func.func @transform_1(%arg0: i32) -> (i32, i32) {
    %c0_i32 = arith.constant 0 : i32
    %c0_i32_0 = arith.constant 0 : i32
    %c0_i32_1 = arith.constant 0 : i32
    return %c0_i32, %c0_i32_0 : i32, i32
  }
  func.func @transform_2(%arg0: i32) -> (i32, i32) {
    %c0_i32 = arith.constant 0 : i32
    %c0_i32_0 = arith.constant 0 : i32
    %c0_i32_1 = arith.constant 0 : i32
    return %c0_i32, %c0_i32_0 : i32, i32
  }
  func.func @transform_3(%arg0: i32) -> (i32, i32) {
    %c0_i32 = arith.constant 0 : i32
    %c0_i32_0 = arith.constant 0 : i32
    %c0_i32_1 = arith.constant 0 : i32
    return %c0_i32, %c0_i32_0 : i32, i32
  }
  func.func @transform_4(%arg0: i32) -> (i32, i32) {
    %c0_i32 = arith.constant 0 : i32
    %c0_i32_0 = arith.constant 0 : i32
    %c0_i32_1 = arith.constant 0 : i32
    return %c0_i32, %c0_i32_0 : i32, i32
  }
  func.func @transform_5(%arg0: i32) -> (i32, i32) {
    %c0_i32 = arith.constant 0 : i32
    %c0_i32_0 = arith.constant 0 : i32
    %c0_i32_1 = arith.constant 0 : i32
    return %c0_i32, %c0_i32_0 : i32, i32
  }
  func.func @transform_6(%arg0: i32) -> (i32, i32) {
    %c0_i32 = arith.constant 0 : i32
    %c0_i32_0 = arith.constant 0 : i32
    %c0_i32_1 = arith.constant 0 : i32
    return %c0_i32, %c0_i32_0 : i32, i32
  }
  func.func @transform_7(%arg0: i32) -> (i32, i32) {
    %c0_i32 = arith.constant 0 : i32
    %c0_i32_0 = arith.constant 0 : i32
    return %arg0, %c0_i32 : i32, i32
  }
}

</mosaic_0001>

<llo_original>
// kernel: tpu_custom_call.1
$region0: #{tpu_custom_call.1}
  #allocation0 [shape = 'u32[]', space=smem, size = 0x4, offset = 0x4, fixed_abs, tag = 'smem constant byte address 0x4 - core index']
  #allocation1 [shape = 'u32[144,128]{1,0:T(1,128)}', space=vmem, size = 0x12000, scoped, tag = 'internal scratch']
  #allocation2 [shape = 'f32[1,1]{1,0:T(1,128)S(1)}', space=vmem, size = 0x200, scoped, tag = 'scoped memory for tpu_custom_call.1']
  %s0 = inlined_call_operand.vmem [shape: f32[32,16], index: 0, kind: input, shape index: {}]
  %s1 = inlined_call_operand.hbm [shape: f32[16,768], index: 1, kind: input, shape index: {}]
  %s2 = inlined_call_operand.hbm [shape: f32[1,768], index: 2, kind: input, shape index: {}]
  %s3 = inlined_call_operand.hbm [shape: bf16[768,2048], index: 3, kind: input, shape index: {}]
  %s4 = inlined_call_operand.vmem [shape: bf16[2048,32], index: 4, kind: input, shape index: {}]
  %s5 = inlined_call_operand.hbm [shape: f32[1,32], index: 5, kind: input, shape index: {}]
  %s6 = inlined_call_operand.<no memory space> [shape: f32[1,1], index: 6, kind: input, shape index: {}]
  %s7 = inlined_call_operand.vmem [shape: f32[32,1], index: 7, kind: output, shape index: {}]
  %s8 = sld [smem:[#allocation0]]
  $region77: #{tpu_custom_call.1} parent=0
    _
  %s10 = ssub.s32 1, %s8
  %s11 = scalar_select 0, %s10, %s8
  %v12 = vstv %s6
  %13 = vst [vmem:[#allocation2] sm:$0x1] %v12
  $region1: #{tpu_custom_call.1} parent=0
    #allocation3 [shape = 'u8[49152]{0}', space=vmem, size = 0xc000, scoped, tag = 'input window, operand 1, single buffered']
    #allocation4 [shape = 's32[2]{0}', space=sflag, size = 0x8, scoped, tag = 'scoped memory for tpu_custom_call.1']
    #allocation5 [shape = 'u8[3072]{0}', space=vmem, size = 0xc00, scoped, tag = 'input window, operand 2, single buffered']
    #allocation6 [shape = 's32[1]{0}', space=sflag, size = 0x4, scoped, tag = 'scoped memory for tpu_custom_call.1']
    #allocation7 [shape = 'u8[3145728]{0}', space=vmem, size = 0x300000, scoped, tag = 'input window, operand 3, single buffered']
    #allocation8 [shape = 'u8[512]{0}', space=vmem, size = 0x400, scoped, tag = 'input window, operand 5, single buffered']
    #allocation9 [shape = 's32[1]{0}', space=sflag, size = 0x4, scoped, tag = 'scoped memory for tpu_custom_call.1']
    %14 = vsyncpa [#allocation4], 0
    %15 = vsyncpa [#allocation6], 0
    %16 = vsyncpa [#allocation9], 0
    loop: start=0, step=1, limit=4
    $region2: #{tpu_custom_call.1} parent=1 // loop_pre_header
      _
    $region3: #{tpu_custom_call.1} parent=1 // loop_header
      %s18 = sphi 0, %s22
      %p19 = scmp.ge.s32.totalorder %s18, 4
      %s28 = sphi 0, %s30
      %s31 = sphi 0, %s28
      %s32 = sphi 0, %s31
      %s48 = sphi 0, %s32
      %s52 = sphi 0, %s52
      %s54 = sphi 0, %s52
      %s55 = sphi 0, %s54
      %s69 = sphi 0, %s55
      %s73 = sphi 0, %s73
      %s75 = sphi 0, %s73
      %s76 = sphi 0, %s75
      %s90 = sphi 0, %s76
      %s94 = sphi 0, %s94
      %s96 = sphi 0, %s94
      %s97 = sphi 0, %s96
      %s111 = sphi 0, %s97
      %s115 = sphi 0, %s115
      %s117 = sphi 0, %s115
      %s118 = sphi 0, %s117
      %s132 = sphi 0, %s118
      %s136 = sphi 0, %s136
      %s138 = sphi 0, %s136
      %s139 = sphi 0, %s138
      %s153 = sphi 0, %s139
      %s157 = sphi 0, %s157
      %s159 = sphi 0, %s157
      %s160 = sphi 0, %s159
      %s174 = sphi 0, %s160
      %s180 = sphi 0, %s182
      %s183 = sphi 0, %s180
      %s184 = sphi 0, %s183
      %s200 = sphi 0, %s184
    $region4: #{tpu_custom_call.1} parent=1 // loop_header_branch
      %21 = sbr.rel (%p19) target = $region8
    $region5: #{tpu_custom_call.1} parent=1 // loop_body
      %s23 = ssub.s32 %s18, 1
      %s24 = ssub.s32 %s18, 2
      %s25 = sadd.s32 %s18, 1
      %s26 = ssub.s32 %s18, %s25
      %p27 = scmp.eq.s32.totalorder %s26, 0
      %s29 = sadd.s32 %s28, 1
      %s30 = scalar_select %p27, %s28, %s29
      %p33 = pneg %p27
      %p34 = scmp.eq.s32.totalorder %s18, 1
      %p35 = por %p33, %p34
      %p36 = scmp.ne.s32.totalorder %s28, %s31
      %p37 = scmp.eq.s32.totalorder %s18, 0
      %p38 = por %p36, %p37
      %p39 = scmp.ne.s32.totalorder %s28, %s31
      %p40 = scmp.eq.s32.totalorder %s23, 1
      %p41 = por %p39, %p40
      %p42 = scmp.ne.s32.totalorder %s31, %s32
      %p43 = scmp.eq.s32.totalorder %s23, 0
      %p44 = por %p42, %p43
      %p45 = scmp.ne.s32.totalorder %s31, %s32
      %p46 = scmp.eq.s32.totalorder %s24, 1
      %p47 = por %p45, %p46
      %p49 = scmp.ne.s32.totalorder %s32, %s48
      %p50 = scmp.eq.s32.totalorder %s24, 0
      %p51 = por %p49, %p50
      %s53 = sadd.s32 %s52, 1
      %p56 = scmp.eq.s32.totalorder %s18, 1
      %p57 = scmp.ne.s32.totalorder %s52, %s54
      %p58 = scmp.eq.s32.totalorder %s18, 0
      %p59 = por %p57, %p58
      %p60 = scmp.ne.s32.totalorder %s52, %s54
      %p61 = scmp.eq.s32.totalorder %s23, 1
      %p62 = por %p60, %p61
      %p63 = scmp.ne.s32.totalorder %s54, %s55
      %p64 = scmp.eq.s32.totalorder %s23, 0
      %p65 = por %p63, %p64
      %p66 = scmp.ne.s32.totalorder %s54, %s55
      %p67 = scmp.eq.s32.totalorder %s24, 1
      %p68 = por %p66, %p67
      %p70 = scmp.ne.s32.totalorder %s55, %s69
      %p71 = scmp.eq.s32.totalorder %s24, 0
      %p72 = por %p70, %p71
      %s74 = sadd.s32 %s73, 1
      %p77 = scmp.eq.s32.totalorder %s18, 1
      %p78 = scmp.ne.s32.totalorder %s73, %s75
      %p79 = scmp.eq.s32.totalorder %s18, 0
      %p80 = por %p78, %p79
      %p81 = scmp.ne.s32.totalorder %s73, %s75
      %p82 = scmp.eq.s32.totalorder %s23, 1
      %p83 = por %p81, %p82
      %p84 = scmp.ne.s32.totalorder %s75, %s76
      %p85 = scmp.eq.s32.totalorder %s23, 0
      %p86 = por %p84, %p85
      %p87 = scmp.ne.s32.totalorder %s75, %s76
      %p88 = scmp.eq.s32.totalorder %s24, 1
      %p89 = por %p87, %p88
      %p91 = scmp.ne.s32.totalorder %s76, %s90
      %p92 = scmp.eq.s32.totalorder %s24, 0
      %p93 = por %p91, %p92
      %s95 = sadd.s32 %s94, 1
      %p98 = scmp.eq.s32.totalorder %s18, 1
      %p99 = scmp.ne.s32.totalorder %s94, %s96
      %p100 = scmp.eq.s32.totalorder %s18, 0
      %p101 = por %p99, %p100
      %p102 = scmp.ne.s32.totalorder %s94, %s96
      %p103 = scmp.eq.s32.totalorder %s23, 1
      %p104 = por %p102, %p103
      %p105 = scmp.ne.s32.totalorder %s96, %s97
      %p106 = scmp.eq.s32.totalorder %s23, 0
      %p107 = por %p105, %p106
      %p108 = scmp.ne.s32.totalorder %s96, %s97
      %p109 = scmp.eq.s32.totalorder %s24, 1
      %p110 = por %p108, %p109
      %p112 = scmp.ne.s32.totalorder %s97, %s111
      %p113 = scmp.eq.s32.totalorder %s24, 0
      %p114 = por %p112, %p113
      %s116 = sadd.s32 %s115, 1
      %p119 = scmp.eq.s32.totalorder %s18, 1
      %p120 = scmp.ne.s32.totalorder %s115, %s117
      %p121 = scmp.eq.s32.totalorder %s18, 0
      %p122 = por %p120, %p121
      %p123 = scmp.ne.s32.totalorder %s115, %s117
      %p124 = scmp.eq.s32.totalorder %s23, 1
      %p125 = por %p123, %p124
      %p126 = scmp.ne.s32.totalorder %s117, %s118
      %p127 = scmp.eq.s32.totalorder %s23, 0
      %p128 = por %p126, %p127
      %p129 = scmp.ne.s32.totalorder %s117, %s118
      %p130 = scmp.eq.s32.totalorder %s24, 1
      %p131 = por %p129, %p130
      %p133 = scmp.ne.s32.totalorder %s118, %s132
      %p134 = scmp.eq.s32.totalorder %s24, 0
      %p135 = por %p133, %p134
      %s137 = sadd.s32 %s136, 1
      %p140 = scmp.eq.s32.totalorder %s18, 1
      %p141 = scmp.ne.s32.totalorder %s136, %s138
      %p142 = scmp.eq.s32.totalorder %s18, 0
      %p143 = por %p141, %p142
      %p144 = scmp.ne.s32.totalorder %s136, %s138
      %p145 = scmp.eq.s32.totalorder %s23, 1
      %p146 = por %p144, %p145
      %p147 = scmp.ne.s32.totalorder %s138, %s139
      %p148 = scmp.eq.s32.totalorder %s23, 0
      %p149 = por %p147, %p148
      %p150 = scmp.ne.s32.totalorder %s138, %s139
      %p151 = scmp.eq.s32.totalorder %s24, 1
      %p152 = por %p150, %p151
      %p154 = scmp.ne.s32.totalorder %s139, %s153
      %p155 = scmp.eq.s32.totalorder %s24, 0
      %p156 = por %p154, %p155
      %s158 = sadd.s32 %s157, 1
      %p161 = scmp.eq.s32.totalorder %s18, 1
      %p162 = scmp.ne.s32.totalorder %s157, %s159
      %p163 = scmp.eq.s32.totalorder %s18, 0
      %p164 = por %p162, %p163
      %p165 = scmp.ne.s32.totalorder %s157, %s159
      %p166 = scmp.eq.s32.totalorder %s23, 1
      %p167 = por %p165, %p166
      %p168 = scmp.ne.s32.totalorder %s159, %s160
      %p169 = scmp.eq.s32.totalorder %s23, 0
      %p170 = por %p168, %p169
      %p171 = scmp.ne.s32.totalorder %s159, %s160
      %p172 = scmp.eq.s32.totalorder %s24, 1
      %p173 = por %p171, %p172
      %p175 = scmp.ne.s32.totalorder %s160, %s174
      %p176 = scmp.eq.s32.totalorder %s24, 0
      %p177 = por %p175, %p176
      %s178 = ssub.s32 %s18, %s25
      %p179 = scmp.eq.s32.totalorder %s178, 0
      %s181 = sadd.s32 %s180, 1
      %s182 = scalar_select %p179, %s180, %s181
      %p185 = pneg %p179
      %p186 = scmp.eq.s32.totalorder %s18, 1
      %p187 = por %p185, %p186
      %p188 = scmp.ne.s32.totalorder %s180, %s183
      %p189 = scmp.eq.s32.totalorder %s18, 0
      %p190 = por %p188, %p189
      %p191 = scmp.ne.s32.totalorder %s180, %s183
      %p192 = scmp.eq.s32.totalorder %s23, 1
      %p193 = por %p191, %p192
      %p194 = scmp.ne.s32.totalorder %s183, %s184
      %p195 = scmp.eq.s32.totalorder %s23, 0
      %p196 = por %p194, %p195
      %p197 = scmp.ne.s32.totalorder %s183, %s184
      %p198 = scmp.eq.s32.totalorder %s24, 1
      %p199 = por %p197, %p198
      %p201 = scmp.ne.s32.totalorder %s184, %s200
      %p202 = scmp.eq.s32.totalorder %s24, 0
      %p203 = por %p201, %p202
      %p204 = scmp.le.s32.totalorder 1, %s18
      %p205 = scmp.lt.s32.totalorder %s18, 3
      %p206 = pnand %p204, %p205
      %p207 = pneg %p206
      // Predicated region
      $region9: #{tpu_custom_call.1} parent=5 // pred_check
        _
      $region10: #{tpu_custom_call.1} parent=5 // pred_check_branch
        %209 = sbr.rel (%p206) target = $region12
      $region11: #{tpu_custom_call.1} parent=5 // pred_region
        %s210 = ssub.s32 %s18, 1
        // Predicated region
        $region13: #{tpu_custom_call.1} parent=11 // pred_check
          %p211 = pneg %p65
        $region14: #{tpu_custom_call.1} parent=11 // pred_check_branch
          %213 = sbr.rel (%p211) target = $region16
        $region15: #{tpu_custom_call.1} parent=11 // pred_region
          %s215 = ssub.s32 1536, 1536
          %216 = vsyncadd [#allocation4], %s215
          %s217 = sshll.u32 [#allocation3], 4
          %s218 = int_to_ptr.vmem [resolvable:$true] %s217
          %223 = dma.hbm_to_vmem [thread:$0]  %s1, 1536, %s218, [#allocation4], 768, 768, 48
        $region16: #{tpu_custom_call.1} parent=11 // pred_fallthru
          _
        // Predicated region
        $region17: #{tpu_custom_call.1} parent=11 // pred_check
          %p224 = pneg %p86
        $region18: #{tpu_custom_call.1} parent=11 // pred_check_branch
          %226 = sbr.rel (%p224) target = $region20
        $region19: #{tpu_custom_call.1} parent=11 // pred_region
          %s228 = ssub.s32 96, 96
          %229 = vsyncadd [#allocation6], %s228
          %s231 = sshll.u32 [#allocation5], 4
          %s232 = int_to_ptr.vmem [resolvable:$true] %s231
          %234 = dma.hbm_to_vmem [thread:$0]  %s2, 96, %s232, [#allocation6]
        $region20: #{tpu_custom_call.1} parent=11 // pred_fallthru
          _
        // Predicated region
        $region21: #{tpu_custom_call.1} parent=11 // pred_check
          %p235 = pneg %p107
        $region22: #{tpu_custom_call.1} parent=11 // pred_check_branch
          %237 = sbr.rel (%p235) target = $region24
        $region23: #{tpu_custom_call.1} parent=11 // pred_region
          %s239 = ssub.s32 98304, 98304
          %240 = vsyncadd [#allocation6], %s239
          %s241 = sshll.u32 [#allocation7], 4
          %s242 = int_to_ptr.vmem [resolvable:$true] %s241
          %247 = dma.hbm_to_vmem [thread:$0]  %s3, 98304, %s242, [#allocation6], 1024, 1024, 64
        $region24: #{tpu_custom_call.1} parent=11 // pred_fallthru
          _
        // Predicated region
        $region25: #{tpu_custom_call.1} parent=11 // pred_check
          %p248 = pneg %p128
        $region26: #{tpu_custom_call.1} parent=11 // pred_check_branch
          %250 = sbr.rel (%p248) target = $region28
        $region27: #{tpu_custom_call.1} parent=11 // pred_region
          _
        $region28: #{tpu_custom_call.1} parent=11 // pred_fallthru
          _
        // Predicated region
        $region29: #{tpu_custom_call.1} parent=11 // pred_check
          %p251 = pneg %p149
        $region30: #{tpu_custom_call.1} parent=11 // pred_check_branch
          %253 = sbr.rel (%p251) target = $region32
        $region31: #{tpu_custom_call.1} parent=11 // pred_region
          %s255 = ssub.s32 16, 16
          %256 = vsyncadd [#allocation9], %s255
          %s258 = sshll.u32 [#allocation8], 4
          %s259 = int_to_ptr.vmem [resolvable:$true] %s258
          %261 = dma.hbm_to_vmem [thread:$0]  %s5, 16, %s259, [#allocation9]
        $region32: #{tpu_custom_call.1} parent=11 // pred_fallthru
          _
        // Predicated region
        $region33: #{tpu_custom_call.1} parent=11 // pred_check
          %p262 = pneg %p170
        $region34: #{tpu_custom_call.1} parent=11 // pred_check_branch
          %264 = sbr.rel (%p262) target = $region36
        $region35: #{tpu_custom_call.1} parent=11 // pred_region
          _
        $region36: #{tpu_custom_call.1} parent=11 // pred_fallthru
          _
      $region12: #{tpu_custom_call.1} parent=5 // pred_fallthru
        _
      %p265 = scmp.lt.s32.totalorder %s18, 2
      // Predicated region
      $region37: #{tpu_custom_call.1} parent=5 // pred_check
        %p266 = pneg %p265
      $region38: #{tpu_custom_call.1} parent=5 // pred_check_branch
        %268 = sbr.rel (%p266) target = $region40
      $region39: #{tpu_custom_call.1} parent=5 // pred_region
        // Predicated region
        $region41: #{tpu_custom_call.1} parent=39 // pred_check
          %p269 = pneg %p38
        $region42: #{tpu_custom_call.1} parent=39 // pred_check_branch
          %271 = sbr.rel (%p269) target = $region44
        $region43: #{tpu_custom_call.1} parent=39 // pred_region
          %s272 = smul.u32 2, %s18
          %p273 = scmp.lt.s32.totalorder %s272, 3
          %s274 = scalar_select %p273, %s272, 3
          %s275 = smul.addr %s274, 8
          %s276 = scalar_lea.vmem %s0, %s275
          %s277 = smul.u32 2, %s18
        $region44: #{tpu_custom_call.1} parent=39 // pred_fallthru
          _
      $region40: #{tpu_custom_call.1} parent=5 // pred_fallthru
        _
      %p278 = scmp.le.s32.totalorder 1, %s18
      %p279 = scmp.lt.s32.totalorder %s18, 3
      %p280 = pnand %p278, %p279
      %p281 = pneg %p280
      // Predicated region
      $region45: #{tpu_custom_call.1} parent=5 // pred_check
        _
      $region46: #{tpu_custom_call.1} parent=5 // pred_check_branch
        %283 = sbr.rel (%p280) target = $region48
      $region47: #{tpu_custom_call.1} parent=5 // pred_region
        %s284 = ssub.s32 %s18, 1
        // Predicated region
        $region49: #{tpu_custom_call.1} parent=47 // pred_check
          %p285 = pneg %p65
        $region50: #{tpu_custom_call.1} parent=47 // pred_check_branch
          %287 = sbr.rel (%p285) target = $region52
        $region51: #{tpu_custom_call.1} parent=47 // pred_region
          %288 = dma.done [#allocation4], 1536
        $region52: #{tpu_custom_call.1} parent=47 // pred_fallthru
          _
        // Predicated region
        $region53: #{tpu_custom_call.1} parent=47 // pred_check
          %p289 = pneg %p86
        $region54: #{tpu_custom_call.1} parent=47 // pred_check_branch
          %291 = sbr.rel (%p289) target = $region56
        $region55: #{tpu_custom_call.1} parent=47 // pred_region
          %292 = dma.done [#allocation6], 96
        $region56: #{tpu_custom_call.1} parent=47 // pred_fallthru
          _
        // Predicated region
        $region57: #{tpu_custom_call.1} parent=47 // pred_check
          %p293 = pneg %p107
        $region58: #{tpu_custom_call.1} parent=47 // pred_check_branch
          %295 = sbr.rel (%p293) target = $region60
        $region59: #{tpu_custom_call.1} parent=47 // pred_region
          %296 = dma.done [#allocation6], 98304
        $region60: #{tpu_custom_call.1} parent=47 // pred_fallthru
          _
        // Predicated region
        $region61: #{tpu_custom_call.1} parent=47 // pred_check
          %p297 = pneg %p149
        $region62: #{tpu_custom_call.1} parent=47 // pred_check_branch
          %299 = sbr.rel (%p297) target = $region64
        $region63: #{tpu_custom_call.1} parent=47 // pred_region
          %300 = dma.done [#allocation9], 16
        $region64: #{tpu_custom_call.1} parent=47 // pred_fallthru
          _
        %s301 = smul.u32 2, %s23
        %p302 = scmp.lt.s32.totalorder %s301, 3
        %s303 = scalar_select %p302, %s301, 3
        %s304 = smul.addr %s303, 8
        %s305 = scalar_lea.vmem %s0, %s304
        %p306 = pneg %p44
        %p307 = pneg %p41
        %p308 = pneg %p65
        %p309 = pneg %p62
        %p310 = pneg %p86
        %p311 = pneg %p83
        %p312 = pneg %p107
        %p313 = pneg %p104
        %p314 = pneg %p128
        %p315 = pneg %p125
        %p316 = pneg %p149
        %p317 = pneg %p146
        %p318 = pneg %p170
        %p319 = pneg %p167
        %p320 = pneg %p196
        %p321 = pneg %p193
        %s322 = smul.u32 2, %s23
        %p323 = scmp.lt.s32.totalorder %s322, 3
        %s324 = scalar_select %p323, %s322, 3
        %s325 = smul.addr %s324, 8
        %s326 = scalar_lea.vmem %s7, %s325
        %s327 = smul.u32 2, %s23
        %p328 = scmp.lt.s32.totalorder %s327, 3
        %s329 = scalar_select %p328, %s327, 3
        %s330 = smul.addr %s329, 8
        %s331 = scalar_lea.vmem %s0, %s330
        %s332 = smul.u32 2, %s23
        %s333 = smul.u32 2, %s23
        %p334 = scmp.lt.s32.totalorder %s333, 3
        %s335 = scalar_select %p334, %s333, 3
        %s336 = smul.addr %s335, 8
        %s337 = scalar_lea.vmem %s7, %s336
        %s338 = smul.u32 2, %s23
        %v340 = vld [vmem:[%s331] sm:$0xff]
        %v341 = vld [vmem:[%s331 + $0x8] sm:$0xff]
        %v342 = vld [vmem:[#allocation3] sm:$0xff]
        %v343 = vld [vmem:[#allocation3 + $0x8] sm:$0xff]
        %v344 = vld [vmem:[#allocation3 + $0x10] sm:$0xff]
        %v345 = vld [vmem:[#allocation3 + $0x18] sm:$0xff]
        %v346 = vld [vmem:[#allocation3 + $0x20] sm:$0xff]
        %v347 = vld [vmem:[#allocation3 + $0x28] sm:$0xff]
        %v348 = vld [vmem:[#allocation3 + $0x30] sm:$0xff]
        %v349 = vld [vmem:[#allocation3 + $0x38] sm:$0xff]
        %v350 = vld [vmem:[#allocation3 + $0x40] sm:$0xff]
        %v351 = vld [vmem:[#allocation3 + $0x48] sm:$0xff]
        %v352 = vld [vmem:[#allocation3 + $0x50] sm:$0xff]
        %v353 = vld [vmem:[#allocation3 + $0x58] sm:$0xff]
        %v354 = vld [vmem:[#allocation5] sm:$0x3f]
        %v356 = vlaneseq
        %v357 = vshrl.u32 %v356, 7
        %v358 = vsub.s32 0, %v357
        %v359 = vrot.slane %v354, %v358
        %v360 = vlaneseq
        %v361 = vshrl.u32 %v360, 7
        %v362 = vsub.s32 1, %v361
        %v363 = vrot.slane %v354, %v362
        %v364 = vlaneseq
        %v365 = vshrl.u32 %v364, 7
        %v366 = vsub.s32 2, %v365
        %v367 = vrot.slane %v354, %v366
        %v368 = vlaneseq
        %v369 = vshrl.u32 %v368, 7
        %v370 = vsub.s32 3, %v369
        %v371 = vrot.slane %v354, %v370
        %v372 = vlaneseq
        %v373 = vshrl.u32 %v372, 7
        %v374 = vsub.s32 4, %v373
        %v375 = vrot.slane %v354, %v374
        %v376 = vlaneseq
        %v377 = vshrl.u32 %v376, 7
        %v378 = vsub.s32 5, %v377
        %v379 = vrot.slane %v354, %v378
        %vm386 = vcmask 130048
        %v388 = vsel %vm386, %v340, 0
        %v391 = vsel %vm386, %v341, 0
        %393 = vmatprep.subr.mxu0 %v343
        %394 = vmatpush1.msra.mxu0 %v342
        %395 = vmatprep.subr.mxu0 %v349
        %396 = vmatpush1.msra.mxu0 %v348
        %397 = vmatprep.subr.mxu0 0.0
        %398 = vmatpush1.msra.mxu0 0.0
        %399 = vmatprep.subr.mxu0 0.0
        %400 = vmatpush1.msra.mxu0 0.0
        %401 = vmatprep.subr.mxu0 0.0
        %402 = vmatpush1.msra.mxu0 0.0
        %403 = vmatprep.subr.mxu0 0.0
        %404 = vmatpush1.msra.mxu0 0.0
        %405 = vmatprep.subr.mxu0 0.0
        %406 = vmatpush1.msra.mxu0 0.0
        %407 = vmatprep.subr.mxu0 0.0
        %408 = vmatpush1.msra.mxu0 0.0
        %409 = vmatprep.subr.mxu0 0.0
        %410 = vmatpush1.msra.mxu0 0.0
        %411 = vmatprep.subr.mxu0 0.0
        %412 = vmatpush1.msra.mxu0 0.0
        %413 = vmatprep.subr.mxu0 0.0
        %414 = vmatpush1.msra.mxu0 0.0
        %415 = vmatprep.subr.mxu0 0.0
        %416 = vmatpush1.msra.mxu0 0.0
        %417 = vmatprep.subr.mxu0 0.0
        %418 = vmatpush1.msra.mxu0 0.0
        %419 = vmatprep.subr.mxu0 0.0
        %420 = vmatpush1.msra.mxu0 0.0
        %421 = vmatprep.subr.mxu0 0.0
        %422 = vmatpush1.msra.mxu0 0.0
        %423 = vmatprep.subr.mxu0 0.0
        %424 = vmatpush1.msra.mxu0 0.0
        %425 = vmatprep.subr.mxu0 0.0
        %426 = vmatpush1.msra.mxu0 0.0
        %427 = vmatprep.subr.mxu0 0.0
        %428 = vmatpush1.msra.mxu0 0.0
        %429 = vmatprep.subr.mxu0 0.0
        %430 = vmatpush1.msra.mxu0 0.0
        %431 = vmatprep.subr.mxu0 0.0
        %432 = vmatpush1.msra.mxu0 0.0
        %433 = vmatprep.subr.mxu0 0.0
        %434 = vmatpush1.msra.mxu0 0.0
        %435 = vmatprep.subr.mxu0 0.0
        %436 = vmatpush1.msra.mxu0 0.0
        %437 = vmatprep.subr.mxu0 0.0
        %438 = vmatpush1.msra.mxu0 0.0
        %439 = vmatprep.subr.mxu0 0.0
        %440 = vmatpush1.msra.mxu0 0.0
        %441 = vmatprep.subr.mxu0 0.0
        %442 = vmatpush1.msra.mxu0 0.0
        %443 = vmatprep.subr.mxu0 0.0
        %444 = vmatpush1.msra.mxu0 0.0
        %445 = vmatprep.subr.mxu0 0.0
        %446 = vmatpush1.msra.mxu0 0.0
        %447 = vmatprep.subr.mxu0 0.0
        %448 = vmatpush1.msra.mxu0 0.0
        %449 = vmatprep.subr.mxu0 0.0
        %450 = vmatpush1.msra.mxu0 0.0
        %451 = vmatprep.subr.mxu0 0.0
        %452 = vmatpush1.msra.mxu0 0.0
        %453 = vmatprep.subr.mxu0 0.0
        %454 = vmatpush1.msra.mxu0 0.0
        %455 = vmatprep.subr.mxu0 0.0
        %456 = vmatpush1.msra.mxu0 0.0
        %457 = vmatprep.mubr.f32.mxu0 0.0
        %458 = vmatmul.mubr.f32.gmra.mrb[0].mxu0 %v388
        %v459 = vpop.f32.mrb[0].mxu0
        %v460 = vadd.f32 %v359, %v459
        %v461 = vpop.f32.mrb[0].mxu0
        %v462 = vadd.f32 %v363, %v461
        %463 = vmatprep.mubr.f32.mxu0 0.0
        %464 = vmatmul.mubr.f32.gmra.mrb[0].mxu0 %v391
        %v465 = vpop.f32.mrb[0].mxu0
        %v466 = vadd.f32 %v359, %v465
        %v467 = vpop.f32.mrb[0].mxu0
        %v468 = vadd.f32 %v363, %v467
        %469 = vdwg.mxu0
        %470 = vmatprep.subr.mxu0 %v345
        %471 = vmatpush1.msra.mxu0 %v344
        %472 = vmatprep.subr.mxu0 %v351
        %473 = vmatpush1.msra.mxu0 %v350
        %474 = vmatprep.subr.mxu0 0.0
        %475 = vmatpush1.msra.mxu0 0.0
        %476 = vmatprep.subr.mxu0 0.0
        %477 = vmatpush1.msra.mxu0 0.0
        %478 = vmatprep.subr.mxu0 0.0
        %479 = vmatpush1.msra.mxu0 0.0
        %480 = vmatprep.subr.mxu0 0.0
        %481 = vmatpush1.msra.mxu0 0.0
        %482 = vmatprep.subr.mxu0 0.0
        %483 = vmatpush1.msra.mxu0 0.0
        %484 = vmatprep.subr.mxu0 0.0
        %485 = vmatpush1.msra.mxu0 0.0
        %486 = vmatprep.subr.mxu0 0.0
        %487 = vmatpush1.msra.mxu0 0.0
        %488 = vmatprep.subr.mxu0 0.0
        %489 = vmatpush1.msra.mxu0 0.0
        %490 = vmatprep.subr.mxu0 0.0
        %491 = vmatpush1.msra.mxu0 0.0
        %492 = vmatprep.subr.mxu0 0.0
        %493 = vmatpush1.msra.mxu0 0.0
        %494 = vmatprep.subr.mxu0 0.0
        %495 = vmatpush1.msra.mxu0 0.0
        %496 = vmatprep.subr.mxu0 0.0
        %497 = vmatpush1.msra.mxu0 0.0
        %498 = vmatprep.subr.mxu0 0.0
        %499 = vmatpush1.msra.mxu0 0.0
        %500 = vmatprep.subr.mxu0 0.0
        %501 = vmatpush1.msra.mxu0 0.0
        %502 = vmatprep.subr.mxu0 0.0
        %503 = vmatpush1.msra.mxu0 0.0
        %504 = vmatprep.subr.mxu0 0.0
        %505 = vmatpush1.msra.mxu0 0.0
        %506 = vmatprep.subr.mxu0 0.0
        %507 = vmatpush1.msra.mxu0 0.0
        %508 = vmatprep.subr.mxu0 0.0
        %509 = vmatpush1.msra.mxu0 0.0
        %510 = vmatprep.subr.mxu0 0.0
        %511 = vmatpush1.msra.mxu0 0.0
        %512 = vmatprep.subr.mxu0 0.0
        %513 = vmatpush1.msra.mxu0 0.0
        %514 = vmatprep.subr.mxu0 0.0
        %515 = vmatpush1.msra.mxu0 0.0
        %516 = vmatprep.subr.mxu0 0.0
        %517 = vmatpush1.msra.mxu0 0.0
        %518 = vmatprep.subr.mxu0 0.0
        %519 = vmatpush1.msra.mxu0 0.0
        %520 = vmatprep.subr.mxu0 0.0
        %521 = vmatpush1.msra.mxu0 0.0
        %522 = vmatprep.subr.mxu0 0.0
        %523 = vmatpush1.msra.mxu0 0.0
        %524 = vmatprep.subr.mxu0 0.0
        %525 = vmatpush1.msra.mxu0 0.0
        %526 = vmatprep.subr.mxu0 0.0
        %527 = vmatpush1.msra.mxu0 0.0
        %528 = vmatprep.subr.mxu0 0.0
        %529 = vmatpush1.msra.mxu0 0.0
        %530 = vmatprep.subr.mxu0 0.0
        %531 = vmatpush1.msra.mxu0 0.0
        %532 = vmatprep.subr.mxu0 0.0
        %533 = vmatpush1.msra.mxu0 0.0
        %534 = vmatprep.mubr.f32.mxu0 0.0
        %535 = vmatmul.mubr.f32.gmra.mrb[0].mxu0 %v388
        %v536 = vpop.f32.mrb[0].mxu0
        %v537 = vadd.f32 %v367, %v536
        %v538 = vpop.f32.mrb[0].mxu0
        %v539 = vadd.f32 %v371, %v538
        %540 = vmatprep.mubr.f32.mxu0 0.0
        %541 = vmatmul.mubr.f32.gmra.mrb[0].mxu0 %v391
        %v542 = vpop.f32.mrb[0].mxu0
        %v543 = vadd.f32 %v367, %v542
        %v544 = vpop.f32.mrb[0].mxu0
        %v545 = vadd.f32 %v371, %v544
        %546 = vdwg.mxu0
        %547 = vmatprep.subr.mxu0 %v347
        %548 = vmatpush1.msra.mxu0 %v346
        %549 = vmatprep.subr.mxu0 %v353
        %550 = vmatpush1.msra.mxu0 %v352
        %551 = vmatprep.subr.mxu0 0.0
        %552 = vmatpush1.msra.mxu0 0.0
        %553 = vmatprep.subr.mxu0 0.0
        %554 = vmatpush1.msra.mxu0 0.0
        %555 = vmatprep.subr.mxu0 0.0
        %556 = vmatpush1.msra.mxu0 0.0
        %557 = vmatprep.subr.mxu0 0.0
        %558 = vmatpush1.msra.mxu0 0.0
        %559 = vmatprep.subr.mxu0 0.0
        %560 = vmatpush1.msra.mxu0 0.0
        %561 = vmatprep.subr.mxu0 0.0
        %562 = vmatpush1.msra.mxu0 0.0
        %563 = vmatprep.subr.mxu0 0.0
        %564 = vmatpush1.msra.mxu0 0.0
        %565 = vmatprep.subr.mxu0 0.0
        %566 = vmatpush1.msra.mxu0 0.0
        %567 = vmatprep.subr.mxu0 0.0
        %568 = vmatpush1.msra.mxu0 0.0
        %569 = vmatprep.subr.mxu0 0.0
        %570 = vmatpush1.msra.mxu0 0.0
        %571 = vmatprep.subr.mxu0 0.0
        %572 = vmatpush1.msra.mxu0 0.0
        %573 = vmatprep.subr.mxu0 0.0
        %574 = vmatpush1.msra.mxu0 0.0
        %575 = vmatprep.subr.mxu0 0.0
        %576 = vmatpush1.msra.mxu0 0.0
        %577 = vmatprep.subr.mxu0 0.0
        %578 = vmatpush1.msra.mxu0 0.0
        %579 = vmatprep.subr.mxu0 0.0
        %580 = vmatpush1.msra.mxu0 0.0
        %581 = vmatprep.subr.mxu0 0.0
        %582 = vmatpush1.msra.mxu0 0.0
        %583 = vmatprep.subr.mxu0 0.0
        %584 = vmatpush1.msra.mxu0 0.0
        %585 = vmatprep.subr.mxu0 0.0
        %586 = vmatpush1.msra.mxu0 0.0
        %587 = vmatprep.subr.mxu0 0.0
        %588 = vmatpush1.msra.mxu0 0.0
        %589 = vmatprep.subr.mxu0 0.0
        %590 = vmatpush1.msra.mxu0 0.0
        %591 = vmatprep.subr.mxu0 0.0
        %592 = vmatpush1.msra.mxu0 0.0
        %593 = vmatprep.subr.mxu0 0.0
        %594 = vmatpush1.msra.mxu0 0.0
        %595 = vmatprep.subr.mxu0 0.0
        %596 = vmatpush1.msra.mxu0 0.0
        %597 = vmatprep.subr.mxu0 0.0
        %598 = vmatpush1.msra.mxu0 0.0
        %599 = vmatprep.subr.mxu0 0.0
        %600 = vmatpush1.msra.mxu0 0.0
        %601 = vmatprep.subr.mxu0 0.0
        %602 = vmatpush1.msra.mxu0 0.0
        %603 = vmatprep.subr.mxu0 0.0
        %604 = vmatpush1.msra.mxu0 0.0
        %605 = vmatprep.subr.mxu0 0.0
        %606 = vmatpush1.msra.mxu0 0.0
        %607 = vmatprep.subr.mxu0 0.0
        %608 = vmatpush1.msra.mxu0 0.0
        %609 = vmatprep.subr.mxu0 0.0
        %610 = vmatpush1.msra.mxu0 0.0
        %611 = vmatprep.mubr.f32.mxu0 0.0
        %612 = vmatmul.mubr.f32.gmra.mrb[0].mxu0 %v388
        %v613 = vpop.f32.mrb[0].mxu0
        %v614 = vadd.f32 %v375, %v613
        %v615 = vpop.f32.mrb[0].mxu0
        %v616 = vadd.f32 %v379, %v615
        %617 = vmatprep.mubr.f32.mxu0 0.0
        %618 = vmatmul.mubr.f32.gmra.mrb[0].mxu0 %v391
        %v619 = vpop.f32.mrb[0].mxu0
        %v620 = vadd.f32 %v375, %v619
        %v621 = vpop.f32.mrb[0].mxu0
        %v622 = vadd.f32 %v379, %v621
        %623 = vdwg.mxu0
        %v624 = vmax.f32 %v460, 0.0
        %v625 = vmax.f32 %v462, 0.0
        %v626 = vmax.f32 %v537, 0.0
        %v627 = vmax.f32 %v539, 0.0
        %v628 = vmax.f32 %v614, 0.0
        %v629 = vmax.f32 %v616, 0.0
        %v630 = vmax.f32 %v466, 0.0
        %v631 = vmax.f32 %v468, 0.0
        %v632 = vmax.f32 %v543, 0.0
        %v633 = vmax.f32 %v545, 0.0
        %v634 = vmax.f32 %v620, 0.0
        %v635 = vmax.f32 %v622, 0.0
        %v636 = vmin.f32 %v624, 1.0
        %v637 = vmin.f32 %v625, 1.0
        %v638 = vmin.f32 %v626, 1.0
        %v639 = vmin.f32 %v627, 1.0
        %v640 = vmin.f32 %v628, 1.0
        %v641 = vmin.f32 %v629, 1.0
        %v642 = vmin.f32 %v630, 1.0
        %v643 = vmin.f32 %v631, 1.0
        %v644 = vmin.f32 %v632, 1.0
        %v645 = vmin.f32 %v633, 1.0
        %v646 = vmin.f32 %v634, 1.0
        %v647 = vmin.f32 %v635, 1.0
        %v648 = vpack.c.bf16 %v642, %v636
        %v649 = vpack.c.bf16 %v643, %v637
        %v650 = vpack.c.bf16 %v644, %v638
        %v651 = vpack.c.bf16 %v645, %v639
        %v652 = vpack.c.bf16 %v646, %v640
        %v653 = vpack.c.bf16 %v647, %v641
        %v654 = vld [vmem:[#allocation7] sm:$0xff]
        %v655 = vld [vmem:[#allocation7 + $0x8] sm:$0xff]
        %v656 = vld [vmem:[#allocation7 + $0x10] sm:$0xff]
        %v657 = vld [vmem:[#allocation7 + $0x18] sm:$0xff]
        %v658 = vld [vmem:[#allocation7 + $0x20] sm:$0xff]
        %v659 = vld [vmem:[#allocation7 + $0x28] sm:$0xff]
        %v660 = vld [vmem:[#allocation7 + $0x30] sm:$0xff]
        %v661 = vld [vmem:[#allocation7 + $0x38] sm:$0xff]
        %v662 = vld [vmem:[#allocation7 + $0x40] sm:$0xff]
        %v663 = vld [vmem:[#allocation7 + $0x48] sm:$0xff]
        %v664 = vld [vmem:[#allocation7 + $0x50] sm:$0xff]
        %v665 = vld [vmem:[#allocation7 + $0x58] sm:$0xff]
        %v666 = vld [vmem:[#allocation7 + $0x60] sm:$0xff]
        %v667 = vld [vmem:[#allocation7 + $0x68] sm:$0xff]
        %v668 = vld [vmem:[#allocation7 + $0x70] sm:$0xff]
        %v669 = vld [vmem:[#allocation7 + $0x78] sm:$0xff]
        %v670 = vld [vmem:[#allocation7 + $0x80] sm:$0xff]
        %v671 = vld [vmem:[#allocation7 + $0x88] sm:$0xff]
        %v672 = vld [vmem:[#allocation7 + $0x90] sm:$0xff]
        %v673 = vld [vmem:[#allocation7 + $0x98] sm:$0xff]
        %v674 = vld [vmem:[#allocation7 + $0xa0] sm:$0xff]
        %v675 = vld [vmem:[#allocation7 + $0xa8] sm:$0xff]
        %v676 = vld [vmem:[#allocation7 + $0xb0] sm:$0xff]
        %v677 = vld [vmem:[#allocation7 + $0xb8] sm:$0xff]
        %v678 = vld [vmem:[#allocation7 + $0xc0] sm:$0xff]
        %v679 = vld [vmem:[#allocation7 + $0xc8] sm:$0xff]
        %v680 = vld [vmem:[#allocation7 + $0xd0] sm:$0xff]
        %v681 = vld [vmem:[#allocation7 + $0xd8] sm:$0xff]
        %v682 = vld [vmem:[#allocation7 + $0xe0] sm:$0xff]
        %v683 = vld [vmem:[#allocation7 + $0xe8] sm:$0xff]
        %v684 = vld [vmem:[#allocation7 + $0xf0] sm:$0xff]
        %v685 = vld [vmem:[#allocation7 + $0xf8] sm:$0xff]
        %v686 = vld [vmem:[#allocation7 + $0x100] sm:$0xff]
        %v687 = vld [vmem:[#allocation7 + $0x108] sm:$0xff]
        %v688 = vld [vmem:[#allocation7 + $0x110] sm:$0xff]
        %v689 = vld [vmem:[#allocation7 + $0x118] sm:$0xff]
        %v690 = vld [vmem:[#allocation7 + $0x120] sm:$0xff]
        %v691 = vld [vmem:[#allocation7 + $0x128] sm:$0xff]
        %v692 = vld [vmem:[#allocation7 + $0x130] sm:$0xff]
        %v693 = vld [vmem:[#allocation7 + $0x138] sm:$0xff]
        %v694 = vld [vmem:[#allocation7 + $0x140] sm:$0xff]
        %v695 = vld [vmem:[#allocation7 + $0x148] sm:$0xff]
        %v696 = vld [vmem:[#allocation7 + $0x150] sm:$0xff]
        %v697 = vld [vmem:[#allocation7 + $0x158] sm:$0xff]
        %v698 = vld [vmem:[#allocation7 + $0x160] sm:$0xff]
        %v699 = vld [vmem:[#allocation7 + $0x168] sm:$0xff]
        %v700 = vld [vmem:[#allocation7 + $0x170] sm:$0xff]
        %v701 = vld [vmem:[#allocation7 + $0x178] sm:$0xff]
        %v702 = vld [vmem:[#allocation7 + $0x180] sm:$0xff]
        %v703 = vld [vmem:[#allocation7 + $0x188] sm:$0xff]
        %v704 = vld [vmem:[#allocation7 + $0x190] sm:$0xff]
        %v705 = vld [vmem:[#allocation7 + $0x198] sm:$0xff]
        %v706 = vld [vmem:[#allocation7 + $0x1a0] sm:$0xff]
        %v707 = vld [vmem:[#allocation7 + $0x1a8] sm:$0xff]
        %v708 = vld [vmem:[#allocation7 + $0x1b0] sm:$0xff]
        %v709 = vld [vmem:[#allocation7 + $0x1b8] sm:$0xff]
        %v710 = vld [vmem:[#allocation7 + $0x1c0] sm:$0xff]
        %v711 = vld [vmem:[#allocation7 + $0x1c8] sm:$0xff]
        %v712 = vld [vmem:[#allocation7 + $0x1d0] sm:$0xff]
        %v713 = vld [vmem:[#allocation7 + $0x1d8] sm:$0xff]
        %v714 = vld [vmem:[#allocation7 + $0x1e0] sm:$0xff]
        %v715 = vld [vmem:[#allocation7 + $0x1e8] sm:$0xff]
        %v716 = vld [vmem:[#allocation7 + $0x1f0] sm:$0xff]
        %v717 = vld [vmem:[#allocation7 + $0x1f8] sm:$0xff]
        %v718 = vld [vmem:[#allocation7 + $0x200] sm:$0xff]
        %v719 = vld [vmem:[#allocation7 + $0x208] sm:$0xff]
        %v720 = vld [vmem:[#allocation7 + $0x210] sm:$0xff]
        %v721 = vld [vmem:[#allocation7 + $0x218] sm:$0xff]
        %v722 = vld [vmem:[#allocation7 + $0x220] sm:$0xff]
        %v723 = vld [vmem:[#allocation7 + $0x228] sm:$0xff]
        %v724 = vld [vmem:[#allocation7 + $0x230] sm:$0xff]
        %v725 = vld [vmem:[#allocation7 + $0x238] sm:$0xff]
        %v726 = vld [vmem:[#allocation7 + $0x240] sm:$0xff]
        %v727 = vld [vmem:[#allocation7 + $0x248] sm:$0xff]
        %v728 = vld [vmem:[#allocation7 + $0x250] sm:$0xff]
        %v729 = vld [vmem:[#allocation7 + $0x258] sm:$0xff]
        %v730 = vld [vmem:[#allocation7 + $0x260] sm:$0xff]
        %v731 = vld [vmem:[#allocation7 + $0x268] sm:$0xff]
        %v732 = vld [vmem:[#allocation7 + $0x270] sm:$0xff]
        %v733 = vld [vmem:[#allocation7 + $0x278] sm:$0xff]
        %v734 = vld [vmem:[#allocation7 + $0x280] sm:$0xff]
        %v735 = vld [vmem:[#allocation7 + $0x288] sm:$0xff]
        %v736 = vld [vmem:[#allocation7 + $0x290] sm:$0xff]
        %v737 = vld [vmem:[#allocation7 + $0x298] sm:$0xff]
        %v738 = vld [vmem:[#allocation7 + $0x2a0] sm:$0xff]
        %v739 = vld [vmem:[#allocation7 + $0x2a8] sm:$0xff]
        %v740 = vld [vmem:[#allocation7 + $0x2b0] sm:$0xff]
        %v741 = vld [vmem:[#allocation7 + $0x2b8] sm:$0xff]
        %v742 = vld [vmem:[#allocation7 + $0x2c0] sm:$0xff]
        %v743 = vld [vmem:[#allocation7 + $0x2c8] sm:$0xff]
        %v744 = vld [vmem:[#allocation7 + $0x2d0] sm:$0xff]
        %v745 = vld [vmem:[#allocation7 + $0x2d8] sm:$0xff]
        %v746 = vld [vmem:[#allocation7 + $0x2e0] sm:$0xff]
        %v747 = vld [vmem:[#allocation7 + $0x2e8] sm:$0xff]
        %v748 = vld [vmem:[#allocation7 + $0x2f0] sm:$0xff]
        %v749 = vld [vmem:[#allocation7 + $0x2f8] sm:$0xff]
        %v750 = vld [vmem:[#allocation7 + $0x300] sm:$0xff]
        %v751 = vld [vmem:[#allocation7 + $0x308] sm:$0xff]
        %v752 = vld [vmem:[#allocation7 + $0x310] sm:$0xff]
        %v753 = vld [vmem:[#allocation7 + $0x318] sm:$0xff]
        %v754 = vld [vmem:[#allocation7 + $0x320] sm:$0xff]
        %v755 = vld [vmem:[#allocation7 + $0x328] sm:$0xff]
        %v756 = vld [vmem:[#allocation7 + $0x330] sm:$0xff]
        %v757 = vld [vmem:[#allocation7 + $0x338] sm:$0xff]
        %v758 = vld [vmem:[#allocation7 + $0x340] sm:$0xff]
        %v759 = vld [vmem:[#allocation7 + $0x348] sm:$0xff]
        %v760 = vld [vmem:[#allocation7 + $0x350] sm:$0xff]
        %v761 = vld [vmem:[#allocation7 + $0x358] sm:$0xff]
        %v762 = vld [vmem:[#allocation7 + $0x360] sm:$0xff]
        %v763 = vld [vmem:[#allocation7 + $0x368] sm:$0xff]
        %v764 = vld [vmem:[#allocation7 + $0x370] sm:$0xff]
        %v765 = vld [vmem:[#allocation7 + $0x378] sm:$0xff]
        %v766 = vld [vmem:[#allocation7 + $0x380] sm:$0xff]
        %v767 = vld [vmem:[#allocation7 + $0x388] sm:$0xff]
        %v768 = vld [vmem:[#allocation7 + $0x390] sm:$0xff]
        %v769 = vld [vmem:[#allocation7 + $0x398] sm:$0xff]
        %v770 = vld [vmem:[#allocation7 + $0x3a0] sm:$0xff]
        %v771 = vld [vmem:[#allocation7 + $0x3a8] sm:$0xff]
        %v772 = vld [vmem:[#allocation7 + $0x3b0] sm:$0xff]
        %v773 = vld [vmem:[#allocation7 + $0x3b8] sm:$0xff]
        %v774 = vld [vmem:[#allocation7 + $0x3c0] sm:$0xff]
        %v775 = vld [vmem:[#allocation7 + $0x3c8] sm:$0xff]
        %v776 = vld [vmem:[#allocation7 + $0x3d0] sm:$0xff]
        %v777 = vld [vmem:[#allocation7 + $0x3d8] sm:$0xff]
        %v778 = vld [vmem:[#allocation7 + $0x3e0] sm:$0xff]
        %v779 = vld [vmem:[#allocation7 + $0x3e8] sm:$0xff]
        %v780 = vld [vmem:[#allocation7 + $0x3f0] sm:$0xff]
        %v781 = vld [vmem:[#allocation7 + $0x3f8] sm:$0xff]
        %v910 = vunpack.c.l.b16 %v654
        %v911 = vunpack.c.h.b16 %v654
        %v912 = vunpack.c.l.b16 %v655
        %v913 = vunpack.c.h.b16 %v655
        %v914 = vunpack.c.l.b16 %v656
        %v915 = vunpack.c.h.b16 %v656
        %v916 = vunpack.c.l.b16 %v657
        %v917 = vunpack.c.h.b16 %v657
        %v918 = vunpack.c.l.b16 %v658
        %v919 = vunpack.c.h.b16 %v658
        %v920 = vunpack.c.l.b16 %v659
        %v921 = vunpack.c.h.b16 %v659
        %v922 = vunpack.c.l.b16 %v660
        %v923 = vunpack.c.h.b16 %v660
        %v924 = vunpack.c.l.b16 %v661
        %v925 = vunpack.c.h.b16 %v661
        %v926 = vunpack.c.l.b16 %v662
        %v927 = vunpack.c.h.b16 %v662
        %v928 = vunpack.c.l.b16 %v663
        %v929 = vunpack.c.h.b16 %v663
        %v930 = vunpack.c.l.b16 %v664
        %v931 = vunpack.c.h.b16 %v664
        %v932 = vunpack.c.l.b16 %v665
        %v933 = vunpack.c.h.b16 %v665
        %v934 = vunpack.c.l.b16 %v666
        %v935 = vunpack.c.h.b16 %v666
        %v936 = vunpack.c.l.b16 %v667
        %v937 = vunpack.c.h.b16 %v667
        %v938 = vunpack.c.l.b16 %v668
        %v939 = vunpack.c.h.b16 %v668
        %v940 = vunpack.c.l.b16 %v669
        %v941 = vunpack.c.h.b16 %v669
        %v942 = vunpack.c.l.b16 %v670
        %v943 = vunpack.c.h.b16 %v670
        %v944 = vunpack.c.l.b16 %v671
        %v945 = vunpack.c.h.b16 %v671
        %v946 = vunpack.c.l.b16 %v672
        %v947 = vunpack.c.h.b16 %v672
        %v948 = vunpack.c.l.b16 %v673
        %v949 = vunpack.c.h.b16 %v673
        %v950 = vunpack.c.l.b16 %v674
        %v951 = vunpack.c.h.b16 %v674
        %v952 = vunpack.c.l.b16 %v675
        %v953 = vunpack.c.h.b16 %v675
        %v954 = vunpack.c.l.b16 %v676
        %v955 = vunpack.c.h.b16 %v676
        %v956 = vunpack.c.l.b16 %v677
        %v957 = vunpack.c.h.b16 %v677
        %v958 = vunpack.c.l.b16 %v678
        %v959 = vunpack.c.h.b16 %v678
        %v960 = vunpack.c.l.b16 %v679
        %v961 = vunpack.c.h.b16 %v679
        %v962 = vunpack.c.l.b16 %v680
        %v963 = vunpack.c.h.b16 %v680
        %v964 = vunpack.c.l.b16 %v681
        %v965 = vunpack.c.h.b16 %v681
        %v966 = vunpack.c.l.b16 %v682
        %v967 = vunpack.c.h.b16 %v682
        %v968 = vunpack.c.l.b16 %v683
        %v969 = vunpack.c.h.b16 %v683
        %v970 = vunpack.c.l.b16 %v684
        %v971 = vunpack.c.h.b16 %v684
        %v972 = vunpack.c.l.b16 %v685
        %v973 = vunpack.c.h.b16 %v685
        %v974 = vunpack.c.l.b16 %v686
        %v975 = vunpack.c.h.b16 %v686
        %v976 = vunpack.c.l.b16 %v687
        %v977 = vunpack.c.h.b16 %v687
        %v978 = vunpack.c.l.b16 %v688
        %v979 = vunpack.c.h.b16 %v688
        %v980 = vunpack.c.l.b16 %v689
        %v981 = vunpack.c.h.b16 %v689
        %v982 = vunpack.c.l.b16 %v690
        %v983 = vunpack.c.h.b16 %v690
        %v984 = vunpack.c.l.b16 %v691
        %v985 = vunpack.c.h.b16 %v691
        %v986 = vunpack.c.l.b16 %v692
        %v987 = vunpack.c.h.b16 %v692
        %v988 = vunpack.c.l.b16 %v693
        %v989 = vunpack.c.h.b16 %v693
        %v990 = vunpack.c.l.b16 %v694
        %v991 = vunpack.c.h.b16 %v694
        %v992 = vunpack.c.l.b16 %v695
        %v993 = vunpack.c.h.b16 %v695
        %v994 = vunpack.c.l.b16 %v696
        %v995 = vunpack.c.h.b16 %v696
        %v996 = vunpack.c.l.b16 %v697
        %v997 = vunpack.c.h.b16 %v697
        %v998 = vunpack.c.l.b16 %v698
        %v999 = vunpack.c.h.b16 %v698
        %v1000 = vunpack.c.l.b16 %v699
        %v1001 = vunpack.c.h.b16 %v699
        %v1002 = vunpack.c.l.b16 %v700
        %v1003 = vunpack.c.h.b16 %v700
        %v1004 = vunpack.c.l.b16 %v701
        %v1005 = vunpack.c.h.b16 %v701
        %v1006 = vunpack.c.l.b16 %v702
        %v1007 = vunpack.c.h.b16 %v702
        %v1008 = vunpack.c.l.b16 %v703
        %v1009 = vunpack.c.h.b16 %v703
        %v1010 = vunpack.c.l.b16 %v704
        %v1011 = vunpack.c.h.b16 %v704
        %v1012 = vunpack.c.l.b16 %v705
        %v1013 = vunpack.c.h.b16 %v705
        %v1014 = vunpack.c.l.b16 %v706
        %v1015 = vunpack.c.h.b16 %v706
        %v1016 = vunpack.c.l.b16 %v707
        %v1017 = vunpack.c.h.b16 %v707
        %v1018 = vunpack.c.l.b16 %v708
        %v1019 = vunpack.c.h.b16 %v708
        %v1020 = vunpack.c.l.b16 %v709
        %v1021 = vunpack.c.h.b16 %v709
        %v1022 = vunpack.c.l.b16 %v710
        %v1023 = vunpack.c.h.b16 %v710
        %v1024 = vunpack.c.l.b16 %v711
        %v1025 = vunpack.c.h.b16 %v711
        %v1026 = vunpack.c.l.b16 %v712
        %v1027 = vunpack.c.h.b16 %v712
        %v1028 = vunpack.c.l.b16 %v713
        %v1029 = vunpack.c.h.b16 %v713
        %v1030 = vunpack.c.l.b16 %v714
        %v1031 = vunpack.c.h.b16 %v714
        %v1032 = vunpack.c.l.b16 %v715
        %v1033 = vunpack.c.h.b16 %v715
        %v1034 = vunpack.c.l.b16 %v716
        %v1035 = vunpack.c.h.b16 %v716
        %v1036 = vunpack.c.l.b16 %v717
        %v1037 = vunpack.c.h.b16 %v717
        %v1038 = vunpack.c.l.b16 %v718
        %v1039 = vunpack.c.h.b16 %v718
        %v1040 = vunpack.c.l.b16 %v719
        %v1041 = vunpack.c.h.b16 %v719
        %v1042 = vunpack.c.l.b16 %v720
        %v1043 = vunpack.c.h.b16 %v720
        %v1044 = vunpack.c.l.b16 %v721
        %v1045 = vunpack.c.h.b16 %v721
        %v1046 = vunpack.c.l.b16 %v722
        %v1047 = vunpack.c.h.b16 %v722
        %v1048 = vunpack.c.l.b16 %v723
        %v1049 = vunpack.c.h.b16 %v723
        %v1050 = vunpack.c.l.b16 %v724
        %v1051 = vunpack.c.h.b16 %v724
        %v1052 = vunpack.c.l.b16 %v725
        %v1053 = vunpack.c.h.b16 %v725
        %v1054 = vunpack.c.l.b16 %v726
        %v1055 = vunpack.c.h.b16 %v726
        %v1056 = vunpack.c.l.b16 %v727
        %v1057 = vunpack.c.h.b16 %v727
        %v1058 = vunpack.c.l.b16 %v728
        %v1059 = vunpack.c.h.b16 %v728
        %v1060 = vunpack.c.l.b16 %v729
        %v1061 = vunpack.c.h.b16 %v729
        %v1062 = vunpack.c.l.b16 %v730
        %v1063 = vunpack.c.h.b16 %v730
        %v1064 = vunpack.c.l.b16 %v731
        %v1065 = vunpack.c.h.b16 %v731
        %v1066 = vunpack.c.l.b16 %v732
        %v1067 = vunpack.c.h.b16 %v732
        %v1068 = vunpack.c.l.b16 %v733
        %v1069 = vunpack.c.h.b16 %v733
        %v1070 = vunpack.c.l.b16 %v734
        %v1071 = vunpack.c.h.b16 %v734
        %v1072 = vunpack.c.l.b16 %v735
        %v1073 = vunpack.c.h.b16 %v735
        %v1074 = vunpack.c.l.b16 %v736
        %v1075 = vunpack.c.h.b16 %v736
        %v1076 = vunpack.c.l.b16 %v737
        %v1077 = vunpack.c.h.b16 %v737
        %v1078 = vunpack.c.l.b16 %v738
        %v1079 = vunpack.c.h.b16 %v738
        %v1080 = vunpack.c.l.b16 %v739
        %v1081 = vunpack.c.h.b16 %v739
        %v1082 = vunpack.c.l.b16 %v740
        %v1083 = vunpack.c.h.b16 %v740
        %v1084 = vunpack.c.l.b16 %v741
        %v1085 = vunpack.c.h.b16 %v741
        %v1086 = vunpack.c.l.b16 %v742
        %v1087 = vunpack.c.h.b16 %v742
        %v1088 = vunpack.c.l.b16 %v743
        %v1089 = vunpack.c.h.b16 %v743
        %v1090 = vunpack.c.l.b16 %v744
        %v1091 = vunpack.c.h.b16 %v744
        %v1092 = vunpack.c.l.b16 %v745
        %v1093 = vunpack.c.h.b16 %v745
        %v1094 = vunpack.c.l.b16 %v746
        %v1095 = vunpack.c.h.b16 %v746
        %v1096 = vunpack.c.l.b16 %v747
        %v1097 = vunpack.c.h.b16 %v747
        %v1098 = vunpack.c.l.b16 %v748
        %v1099 = vunpack.c.h.b16 %v748
        %v1100 = vunpack.c.l.b16 %v749
        %v1101 = vunpack.c.h.b16 %v749
        %v1102 = vunpack.c.l.b16 %v750
        %v1103 = vunpack.c.h.b16 %v750
        %v1104 = vunpack.c.l.b16 %v751
        %v1105 = vunpack.c.h.b16 %v751
        %v1106 = vunpack.c.l.b16 %v752
        %v1107 = vunpack.c.h.b16 %v752
        %v1108 = vunpack.c.l.b16 %v753
        %v1109 = vunpack.c.h.b16 %v753
        %v1110 = vunpack.c.l.b16 %v754
        %v1111 = vunpack.c.h.b16 %v754
        %v1112 = vunpack.c.l.b16 %v755
        %v1113 = vunpack.c.h.b16 %v755
        %v1114 = vunpack.c.l.b16 %v756
        %v1115 = vunpack.c.h.b16 %v756
        %v1116 = vunpack.c.l.b16 %v757
        %v1117 = vunpack.c.h.b16 %v757
        %v1118 = vunpack.c.l.b16 %v758
        %v1119 = vunpack.c.h.b16 %v758
        %v1120 = vunpack.c.l.b16 %v759
        %v1121 = vunpack.c.h.b16 %v759
        %v1122 = vunpack.c.l.b16 %v760
        %v1123 = vunpack.c.h.b16 %v760
        %v1124 = vunpack.c.l.b16 %v761
        %v1125 = vunpack.c.h.b16 %v761
        %v1126 = vunpack.c.l.b16 %v762
        %v1127 = vunpack.c.h.b16 %v762
        %v1128 = vunpack.c.l.b16 %v763
        %v1129 = vunpack.c.h.b16 %v763
        %v1130 = vunpack.c.l.b16 %v764
        %v1131 = vunpack.c.h.b16 %v764
        %v1132 = vunpack.c.l.b16 %v765
        %v1133 = vunpack.c.h.b16 %v765
        %v1134 = vunpack.c.l.b16 %v766
        %v1135 = vunpack.c.h.b16 %v766
        %v1136 = vunpack.c.l.b16 %v767
        %v1137 = vunpack.c.h.b16 %v767
        %v1138 = vunpack.c.l.b16 %v768
        %v1139 = vunpack.c.h.b16 %v768
        %v1140 = vunpack.c.l.b16 %v769
        %v1141 = vunpack.c.h.b16 %v769
        %v1142 = vunpack.c.l.b16 %v770
        %v1143 = vunpack.c.h.b16 %v770
        %v1144 = vunpack.c.l.b16 %v771
        %v1145 = vunpack.c.h.b16 %v771
        %v1146 = vunpack.c.l.b16 %v772
        %v1147 = vunpack.c.h.b16 %v772
        %v1148 = vunpack.c.l.b16 %v773
        %v1149 = vunpack.c.h.b16 %v773
        %v1150 = vunpack.c.l.b16 %v774
        %v1151 = vunpack.c.h.b16 %v774
        %v1152 = vunpack.c.l.b16 %v775
        %v1153 = vunpack.c.h.b16 %v775
        %v1154 = vunpack.c.l.b16 %v776
        %v1155 = vunpack.c.h.b16 %v776
        %v1156 = vunpack.c.l.b16 %v777
        %v1157 = vunpack.c.h.b16 %v777
        %v1158 = vunpack.c.l.b16 %v778
        %v1159 = vunpack.c.h.b16 %v778
        %v1160 = vunpack.c.l.b16 %v779
        %v1161 = vunpack.c.h.b16 %v779
        %v1162 = vunpack.c.l.b16 %v780
        %v1163 = vunpack.c.h.b16 %v780
        %v1164 = vunpack.c.l.b16 %v781
        %v1165 = vunpack.c.h.b16 %v781
        %v1166 = vpack.c.b16 %v926, %v910
        %v1167 = vpack.c.b16 %v927, %v911
        %v1168 = vpack.c.b16 %v928, %v912
        %v1169 = vpack.c.b16 %v929, %v913
        %v1170 = vpack.c.b16 %v930, %v914
        %v1171 = vpack.c.b16 %v931, %v915
        %v1172 = vpack.c.b16 %v932, %v916
        %v1173 = vpack.c.b16 %v933, %v917
        %v1174 = vpack.c.b16 %v934, %v918
        %v1175 = vpack.c.b16 %v935, %v919
        %v1176 = vpack.c.b16 %v936, %v920
        %v1177 = vpack.c.b16 %v937, %v921
        %v1178 = vpack.c.b16 %v938, %v922
        %v1179 = vpack.c.b16 %v939, %v923
        %v1180 = vpack.c.b16 %v940, %v924
        %v1181 = vpack.c.b16 %v941, %v925
        %v1182 = vpack.c.b16 %v958, %v942
        %v1183 = vpack.c.b16 %v959, %v943
        %v1184 = vpack.c.b16 %v960, %v944
        %v1185 = vpack.c.b16 %v961, %v945
        %v1186 = vpack.c.b16 %v962, %v946
        %v1187 = vpack.c.b16 %v963, %v947
        %v1188 = vpack.c.b16 %v964, %v948
        %v1189 = vpack.c.b16 %v965, %v949
        %v1190 = vpack.c.b16 %v966, %v950
        %v1191 = vpack.c.b16 %v967, %v951
        %v1192 = vpack.c.b16 %v968, %v952
        %v1193 = vpack.c.b16 %v969, %v953
        %v1194 = vpack.c.b16 %v970, %v954
        %v1195 = vpack.c.b16 %v971, %v955
        %v1196 = vpack.c.b16 %v972, %v956
        %v1197 = vpack.c.b16 %v973, %v957
        %v1198 = vpack.c.b16 %v990, %v974
        %v1199 = vpack.c.b16 %v991, %v975
        %v1200 = vpack.c.b16 %v992, %v976
        %v1201 = vpack.c.b16 %v993, %v977
        %v1202 = vpack.c.b16 %v994, %v978
        %v1203 = vpack.c.b16 %v995, %v979
        %v1204 = vpack.c.b16 %v996, %v980
        %v1205 = vpack.c.b16 %v997, %v981
        %v1206 = vpack.c.b16 %v998, %v982
        %v1207 = vpack.c.b16 %v999, %v983
        %v1208 = vpack.c.b16 %v1000, %v984
        %v1209 = vpack.c.b16 %v1001, %v985
        %v1210 = vpack.c.b16 %v1002, %v986
        %v1211 = vpack.c.b16 %v1003, %v987
        %v1212 = vpack.c.b16 %v1004, %v988
        %v1213 = vpack.c.b16 %v1005, %v989
        %v1214 = vpack.c.b16 %v1022, %v1006
        %v1215 = vpack.c.b16 %v1023, %v1007
        %v1216 = vpack.c.b16 %v1024, %v1008
        %v1217 = vpack.c.b16 %v1025, %v1009
        %v1218 = vpack.c.b16 %v1026, %v1010
        %v1219 = vpack.c.b16 %v1027, %v1011
        %v1220 = vpack.c.b16 %v1028, %v1012
        %v1221 = vpack.c.b16 %v1029, %v1013
        %v1222 = vpack.c.b16 %v1030, %v1014
        %v1223 = vpack.c.b16 %v1031, %v1015
        %v1224 = vpack.c.b16 %v1032, %v1016
        %v1225 = vpack.c.b16 %v1033, %v1017
        %v1226 = vpack.c.b16 %v1034, %v1018
        %v1227 = vpack.c.b16 %v1035, %v1019
        %v1228 = vpack.c.b16 %v1036, %v1020
        %v1229 = vpack.c.b16 %v1037, %v1021
        %v1230 = vpack.c.b16 %v1054, %v1038
        %v1231 = vpack.c.b16 %v1055, %v1039
        %v1232 = vpack.c.b16 %v1056, %v1040
        %v1233 = vpack.c.b16 %v1057, %v1041
        %v1234 = vpack.c.b16 %v1058, %v1042
        %v1235 = vpack.c.b16 %v1059, %v1043
        %v1236 = vpack.c.b16 %v1060, %v1044
        %v1237 = vpack.c.b16 %v1061, %v1045
        %v1238 = vpack.c.b16 %v1062, %v1046
        %v1239 = vpack.c.b16 %v1063, %v1047
        %v1240 = vpack.c.b16 %v1064, %v1048
        %v1241 = vpack.c.b16 %v1065, %v1049
        %v1242 = vpack.c.b16 %v1066, %v1050
        %v1243 = vpack.c.b16 %v1067, %v1051
        %v1244 = vpack.c.b16 %v1068, %v1052
        %v1245 = vpack.c.b16 %v1069, %v1053
        %v1246 = vpack.c.b16 %v1086, %v1070
        %v1247 = vpack.c.b16 %v1087, %v1071
        %v1248 = vpack.c.b16 %v1088, %v1072
        %v1249 = vpack.c.b16 %v1089, %v1073
        %v1250 = vpack.c.b16 %v1090, %v1074
        %v1251 = vpack.c.b16 %v1091, %v1075
        %v1252 = vpack.c.b16 %v1092, %v1076
        %v1253 = vpack.c.b16 %v1093, %v1077
        %v1254 = vpack.c.b16 %v1094, %v1078
        %v1255 = vpack.c.b16 %v1095, %v1079
        %v1256 = vpack.c.b16 %v1096, %v1080
        %v1257 = vpack.c.b16 %v1097, %v1081
        %v1258 = vpack.c.b16 %v1098, %v1082
        %v1259 = vpack.c.b16 %v1099, %v1083
        %v1260 = vpack.c.b16 %v1100, %v1084
        %v1261 = vpack.c.b16 %v1101, %v1085
        %v1262 = vpack.c.b16 %v1118, %v1102
        %v1263 = vpack.c.b16 %v1119, %v1103
        %v1264 = vpack.c.b16 %v1120, %v1104
        %v1265 = vpack.c.b16 %v1121, %v1105
        %v1266 = vpack.c.b16 %v1122, %v1106
        %v1267 = vpack.c.b16 %v1123, %v1107
        %v1268 = vpack.c.b16 %v1124, %v1108
        %v1269 = vpack.c.b16 %v1125, %v1109
        %v1270 = vpack.c.b16 %v1126, %v1110
        %v1271 = vpack.c.b16 %v1127, %v1111
        %v1272 = vpack.c.b16 %v1128, %v1112
        %v1273 = vpack.c.b16 %v1129, %v1113
        %v1274 = vpack.c.b16 %v1130, %v1114
        %v1275 = vpack.c.b16 %v1131, %v1115
        %v1276 = vpack.c.b16 %v1132, %v1116
        %v1277 = vpack.c.b16 %v1133, %v1117
        %v1278 = vpack.c.b16 %v1150, %v1134
        %v1279 = vpack.c.b16 %v1151, %v1135
        %v1280 = vpack.c.b16 %v1152, %v1136
        %v1281 = vpack.c.b16 %v1153, %v1137
        %v1282 = vpack.c.b16 %v1154, %v1138
        %v1283 = vpack.c.b16 %v1155, %v1139
        %v1284 = vpack.c.b16 %v1156, %v1140
        %v1285 = vpack.c.b16 %v1157, %v1141
        %v1286 = vpack.c.b16 %v1158, %v1142
        %v1287 = vpack.c.b16 %v1159, %v1143
        %v1288 = vpack.c.b16 %v1160, %v1144
        %v1289 = vpack.c.b16 %v1161, %v1145
        %v1290 = vpack.c.b16 %v1162, %v1146
        %v1291 = vpack.c.b16 %v1163, %v1147
        %v1292 = vpack.c.b16 %v1164, %v1148
        %v1293 = vpack.c.b16 %v1165, %v1149
        %1422 = vmatprep.subr.bf16.mxu0 %v1167
        %1423 = vmatpush1.bf16.msra.mxu0 %v1166
        %1424 = vmatprep.subr.bf16.mxu0 %v1183
        %1425 = vmatpush1.bf16.msra.mxu0 %v1182
        %1426 = vmatprep.subr.bf16.mxu0 %v1199
        %1427 = vmatpush1.bf16.msra.mxu0 %v1198
        %1428 = vmatprep.subr.bf16.mxu0 %v1215
        %1429 = vmatpush1.bf16.msra.mxu0 %v1214
        %1430 = vmatprep.subr.bf16.mxu0 %v1231
        %1431 = vmatpush1.bf16.msra.mxu0 %v1230
        %1432 = vmatprep.subr.bf16.mxu0 %v1247
        %1433 = vmatpush1.bf16.msra.mxu0 %v1246
        %1434 = vmatprep.subr.bf16.mxu0 %v1263
        %1435 = vmatpush1.bf16.msra.mxu0 %v1262
        %1436 = vmatprep.subr.bf16.mxu0 %v1279
        %1437 = vmatpush1.bf16.msra.mxu0 %v1278
        %1438 = vmatprep.subr.bf16.mxu0 0
        %1439 = vmatpush1.bf16.msra.mxu0 0
        %1440 = vmatprep.subr.bf16.mxu0 0
        %1441 = vmatpush1.bf16.msra.mxu0 0
        %1442 = vmatprep.subr.bf16.mxu0 0
        %1443 = vmatpush1.bf16.msra.mxu0 0
        %1444 = vmatprep.subr.bf16.mxu0 0
        %1445 = vmatpush1.bf16.msra.mxu0 0
        %1446 = vmatprep.subr.bf16.mxu0 0
        %1447 = vmatpush1.bf16.msra.mxu0 0
        %1448 = vmatprep.subr.bf16.mxu0 0
        %1449 = vmatpush1.bf16.msra.mxu0 0
        %1450 = vmatprep.subr.bf16.mxu0 0
        %1451 = vmatpush1.bf16.msra.mxu0 0
        %1452 = vmatprep.subr.bf16.mxu0 0
        %1453 = vmatpush1.bf16.msra.mxu0 0
        %1454 = vmatprep.mubr.bf16.mxu0 0
        %1455 = vmatmul.mubr.bf16.gmra.mrb[0].mxu0 %v648
        %v1456 = vpop.f32.mrb[0].mxu0
        %v1457 = vadd.f32 0.0, %v1456
        %v1458 = vpop.f32.mrb[0].mxu0
        %v1459 = vadd.f32 0.0, %v1458
        %v1460 = vpop.f32.mrb[0].mxu0
        %v1461 = vadd.f32 0.0, %v1460
        %v1462 = vpop.f32.mrb[0].mxu0
        %v1463 = vadd.f32 0.0, %v1462
        %1464 = vdwg.mxu0
        %1465 = vmatprep.subr.bf16.mxu0 %v1169
        %1466 = vmatpush1.bf16.msra.mxu0 %v1168
        %1467 = vmatprep.subr.bf16.mxu0 %v1185
        %1468 = vmatpush1.bf16.msra.mxu0 %v1184
        %1469 = vmatprep.subr.bf16.mxu0 %v1201
        %1470 = vmatpush1.bf16.msra.mxu0 %v1200
        %1471 = vmatprep.subr.bf16.mxu0 %v1217
        %1472 = vmatpush1.bf16.msra.mxu0 %v1216
        %1473 = vmatprep.subr.bf16.mxu0 %v1233
        %1474 = vmatpush1.bf16.msra.mxu0 %v1232
        %1475 = vmatprep.subr.bf16.mxu0 %v1249
        %1476 = vmatpush1.bf16.msra.mxu0 %v1248
        %1477 = vmatprep.subr.bf16.mxu0 %v1265
        %1478 = vmatpush1.bf16.msra.mxu0 %v1264
        %1479 = vmatprep.subr.bf16.mxu0 %v1281
        %1480 = vmatpush1.bf16.msra.mxu0 %v1280
        %1481 = vmatprep.subr.bf16.mxu0 0
        %1482 = vmatpush1.bf16.msra.mxu0 0
        %1483 = vmatprep.subr.bf16.mxu0 0
        %1484 = vmatpush1.bf16.msra.mxu0 0
        %1485 = vmatprep.subr.bf16.mxu0 0
        %1486 = vmatpush1.bf16.msra.mxu0 0
        %1487 = vmatprep.subr.bf16.mxu0 0
        %1488 = vmatpush1.bf16.msra.mxu0 0
        %1489 = vmatprep.subr.bf16.mxu0 0
        %1490 = vmatpush1.bf16.msra.mxu0 0
        %1491 = vmatprep.subr.bf16.mxu0 0
        %1492 = vmatpush1.bf16.msra.mxu0 0
        %1493 = vmatprep.subr.bf16.mxu0 0
        %1494 = vmatpush1.bf16.msra.mxu0 0
        %1495 = vmatprep.subr.bf16.mxu0 0
        %1496 = vmatpush1.bf16.msra.mxu0 0
        %1497 = vmatprep.mubr.bf16.mxu0 0
        %1498 = vmatmul.mubr.bf16.gmra.mrb[0].mxu0 %v648
        %v1499 = vpop.f32.mrb[0].mxu0
        %v1500 = vadd.f32 0.0, %v1499
        %v1501 = vpop.f32.mrb[0].mxu0
        %v1502 = vadd.f32 0.0, %v1501
        %v1503 = vpop.f32.mrb[0].mxu0
        %v1504 = vadd.f32 0.0, %v1503
        %v1505 = vpop.f32.mrb[0].mxu0
        %v1506 = vadd.f32 0.0, %v1505
        %1507 = vdwg.mxu0
        %1508 = vmatprep.subr.bf16.mxu0 %v1171
        %1509 = vmatpush1.bf16.msra.mxu0 %v1170
        %1510 = vmatprep.subr.bf16.mxu0 %v1187
        %1511 = vmatpush1.bf16.msra.mxu0 %v1186
        %1512 = vmatprep.subr.bf16.mxu0 %v1203
        %1513 = vmatpush1.bf16.msra.mxu0 %v1202
        %1514 = vmatprep.subr.bf16.mxu0 %v1219
        %1515 = vmatpush1.bf16.msra.mxu0 %v1218
        %1516 = vmatprep.subr.bf16.mxu0 %v1235
        %1517 = vmatpush1.bf16.msra.mxu0 %v1234
        %1518 = vmatprep.subr.bf16.mxu0 %v1251
        %1519 = vmatpush1.bf16.msra.mxu0 %v1250
        %1520 = vmatprep.subr.bf16.mxu0 %v1267
        %1521 = vmatpush1.bf16.msra.mxu0 %v1266
        %1522 = vmatprep.subr.bf16.mxu0 %v1283
        %1523 = vmatpush1.bf16.msra.mxu0 %v1282
        %1524 = vmatprep.subr.bf16.mxu0 0
        %1525 = vmatpush1.bf16.msra.mxu0 0
        %1526 = vmatprep.subr.bf16.mxu0 0
        %1527 = vmatpush1.bf16.msra.mxu0 0
        %1528 = vmatprep.subr.bf16.mxu0 0
        %1529 = vmatpush1.bf16.msra.mxu0 0
        %1530 = vmatprep.subr.bf16.mxu0 0
        %1531 = vmatpush1.bf16.msra.mxu0 0
        %1532 = vmatprep.subr.bf16.mxu0 0
        %1533 = vmatpush1.bf16.msra.mxu0 0
        %1534 = vmatprep.subr.bf16.mxu0 0
        %1535 = vmatpush1.bf16.msra.mxu0 0
        %1536 = vmatprep.subr.bf16.mxu0 0
        %1537 = vmatpush1.bf16.msra.mxu0 0
        %1538 = vmatprep.subr.bf16.mxu0 0
        %1539 = vmatpush1.bf16.msra.mxu0 0
        %1540 = vmatprep.mubr.bf16.mxu0 0
        %1541 = vmatmul.mubr.bf16.gmra.mrb[0].mxu0 %v648
        %v1542 = vpop.f32.mrb[0].mxu0
        %v1543 = vadd.f32 0.0, %v1542
        %v1544 = vpop.f32.mrb[0].mxu0
        %v1545 = vadd.f32 0.0, %v1544
        %v1546 = vpop.f32.mrb[0].mxu0
        %v1547 = vadd.f32 0.0, %v1546
        %v1548 = vpop.f32.mrb[0].mxu0
        %v1549 = vadd.f32 0.0, %v1548
        %1550 = vdwg.mxu0
        %1551 = vmatprep.subr.bf16.mxu0 %v1173
        %1552 = vmatpush1.bf16.msra.mxu0 %v1172
        %1553 = vmatprep.subr.bf16.mxu0 %v1189
        %1554 = vmatpush1.bf16.msra.mxu0 %v1188
        %1555 = vmatprep.subr.bf16.mxu0 %v1205
        %1556 = vmatpush1.bf16.msra.mxu0 %v1204
        %1557 = vmatprep.subr.bf16.mxu0 %v1221
        %1558 = vmatpush1.bf16.msra.mxu0 %v1220
        %1559 = vmatprep.subr.bf16.mxu0 %v1237
        %1560 = vmatpush1.bf16.msra.mxu0 %v1236
        %1561 = vmatprep.subr.bf16.mxu0 %v1253
        %1562 = vmatpush1.bf16.msra.mxu0 %v1252
        %1563 = vmatprep.subr.bf16.mxu0 %v1269
        %1564 = vmatpush1.bf16.msra.mxu0 %v1268
        %1565 = vmatprep.subr.bf16.mxu0 %v1285
        %1566 = vmatpush1.bf16.msra.mxu0 %v1284
        %1567 = vmatprep.subr.bf16.mxu0 0
        %1568 = vmatpush1.bf16.msra.mxu0 0
        %1569 = vmatprep.subr.bf16.mxu0 0
        %1570 = vmatpush1.bf16.msra.mxu0 0
        %1571 = vmatprep.subr.bf16.mxu0 0
        %1572 = vmatpush1.bf16.msra.mxu0 0
        %1573 = vmatprep.subr.bf16.mxu0 0
        %1574 = vmatpush1.bf16.msra.mxu0 0
        %1575 = vmatprep.subr.bf16.mxu0 0
        %1576 = vmatpush1.bf16.msra.mxu0 0
        %1577 = vmatprep.subr.bf16.mxu0 0
        %1578 = vmatpush1.bf16.msra.mxu0 0
        %1579 = vmatprep.subr.bf16.mxu0 0
        %1580 = vmatpush1.bf16.msra.mxu0 0
        %1581 = vmatprep.subr.bf16.mxu0 0
        %1582 = vmatpush1.bf16.msra.mxu0 0
        %1583 = vmatprep.mubr.bf16.mxu0 0
        %1584 = vmatmul.mubr.bf16.gmra.mrb[0].mxu0 %v648
        %v1585 = vpop.f32.mrb[0].mxu0
        %v1586 = vadd.f32 0.0, %v1585
        %v1587 = vpop.f32.mrb[0].mxu0
        %v1588 = vadd.f32 0.0, %v1587
        %v1589 = vpop.f32.mrb[0].mxu0
        %v1590 = vadd.f32 0.0, %v1589
        %v1591 = vpop.f32.mrb[0].mxu0
        %v1592 = vadd.f32 0.0, %v1591
        %1593 = vdwg.mxu0
        %1594 = vmatprep.subr.bf16.mxu0 %v1175
        %1595 = vmatpush1.bf16.msra.mxu0 %v1174
        %1596 = vmatprep.subr.bf16.mxu0 %v1191
        %1597 = vmatpush1.bf16.msra.mxu0 %v1190
        %1598 = vmatprep.subr.bf16.mxu0 %v1207
        %1599 = vmatpush1.bf16.msra.mxu0 %v1206
        %1600 = vmatprep.subr.bf16.mxu0 %v1223
        %1601 = vmatpush1.bf16.msra.mxu0 %v1222
        %1602 = vmatprep.subr.bf16.mxu0 %v1239
        %1603 = vmatpush1.bf16.msra.mxu0 %v1238
        %1604 = vmatprep.subr.bf16.mxu0 %v1255
        %1605 = vmatpush1.bf16.msra.mxu0 %v1254
        %1606 = vmatprep.subr.bf16.mxu0 %v1271
        %1607 = vmatpush1.bf16.msra.mxu0 %v1270
        %1608 = vmatprep.subr.bf16.mxu0 %v1287
        %1609 = vmatpush1.bf16.msra.mxu0 %v1286
        %1610 = vmatprep.subr.bf16.mxu0 0
        %1611 = vmatpush1.bf16.msra.mxu0 0
        %1612 = vmatprep.subr.bf16.mxu0 0
        %1613 = vmatpush1.bf16.msra.mxu0 0
        %1614 = vmatprep.subr.bf16.mxu0 0
        %1615 = vmatpush1.bf16.msra.mxu0 0
        %1616 = vmatprep.subr.bf16.mxu0 0
        %1617 = vmatpush1.bf16.msra.mxu0 0
        %1618 = vmatprep.subr.bf16.mxu0 0
        %1619 = vmatpush1.bf16.msra.mxu0 0
        %1620 = vmatprep.subr.bf16.mxu0 0
        %1621 = vmatpush1.bf16.msra.mxu0 0
        %1622 = vmatprep.subr.bf16.mxu0 0
        %1623 = vmatpush1.bf16.msra.mxu0 0
        %1624 = vmatprep.subr.bf16.mxu0 0
        %1625 = vmatpush1.bf16.msra.mxu0 0
        %1626 = vmatprep.mubr.bf16.mxu0 0
        %1627 = vmatmul.mubr.bf16.gmra.mrb[0].mxu0 %v648
        %v1628 = vpop.f32.mrb[0].mxu0
        %v1629 = vadd.f32 0.0, %v1628
        %v1630 = vpop.f32.mrb[0].mxu0
        %v1631 = vadd.f32 0.0, %v1630
        %v1632 = vpop.f32.mrb[0].mxu0
        %v1633 = vadd.f32 0.0, %v1632
        %v1634 = vpop.f32.mrb[0].mxu0
        %v1635 = vadd.f32 0.0, %v1634
        %1636 = vdwg.mxu0
        %1637 = vmatprep.subr.bf16.mxu0 %v1177
        %1638 = vmatpush1.bf16.msra.mxu0 %v1176
        %1639 = vmatprep.subr.bf16.mxu0 %v1193
        %1640 = vmatpush1.bf16.msra.mxu0 %v1192
        %1641 = vmatprep.subr.bf16.mxu0 %v1209
        %1642 = vmatpush1.bf16.msra.mxu0 %v1208
        %1643 = vmatprep.subr.bf16.mxu0 %v1225
        %1644 = vmatpush1.bf16.msra.mxu0 %v1224
        %1645 = vmatprep.subr.bf16.mxu0 %v1241
        %1646 = vmatpush1.bf16.msra.mxu0 %v1240
        %1647 = vmatprep.subr.bf16.mxu0 %v1257
        %1648 = vmatpush1.bf16.msra.mxu0 %v1256
        %1649 = vmatprep.subr.bf16.mxu0 %v1273
        %1650 = vmatpush1.bf16.msra.mxu0 %v1272
        %1651 = vmatprep.subr.bf16.mxu0 %v1289
        %1652 = vmatpush1.bf16.msra.mxu0 %v1288
        %1653 = vmatprep.subr.bf16.mxu0 0
        %1654 = vmatpush1.bf16.msra.mxu0 0
        %1655 = vmatprep.subr.bf16.mxu0 0
        %1656 = vmatpush1.bf16.msra.mxu0 0
        %1657 = vmatprep.subr.bf16.mxu0 0
        %1658 = vmatpush1.bf16.msra.mxu0 0
        %1659 = vmatprep.subr.bf16.mxu0 0
        %1660 = vmatpush1.bf16.msra.mxu0 0
        %1661 = vmatprep.subr.bf16.mxu0 0
        %1662 = vmatpush1.bf16.msra.mxu0 0
        %1663 = vmatprep.subr.bf16.mxu0 0
        %1664 = vmatpush1.bf16.msra.mxu0 0
        %1665 = vmatprep.subr.bf16.mxu0 0
        %1666 = vmatpush1.bf16.msra.mxu0 0
        %1667 = vmatprep.subr.bf16.mxu0 0
        %1668 = vmatpush1.bf16.msra.mxu0 0
        %1669 = vmatprep.mubr.bf16.mxu0 0
        %1670 = vmatmul.mubr.bf16.gmra.mrb[0].mxu0 %v648
        %v1671 = vpop.f32.mrb[0].mxu0
        %v1672 = vadd.f32 0.0, %v1671
        %v1673 = vpop.f32.mrb[0].mxu0
        %v1674 = vadd.f32 0.0, %v1673
        %v1675 = vpop.f32.mrb[0].mxu0
        %v1676 = vadd.f32 0.0, %v1675
        %v1677 = vpop.f32.mrb[0].mxu0
        %v1678 = vadd.f32 0.0, %v1677
        %1679 = vdwg.mxu0
        %1680 = vmatprep.subr.bf16.mxu0 %v1179
        %1681 = vmatpush1.bf16.msra.mxu0 %v1178
        %1682 = vmatprep.subr.bf16.mxu0 %v1195
        %1683 = vmatpush1.bf16.msra.mxu0 %v1194
        %1684 = vmatprep.subr.bf16.mxu0 %v1211
        %1685 = vmatpush1.bf16.msra.mxu0 %v1210
        %1686 = vmatprep.subr.bf16.mxu0 %v1227
        %1687 = vmatpush1.bf16.msra.mxu0 %v1226
        %1688 = vmatprep.subr.bf16.mxu0 %v1243
        %1689 = vmatpush1.bf16.msra.mxu0 %v1242
        %1690 = vmatprep.subr.bf16.mxu0 %v1259
        %1691 = vmatpush1.bf16.msra.mxu0 %v1258
        %1692 = vmatprep.subr.bf16.mxu0 %v1275
        %1693 = vmatpush1.bf16.msra.mxu0 %v1274
        %1694 = vmatprep.subr.bf16.mxu0 %v1291
        %1695 = vmatpush1.bf16.msra.mxu0 %v1290
        %1696 = vmatprep.subr.bf16.mxu0 0
        %1697 = vmatpush1.bf16.msra.mxu0 0
        %1698 = vmatprep.subr.bf16.mxu0 0
        %1699 = vmatpush1.bf16.msra.mxu0 0
        %1700 = vmatprep.subr.bf16.mxu0 0
        %1701 = vmatpush1.bf16.msra.mxu0 0
        %1702 = vmatprep.subr.bf16.mxu0 0
        %1703 = vmatpush1.bf16.msra.mxu0 0
        %1704 = vmatprep.subr.bf16.mxu0 0
        %1705 = vmatpush1.bf16.msra.mxu0 0
        %1706 = vmatprep.subr.bf16.mxu0 0
        %1707 = vmatpush1.bf16.msra.mxu0 0
        %1708 = vmatprep.subr.bf16.mxu0 0
        %1709 = vmatpush1.bf16.msra.mxu0 0
        %1710 = vmatprep.subr.bf16.mxu0 0
        %1711 = vmatpush1.bf16.msra.mxu0 0
        %1712 = vmatprep.mubr.bf16.mxu0 0
        %1713 = vmatmul.mubr.bf16.gmra.mrb[0].mxu0 %v648
        %v1714 = vpop.f32.mrb[0].mxu0
        %v1715 = vadd.f32 0.0, %v1714
        %v1716 = vpop.f32.mrb[0].mxu0
        %v1717 = vadd.f32 0.0, %v1716
        %v1718 = vpop.f32.mrb[0].mxu0
        %v1719 = vadd.f32 0.0, %v1718
        %v1720 = vpop.f32.mrb[0].mxu0
        %v1721 = vadd.f32 0.0, %v1720
        %1722 = vdwg.mxu0
        %1723 = vmatprep.subr.bf16.mxu0 %v1181
        %1724 = vmatpush1.bf16.msra.mxu0 %v1180
        %1725 = vmatprep.subr.bf16.mxu0 %v1197
        %1726 = vmatpush1.bf16.msra.mxu0 %v1196
        %1727 = vmatprep.subr.bf16.mxu0 %v1213
        %1728 = vmatpush1.bf16.msra.mxu0 %v1212
        %1729 = vmatprep.subr.bf16.mxu0 %v1229
        %1730 = vmatpush1.bf16.msra.mxu0 %v1228
        %1731 = vmatprep.subr.bf16.mxu0 %v1245
        %1732 = vmatpush1.bf16.msra.mxu0 %v1244
        %1733 = vmatprep.subr.bf16.mxu0 %v1261
        %1734 = vmatpush1.bf16.msra.mxu0 %v1260
        %1735 = vmatprep.subr.bf16.mxu0 %v1277
        %1736 = vmatpush1.bf16.msra.mxu0 %v1276
        %1737 = vmatprep.subr.bf16.mxu0 %v1293
        %1738 = vmatpush1.bf16.msra.mxu0 %v1292
        %1739 = vmatprep.subr.bf16.mxu0 0
        %1740 = vmatpush1.bf16.msra.mxu0 0
        %1741 = vmatprep.subr.bf16.mxu0 0
        %1742 = vmatpush1.bf16.msra.mxu0 0
        %1743 = vmatprep.subr.bf16.mxu0 0
        %1744 = vmatpush1.bf16.msra.mxu0 0
        %1745 = vmatprep.subr.bf16.mxu0 0
        %1746 = vmatpush1.bf16.msra.mxu0 0
        %1747 = vmatprep.subr.bf16.mxu0 0
        %1748 = vmatpush1.bf16.msra.mxu0 0
        %1749 = vmatprep.subr.bf16.mxu0 0
        %1750 = vmatpush1.bf16.msra.mxu0 0
        %1751 = vmatprep.subr.bf16.mxu0 0
        %1752 = vmatpush1.bf16.msra.mxu0 0
        %1753 = vmatprep.subr.bf16.mxu0 0
        %1754 = vmatpush1.bf16.msra.mxu0 0
        %1755 = vmatprep.mubr.bf16.mxu0 0
        %1756 = vmatmul.mubr.bf16.gmra.mrb[0].mxu0 %v648
        %v1757 = vpop.f32.mrb[0].mxu0
        %v1758 = vadd.f32 0.0, %v1757
        %v1759 = vpop.f32.mrb[0].mxu0
        %v1760 = vadd.f32 0.0, %v1759
        %v1761 = vpop.f32.mrb[0].mxu0
        %v1762 = vadd.f32 0.0, %v1761
        %v1763 = vpop.f32.mrb[0].mxu0
        %v1764 = vadd.f32 0.0, %v1763
        %1765 = vdwg.mxu0
        %v1766 = vpack.c.bf16 %v1461, %v1457
        %v1767 = vpack.c.bf16 %v1463, %v1459
        %v1768 = vpack.c.bf16 %v1504, %v1500
        %v1769 = vpack.c.bf16 %v1506, %v1502
        %v1770 = vpack.c.bf16 %v1547, %v1543
        %v1771 = vpack.c.bf16 %v1549, %v1545
        %v1772 = vpack.c.bf16 %v1590, %v1586
        %v1773 = vpack.c.bf16 %v1592, %v1588
        %v1774 = vpack.c.bf16 %v1633, %v1629
        %v1775 = vpack.c.bf16 %v1635, %v1631
        %v1776 = vpack.c.bf16 %v1676, %v1672
        %v1777 = vpack.c.bf16 %v1678, %v1674
        %v1778 = vpack.c.bf16 %v1719, %v1715
        %v1779 = vpack.c.bf16 %v1721, %v1717
        %v1780 = vpack.c.bf16 %v1762, %v1758
        %v1781 = vpack.c.bf16 %v1764, %v1760
        %v1782 = vld [vmem:[#allocation7 + $0x400] sm:$0xff]
        %v1783 = vld [vmem:[#allocation7 + $0x408] sm:$0xff]
        %v1784 = vld [vmem:[#allocation7 + $0x410] sm:$0xff]
        %v1785 = vld [vmem:[#allocation7 + $0x418] sm:$0xff]
        %v1786 = vld [vmem:[#allocation7 + $0x420] sm:$0xff]
        %v1787 = vld [vmem:[#allocation7 + $0x428] sm:$0xff]
        %v1788 = vld [vmem:[#allocation7 + $0x430] sm:$0xff]
        %v1789 = vld [vmem:[#allocation7 + $0x438] sm:$0xff]
        %v1790 = vld [vmem:[#allocation7 + $0x440] sm:$0xff]
        %v1791 = vld [vmem:[#allocation7 + $0x448] sm:$0xff]
        %v1792 = vld [vmem:[#allocation7 + $0x450] sm:$0xff]
        %v1793 = vld [vmem:[#allocation7 + $0x458] sm:$0xff]
        %v1794 = vld [vmem:[#allocation7 + $0x460] sm:$0xff]
        %v1795 = vld [vmem:[#allocation7 + $0x468] sm:$0xff]
        %v1796 = vld [vmem:[#allocation7 + $0x470] sm:$0xff]
        %v1797 = vld [vmem:[#allocation7 + $0x478] sm:$0xff]
        %v1798 = vld [vmem:[#allocation7 + $0x480] sm:$0xff]
        %v1799 = vld [vmem:[#allocation7 + $0x488] sm:$0xff]
        %v1800 = vld [vmem:[#allocation7 + $0x490] sm:$0xff]
        %v1801 = vld [vmem:[#allocation7 + $0x498] sm:$0xff]
        %v1802 = vld [vmem:[#allocation7 + $0x4a0] sm:$0xff]
        %v1803 = vld [vmem:[#allocation7 + $0x4a8] sm:$0xff]
        %v1804 = vld [vmem:[#allocation7 + $0x4b0] sm:$0xff]
        %v1805 = vld [vmem:[#allocation7 + $0x4b8] sm:$0xff]
        %v1806 = vld [vmem:[#allocation7 + $0x4c0] sm:$0xff]
        %v1807 = vld [vmem:[#allocation7 + $0x4c8] sm:$0xff]
        %v1808 = vld [vmem:[#allocation7 + $0x4d0] sm:$0xff]
        %v1809 = vld [vmem:[#allocation7 + $0x4d8] sm:$0xff]
        %v1810 = vld [vmem:[#allocation7 + $0x4e0] sm:$0xff]
        %v1811 = vld [vmem:[#allocation7 + $0x4e8] sm:$0xff]
        %v1812 = vld [vmem:[#allocation7 + $0x4f0] sm:$0xff]
        %v1813 = vld [vmem:[#allocation7 + $0x4f8] sm:$0xff]
        %v1814 = vld [vmem:[#allocation7 + $0x500] sm:$0xff]
        %v1815 = vld [vmem:[#allocation7 + $0x508] sm:$0xff]
        %v1816 = vld [vmem:[#allocation7 + $0x510] sm:$0xff]
        %v1817 = vld [vmem:[#allocation7 + $0x518] sm:$0xff]
        %v1818 = vld [vmem:[#allocation7 + $0x520] sm:$0xff]
        %v1819 = vld [vmem:[#allocation7 + $0x528] sm:$0xff]
        %v1820 = vld [vmem:[#allocation7 + $0x530] sm:$0xff]
        %v1821 = vld [vmem:[#allocation7 + $0x538] sm:$0xff]
        %v1822 = vld [vmem:[#allocation7 + $0x540] sm:$0xff]
        %v1823 = vld [vmem:[#allocation7 + $0x548] sm:$0xff]
        %v1824 = vld [vmem:[#allocation7 + $0x550] sm:$0xff]
        %v1825 = vld [vmem:[#allocation7 + $0x558] sm:$0xff]
        %v1826 = vld [vmem:[#allocation7 + $0x560] sm:$0xff]
        %v1827 = vld [vmem:[#allocation7 + $0x568] sm:$0xff]
        %v1828 = vld [vmem:[#allocation7 + $0x570] sm:$0xff]
        %v1829 = vld [vmem:[#allocation7 + $0x578] sm:$0xff]
        %v1830 = vld [vmem:[#allocation7 + $0x580] sm:$0xff]
        %v1831 = vld [vmem:[#allocation7 + $0x588] sm:$0xff]
        %v1832 = vld [vmem:[#allocation7 + $0x590] sm:$0xff]
        %v1833 = vld [vmem:[#allocation7 + $0x598] sm:$0xff]
        %v1834 = vld [vmem:[#allocation7 + $0x5a0] sm:$0xff]
        %v1835 = vld [vmem:[#allocation7 + $0x5a8] sm:$0xff]
        %v1836 = vld [vmem:[#allocation7 + $0x5b0] sm:$0xff]
        %v1837 = vld [vmem:[#allocation7 + $0x5b8] sm:$0xff]
        %v1838 = vld [vmem:[#allocation7 + $0x5c0] sm:$0xff]
        %v1839 = vld [vmem:[#allocation7 + $0x5c8] sm:$0xff]
        %v1840 = vld [vmem:[#allocation7 + $0x5d0] sm:$0xff]
        %v1841 = vld [vmem:[#allocation7 + $0x5d8] sm:$0xff]
        %v1842 = vld [vmem:[#allocation7 + $0x5e0] sm:$0xff]
        %v1843 = vld [vmem:[#allocation7 + $0x5e8] sm:$0xff]
        %v1844 = vld [vmem:[#allocation7 + $0x5f0] sm:$0xff]
        %v1845 = vld [vmem:[#allocation7 + $0x5f8] sm:$0xff]
        %v1846 = vld [vmem:[#allocation7 + $0x600] sm:$0xff]
        %v1847 = vld [vmem:[#allocation7 + $0x608] sm:$0xff]
        %v1848 = vld [vmem:[#allocation7 + $0x610] sm:$0xff]
        %v1849 = vld [vmem:[#allocation7 + $0x618] sm:$0xff]
        %v1850 = vld [vmem:[#allocation7 + $0x620] sm:$0xff]
        %v1851 = vld [vmem:[#allocation7 + $0x628] sm:$0xff]
        %v1852 = vld [vmem:[#allocation7 + $0x630] sm:$0xff]
        %v1853 = vld [vmem:[#allocation7 + $0x638] sm:$0xff]
        %v1854 = vld [vmem:[#allocation7 + $0x640] sm:$0xff]
        %v1855 = vld [vmem:[#allocation7 + $0x648] sm:$0xff]
        %v1856 = vld [vmem:[#allocation7 + $0x650] sm:$0xff]
        %v1857 = vld [vmem:[#allocation7 + $0x658] sm:$0xff]
        %v1858 = vld [vmem:[#allocation7 + $0x660] sm:$0xff]
        %v1859 = vld [vmem:[#allocation7 + $0x668] sm:$0xff]
        %v1860 = vld [vmem:[#allocation7 + $0x670] sm:$0xff]
        %v1861 = vld [vmem:[#allocation7 + $0x678] sm:$0xff]
        %v1862 = vld [vmem:[#allocation7 + $0x680] sm:$0xff]
        %v1863 = vld [vmem:[#allocation7 + $0x688] sm:$0xff]
        %v1864 = vld [vmem:[#allocation7 + $0x690] sm:$0xff]
        %v1865 = vld [vmem:[#allocation7 + $0x698] sm:$0xff]
        %v1866 = vld [vmem:[#allocation7 + $0x6a0] sm:$0xff]
        %v1867 = vld [vmem:[#allocation7 + $0x6a8] sm:$0xff]
        %v1868 = vld [vmem:[#allocation7 + $0x6b0] sm:$0xff]
        %v1869 = vld [vmem:[#allocation7 + $0x6b8] sm:$0xff]
        %v1870 = vld [vmem:[#allocation7 + $0x6c0] sm:$0xff]
        %v1871 = vld [vmem:[#allocation7 + $0x6c8] sm:$0xff]
        %v1872 = vld [vmem:[#allocation7 + $0x6d0] sm:$0xff]
        %v1873 = vld [vmem:[#allocation7 + $0x6d8] sm:$0xff]
        %v1874 = vld [vmem:[#allocation7 + $0x6e0] sm:$0xff]
        %v1875 = vld [vmem:[#allocation7 + $0x6e8] sm:$0xff]
        %v1876 = vld [vmem:[#allocation7 + $0x6f0] sm:$0xff]
        %v1877 = vld [vmem:[#allocation7 + $0x6f8] sm:$0xff]
        %v1878 = vld [vmem:[#allocation7 + $0x700] sm:$0xff]
        %v1879 = vld [vmem:[#allocation7 + $0x708] sm:$0xff]
        %v1880 = vld [vmem:[#allocation7 + $0x710] sm:$0xff]
        %v1881 = vld [vmem:[#allocation7 + $0x718] sm:$0xff]
        %v1882 = vld [vmem:[#allocation7 + $0x720] sm:$0xff]
        %v1883 = vld [vmem:[#allocation7 + $0x728] sm:$0xff]
        %v1884 = vld [vmem:[#allocation7 + $0x730] sm:$0xff]
        %v1885 = vld [vmem:[#allocation7 + $0x738] sm:$0xff]
        %v1886 = vld [vmem:[#allocation7 + $0x740] sm:$0xff]
        %v1887 = vld [vmem:[#allocation7 + $0x748] sm:$0xff]
        %v1888 = vld [vmem:[#allocation7 + $0x750] sm:$0xff]
        %v1889 = vld [vmem:[#allocation7 + $0x758] sm:$0xff]
        %v1890 = vld [vmem:[#allocation7 + $0x760] sm:$0xff]
        %v1891 = vld [vmem:[#allocation7 + $0x768] sm:$0xff]
        %v1892 = vld [vmem:[#allocation7 + $0x770] sm:$0xff]
        %v1893 = vld [vmem:[#allocation7 + $0x778] sm:$0xff]
        %v1894 = vld [vmem:[#allocation7 + $0x780] sm:$0xff]
        %v1895 = vld [vmem:[#allocation7 + $0x788] sm:$0xff]
        %v1896 = vld [vmem:[#allocation7 + $0x790] sm:$0xff]
        %v1897 = vld [vmem:[#allocation7 + $0x798] sm:$0xff]
        %v1898 = vld [vmem:[#allocation7 + $0x7a0] sm:$0xff]
        %v1899 = vld [vmem:[#allocation7 + $0x7a8] sm:$0xff]
        %v1900 = vld [vmem:[#allocation7 + $0x7b0] sm:$0xff]
        %v1901 = vld [vmem:[#allocation7 + $0x7b8] sm:$0xff]
        %v1902 = vld [vmem:[#allocation7 + $0x7c0] sm:$0xff]
        %v1903 = vld [vmem:[#allocation7 + $0x7c8] sm:$0xff]
        %v1904 = vld [vmem:[#allocation7 + $0x7d0] sm:$0xff]
        %v1905 = vld [vmem:[#allocation7 + $0x7d8] sm:$0xff]
        %v1906 = vld [vmem:[#allocation7 + $0x7e0] sm:$0xff]
        %v1907 = vld [vmem:[#allocation7 + $0x7e8] sm:$0xff]
        %v1908 = vld [vmem:[#allocation7 + $0x7f0] sm:$0xff]
        %v1909 = vld [vmem:[#allocation7 + $0x7f8] sm:$0xff]
        %v2038 = vunpack.c.l.b16 %v1782
        %v2039 = vunpack.c.h.b16 %v1782
        %v2040 = vunpack.c.l.b16 %v1783
        %v2041 = vunpack.c.h.b16 %v1783
        %v2042 = vunpack.c.l.b16 %v1784
        %v2043 = vunpack.c.h.b16 %v1784
        %v2044 = vunpack.c.l.b16 %v1785
        %v2045 = vunpack.c.h.b16 %v1785
        %v2046 = vunpack.c.l.b16 %v1786
        %v2047 = vunpack.c.h.b16 %v1786
        %v2048 = vunpack.c.l.b16 %v1787
        %v2049 = vunpack.c.h.b16 %v1787
        %v2050 = vunpack.c.l.b16 %v1788
        %v2051 = vunpack.c.h.b16 %v1788
        %v2052 = vunpack.c.l.b16 %v1789
        %v2053 = vunpack.c.h.b16 %v1789
        %v2054 = vunpack.c.l.b16 %v1790
        %v2055 = vunpack.c.h.b16 %v1790
        %v2056 = vunpack.c.l.b16 %v1791
        %v2057 = vunpack.c.h.b16 %v1791
        %v2058 = vunpack.c.l.b16 %v1792
        %v2059 = vunpack.c.h.b16 %v1792
        %v2060 = vunpack.c.l.b16 %v1793
        %v2061 = vunpack.c.h.b16 %v1793
        %v2062 = vunpack.c.l.b16 %v1794
        %v2063 = vunpack.c.h.b16 %v1794
        %v2064 = vunpack.c.l.b16 %v1795
        %v2065 = vunpack.c.h.b16 %v1795
        %v2066 = vunpack.c.l.b16 %v1796
        %v2067 = vunpack.c.h.b16 %v1796
        %v2068 = vunpack.c.l.b16 %v1797
        %v2069 = vunpack.c.h.b16 %v1797
        %v2070 = vunpack.c.l.b16 %v1798
        %v2071 = vunpack.c.h.b16 %v1798
        %v2072 = vunpack.c.l.b16 %v1799
        %v2073 = vunpack.c.h.b16 %v1799
        %v2074 = vunpack.c.l.b16 %v1800
        %v2075 = vunpack.c.h.b16 %v1800
        %v2076 = vunpack.c.l.b16 %v1801
        %v2077 = vunpack.c.h.b16 %v1801
        %v2078 = vunpack.c.l.b16 %v1802
        %v2079 = vunpack.c.h.b16 %v1802
        %v2080 = vunpack.c.l.b16 %v1803
        %v2081 = vunpack.c.h.b16 %v1803
        %v2082 = vunpack.c.l.b16 %v1804
        %v2083 = vunpack.c.h.b16 %v1804
        %v2084 = vunpack.c.l.b16 %v1805
        %v2085 = vunpack.c.h.b16 %v1805
        %v2086 = vunpack.c.l.b16 %v1806
        %v2087 = vunpack.c.h.b16 %v1806
        %v2088 = vunpack.c.l.b16 %v1807
        %v2089 = vunpack.c.h.b16 %v1807
        %v2090 = vunpack.c.l.b16 %v1808
        %v2091 = vunpack.c.h.b16 %v1808
        %v2092 = vunpack.c.l.b16 %v1809
        %v2093 = vunpack.c.h.b16 %v1809
        %v2094 = vunpack.c.l.b16 %v1810
        %v2095 = vunpack.c.h.b16 %v1810
        %v2096 = vunpack.c.l.b16 %v1811
        %v2097 = vunpack.c.h.b16 %v1811
        %v2098 = vunpack.c.l.b16 %v1812
        %v2099 = vunpack.c.h.b16 %v1812
        %v2100 = vunpack.c.l.b16 %v1813
        %v2101 = vunpack.c.h.b16 %v1813
        %v2102 = vunpack.c.l.b16 %v1814
        %v2103 = vunpack.c.h.b16 %v1814
        %v2104 = vunpack.c.l.b16 %v1815
        %v2105 = vunpack.c.h.b16 %v1815
        %v2106 = vunpack.c.l.b16 %v1816
        %v2107 = vunpack.c.h.b16 %v1816
        %v2108 = vunpack.c.l.b16 %v1817
        %v2109 = vunpack.c.h.b16 %v1817
        %v2110 = vunpack.c.l.b16 %v1818
        %v2111 = vunpack.c.h.b16 %v1818
        %v2112 = vunpack.c.l.b16 %v1819
        %v2113 = vunpack.c.h.b16 %v1819
        %v2114 = vunpack.c.l.b16 %v1820
        %v2115 = vunpack.c.h.b16 %v1820
        %v2116 = vunpack.c.l.b16 %v1821
        %v2117 = vunpack.c.h.b16 %v1821
        %v2118 = vunpack.c.l.b16 %v1822
        %v2119 = vunpack.c.h.b16 %v1822
        %v2120 = vunpack.c.l.b16 %v1823
        %v2121 = vunpack.c.h.b16 %v1823
        %v2122 = vunpack.c.l.b16 %v1824
        %v2123 = vunpack.c.h.b16 %v1824
        %v2124 = vunpack.c.l.b16 %v1825
        %v2125 = vunpack.c.h.b16 %v1825
        %v2126 = vunpack.c.l.b16 %v1826
        %v2127 = vunpack.c.h.b16 %v1826
        %v2128 = vunpack.c.l.b16 %v1827
        %v2129 = vunpack.c.h.b16 %v1827
        %v2130 = vunpack.c.l.b16 %v1828
        %v2131 = vunpack.c.h.b16 %v1828
        %v2132 = vunpack.c.l.b16 %v1829
        %v2133 = vunpack.c.h.b16 %v1829
        %v2134 = vunpack.c.l.b16 %v1830
        %v2135 = vunpack.c.h.b16 %v1830
        %v2136 = vunpack.c.l.b16 %v1831
        %v2137 = vunpack.c.h.b16 %v1831
        %v2138 = vunpack.c.l.b16 %v1832
        %v2139 = vunpack.c.h.b16 %v1832
        %v2140 = vunpack.c.l.b16 %v1833
        %v2141 = vunpack.c.h.b16 %v1833
        %v2142 = vunpack.c.l.b16 %v1834
        %v2143 = vunpack.c.h.b16 %v1834
        %v2144 = vunpack.c.l.b16 %v1835
        %v2145 = vunpack.c.h.b16 %v1835
        %v2146 = vunpack.c.l.b16 %v1836
        %v2147 = vunpack.c.h.b16 %v1836
        %v2148 = vunpack.c.l.b16 %v1837
        %v2149 = vunpack.c.h.b16 %v1837
        %v2150 = vunpack.c.l.b16 %v1838
        %v2151 = vunpack.c.h.b16 %v1838
        %v2152 = vunpack.c.l.b16 %v1839
        %v2153 = vunpack.c.h.b16 %v1839
        %v2154 = vunpack.c.l.b16 %v1840
        %v2155 = vunpack.c.h.b16 %v1840
        %v2156 = vunpack.c.l.b16 %v1841
        %v2157 = vunpack.c.h.b16 %v1841
        %v2158 = vunpack.c.l.b16 %v1842
        %v2159 = vunpack.c.h.b16 %v1842
        %v2160 = vunpack.c.l.b16 %v1843
        %v2161 = vunpack.c.h.b16 %v1843
        %v2162 = vunpack.c.l.b16 %v1844
        %v2163 = vunpack.c.h.b16 %v1844
        %v2164 = vunpack.c.l.b16 %v1845
        %v2165 = vunpack.c.h.b16 %v1845
        %v2166 = vunpack.c.l.b16 %v1846
        %v2167 = vunpack.c.h.b16 %v1846
        %v2168 = vunpack.c.l.b16 %v1847
        %v2169 = vunpack.c.h.b16 %v1847
        %v2170 = vunpack.c.l.b16 %v1848
        %v2171 = vunpack.c.h.b16 %v1848
        %v2172 = vunpack.c.l.b16 %v1849
        %v2173 = vunpack.c.h.b16 %v1849
        %v2174 = vunpack.c.l.b16 %v1850
        %v2175 = vunpack.c.h.b16 %v1850
        %v2176 = vunpack.c.l.b16 %v1851
        %v2177 = vunpack.c.h.b16 %v1851
        %v2178 = vunpack.c.l.b16 %v1852
        %v2179 = vunpack.c.h.b16 %v1852
        %v2180 = vunpack.c.l.b16 %v1853
        %v2181 = vunpack.c.h.b16 %v1853
        %v2182 = vunpack.c.l.b16 %v1854
        %v2183 = vunpack.c.h.b16 %v1854
        %v2184 = vunpack.c.l.b16 %v1855
        %v2185 = vunpack.c.h.b16 %v1855
        %v2186 = vunpack.c.l.b16 %v1856
        %v2187 = vunpack.c.h.b16 %v1856
        %v2188 = vunpack.c.l.b16 %v1857
        %v2189 = vunpack.c.h.b16 %v1857
        %v2190 = vunpack.c.l.b16 %v1858
        %v2191 = vunpack.c.h.b16 %v1858
        %v2192 = vunpack.c.l.b16 %v1859
        %v2193 = vunpack.c.h.b16 %v1859
        %v2194 = vunpack.c.l.b16 %v1860
        %v2195 = vunpack.c.h.b16 %v1860
        %v2196 = vunpack.c.l.b16 %v1861
        %v2197 = vunpack.c.h.b16 %v1861
        %v2198 = vunpack.c.l.b16 %v1862
        %v2199 = vunpack.c.h.b16 %v1862
        %v2200 = vunpack.c.l.b16 %v1863
        %v2201 = vunpack.c.h.b16 %v1863
        %v2202 = vunpack.c.l.b16 %v1864
        %v2203 = vunpack.c.h.b16 %v1864
        %v2204 = vunpack.c.l.b16 %v1865
        %v2205 = vunpack.c.h.b16 %v1865
        %v2206 = vunpack.c.l.b16 %v1866
        %v2207 = vunpack.c.h.b16 %v1866
        %v2208 = vunpack.c.l.b16 %v1867
        %v2209 = vunpack.c.h.b16 %v1867
        %v2210 = vunpack.c.l.b16 %v1868
        %v2211 = vunpack.c.h.b16 %v1868
        %v2212 = vunpack.c.l.b16 %v1869
        %v2213 = vunpack.c.h.b16 %v1869
        %v2214 = vunpack.c.l.b16 %v1870
        %v2215 = vunpack.c.h.b16 %v1870
        %v2216 = vunpack.c.l.b16 %v1871
        %v2217 = vunpack.c.h.b16 %v1871
        %v2218 = vunpack.c.l.b16 %v1872
        %v2219 = vunpack.c.h.b16 %v1872
        %v2220 = vunpack.c.l.b16 %v1873
        %v2221 = vunpack.c.h.b16 %v1873
        %v2222 = vunpack.c.l.b16 %v1874
        %v2223 = vunpack.c.h.b16 %v1874
        %v2224 = vunpack.c.l.b16 %v1875
        %v2225 = vunpack.c.h.b16 %v1875
        %v2226 = vunpack.c.l.b16 %v1876
        %v2227 = vunpack.c.h.b16 %v1876
        %v2228 = vunpack.c.l.b16 %v1877
        %v2229 = vunpack.c.h.b16 %v1877
        %v2230 = vunpack.c.l.b16 %v1878
        %v2231 = vunpack.c.h.b16 %v1878
        %v2232 = vunpack.c.l.b16 %v1879
        %v2233 = vunpack.c.h.b16 %v1879
        %v2234 = vunpack.c.l.b16 %v1880
        %v2235 = vunpack.c.h.b16 %v1880
        %v2236 = vunpack.c.l.b16 %v1881
        %v2237 = vunpack.c.h.b16 %v1881
        %v2238 = vunpack.c.l.b16 %v1882
        %v2239 = vunpack.c.h.b16 %v1882
        %v2240 = vunpack.c.l.b16 %v1883
        %v2241 = vunpack.c.h.b16 %v1883
        %v2242 = vunpack.c.l.b16 %v1884
        %v2243 = vunpack.c.h.b16 %v1884
        %v2244 = vunpack.c.l.b16 %v1885
        %v2245 = vunpack.c.h.b16 %v1885
        %v2246 = vunpack.c.l.b16 %v1886
        %v2247 = vunpack.c.h.b16 %v1886
        %v2248 = vunpack.c.l.b16 %v1887
        %v2249 = vunpack.c.h.b16 %v1887
        %v2250 = vunpack.c.l.b16 %v1888
        %v2251 = vunpack.c.h.b16 %v1888
        %v2252 = vunpack.c.l.b16 %v1889
        %v2253 = vunpack.c.h.b16 %v1889
        %v2254 = vunpack.c.l.b16 %v1890
        %v2255 = vunpack.c.h.b16 %v1890
        %v2256 = vunpack.c.l.b16 %v1891
        %v2257 = vunpack.c.h.b16 %v1891
        %v2258 = vunpack.c.l.b16 %v1892
        %v2259 = vunpack.c.h.b16 %v1892
        %v2260 = vunpack.c.l.b16 %v1893
        %v2261 = vunpack.c.h.b16 %v1893
        %v2262 = vunpack.c.l.b16 %v1894
        %v2263 = vunpack.c.h.b16 %v1894
        %v2264 = vunpack.c.l.b16 %v1895
        %v2265 = vunpack.c.h.b16 %v1895
        %v2266 = vunpack.c.l.b16 %v1896
        %v2267 = vunpack.c.h.b16 %v1896
        %v2268 = vunpack.c.l.b16 %v1897
        %v2269 = vunpack.c.h.b16 %v1897
        %v2270 = vunpack.c.l.b16 %v1898
        %v2271 = vunpack.c.h.b16 %v1898
        %v2272 = vunpack.c.l.b16 %v1899
        %v2273 = vunpack.c.h.b16 %v1899
        %v2274 = vunpack.c.l.b16 %v1900
        %v2275 = vunpack.c.h.b16 %v1900
        %v2276 = vunpack.c.l.b16 %v1901
        %v2277 = vunpack.c.h.b16 %v1901
        %v2278 = vunpack.c.l.b16 %v1902
        %v2279 = vunpack.c.h.b16 %v1902
        %v2280 = vunpack.c.l.b16 %v1903
        %v2281 = vunpack.c.h.b16 %v1903
        %v2282 = vunpack.c.l.b16 %v1904
        %v2283 = vunpack.c.h.b16 %v1904
        %v2284 = vunpack.c.l.b16 %v1905
        %v2285 = vunpack.c.h.b16 %v1905
        %v2286 = vunpack.c.l.b16 %v1906
        %v2287 = vunpack.c.h.b16 %v1906
        %v2288 = vunpack.c.l.b16 %v1907
        %v2289 = vunpack.c.h.b16 %v1907
        %v2290 = vunpack.c.l.b16 %v1908
        %v2291 = vunpack.c.h.b16 %v1908
        %v2292 = vunpack.c.l.b16 %v1909
        %v2293 = vunpack.c.h.b16 %v1909
        %v2294 = vpack.c.b16 %v2054, %v2038
        %v2295 = vpack.c.b16 %v2055, %v2039
        %v2296 = vpack.c.b16 %v2056, %v2040
        %v2297 = vpack.c.b16 %v2057, %v2041
        %v2298 = vpack.c.b16 %v2058, %v2042
        %v2299 = vpack.c.b16 %v2059, %v2043
        %v2300 = vpack.c.b16 %v2060, %v2044
        %v2301 = vpack.c.b16 %v2061, %v2045
        %v2302 = vpack.c.b16 %v2062, %v2046
        %v2303 = vpack.c.b16 %v2063, %v2047
        %v2304 = vpack.c.b16 %v2064, %v2048
        %v2305 = vpack.c.b16 %v2065, %v2049
        %v2306 = vpack.c.b16 %v2066, %v2050
        %v2307 = vpack.c.b16 %v2067, %v2051
        %v2308 = vpack.c.b16 %v2068, %v2052
        %v2309 = vpack.c.b16 %v2069, %v2053
        %v2310 = vpack.c.b16 %v2086, %v2070
        %v2311 = vpack.c.b16 %v2087, %v2071
        %v2312 = vpack.c.b16 %v2088, %v2072
        %v2313 = vpack.c.b16 %v2089, %v2073
        %v2314 = vpack.c.b16 %v2090, %v2074
        %v2315 = vpack.c.b16 %v2091, %v2075
        %v2316 = vpack.c.b16 %v2092, %v2076
        %v2317 = vpack.c.b16 %v2093, %v2077
        %v2318 = vpack.c.b16 %v2094, %v2078
        %v2319 = vpack.c.b16 %v2095, %v2079
        %v2320 = vpack.c.b16 %v2096, %v2080
        %v2321 = vpack.c.b16 %v2097, %v2081
        %v2322 = vpack.c.b16 %v2098, %v2082
        %v2323 = vpack.c.b16 %v2099, %v2083
        %v2324 = vpack.c.b16 %v2100, %v2084
        %v2325 = vpack.c.b16 %v2101, %v2085
        %v2326 = vpack.c.b16 %v2118, %v2102
        %v2327 = vpack.c.b16 %v2119, %v2103
        %v2328 = vpack.c.b16 %v2120, %v2104
        %v2329 = vpack.c.b16 %v2121, %v2105
        %v2330 = vpack.c.b16 %v2122, %v2106
        %v2331 = vpack.c.b16 %v2123, %v2107
        %v2332 = vpack.c.b16 %v2124, %v2108
        %v2333 = vpack.c.b16 %v2125, %v2109
        %v2334 = vpack.c.b16 %v2126, %v2110
        %v2335 = vpack.c.b16 %v2127, %v2111
        %v2336 = vpack.c.b16 %v2128, %v2112
        %v2337 = vpack.c.b16 %v2129, %v2113
        %v2338 = vpack.c.b16 %v2130, %v2114
        %v2339 = vpack.c.b16 %v2131, %v2115
        %v2340 = vpack.c.b16 %v2132, %v2116
        %v2341 = vpack.c.b16 %v2133, %v2117
        %v2342 = vpack.c.b16 %v2150, %v2134
        %v2343 = vpack.c.b16 %v2151, %v2135
        %v2344 = vpack.c.b16 %v2152, %v2136
        %v2345 = vpack.c.b16 %v2153, %v2137
        %v2346 = vpack.c.b16 %v2154, %v2138
        %v2347 = vpack.c.b16 %v2155, %v2139
        %v2348 = vpack.c.b16 %v2156, %v2140
        %v2349 = vpack.c.b16 %v2157, %v2141
        %v2350 = vpack.c.b16 %v2158, %v2142
        %v2351 = vpack.c.b16 %v2159, %v2143
        %v2352 = vpack.c.b16 %v2160, %v2144
        %v2353 = vpack.c.b16 %v2161, %v2145
        %v2354 = vpack.c.b16 %v2162, %v2146
        %v2355 = vpack.c.b16 %v2163, %v2147
        %v2356 = vpack.c.b16 %v2164, %v2148
        %v2357 = vpack.c.b16 %v2165, %v2149
        %v2358 = vpack.c.b16 %v2182, %v2166
        %v2359 = vpack.c.b16 %v2183, %v2167
        %v2360 = vpack.c.b16 %v2184, %v2168
        %v2361 = vpack.c.b16 %v2185, %v2169
        %v2362 = vpack.c.b16 %v2186, %v2170
        %v2363 = vpack.c.b16 %v2187, %v2171
        %v2364 = vpack.c.b16 %v2188, %v2172
        %v2365 = vpack.c.b16 %v2189, %v2173
        %v2366 = vpack.c.b16 %v2190, %v2174
        %v2367 = vpack.c.b16 %v2191, %v2175
        %v2368 = vpack.c.b16 %v2192, %v2176
        %v2369 = vpack.c.b16 %v2193, %v2177
        %v2370 = vpack.c.b16 %v2194, %v2178
        %v2371 = vpack.c.b16 %v2195, %v2179
        %v2372 = vpack.c.b16 %v2196, %v2180
        %v2373 = vpack.c.b16 %v2197, %v2181
        %v2374 = vpack.c.b16 %v2214, %v2198
        %v2375 = vpack.c.b16 %v2215, %v2199
        %v2376 = vpack.c.b16 %v2216, %v2200
        %v2377 = vpack.c.b16 %v2217, %v2201
        %v2378 = vpack.c.b16 %v2218, %v2202
        %v2379 = vpack.c.b16 %v2219, %v2203
        %v2380 = vpack.c.b16 %v2220, %v2204
        %v2381 = vpack.c.b16 %v2221, %v2205
        %v2382 = vpack.c.b16 %v2222, %v2206
        %v2383 = vpack.c.b16 %v2223, %v2207
        %v2384 = vpack.c.b16 %v2224, %v2208
        %v2385 = vpack.c.b16 %v2225, %v2209
        %v2386 = vpack.c.b16 %v2226, %v2210
        %v2387 = vpack.c.b16 %v2227, %v2211
        %v2388 = vpack.c.b16 %v2228, %v2212
        %v2389 = vpack.c.b16 %v2229, %v2213
        %v2390 = vpack.c.b16 %v2246, %v2230
        %v2391 = vpack.c.b16 %v2247, %v2231
        %v2392 = vpack.c.b16 %v2248, %v2232
        %v2393 = vpack.c.b16 %v2249, %v2233
        %v2394 = vpack.c.b16 %v2250, %v2234
        %v2395 = vpack.c.b16 %v2251, %v2235
        %v2396 = vpack.c.b16 %v2252, %v2236
        %v2397 = vpack.c.b16 %v2253, %v2237
        %v2398 = vpack.c.b16 %v2254, %v2238
        %v2399 = vpack.c.b16 %v2255, %v2239
        %v2400 = vpack.c.b16 %v2256, %v2240
        %v2401 = vpack.c.b16 %v2257, %v2241
        %v2402 = vpack.c.b16 %v2258, %v2242
        %v2403 = vpack.c.b16 %v2259, %v2243
        %v2404 = vpack.c.b16 %v2260, %v2244
        %v2405 = vpack.c.b16 %v2261, %v2245
        %v2406 = vpack.c.b16 %v2278, %v2262
        %v2407 = vpack.c.b16 %v2279, %v2263
        %v2408 = vpack.c.b16 %v2280, %v2264
        %v2409 = vpack.c.b16 %v2281, %v2265
        %v2410 = vpack.c.b16 %v2282, %v2266
        %v2411 = vpack.c.b16 %v2283, %v2267
        %v2412 = vpack.c.b16 %v2284, %v2268
        %v2413 = vpack.c.b16 %v2285, %v2269
        %v2414 = vpack.c.b16 %v2286, %v2270
        %v2415 = vpack.c.b16 %v2287, %v2271
        %v2416 = vpack.c.b16 %v2288, %v2272
        %v2417 = vpack.c.b16 %v2289, %v2273
        %v2418 = vpack.c.b16 %v2290, %v2274
        %v2419 = vpack.c.b16 %v2291, %v2275
        %v2420 = vpack.c.b16 %v2292, %v2276
        %v2421 = vpack.c.b16 %v2293, %v2277
        %2550 = vmatprep.subr.bf16.mxu0 %v2295
        %2551 = vmatpush1.bf16.msra.mxu0 %v2294
        %2552 = vmatprep.subr.bf16.mxu0 %v2311
        %2553 = vmatpush1.bf16.msra.mxu0 %v2310
        %2554 = vmatprep.subr.bf16.mxu0 %v2327
        %2555 = vmatpush1.bf16.msra.mxu0 %v2326
        %2556 = vmatprep.subr.bf16.mxu0 %v2343
        %2557 = vmatpush1.bf16.msra.mxu0 %v2342
        %2558 = vmatprep.subr.bf16.mxu0 %v2359
        %2559 = vmatpush1.bf16.msra.mxu0 %v2358
        %2560 = vmatprep.subr.bf16.mxu0 %v2375
        %2561 = vmatpush1.bf16.msra.mxu0 %v2374
        %2562 = vmatprep.subr.bf16.mxu0 %v2391
        %2563 = vmatpush1.bf16.msra.mxu0 %v2390
        %2564 = vmatprep.subr.bf16.mxu0 %v2407
        %2565 = vmatpush1.bf16.msra.mxu0 %v2406
        %2566 = vmatprep.subr.bf16.mxu0 0
        %2567 = vmatpush1.bf16.msra.mxu0 0
        %2568 = vmatprep.subr.bf16.mxu0 0
        %2569 = vmatpush1.bf16.msra.mxu0 0
        %2570 = vmatprep.subr.bf16.mxu0 0
        %2571 = vmatpush1.bf16.msra.mxu0 0
        %2572 = vmatprep.subr.bf16.mxu0 0
        %2573 = vmatpush1.bf16.msra.mxu0 0
        %2574 = vmatprep.subr.bf16.mxu0 0
        %2575 = vmatpush1.bf16.msra.mxu0 0
        %2576 = vmatprep.subr.bf16.mxu0 0
        %2577 = vmatpush1.bf16.msra.mxu0 0
        %2578 = vmatprep.subr.bf16.mxu0 0
        %2579 = vmatpush1.bf16.msra.mxu0 0
        %2580 = vmatprep.subr.bf16.mxu0 0
        %2581 = vmatpush1.bf16.msra.mxu0 0
        %2582 = vmatprep.mubr.bf16.mxu0 0
        %2583 = vmatmul.mubr.bf16.gmra.mrb[0].mxu0 %v649
        %v2584 = vpop.f32.mrb[0].mxu0
        %v2585 = vadd.f32 0.0, %v2584
        %v2586 = vpop.f32.mrb[0].mxu0
        %v2587 = vadd.f32 0.0, %v2586
        %v2588 = vpop.f32.mrb[0].mxu0
        %v2589 = vadd.f32 0.0, %v2588
        %v2590 = vpop.f32.mrb[0].mxu0
        %v2591 = vadd.f32 0.0, %v2590
        %2592 = vdwg.mxu0
        %2593 = vmatprep.subr.bf16.mxu0 %v2297
        %2594 = vmatpush1.bf16.msra.mxu0 %v2296
        %2595 = vmatprep.subr.bf16.mxu0 %v2313
        %2596 = vmatpush1.bf16.msra.mxu0 %v2312
        %2597 = vmatprep.subr.bf16.mxu0 %v2329
        %2598 = vmatpush1.bf16.msra.mxu0 %v2328
        %2599 = vmatprep.subr.bf16.mxu0 %v2345
        %2600 = vmatpush1.bf16.msra.mxu0 %v2344
        %2601 = vmatprep.subr.bf16.mxu0 %v2361
        %2602 = vmatpush1.bf16.msra.mxu0 %v2360
        %2603 = vmatprep.subr.bf16.mxu0 %v2377
        %2604 = vmatpush1.bf16.msra.mxu0 %v2376
        %2605 = vmatprep.subr.bf16.mxu0 %v2393
        %2606 = vmatpush1.bf16.msra.mxu0 %v2392
        %2607 = vmatprep.subr.bf16.mxu0 %v2409
        %2608 = vmatpush1.bf16.msra.mxu0 %v2408
        %2609 = vmatprep.subr.bf16.mxu0 0
        %2610 = vmatpush1.bf16.msra.mxu0 0
        %2611 = vmatprep.subr.bf16.mxu0 0
        %2612 = vmatpush1.bf16.msra.mxu0 0
        %2613 = vmatprep.subr.bf16.mxu0 0
        %2614 = vmatpush1.bf16.msra.mxu0 0
        %2615 = vmatprep.subr.bf16.mxu0 0
        %2616 = vmatpush1.bf16.msra.mxu0 0
        %2617 = vmatprep.subr.bf16.mxu0 0
        %2618 = vmatpush1.bf16.msra.mxu0 0
        %2619 = vmatprep.subr.bf16.mxu0 0
        %2620 = vmatpush1.bf16.msra.mxu0 0
        %2621 = vmatprep.subr.bf16.mxu0 0
        %2622 = vmatpush1.bf16.msra.mxu0 0
        %2623 = vmatprep.subr.bf16.mxu0 0
        %2624 = vmatpush1.bf16.msra.mxu0 0
        %2625 = vmatprep.mubr.bf16.mxu0 0
        %2626 = vmatmul.mubr.bf16.gmra.mrb[0].mxu0 %v649
        %v2627 = vpop.f32.mrb[0].mxu0
        %v2628 = vadd.f32 0.0, %v2627
        %v2629 = vpop.f32.mrb[0].mxu0
        %v2630 = vadd.f32 0.0, %v2629
        %v2631 = vpop.f32.mrb[0].mxu0
        %v2632 = vadd.f32 0.0, %v2631
        %v2633 = vpop.f32.mrb[0].mxu0
        %v2634 = vadd.f32 0.0, %v2633
        %2635 = vdwg.mxu0
        %2636 = vmatprep.subr.bf16.mxu0 %v2299
        %2637 = vmatpush1.bf16.msra.mxu0 %v2298
        %2638 = vmatprep.subr.bf16.mxu0 %v2315
        %2639 = vmatpush1.bf16.msra.mxu0 %v2314
        %2640 = vmatprep.subr.bf16.mxu0 %v2331
        %2641 = vmatpush1.bf16.msra.mxu0 %v2330
        %2642 = vmatprep.subr.bf16.mxu0 %v2347
        %2643 = vmatpush1.bf16.msra.mxu0 %v2346
        %2644 = vmatprep.subr.bf16.mxu0 %v2363
        %2645 = vmatpush1.bf16.msra.mxu0 %v2362
        %2646 = vmatprep.subr.bf16.mxu0 %v2379
        %2647 = vmatpush1.bf16.msra.mxu0 %v2378
        %2648 = vmatprep.subr.bf16.mxu0 %v2395
        %2649 = vmatpush1.bf16.msra.mxu0 %v2394
        %2650 = vmatprep.subr.bf16.mxu0 %v2411
        %2651 = vmatpush1.bf16.msra.mxu0 %v2410
        %2652 = vmatprep.subr.bf16.mxu0 0
        %2653 = vmatpush1.bf16.msra.mxu0 0
        %2654 = vmatprep.subr.bf16.mxu0 0
        %2655 = vmatpush1.bf16.msra.mxu0 0
        %2656 = vmatprep.subr.bf16.mxu0 0
        %2657 = vmatpush1.bf16.msra.mxu0 0
        %2658 = vmatprep.subr.bf16.mxu0 0
        %2659 = vmatpush1.bf16.msra.mxu0 0
        %2660 = vmatprep.subr.bf16.mxu0 0
        %2661 = vmatpush1.bf16.msra.mxu0 0
        %2662 = vmatprep.subr.bf16.mxu0 0
        %2663 = vmatpush1.bf16.msra.mxu0 0
        %2664 = vmatprep.subr.bf16.mxu0 0
        %2665 = vmatpush1.bf16.msra.mxu0 0
        %2666 = vmatprep.subr.bf16.mxu0 0
        %2667 = vmatpush1.bf16.msra.mxu0 0
        %2668 = vmatprep.mubr.bf16.mxu0 0
        %2669 = vmatmul.mubr.bf16.gmra.mrb[0].mxu0 %v649
        %v2670 = vpop.f32.mrb[0].mxu0
        %v2671 = vadd.f32 0.0, %v2670
        %v2672 = vpop.f32.mrb[0].mxu0
        %v2673 = vadd.f32 0.0, %v2672
        %v2674 = vpop.f32.mrb[0].mxu0
        %v2675 = vadd.f32 0.0, %v2674
        %v2676 = vpop.f32.mrb[0].mxu0
        %v2677 = vadd.f32 0.0, %v2676
        %2678 = vdwg.mxu0
        %2679 = vmatprep.subr.bf16.mxu0 %v2301
        %2680 = vmatpush1.bf16.msra.mxu0 %v2300
        %2681 = vmatprep.subr.bf16.mxu0 %v2317
        %2682 = vmatpush1.bf16.msra.mxu0 %v2316
        %2683 = vmatprep.subr.bf16.mxu0 %v2333
        %2684 = vmatpush1.bf16.msra.mxu0 %v2332
        %2685 = vmatprep.subr.bf16.mxu0 %v2349
        %2686 = vmatpush1.bf16.msra.mxu0 %v2348
        %2687 = vmatprep.subr.bf16.mxu0 %v2365
        %2688 = vmatpush1.bf16.msra.mxu0 %v2364
        %2689 = vmatprep.subr.bf16.mxu0 %v2381
        %2690 = vmatpush1.bf16.msra.mxu0 %v2380
        %2691 = vmatprep.subr.bf16.mxu0 %v2397
        %2692 = vmatpush1.bf16.msra.mxu0 %v2396
        %2693 = vmatprep.subr.bf16.mxu0 %v2413
        %2694 = vmatpush1.bf16.msra.mxu0 %v2412
        %2695 = vmatprep.subr.bf16.mxu0 0
        %2696 = vmatpush1.bf16.msra.mxu0 0
        %2697 = vmatprep.subr.bf16.mxu0 0
        %2698 = vmatpush1.bf16.msra.mxu0 0
        %2699 = vmatprep.subr.bf16.mxu0 0
        %2700 = vmatpush1.bf16.msra.mxu0 0
        %2701 = vmatprep.subr.bf16.mxu0 0
        %2702 = vmatpush1.bf16.msra.mxu0 0
        %2703 = vmatprep.subr.bf16.mxu0 0
        %2704 = vmatpush1.bf16.msra.mxu0 0
        %2705 = vmatprep.subr.bf16.mxu0 0
        %2706 = vmatpush1.bf16.msra.mxu0 0
        %2707 = vmatprep.subr.bf16.mxu0 0
        %2708 = vmatpush1.bf16.msra.mxu0 0
        %2709 = vmatprep.subr.bf16.mxu0 0
        %2710 = vmatpush1.bf16.msra.mxu0 0
        %2711 = vmatprep.mubr.bf16.mxu0 0
        %2712 = vmatmul.mubr.bf16.gmra.mrb[0].mxu0 %v649
        %v2713 = vpop.f32.mrb[0].mxu0
        %v2714 = vadd.f32 0.0, %v2713
        %v2715 = vpop.f32.mrb[0].mxu0
        %v2716 = vadd.f32 0.0, %v2715
        %v2717 = vpop.f32.mrb[0].mxu0
        %v2718 = vadd.f32 0.0, %v2717
        %v2719 = vpop.f32.mrb[0].mxu0
        %v2720 = vadd.f32 0.0, %v2719
        %2721 = vdwg.mxu0
        %2722 = vmatprep.subr.bf16.mxu0 %v2303
        %2723 = vmatpush1.bf16.msra.mxu0 %v2302
        %2724 = vmatprep.subr.bf16.mxu0 %v2319
        %2725 = vmatpush1.bf16.msra.mxu0 %v2318
        %2726 = vmatprep.subr.bf16.mxu0 %v2335
        %2727 = vmatpush1.bf16.msra.mxu0 %v2334
        %2728 = vmatprep.subr.bf16.mxu0 %v2351
        %2729 = vmatpush1.bf16.msra.mxu0 %v2350
        %2730 = vmatprep.subr.bf16.mxu0 %v2367
        %2731 = vmatpush1.bf16.msra.mxu0 %v2366
        %2732 = vmatprep.subr.bf16.mxu0 %v2383
        %2733 = vmatpush1.bf16.msra.mxu0 %v2382
        %2734 = vmatprep.subr.bf16.mxu0 %v2399
        %2735 = vmatpush1.bf16.msra.mxu0 %v2398
        %2736 = vmatprep.subr.bf16.mxu0 %v2415
        %2737 = vmatpush1.bf16.msra.mxu0 %v2414
        %2738 = vmatprep.subr.bf16.mxu0 0
        %2739 = vmatpush1.bf16.msra.mxu0 0
        %2740 = vmatprep.subr.bf16.mxu0 0
        %2741 = vmatpush1.bf16.msra.mxu0 0
        %2742 = vmatprep.subr.bf16.mxu0 0
        %2743 = vmatpush1.bf16.msra.mxu0 0
        %2744 = vmatprep.subr.bf16.mxu0 0
        %2745 = vmatpush1.bf16.msra.mxu0 0
        %2746 = vmatprep.subr.bf16.mxu0 0
        %2747 = vmatpush1.bf16.msra.mxu0 0
        %2748 = vmatprep.subr.bf16.mxu0 0
        %2749 = vmatpush1.bf16.msra.mxu0 0
        %2750 = vmatprep.subr.bf16.mxu0 0
        %2751 = vmatpush1.bf16.msra.mxu0 0
        %2752 = vmatprep.subr.bf16.mxu0 0
        %2753 = vmatpush1.bf16.msra.mxu0 0
        %2754 = vmatprep.mubr.bf16.mxu0 0
        %2755 = vmatmul.mubr.bf16.gmra.mrb[0].mxu0 %v649
        %v2756 = vpop.f32.mrb[0].mxu0
        %v2757 = vadd.f32 0.0, %v2756
        %v2758 = vpop.f32.mrb[0].mxu0
        %v2759 = vadd.f32 0.0, %v2758
        %v2760 = vpop.f32.mrb[0].mxu0
        %v2761 = vadd.f32 0.0, %v2760
        %v2762 = vpop.f32.mrb[0].mxu0
        %v2763 = vadd.f32 0.0, %v2762
        %2764 = vdwg.mxu0
        %2765 = vmatprep.subr.bf16.mxu0 %v2305
        %2766 = vmatpush1.bf16.msra.mxu0 %v2304
        %2767 = vmatprep.subr.bf16.mxu0 %v2321
        %2768 = vmatpush1.bf16.msra.mxu0 %v2320
        %2769 = vmatprep.subr.bf16.mxu0 %v2337
        %2770 = vmatpush1.bf16.msra.mxu0 %v2336
        %2771 = vmatprep.subr.bf16.mxu0 %v2353
        %2772 = vmatpush1.bf16.msra.mxu0 %v2352
        %2773 = vmatprep.subr.bf16.mxu0 %v2369
        %2774 = vmatpush1.bf16.msra.mxu0 %v2368
        %2775 = vmatprep.subr.bf16.mxu0 %v2385
        %2776 = vmatpush1.bf16.msra.mxu0 %v2384
        %2777 = vmatprep.subr.bf16.mxu0 %v2401
        %2778 = vmatpush1.bf16.msra.mxu0 %v2400
        %2779 = vmatprep.subr.bf16.mxu0 %v2417
        %2780 = vmatpush1.bf16.msra.mxu0 %v2416
        %2781 = vmatprep.subr.bf16.mxu0 0
        %2782 = vmatpush1.bf16.msra.mxu0 0
        %2783 = vmatprep.subr.bf16.mxu0 0
        %2784 = vmatpush1.bf16.msra.mxu0 0
        %2785 = vmatprep.subr.bf16.mxu0 0
        %2786 = vmatpush1.bf16.msra.mxu0 0
        %2787 = vmatprep.subr.bf16.mxu0 0
        %2788 = vmatpush1.bf16.msra.mxu0 0
        %2789 = vmatprep.subr.bf16.mxu0 0
        %2790 = vmatpush1.bf16.msra.mxu0 0
        %2791 = vmatprep.subr.bf16.mxu0 0
        %2792 = vmatpush1.bf16.msra.mxu0 0
        %2793 = vmatprep.subr.bf16.mxu0 0
        %2794 = vmatpush1.bf16.msra.mxu0 0
        %2795 = vmatprep.subr.bf16.mxu0 0
        %2796 = vmatpush1.bf16.msra.mxu0 0
        %2797 = vmatprep.mubr.bf16.mxu0 0
        %2798 = vmatmul.mubr.bf16.gmra.mrb[0].mxu0 %v649
        %v2799 = vpop.f32.mrb[0].mxu0
        %v2800 = vadd.f32 0.0, %v2799
        %v2801 = vpop.f32.mrb[0].mxu0
        %v2802 = vadd.f32 0.0, %v2801
        %v2803 = vpop.f32.mrb[0].mxu0
        %v2804 = vadd.f32 0.0, %v2803
        %v2805 = vpop.f32.mrb[0].mxu0
        %v2806 = vadd.f32 0.0, %v2805
        %2807 = vdwg.mxu0
        %2808 = vmatprep.subr.bf16.mxu0 %v2307
        %2809 = vmatpush1.bf16.msra.mxu0 %v2306
        %2810 = vmatprep.subr.bf16.mxu0 %v2323
        %2811 = vmatpush1.bf16.msra.mxu0 %v2322
        %2812 = vmatprep.subr.bf16.mxu0 %v2339
        %2813 = vmatpush1.bf16.msra.mxu0 %v2338
        %2814 = vmatprep.subr.bf16.mxu0 %v2355
        %2815 = vmatpush1.bf16.msra.mxu0 %v2354
        %2816 = vmatprep.subr.bf16.mxu0 %v2371
        %2817 = vmatpush1.bf16.msra.mxu0 %v2370
        %2818 = vmatprep.subr.bf16.mxu0 %v2387
        %2819 = vmatpush1.bf16.msra.mxu0 %v2386
        %2820 = vmatprep.subr.bf16.mxu0 %v2403
        %2821 = vmatpush1.bf16.msra.mxu0 %v2402
        %2822 = vmatprep.subr.bf16.mxu0 %v2419
        %2823 = vmatpush1.bf16.msra.mxu0 %v2418
        %2824 = vmatprep.subr.bf16.mxu0 0
        %2825 = vmatpush1.bf16.msra.mxu0 0
        %2826 = vmatprep.subr.bf16.mxu0 0
        %2827 = vmatpush1.bf16.msra.mxu0 0
        %2828 = vmatprep.subr.bf16.mxu0 0
        %2829 = vmatpush1.bf16.msra.mxu0 0
        %2830 = vmatprep.subr.bf16.mxu0 0
        %2831 = vmatpush1.bf16.msra.mxu0 0
        %2832 = vmatprep.subr.bf16.mxu0 0
        %2833 = vmatpush1.bf16.msra.mxu0 0
        %2834 = vmatprep.subr.bf16.mxu0 0
        %2835 = vmatpush1.bf16.msra.mxu0 0
        %2836 = vmatprep.subr.bf16.mxu0 0
        %2837 = vmatpush1.bf16.msra.mxu0 0
        %2838 = vmatprep.subr.bf16.mxu0 0
        %2839 = vmatpush1.bf16.msra.mxu0 0
        %2840 = vmatprep.mubr.bf16.mxu0 0
        %2841 = vmatmul.mubr.bf16.gmra.mrb[0].mxu0 %v649
        %v2842 = vpop.f32.mrb[0].mxu0
        %v2843 = vadd.f32 0.0, %v2842
        %v2844 = vpop.f32.mrb[0].mxu0
        %v2845 = vadd.f32 0.0, %v2844
        %v2846 = vpop.f32.mrb[0].mxu0
        %v2847 = vadd.f32 0.0, %v2846
        %v2848 = vpop.f32.mrb[0].mxu0
        %v2849 = vadd.f32 0.0, %v2848
        %2850 = vdwg.mxu0
        %2851 = vmatprep.subr.bf16.mxu0 %v2309
        %2852 = vmatpush1.bf16.msra.mxu0 %v2308
        %2853 = vmatprep.subr.bf16.mxu0 %v2325
        %2854 = vmatpush1.bf16.msra.mxu0 %v2324
        %2855 = vmatprep.subr.bf16.mxu0 %v2341
        %2856 = vmatpush1.bf16.msra.mxu0 %v2340
        %2857 = vmatprep.subr.bf16.mxu0 %v2357
        %2858 = vmatpush1.bf16.msra.mxu0 %v2356
        %2859 = vmatprep.subr.bf16.mxu0 %v2373
        %2860 = vmatpush1.bf16.msra.mxu0 %v2372
        %2861 = vmatprep.subr.bf16.mxu0 %v2389
        %2862 = vmatpush1.bf16.msra.mxu0 %v2388
        %2863 = vmatprep.subr.bf16.mxu0 %v2405
        %2864 = vmatpush1.bf16.msra.mxu0 %v2404
        %2865 = vmatprep.subr.bf16.mxu0 %v2421
        %2866 = vmatpush1.bf16.msra.mxu0 %v2420
        %2867 = vmatprep.subr.bf16.mxu0 0
        %2868 = vmatpush1.bf16.msra.mxu0 0
        %2869 = vmatprep.subr.bf16.mxu0 0
        %2870 = vmatpush1.bf16.msra.mxu0 0
        %2871 = vmatprep.subr.bf16.mxu0 0
        %2872 = vmatpush1.bf16.msra.mxu0 0
        %2873 = vmatprep.subr.bf16.mxu0 0
        %2874 = vmatpush1.bf16.msra.mxu0 0
        %2875 = vmatprep.subr.bf16.mxu0 0
        %2876 = vmatpush1.bf16.msra.mxu0 0
        %2877 = vmatprep.subr.bf16.mxu0 0
        %2878 = vmatpush1.bf16.msra.mxu0 0
        %2879 = vmatprep.subr.bf16.mxu0 0
        %2880 = vmatpush1.bf16.msra.mxu0 0
        %2881 = vmatprep.subr.bf16.mxu0 0
        %2882 = vmatpush1.bf16.msra.mxu0 0
        %2883 = vmatprep.mubr.bf16.mxu0 0
        %2884 = vmatmul.mubr.bf16.gmra.mrb[0].mxu0 %v649
        %v2885 = vpop.f32.mrb[0].mxu0
        %v2886 = vadd.f32 0.0, %v2885
        %v2887 = vpop.f32.mrb[0].mxu0
        %v2888 = vadd.f32 0.0, %v2887
        %v2889 = vpop.f32.mrb[0].mxu0
        %v2890 = vadd.f32 0.0, %v2889
        %v2891 = vpop.f32.mrb[0].mxu0
        %v2892 = vadd.f32 0.0, %v2891
        %2893 = vdwg.mxu0
        %v2894 = vpack.c.bf16 %v2589, %v2585
        %v2895 = vpack.c.bf16 %v2591, %v2587
        %v2896 = vpack.c.bf16 %v2632, %v2628
        %v2897 = vpack.c.bf16 %v2634, %v2630
        %v2898 = vpack.c.bf16 %v2675, %v2671
        %v2899 = vpack.c.bf16 %v2677, %v2673
        %v2900 = vpack.c.bf16 %v2718, %v2714
        %v2901 = vpack.c.bf16 %v2720, %v2716
        %v2902 = vpack.c.bf16 %v2761, %v2757
        %v2903 = vpack.c.bf16 %v2763, %v2759
        %v2904 = vpack.c.bf16 %v2804, %v2800
        %v2905 = vpack.c.bf16 %v2806, %v2802
        %v2906 = vpack.c.bf16 %v2847, %v2843
        %v2907 = vpack.c.bf16 %v2849, %v2845
        %v2908 = vpack.c.bf16 %v2890, %v2886
        %v2909 = vpack.c.bf16 %v2892, %v2888
        %v2910 = vmul.bf16 %v1766, %v2894
        %v2911 = vmul.bf16 %v1767, %v2895
        %v2912 = vmul.bf16 %v1768, %v2896
        %v2913 = vmul.bf16 %v1769, %v2897
        %v2914 = vmul.bf16 %v1770, %v2898
        %v2915 = vmul.bf16 %v1771, %v2899
        %v2916 = vmul.bf16 %v1772, %v2900
        %v2917 = vmul.bf16 %v1773, %v2901
        %v2918 = vmul.bf16 %v1774, %v2902
        %v2919 = vmul.bf16 %v1775, %v2903
        %v2920 = vmul.bf16 %v1776, %v2904
        %v2921 = vmul.bf16 %v1777, %v2905
        %v2922 = vmul.bf16 %v1778, %v2906
        %v2923 = vmul.bf16 %v1779, %v2907
        %v2924 = vmul.bf16 %v1780, %v2908
        %v2925 = vmul.bf16 %v1781, %v2909
        %v2926 = vld [vmem:[#allocation7 + $0x800] sm:$0xff]
        %v2927 = vld [vmem:[#allocation7 + $0x808] sm:$0xff]
        %v2928 = vld [vmem:[#allocation7 + $0x810] sm:$0xff]
        %v2929 = vld [vmem:[#allocation7 + $0x818] sm:$0xff]
        %v2930 = vld [vmem:[#allocation7 + $0x820] sm:$0xff]
        %v2931 = vld [vmem:[#allocation7 + $0x828] sm:$0xff]
        %v2932 = vld [vmem:[#allocation7 + $0x830] sm:$0xff]
        %v2933 = vld [vmem:[#allocation7 + $0x838] sm:$0xff]
        %v2934 = vld [vmem:[#allocation7 + $0x840] sm:$0xff]
        %v2935 = vld [vmem:[#allocation7 + $0x848] sm:$0xff]
        %v2936 = vld [vmem:[#allocation7 + $0x850] sm:$0xff]
        %v2937 = vld [vmem:[#allocation7 + $0x858] sm:$0xff]
        %v2938 = vld [vmem:[#allocation7 + $0x860] sm:$0xff]
        %v2939 = vld [vmem:[#allocation7 + $0x868] sm:$0xff]
        %v2940 = vld [vmem:[#allocation7 + $0x870] sm:$0xff]
        %v2941 = vld [vmem:[#allocation7 + $0x878] sm:$0xff]
        %v2942 = vld [vmem:[#allocation7 + $0x880] sm:$0xff]
        %v2943 = vld [vmem:[#allocation7 + $0x888] sm:$0xff]
        %v2944 = vld [vmem:[#allocation7 + $0x890] sm:$0xff]
        %v2945 = vld [vmem:[#allocation7 + $0x898] sm:$0xff]
        %v2946 = vld [vmem:[#allocation7 + $0x8a0] sm:$0xff]
        %v2947 = vld [vmem:[#allocation7 + $0x8a8] sm:$0xff]
        %v2948 = vld [vmem:[#allocation7 + $0x8b0] sm:$0xff]
        %v2949 = vld [vmem:[#allocation7 + $0x8b8] sm:$0xff]
        %v2950 = vld [vmem:[#allocation7 + $0x8c0] sm:$0xff]
        %v2951 = vld [vmem:[#allocation7 + $0x8c8] sm:$0xff]
        %v2952 = vld [vmem:[#allocation7 + $0x8d0] sm:$0xff]
        %v2953 = vld [vmem:[#allocation7 + $0x8d8] sm:$0xff]
        %v2954 = vld [vmem:[#allocation7 + $0x8e0] sm:$0xff]
        %v2955 = vld [vmem:[#allocation7 + $0x8e8] sm:$0xff]
        %v2956 = vld [vmem:[#allocation7 + $0x8f0] sm:$0xff]
        %v2957 = vld [vmem:[#allocation7 + $0x8f8] sm:$0xff]
        %v2958 = vld [vmem:[#allocation7 + $0x900] sm:$0xff]
        %v2959 = vld [vmem:[#allocation7 + $0x908] sm:$0xff]
        %v2960 = vld [vmem:[#allocation7 + $0x910] sm:$0xff]
        %v2961 = vld [vmem:[#allocation7 + $0x918] sm:$0xff]
        %v2962 = vld [vmem:[#allocation7 + $0x920] sm:$0xff]
        %v2963 = vld [vmem:[#allocation7 + $0x928] sm:$0xff]
        %v2964 = vld [vmem:[#allocation7 + $0x930] sm:$0xff]
        %v2965 = vld [vmem:[#allocation7 + $0x938] sm:$0xff]
        %v2966 = vld [vmem:[#allocation7 + $0x940] sm:$0xff]
        %v2967 = vld [vmem:[#allocation7 + $0x948] sm:$0xff]
        %v2968 = vld [vmem:[#allocation7 + $0x950] sm:$0xff]
        %v2969 = vld [vmem:[#allocation7 + $0x958] sm:$0xff]
        %v2970 = vld [vmem:[#allocation7 + $0x960] sm:$0xff]
        %v2971 = vld [vmem:[#allocation7 + $0x968] sm:$0xff]
        %v2972 = vld [vmem:[#allocation7 + $0x970] sm:$0xff]
        %v2973 = vld [vmem:[#allocation7 + $0x978] sm:$0xff]
        %v2974 = vld [vmem:[#allocation7 + $0x980] sm:$0xff]
        %v2975 = vld [vmem:[#allocation7 + $0x988] sm:$0xff]
        %v2976 = vld [vmem:[#allocation7 + $0x990] sm:$0xff]
        %v2977 = vld [vmem:[#allocation7 + $0x998] sm:$0xff]
        %v2978 = vld [vmem:[#allocation7 + $0x9a0] sm:$0xff]
        %v2979 = vld [vmem:[#allocation7 + $0x9a8] sm:$0xff]
        %v2980 = vld [vmem:[#allocation7 + $0x9b0] sm:$0xff]
        %v2981 = vld [vmem:[#allocation7 + $0x9b8] sm:$0xff]
        %v2982 = vld [vmem:[#allocation7 + $0x9c0] sm:$0xff]
        %v2983 = vld [vmem:[#allocation7 + $0x9c8] sm:$0xff]
        %v2984 = vld [vmem:[#allocation7 + $0x9d0] sm:$0xff]
        %v2985 = vld [vmem:[#allocation7 + $0x9d8] sm:$0xff]
        %v2986 = vld [vmem:[#allocation7 + $0x9e0] sm:$0xff]
        %v2987 = vld [vmem:[#allocation7 + $0x9e8] sm:$0xff]
        %v2988 = vld [vmem:[#allocation7 + $0x9f0] sm:$0xff]
        %v2989 = vld [vmem:[#allocation7 + $0x9f8] sm:$0xff]
        %v2990 = vld [vmem:[#allocation7 + $0xa00] sm:$0xff]
        %v2991 = vld [vmem:[#allocation7 + $0xa08] sm:$0xff]
        %v2992 = vld [vmem:[#allocation7 + $0xa10] sm:$0xff]
        %v2993 = vld [vmem:[#allocation7 + $0xa18] sm:$0xff]
        %v2994 = vld [vmem:[#allocation7 + $0xa20] sm:$0xff]
        %v2995 = vld [vmem:[#allocation7 + $0xa28] sm:$0xff]
        %v2996 = vld [vmem:[#allocation7 + $0xa30] sm:$0xff]
        %v2997 = vld [vmem:[#allocation7 + $0xa38] sm:$0xff]
        %v2998 = vld [vmem:[#allocation7 + $0xa40] sm:$0xff]
        %v2999 = vld [vmem:[#allocation7 + $0xa48] sm:$0xff]
        %v3000 = vld [vmem:[#allocation7 + $0xa50] sm:$0xff]
        %v3001 = vld [vmem:[#allocation7 + $0xa58] sm:$0xff]
        %v3002 = vld [vmem:[#allocation7 + $0xa60] sm:$0xff]
        %v3003 = vld [vmem:[#allocation7 + $0xa68] sm:$0xff]
        %v3004 = vld [vmem:[#allocation7 + $0xa70] sm:$0xff]
        %v3005 = vld [vmem:[#allocation7 + $0xa78] sm:$0xff]
        %v3006 = vld [vmem:[#allocation7 + $0xa80] sm:$0xff]
        %v3007 = vld [vmem:[#allocation7 + $0xa88] sm:$0xff]
        %v3008 = vld [vmem:[#allocation7 + $0xa90] sm:$0xff]
        %v3009 = vld [vmem:[#allocation7 + $0xa98] sm:$0xff]
        %v3010 = vld [vmem:[#allocation7 + $0xaa0] sm:$0xff]
        %v3011 = vld [vmem:[#allocation7 + $0xaa8] sm:$0xff]
        %v3012 = vld [vmem:[#allocation7 + $0xab0] sm:$0xff]
        %v3013 = vld [vmem:[#allocation7 + $0xab8] sm:$0xff]
        %v3014 = vld [vmem:[#allocation7 + $0xac0] sm:$0xff]
        %v3015 = vld [vmem:[#allocation7 + $0xac8] sm:$0xff]
        %v3016 = vld [vmem:[#allocation7 + $0xad0] sm:$0xff]
        %v3017 = vld [vmem:[#allocation7 + $0xad8] sm:$0xff]
        %v3018 = vld [vmem:[#allocation7 + $0xae0] sm:$0xff]
        %v3019 = vld [vmem:[#allocation7 + $0xae8] sm:$0xff]
        %v3020 = vld [vmem:[#allocation7 + $0xaf0] sm:$0xff]
        %v3021 = vld [vmem:[#allocation7 + $0xaf8] sm:$0xff]
        %v3022 = vld [vmem:[#allocation7 + $0xb00] sm:$0xff]
        %v3023 = vld [vmem:[#allocation7 + $0xb08] sm:$0xff]
        %v3024 = vld [vmem:[#allocation7 + $0xb10] sm:$0xff]
        %v3025 = vld [vmem:[#allocation7 + $0xb18] sm:$0xff]
        %v3026 = vld [vmem:[#allocation7 + $0xb20] sm:$0xff]
        %v3027 = vld [vmem:[#allocation7 + $0xb28] sm:$0xff]
        %v3028 = vld [vmem:[#allocation7 + $0xb30] sm:$0xff]
        %v3029 = vld [vmem:[#allocation7 + $0xb38] sm:$0xff]
        %v3030 = vld [vmem:[#allocation7 + $0xb40] sm:$0xff]
        %v3031 = vld [vmem:[#allocation7 + $0xb48] sm:$0xff]
        %v3032 = vld [vmem:[#allocation7 + $0xb50] sm:$0xff]
        %v3033 = vld [vmem:[#allocation7 + $0xb58] sm:$0xff]
        %v3034 = vld [vmem:[#allocation7 + $0xb60] sm:$0xff]
        %v3035 = vld [vmem:[#allocation7 + $0xb68] sm:$0xff]
        %v3036 = vld [vmem:[#allocation7 + $0xb70] sm:$0xff]
        %v3037 = vld [vmem:[#allocation7 + $0xb78] sm:$0xff]
        %v3038 = vld [vmem:[#allocation7 + $0xb80] sm:$0xff]
        %v3039 = vld [vmem:[#allocation7 + $0xb88] sm:$0xff]
        %v3040 = vld [vmem:[#allocation7 + $0xb90] sm:$0xff]
        %v3041 = vld [vmem:[#allocation7 + $0xb98] sm:$0xff]
        %v3042 = vld [vmem:[#allocation7 + $0xba0] sm:$0xff]
        %v3043 = vld [vmem:[#allocation7 + $0xba8] sm:$0xff]
        %v3044 = vld [vmem:[#allocation7 + $0xbb0] sm:$0xff]
        %v3045 = vld [vmem:[#allocation7 + $0xbb8] sm:$0xff]
        %v3046 = vld [vmem:[#allocation7 + $0xbc0] sm:$0xff]
        %v3047 = vld [vmem:[#allocation7 + $0xbc8] sm:$0xff]
        %v3048 = vld [vmem:[#allocation7 + $0xbd0] sm:$0xff]
        %v3049 = vld [vmem:[#allocation7 + $0xbd8] sm:$0xff]
        %v3050 = vld [vmem:[#allocation7 + $0xbe0] sm:$0xff]
        %v3051 = vld [vmem:[#allocation7 + $0xbe8] sm:$0xff]
        %v3052 = vld [vmem:[#allocation7 + $0xbf0] sm:$0xff]
        %v3053 = vld [vmem:[#allocation7 + $0xbf8] sm:$0xff]
        %v3182 = vunpack.c.l.b16 %v2926
        %v3183 = vunpack.c.h.b16 %v2926
        %v3184 = vunpack.c.l.b16 %v2927
        %v3185 = vunpack.c.h.b16 %v2927
        %v3186 = vunpack.c.l.b16 %v2928
        %v3187 = vunpack.c.h.b16 %v2928
        %v3188 = vunpack.c.l.b16 %v2929
        %v3189 = vunpack.c.h.b16 %v2929
        %v3190 = vunpack.c.l.b16 %v2930
        %v3191 = vunpack.c.h.b16 %v2930
        %v3192 = vunpack.c.l.b16 %v2931
        %v3193 = vunpack.c.h.b16 %v2931
        %v3194 = vunpack.c.l.b16 %v2932
        %v3195 = vunpack.c.h.b16 %v2932
        %v3196 = vunpack.c.l.b16 %v2933
        %v3197 = vunpack.c.h.b16 %v2933
        %v3198 = vunpack.c.l.b16 %v2934
        %v3199 = vunpack.c.h.b16 %v2934
        %v3200 = vunpack.c.l.b16 %v2935
        %v3201 = vunpack.c.h.b16 %v2935
        %v3202 = vunpack.c.l.b16 %v2936
        %v3203 = vunpack.c.h.b16 %v2936
        %v3204 = vunpack.c.l.b16 %v2937
        %v3205 = vunpack.c.h.b16 %v2937
        %v3206 = vunpack.c.l.b16 %v2938
        %v3207 = vunpack.c.h.b16 %v2938
        %v3208 = vunpack.c.l.b16 %v2939
        %v3209 = vunpack.c.h.b16 %v2939
        %v3210 = vunpack.c.l.b16 %v2940
        %v3211 = vunpack.c.h.b16 %v2940
        %v3212 = vunpack.c.l.b16 %v2941
        %v3213 = vunpack.c.h.b16 %v2941
        %v3214 = vunpack.c.l.b16 %v2942
        %v3215 = vunpack.c.h.b16 %v2942
        %v3216 = vunpack.c.l.b16 %v2943
        %v3217 = vunpack.c.h.b16 %v2943
        %v3218 = vunpack.c.l.b16 %v2944
        %v3219 = vunpack.c.h.b16 %v2944
        %v3220 = vunpack.c.l.b16 %v2945
        %v3221 = vunpack.c.h.b16 %v2945
        %v3222 = vunpack.c.l.b16 %v2946
        %v3223 = vunpack.c.h.b16 %v2946
        %v3224 = vunpack.c.l.b16 %v2947
        %v3225 = vunpack.c.h.b16 %v2947
        %v3226 = vunpack.c.l.b16 %v2948
        %v3227 = vunpack.c.h.b16 %v2948
        %v3228 = vunpack.c.l.b16 %v2949
        %v3229 = vunpack.c.h.b16 %v2949
        %v3230 = vunpack.c.l.b16 %v2950
        %v3231 = vunpack.c.h.b16 %v2950
        %v3232 = vunpack.c.l.b16 %v2951
        %v3233 = vunpack.c.h.b16 %v2951
        %v3234 = vunpack.c.l.b16 %v2952
        %v3235 = vunpack.c.h.b16 %v2952
        %v3236 = vunpack.c.l.b16 %v2953
        %v3237 = vunpack.c.h.b16 %v2953
        %v3238 = vunpack.c.l.b16 %v2954
        %v3239 = vunpack.c.h.b16 %v2954
        %v3240 = vunpack.c.l.b16 %v2955
        %v3241 = vunpack.c.h.b16 %v2955
        %v3242 = vunpack.c.l.b16 %v2956
        %v3243 = vunpack.c.h.b16 %v2956
        %v3244 = vunpack.c.l.b16 %v2957
        %v3245 = vunpack.c.h.b16 %v2957
        %v3246 = vunpack.c.l.b16 %v2958
        %v3247 = vunpack.c.h.b16 %v2958
        %v3248 = vunpack.c.l.b16 %v2959
        %v3249 = vunpack.c.h.b16 %v2959
        %v3250 = vunpack.c.l.b16 %v2960
        %v3251 = vunpack.c.h.b16 %v2960
        %v3252 = vunpack.c.l.b16 %v2961
        %v3253 = vunpack.c.h.b16 %v2961
        %v3254 = vunpack.c.l.b16 %v2962
        %v3255 = vunpack.c.h.b16 %v2962
        %v3256 = vunpack.c.l.b16 %v2963
        %v3257 = vunpack.c.h.b16 %v2963
        %v3258 = vunpack.c.l.b16 %v2964
        %v3259 = vunpack.c.h.b16 %v2964
        %v3260 = vunpack.c.l.b16 %v2965
        %v3261 = vunpack.c.h.b16 %v2965
        %v3262 = vunpack.c.l.b16 %v2966
        %v3263 = vunpack.c.h.b16 %v2966
        %v3264 = vunpack.c.l.b16 %v2967
        %v3265 = vunpack.c.h.b16 %v2967
        %v3266 = vunpack.c.l.b16 %v2968
        %v3267 = vunpack.c.h.b16 %v2968
        %v3268 = vunpack.c.l.b16 %v2969
        %v3269 = vunpack.c.h.b16 %v2969
        %v3270 = vunpack.c.l.b16 %v2970
        %v3271 = vunpack.c.h.b16 %v2970
        %v3272 = vunpack.c.l.b16 %v2971
        %v3273 = vunpack.c.h.b16 %v2971
        %v3274 = vunpack.c.l.b16 %v2972
        %v3275 = vunpack.c.h.b16 %v2972
        %v3276 = vunpack.c.l.b16 %v2973
        %v3277 = vunpack.c.h.b16 %v2973
        %v3278 = vunpack.c.l.b16 %v2974
        %v3279 = vunpack.c.h.b16 %v2974
        %v3280 = vunpack.c.l.b16 %v2975
        %v3281 = vunpack.c.h.b16 %v2975
        %v3282 = vunpack.c.l.b16 %v2976
        %v3283 = vunpack.c.h.b16 %v2976
        %v3284 = vunpack.c.l.b16 %v2977
        %v3285 = vunpack.c.h.b16 %v2977
        %v3286 = vunpack.c.l.b16 %v2978
        %v3287 = vunpack.c.h.b16 %v2978
        %v3288 = vunpack.c.l.b16 %v2979
        %v3289 = vunpack.c.h.b16 %v2979
        %v3290 = vunpack.c.l.b16 %v2980
        %v3291 = vunpack.c.h.b16 %v2980
        %v3292 = vunpack.c.l.b16 %v2981
        %v3293 = vunpack.c.h.b16 %v2981
        %v3294 = vunpack.c.l.b16 %v2982
        %v3295 = vunpack.c.h.b16 %v2982
        %v3296 = vunpack.c.l.b16 %v2983
        %v3297 = vunpack.c.h.b16 %v2983
        %v3298 = vunpack.c.l.b16 %v2984
        %v3299 = vunpack.c.h.b16 %v2984
        %v3300 = vunpack.c.l.b16 %v2985
        %v3301 = vunpack.c.h.b16 %v2985
        %v3302 = vunpack.c.l.b16 %v2986
        %v3303 = vunpack.c.h.b16 %v2986
        %v3304 = vunpack.c.l.b16 %v2987
        %v3305 = vunpack.c.h.b16 %v2987
        %v3306 = vunpack.c.l.b16 %v2988
        %v3307 = vunpack.c.h.b16 %v2988
        %v3308 = vunpack.c.l.b16 %v2989
        %v3309 = vunpack.c.h.b16 %v2989
        %v3310 = vunpack.c.l.b16 %v2990
        %v3311 = vunpack.c.h.b16 %v2990
        %v3312 = vunpack.c.l.b16 %v2991
        %v3313 = vunpack.c.h.b16 %v2991
        %v3314 = vunpack.c.l.b16 %v2992
        %v3315 = vunpack.c.h.b16 %v2992
        %v3316 = vunpack.c.l.b16 %v2993
        %v3317 = vunpack.c.h.b16 %v2993
        %v3318 = vunpack.c.l.b16 %v2994
        %v3319 = vunpack.c.h.b16 %v2994
        %v3320 = vunpack.c.l.b16 %v2995
        %v3321 = vunpack.c.h.b16 %v2995
        %v3322 = vunpack.c.l.b16 %v2996
        %v3323 = vunpack.c.h.b16 %v2996
        %v3324 = vunpack.c.l.b16 %v2997
        %v3325 = vunpack.c.h.b16 %v2997
        %v3326 = vunpack.c.l.b16 %v2998
        %v3327 = vunpack.c.h.b16 %v2998
        %v3328 = vunpack.c.l.b16 %v2999
        %v3329 = vunpack.c.h.b16 %v2999
        %v3330 = vunpack.c.l.b16 %v3000
        %v3331 = vunpack.c.h.b16 %v3000
        %v3332 = vunpack.c.l.b16 %v3001
        %v3333 = vunpack.c.h.b16 %v3001
        %v3334 = vunpack.c.l.b16 %v3002
        %v3335 = vunpack.c.h.b16 %v3002
        %v3336 = vunpack.c.l.b16 %v3003
        %v3337 = vunpack.c.h.b16 %v3003
        %v3338 = vunpack.c.l.b16 %v3004
        %v3339 = vunpack.c.h.b16 %v3004
        %v3340 = vunpack.c.l.b16 %v3005
        %v3341 = vunpack.c.h.b16 %v3005
        %v3342 = vunpack.c.l.b16 %v3006
        %v3343 = vunpack.c.h.b16 %v3006
        %v3344 = vunpack.c.l.b16 %v3007
        %v3345 = vunpack.c.h.b16 %v3007
        %v3346 = vunpack.c.l.b16 %v3008
        %v3347 = vunpack.c.h.b16 %v3008
        %v3348 = vunpack.c.l.b16 %v3009
        %v3349 = vunpack.c.h.b16 %v3009
        %v3350 = vunpack.c.l.b16 %v3010
        %v3351 = vunpack.c.h.b16 %v3010
        %v3352 = vunpack.c.l.b16 %v3011
        %v3353 = vunpack.c.h.b16 %v3011
        %v3354 = vunpack.c.l.b16 %v3012
        %v3355 = vunpack.c.h.b16 %v3012
        %v3356 = vunpack.c.l.b16 %v3013
        %v3357 = vunpack.c.h.b16 %v3013
        %v3358 = vunpack.c.l.b16 %v3014
        %v3359 = vunpack.c.h.b16 %v3014
        %v3360 = vunpack.c.l.b16 %v3015
        %v3361 = vunpack.c.h.b16 %v3015
        %v3362 = vunpack.c.l.b16 %v3016
        %v3363 = vunpack.c.h.b16 %v3016
        %v3364 = vunpack.c.l.b16 %v3017
        %v3365 = vunpack.c.h.b16 %v3017
        %v3366 = vunpack.c.l.b16 %v3018
        %v3367 = vunpack.c.h.b16 %v3018
        %v3368 = vunpack.c.l.b16 %v3019
        %v3369 = vunpack.c.h.b16 %v3019
        %v3370 = vunpack.c.l.b16 %v3020
        %v3371 = vunpack.c.h.b16 %v3020
        %v3372 = vunpack.c.l.b16 %v3021
        %v3373 = vunpack.c.h.b16 %v3021
        %v3374 = vunpack.c.l.b16 %v3022
        %v3375 = vunpack.c.h.b16 %v3022
        %v3376 = vunpack.c.l.b16 %v3023
        %v3377 = vunpack.c.h.b16 %v3023
        %v3378 = vunpack.c.l.b16 %v3024
        %v3379 = vunpack.c.h.b16 %v3024
        %v3380 = vunpack.c.l.b16 %v3025
        %v3381 = vunpack.c.h.b16 %v3025
        %v3382 = vunpack.c.l.b16 %v3026
        %v3383 = vunpack.c.h.b16 %v3026
        %v3384 = vunpack.c.l.b16 %v3027
        %v3385 = vunpack.c.h.b16 %v3027
        %v3386 = vunpack.c.l.b16 %v3028
        %v3387 = vunpack.c.h.b16 %v3028
        %v3388 = vunpack.c.l.b16 %v3029
        %v3389 = vunpack.c.h.b16 %v3029
        %v3390 = vunpack.c.l.b16 %v3030
        %v3391 = vunpack.c.h.b16 %v3030
        %v3392 = vunpack.c.l.b16 %v3031
        %v3393 = vunpack.c.h.b16 %v3031
        %v3394 = vunpack.c.l.b16 %v3032
        %v3395 = vunpack.c.h.b16 %v3032
        %v3396 = vunpack.c.l.b16 %v3033
        %v3397 = vunpack.c.h.b16 %v3033
        %v3398 = vunpack.c.l.b16 %v3034
        %v3399 = vunpack.c.h.b16 %v3034
        %v3400 = vunpack.c.l.b16 %v3035
        %v3401 = vunpack.c.h.b16 %v3035
        %v3402 = vunpack.c.l.b16 %v3036
        %v3403 = vunpack.c.h.b16 %v3036
        %v3404 = vunpack.c.l.b16 %v3037
        %v3405 = vunpack.c.h.b16 %v3037
        %v3406 = vunpack.c.l.b16 %v3038
        %v3407 = vunpack.c.h.b16 %v3038
        %v3408 = vunpack.c.l.b16 %v3039
        %v3409 = vunpack.c.h.b16 %v3039
        %v3410 = vunpack.c.l.b16 %v3040
        %v3411 = vunpack.c.h.b16 %v3040
        %v3412 = vunpack.c.l.b16 %v3041
        %v3413 = vunpack.c.h.b16 %v3041
        %v3414 = vunpack.c.l.b16 %v3042
        %v3415 = vunpack.c.h.b16 %v3042
        %v3416 = vunpack.c.l.b16 %v3043
        %v3417 = vunpack.c.h.b16 %v3043
        %v3418 = vunpack.c.l.b16 %v3044
        %v3419 = vunpack.c.h.b16 %v3044
        %v3420 = vunpack.c.l.b16 %v3045
        %v3421 = vunpack.c.h.b16 %v3045
        %v3422 = vunpack.c.l.b16 %v3046
        %v3423 = vunpack.c.h.b16 %v3046
        %v3424 = vunpack.c.l.b16 %v3047
        %v3425 = vunpack.c.h.b16 %v3047
        %v3426 = vunpack.c.l.b16 %v3048
        %v3427 = vunpack.c.h.b16 %v3048
        %v3428 = vunpack.c.l.b16 %v3049
        %v3429 = vunpack.c.h.b16 %v3049
        %v3430 = vunpack.c.l.b16 %v3050
        %v3431 = vunpack.c.h.b16 %v3050
        %v3432 = vunpack.c.l.b16 %v3051
        %v3433 = vunpack.c.h.b16 %v3051
        %v3434 = vunpack.c.l.b16 %v3052
        %v3435 = vunpack.c.h.b16 %v3052
        %v3436 = vunpack.c.l.b16 %v3053
        %v3437 = vunpack.c.h.b16 %v3053
        %v3438 = vpack.c.b16 %v3198, %v3182
        %v3439 = vpack.c.b16 %v3199, %v3183
        %v3440 = vpack.c.b16 %v3200, %v3184
        %v3441 = vpack.c.b16 %v3201, %v3185
        %v3442 = vpack.c.b16 %v3202, %v3186
        %v3443 = vpack.c.b16 %v3203, %v3187
        %v3444 = vpack.c.b16 %v3204, %v3188
        %v3445 = vpack.c.b16 %v3205, %v3189
        %v3446 = vpack.c.b16 %v3206, %v3190
        %v3447 = vpack.c.b16 %v3207, %v3191
        %v3448 = vpack.c.b16 %v3208, %v3192
        %v3449 = vpack.c.b16 %v3209, %v3193
        %v3450 = vpack.c.b16 %v3210, %v3194
        %v3451 = vpack.c.b16 %v3211, %v3195
        %v3452 = vpack.c.b16 %v3212, %v3196
        %v3453 = vpack.c.b16 %v3213, %v3197
        %v3454 = vpack.c.b16 %v3230, %v3214
        %v3455 = vpack.c.b16 %v3231, %v3215
        %v3456 = vpack.c.b16 %v3232, %v3216
        %v3457 = vpack.c.b16 %v3233, %v3217
        %v3458 = vpack.c.b16 %v3234, %v3218
        %v3459 = vpack.c.b16 %v3235, %v3219
        %v3460 = vpack.c.b16 %v3236, %v3220
        %v3461 = vpack.c.b16 %v3237, %v3221
        %v3462 = vpack.c.b16 %v3238, %v3222
        %v3463 = vpack.c.b16 %v3239, %v3223
        %v3464 = vpack.c.b16 %v3240, %v3224
        %v3465 = vpack.c.b16 %v3241, %v3225
        %v3466 = vpack.c.b16 %v3242, %v3226
        %v3467 = vpack.c.b16 %v3243, %v3227
        %v3468 = vpack.c.b16 %v3244, %v3228
        %v3469 = vpack.c.b16 %v3245, %v3229
        %v3470 = vpack.c.b16 %v3262, %v3246
        %v3471 = vpack.c.b16 %v3263, %v3247
        %v3472 = vpack.c.b16 %v3264, %v3248
        %v3473 = vpack.c.b16 %v3265, %v3249
        %v3474 = vpack.c.b16 %v3266, %v3250
        %v3475 = vpack.c.b16 %v3267, %v3251
        %v3476 = vpack.c.b16 %v3268, %v3252
        %v3477 = vpack.c.b16 %v3269, %v3253
        %v3478 = vpack.c.b16 %v3270, %v3254
        %v3479 = vpack.c.b16 %v3271, %v3255
        %v3480 = vpack.c.b16 %v3272, %v3256
        %v3481 = vpack.c.b16 %v3273, %v3257
        %v3482 = vpack.c.b16 %v3274, %v3258
        %v3483 = vpack.c.b16 %v3275, %v3259
        %v3484 = vpack.c.b16 %v3276, %v3260
        %v3485 = vpack.c.b16 %v3277, %v3261
        %v3486 = vpack.c.b16 %v3294, %v3278
        %v3487 = vpack.c.b16 %v3295, %v3279
        %v3488 = vpack.c.b16 %v3296, %v3280
        %v3489 = vpack.c.b16 %v3297, %v3281
        %v3490 = vpack.c.b16 %v3298, %v3282
        %v3491 = vpack.c.b16 %v3299, %v3283
        %v3492 = vpack.c.b16 %v3300, %v3284
        %v3493 = vpack.c.b16 %v3301, %v3285
        %v3494 = vpack.c.b16 %v3302, %v3286
        %v3495 = vpack.c.b16 %v3303, %v3287
        %v3496 = vpack.c.b16 %v3304, %v3288
        %v3497 = vpack.c.b16 %v3305, %v3289
        %v3498 = vpack.c.b16 %v3306, %v3290
        %v3499 = vpack.c.b16 %v3307, %v3291
        %v3500 = vpack.c.b16 %v3308, %v3292
        %v3501 = vpack.c.b16 %v3309, %v3293
        %v3502 = vpack.c.b16 %v3326, %v3310
        %v3503 = vpack.c.b16 %v3327, %v3311
        %v3504 = vpack.c.b16 %v3328, %v3312
        %v3505 = vpack.c.b16 %v3329, %v3313
        %v3506 = vpack.c.b16 %v3330, %v3314
        %v3507 = vpack.c.b16 %v3331, %v3315
        %v3508 = vpack.c.b16 %v3332, %v3316
        %v3509 = vpack.c.b16 %v3333, %v3317
        %v3510 = vpack.c.b16 %v3334, %v3318
        %v3511 = vpack.c.b16 %v3335, %v3319
        %v3512 = vpack.c.b16 %v3336, %v3320
        %v3513 = vpack.c.b16 %v3337, %v3321
        %v3514 = vpack.c.b16 %v3338, %v3322
        %v3515 = vpack.c.b16 %v3339, %v3323
        %v3516 = vpack.c.b16 %v3340, %v3324
        %v3517 = vpack.c.b16 %v3341, %v3325
        %v3518 = vpack.c.b16 %v3358, %v3342
        %v3519 = vpack.c.b16 %v3359, %v3343
        %v3520 = vpack.c.b16 %v3360, %v3344
        %v3521 = vpack.c.b16 %v3361, %v3345
        %v3522 = vpack.c.b16 %v3362, %v3346
        %v3523 = vpack.c.b16 %v3363, %v3347
        %v3524 = vpack.c.b16 %v3364, %v3348
        %v3525 = vpack.c.b16 %v3365, %v3349
        %v3526 = vpack.c.b16 %v3366, %v3350
        %v3527 = vpack.c.b16 %v3367, %v3351
        %v3528 = vpack.c.b16 %v3368, %v3352
        %v3529 = vpack.c.b16 %v3369, %v3353
        %v3530 = vpack.c.b16 %v3370, %v3354
        %v3531 = vpack.c.b16 %v3371, %v3355
        %v3532 = vpack.c.b16 %v3372, %v3356
        %v3533 = vpack.c.b16 %v3373, %v3357
        %v3534 = vpack.c.b16 %v3390, %v3374
        %v3535 = vpack.c.b16 %v3391, %v3375
        %v3536 = vpack.c.b16 %v3392, %v3376
        %v3537 = vpack.c.b16 %v3393, %v3377
        %v3538 = vpack.c.b16 %v3394, %v3378
        %v3539 = vpack.c.b16 %v3395, %v3379
        %v3540 = vpack.c.b16 %v3396, %v3380
        %v3541 = vpack.c.b16 %v3397, %v3381
        %v3542 = vpack.c.b16 %v3398, %v3382
        %v3543 = vpack.c.b16 %v3399, %v3383
        %v3544 = vpack.c.b16 %v3400, %v3384
        %v3545 = vpack.c.b16 %v3401, %v3385
        %v3546 = vpack.c.b16 %v3402, %v3386
        %v3547 = vpack.c.b16 %v3403, %v3387
        %v3548 = vpack.c.b16 %v3404, %v3388
        %v3549 = vpack.c.b16 %v3405, %v3389
        %v3550 = vpack.c.b16 %v3422, %v3406
        %v3551 = vpack.c.b16 %v3423, %v3407
        %v3552 = vpack.c.b16 %v3424, %v3408
        %v3553 = vpack.c.b16 %v3425, %v3409
        %v3554 = vpack.c.b16 %v3426, %v3410
        %v3555 = vpack.c.b16 %v3427, %v3411
        %v3556 = vpack.c.b16 %v3428, %v3412
        %v3557 = vpack.c.b16 %v3429, %v3413
        %v3558 = vpack.c.b16 %v3430, %v3414
        %v3559 = vpack.c.b16 %v3431, %v3415
        %v3560 = vpack.c.b16 %v3432, %v3416
        %v3561 = vpack.c.b16 %v3433, %v3417
        %v3562 = vpack.c.b16 %v3434, %v3418
        %v3563 = vpack.c.b16 %v3435, %v3419
        %v3564 = vpack.c.b16 %v3436, %v3420
        %v3565 = vpack.c.b16 %v3437, %v3421
        %3694 = vmatprep.subr.bf16.mxu0 %v3439
        %3695 = vmatpush1.bf16.msra.mxu0 %v3438
        %3696 = vmatprep.subr.bf16.mxu0 %v3455
        %3697 = vmatpush1.bf16.msra.mxu0 %v3454
        %3698 = vmatprep.subr.bf16.mxu0 %v3471
        %3699 = vmatpush1.bf16.msra.mxu0 %v3470
        %3700 = vmatprep.subr.bf16.mxu0 %v3487
        %3701 = vmatpush1.bf16.msra.mxu0 %v3486
        %3702 = vmatprep.subr.bf16.mxu0 %v3503
        %3703 = vmatpush1.bf16.msra.mxu0 %v3502
        %3704 = vmatprep.subr.bf16.mxu0 %v3519
        %3705 = vmatpush1.bf16.msra.mxu0 %v3518
        %3706 = vmatprep.subr.bf16.mxu0 %v3535
        %3707 = vmatpush1.bf16.msra.mxu0 %v3534
        %3708 = vmatprep.subr.bf16.mxu0 %v3551
        %3709 = vmatpush1.bf16.msra.mxu0 %v3550
        %3710 = vmatprep.subr.bf16.mxu0 0
        %3711 = vmatpush1.bf16.msra.mxu0 0
        %3712 = vmatprep.subr.bf16.mxu0 0
        %3713 = vmatpush1.bf16.msra.mxu0 0
        %3714 = vmatprep.subr.bf16.mxu0 0
        %3715 = vmatpush1.bf16.msra.mxu0 0
        %3716 = vmatprep.subr.bf16.mxu0 0
        %3717 = vmatpush1.bf16.msra.mxu0 0
        %3718 = vmatprep.subr.bf16.mxu0 0
        %3719 = vmatpush1.bf16.msra.mxu0 0
        %3720 = vmatprep.subr.bf16.mxu0 0
        %3721 = vmatpush1.bf16.msra.mxu0 0
        %3722 = vmatprep.subr.bf16.mxu0 0
        %3723 = vmatpush1.bf16.msra.mxu0 0
        %3724 = vmatprep.subr.bf16.mxu0 0
        %3725 = vmatpush1.bf16.msra.mxu0 0
        %3726 = vmatprep.mubr.bf16.mxu0 0
        %3727 = vmatmul.mubr.bf16.gmra.mrb[0].mxu0 %v650
        %v3728 = vpop.f32.mrb[0].mxu0
        %v3729 = vadd.f32 0.0, %v3728
        %v3730 = vpop.f32.mrb[0].mxu0
        %v3731 = vadd.f32 0.0, %v3730
        %v3732 = vpop.f32.mrb[0].mxu0
        %v3733 = vadd.f32 0.0, %v3732
        %v3734 = vpop.f32.mrb[0].mxu0
        %v3735 = vadd.f32 0.0, %v3734
        %3736 = vdwg.mxu0
        %3737 = vmatprep.subr.bf16.mxu0 %v3441
        %3738 = vmatpush1.bf16.msra.mxu0 %v3440
        %3739 = vmatprep.subr.bf16.mxu0 %v3457
        %3740 = vmatpush1.bf16.msra.mxu0 %v3456
        %3741 = vmatprep.subr.bf16.mxu0 %v3473
        %3742 = vmatpush1.bf16.msra.mxu0 %v3472
        %3743 = vmatprep.subr.bf16.mxu0 %v3489
        %3744 = vmatpush1.bf16.msra.mxu0 %v3488
        %3745 = vmatprep.subr.bf16.mxu0 %v3505
        %3746 = vmatpush1.bf16.msra.mxu0 %v3504
        %3747 = vmatprep.subr.bf16.mxu0 %v3521
        %3748 = vmatpush1.bf16.msra.mxu0 %v3520
        %3749 = vmatprep.subr.bf16.mxu0 %v3537
        %3750 = vmatpush1.bf16.msra.mxu0 %v3536
        %3751 = vmatprep.subr.bf16.mxu0 %v3553
        %3752 = vmatpush1.bf16.msra.mxu0 %v3552
        %3753 = vmatprep.subr.bf16.mxu0 0
        %3754 = vmatpush1.bf16.msra.mxu0 0
        %3755 = vmatprep.subr.bf16.mxu0 0
        %3756 = vmatpush1.bf16.msra.mxu0 0
        %3757 = vmatprep.subr.bf16.mxu0 0
        %3758 = vmatpush1.bf16.msra.mxu0 0
        %3759 = vmatprep.subr.bf16.mxu0 0
        %3760 = vmatpush1.bf16.msra.mxu0 0
        %3761 = vmatprep.subr.bf16.mxu0 0
        %3762 = vmatpush1.bf16.msra.mxu0 0
        %3763 = vmatprep.subr.bf16.mxu0 0
        %3764 = vmatpush1.bf16.msra.mxu0 0
        %3765 = vmatprep.subr.bf16.mxu0 0
        %3766 = vmatpush1.bf16.msra.mxu0 0
        %3767 = vmatprep.subr.bf16.mxu0 0
        %3768 = vmatpush1.bf16.msra.mxu0 0
        %3769 = vmatprep.mubr.bf16.mxu0 0
        %3770 = vmatmul.mubr.bf16.gmra.mrb[0].mxu0 %v650
        %v3771 = vpop.f32.mrb[0].mxu0
        %v3772 = vadd.f32 0.0, %v3771
        %v3773 = vpop.f32.mrb[0].mxu0
        %v3774 = vadd.f32 0.0, %v3773
        %v3775 = vpop.f32.mrb[0].mxu0
        %v3776 = vadd.f32 0.0, %v3775
        %v3777 = vpop.f32.mrb[0].mxu0
        %v3778 = vadd.f32 0.0, %v3777
        %3779 = vdwg.mxu0
        %3780 = vmatprep.subr.bf16.mxu0 %v3443
        %3781 = vmatpush1.bf16.msra.mxu0 %v3442
        %3782 = vmatprep.subr.bf16.mxu0 %v3459
        %3783 = vmatpush1.bf16.msra.mxu0 %v3458
        %3784 = vmatprep.subr.bf16.mxu0 %v3475
        %3785 = vmatpush1.bf16.msra.mxu0 %v3474
        %3786 = vmatprep.subr.bf16.mxu0 %v3491
        %3787 = vmatpush1.bf16.msra.mxu0 %v3490
        %3788 = vmatprep.subr.bf16.mxu0 %v3507
        %3789 = vmatpush1.bf16.msra.mxu0 %v3506
        %3790 = vmatprep.subr.bf16.mxu0 %v3523
        %3791 = vmatpush1.bf16.msra.mxu0 %v3522
        %3792 = vmatprep.subr.bf16.mxu0 %v3539
        %3793 = vmatpush1.bf16.msra.mxu0 %v3538
        %3794 = vmatprep.subr.bf16.mxu0 %v3555
        %3795 = vmatpush1.bf16.msra.mxu0 %v3554
        %3796 = vmatprep.subr.bf16.mxu0 0
        %3797 = vmatpush1.bf16.msra.mxu0 0
        %3798 = vmatprep.subr.bf16.mxu0 0
        %3799 = vmatpush1.bf16.msra.mxu0 0
        %3800 = vmatprep.subr.bf16.mxu0 0
        %3801 = vmatpush1.bf16.msra.mxu0 0
        %3802 = vmatprep.subr.bf16.mxu0 0
        %3803 = vmatpush1.bf16.msra.mxu0 0
        %3804 = vmatprep.subr.bf16.mxu0 0
        %3805 = vmatpush1.bf16.msra.mxu0 0
        %3806 = vmatprep.subr.bf16.mxu0 0
        %3807 = vmatpush1.bf16.msra.mxu0 0
        %3808 = vmatprep.subr.bf16.mxu0 0
        %3809 = vmatpush1.bf16.msra.mxu0 0
        %3810 = vmatprep.subr.bf16.mxu0 0
        %3811 = vmatpush1.bf16.msra.mxu0 0
        %3812 = vmatprep.mubr.bf16.mxu0 0
        %3813 = vmatmul.mubr.bf16.gmra.mrb[0].mxu0 %v650
        %v3814 = vpop.f32.mrb[0].mxu0
        %v3815 = vadd.f32 0.0, %v3814
        %v3816 = vpop.f32.mrb[0].mxu0
        %v3817 = vadd.f32 0.0, %v3816
        %v3818 = vpop.f32.mrb[0].mxu0
        %v3819 = vadd.f32 0.0, %v3818
        %v3820 = vpop.f32.mrb[0].mxu0
        %v3821 = vadd.f32 0.0, %v3820
        %3822 = vdwg.mxu0
        %3823 = vmatprep.subr.bf16.mxu0 %v3445
        %3824 = vmatpush1.bf16.msra.mxu0 %v3444
        %3825 = vmatprep.subr.bf16.mxu0 %v3461
        %3826 = vmatpush1.bf16.msra.mxu0 %v3460
        %3827 = vmatprep.subr.bf16.mxu0 %v3477
        %3828 = vmatpush1.bf16.msra.mxu0 %v3476
        %3829 = vmatprep.subr.bf16.mxu0 %v3493
        %3830 = vmatpush1.bf16.msra.mxu0 %v3492
        %3831 = vmatprep.subr.bf16.mxu0 %v3509
        %3832 = vmatpush1.bf16.msra.mxu0 %v3508
        %3833 = vmatprep.subr.bf16.mxu0 %v3525
        %3834 = vmatpush1.bf16.msra.mxu0 %v3524
        %3835 = vmatprep.subr.bf16.mxu0 %v3541
        %3836 = vmatpush1.bf16.msra.mxu0 %v3540
        %3837 = vmatprep.subr.bf16.mxu0 %v3557
        %3838 = vmatpush1.bf16.msra.mxu0 %v3556
        %3839 = vmatprep.subr.bf16.mxu0 0
        %3840 = vmatpush1.bf16.msra.mxu0 0
        %3841 = vmatprep.subr.bf16.mxu0 0
        %3842 = vmatpush1.bf16.msra.mxu0 0
        %3843 = vmatprep.subr.bf16.mxu0 0
        %3844 = vmatpush1.bf16.msra.mxu0 0
        %3845 = vmatprep.subr.bf16.mxu0 0
        %3846 = vmatpush1.bf16.msra.mxu0 0
        %3847 = vmatprep.subr.bf16.mxu0 0
        %3848 = vmatpush1.bf16.msra.mxu0 0
        %3849 = vmatprep.subr.bf16.mxu0 0
        %3850 = vmatpush1.bf16.msra.mxu0 0
        %3851 = vmatprep.subr.bf16.mxu0 0
        %3852 = vmatpush1.bf16.msra.mxu0 0
        %3853 = vmatprep.subr.bf16.mxu0 0
        %3854 = vmatpush1.bf16.msra.mxu0 0
        %3855 = vmatprep.mubr.bf16.mxu0 0
        %3856 = vmatmul.mubr.bf16.gmra.mrb[0].mxu0 %v650
        %v3857 = vpop.f32.mrb[0].mxu0
        %v3858 = vadd.f32 0.0, %v3857
        %v3859 = vpop.f32.mrb[0].mxu0
        %v3860 = vadd.f32 0.0, %v3859
        %v3861 = vpop.f32.mrb[0].mxu0
        %v3862 = vadd.f32 0.0, %v3861
        %v3863 = vpop.f32.mrb[0].mxu0
        %v3864 = vadd.f32 0.0, %v3863
        %3865 = vdwg.mxu0
        %3866 = vmatprep.subr.bf16.mxu0 %v3447
        %3867 = vmatpush1.bf16.msra.mxu0 %v3446
        %3868 = vmatprep.subr.bf16.mxu0 %v3463
        %3869 = vmatpush1.bf16.msra.mxu0 %v3462
        %3870 = vmatprep.subr.bf16.mxu0 %v3479
        %3871 = vmatpush1.bf16.msra.mxu0 %v3478
        %3872 = vmatprep.subr.bf16.mxu0 %v3495
        %3873 = vmatpush1.bf16.msra.mxu0 %v3494
        %3874 = vmatprep.subr.bf16.mxu0 %v3511
        %3875 = vmatpush1.bf16.msra.mxu0 %v3510
        %3876 = vmatprep.subr.bf16.mxu0 %v3527
        %3877 = vmatpush1.bf16.msra.mxu0 %v3526
        %3878 = vmatprep.subr.bf16.mxu0 %v3543
        %3879 = vmatpush1.bf16.msra.mxu0 %v3542
        %3880 = vmatprep.subr.bf16.mxu0 %v3559
        %3881 = vmatpush1.bf16.msra.mxu0 %v3558
        %3882 = vmatprep.subr.bf16.mxu0 0
        %3883 = vmatpush1.bf16.msra.mxu0 0
        %3884 = vmatprep.subr.bf16.mxu0 0
        %3885 = vmatpush1.bf16.msra.mxu0 0
        %3886 = vmatprep.subr.bf16.mxu0 0
        %3887 = vmatpush1.bf16.msra.mxu0 0
        %3888 = vmatprep.subr.bf16.mxu0 0
        %3889 = vmatpush1.bf16.msra.mxu0 0
        %3890 = vmatprep.subr.bf16.mxu0 0
        %3891 = vmatpush1.bf16.msra.mxu0 0
        %3892 = vmatprep.subr.bf16.mxu0 0
        %3893 = vmatpush1.bf16.msra.mxu0 0
        %3894 = vmatprep.subr.bf16.mxu0 0
        %3895 = vmatpush1.bf16.msra.mxu0 0
        %3896 = vmatprep.subr.bf16.mxu0 0
        %3897 = vmatpush1.bf16.msra.mxu0 0
        %3898 = vmatprep.mubr.bf16.mxu0 0
        %3899 = vmatmul.mubr.bf16.gmra.mrb[0].mxu0 %v650
        %v3900 = vpop.f32.mrb[0].mxu0
        %v3901 = vadd.f32 0.0, %v3900
        %v3902 = vpop.f32.mrb[0].mxu0
        %v3903 = vadd.f32 0.0, %v3902
        %v3904 = vpop.f32.mrb[0].mxu0
        %v3905 = vadd.f32 0.0, %v3904
        %v3906 = vpop.f32.mrb[0].mxu0
        %v3907 = vadd.f32 0.0, %v3906
        %3908 = vdwg.mxu0
        %3909 = vmatprep.subr.bf16.mxu0 %v3449
        %3910 = vmatpush1.bf16.msra.mxu0 %v3448
        %3911 = vmatprep.subr.bf16.mxu0 %v3465
        %3912 = vmatpush1.bf16.msra.mxu0 %v3464
        %3913 = vmatprep.subr.bf16.mxu0 %v3481
        %3914 = vmatpush1.bf16.msra.mxu0 %v3480
        %3915 = vmatprep.subr.bf16.mxu0 %v3497
        %3916 = vmatpush1.bf16.msra.mxu0 %v3496
        %3917 = vmatprep.subr.bf16.mxu0 %v3513
        %3918 = vmatpush1.bf16.msra.mxu0 %v3512
        %3919 = vmatprep.subr.bf16.mxu0 %v3529
        %3920 = vmatpush1.bf16.msra.mxu0 %v3528
        %3921 = vmatprep.subr.bf16.mxu0 %v3545
        %3922 = vmatpush1.bf16.msra.mxu0 %v3544
        %3923 = vmatprep.subr.bf16.mxu0 %v3561
        %3924 = vmatpush1.bf16.msra.mxu0 %v3560
        %3925 = vmatprep.subr.bf16.mxu0 0
        %3926 = vmatpush1.bf16.msra.mxu0 0
        %3927 = vmatprep.subr.bf16.mxu0 0
        %3928 = vmatpush1.bf16.msra.mxu0 0
        %3929 = vmatprep.subr.bf16.mxu0 0
        %3930 = vmatpush1.bf16.msra.mxu0 0
        %3931 = vmatprep.subr.bf16.mxu0 0
        %3932 = vmatpush1.bf16.msra.mxu0 0
        %3933 = vmatprep.subr.bf16.mxu0 0
        %3934 = vmatpush1.bf16.msra.mxu0 0
        %3935 = vmatprep.subr.bf16.mxu0 0
        %3936 = vmatpush1.bf16.msra.mxu0 0
        %3937 = vmatprep.subr.bf16.mxu0 0
        %3938 = vmatpush1.bf16.msra.mxu0 0
        %3939 = vmatprep.subr.bf16.mxu0 0
        %3940 = vmatpush1.bf16.msra.mxu0 0
        %3941 = vmatprep.mubr.bf16.mxu0 0
        %3942 = vmatmul.mubr.bf16.gmra.mrb[0].mxu0 %v650
        %v3943 = vpop.f32.mrb[0].mxu0
        %v3944 = vadd.f32 0.0, %v3943
        %v3945 = vpop.f32.mrb[0].mxu0
        %v3946 = vadd.f32 0.0, %v3945
        %v3947 = vpop.f32.mrb[0].mxu0
        %v3948 = vadd.f32 0.0, %v3947
        %v3949 = vpop.f32.mrb[0].mxu0
        %v3950 = vadd.f32 0.0, %v3949
        %3951 = vdwg.mxu0
        %3952 = vmatprep.subr.bf16.mxu0 %v3451
        %3953 = vmatpush1.bf16.msra.mxu0 %v3450
        %3954 = vmatprep.subr.bf16.mxu0 %v3467
        %3955 = vmatpush1.bf16.msra.mxu0 %v3466
        %3956 = vmatprep.subr.bf16.mxu0 %v3483
        %3957 = vmatpush1.bf16.msra.mxu0 %v3482
        %3958 = vmatprep.subr.bf16.mxu0 %v3499
        %3959 = vmatpush1.bf16.msra.mxu0 %v3498
        %3960 = vmatprep.subr.bf16.mxu0 %v3515
        %3961 = vmatpush1.bf16.msra.mxu0 %v3514
        %3962 = vmatprep.subr.bf16.mxu0 %v3531
        %3963 = vmatpush1.bf16.msra.mxu0 %v3530
        %3964 = vmatprep.subr.bf16.mxu0 %v3547
        %3965 = vmatpush1.bf16.msra.mxu0 %v3546
        %3966 = vmatprep.subr.bf16.mxu0 %v3563
        %3967 = vmatpush1.bf16.msra.mxu0 %v3562
        %3968 = vmatprep.subr.bf16.mxu0 0
        %3969 = vmatpush1.bf16.msra.mxu0 0
        %3970 = vmatprep.subr.bf16.mxu0 0
        %3971 = vmatpush1.bf16.msra.mxu0 0
        %3972 = vmatprep.subr.bf16.mxu0 0
        %3973 = vmatpush1.bf16.msra.mxu0 0
        %3974 = vmatprep.subr.bf16.mxu0 0
        %3975 = vmatpush1.bf16.msra.mxu0 0
        %3976 = vmatprep.subr.bf16.mxu0 0
        %3977 = vmatpush1.bf16.msra.mxu0 0
        %3978 = vmatprep.subr.bf16.mxu0 0
        %3979 = vmatpush1.bf16.msra.mxu0 0
        %3980 = vmatprep.subr.bf16.mxu0 0
        %3981 = vmatpush1.bf16.msra.mxu0 0
        %3982 = vmatprep.subr.bf16.mxu0 0
        %3983 = vmatpush1.bf16.msra.mxu0 0
        %3984 = vmatprep.mubr.bf16.mxu0 0
        %3985 = vmatmul.mubr.bf16.gmra.mrb[0].mxu0 %v650
        %v3986 = vpop.f32.mrb[0].mxu0
        %v3987 = vadd.f32 0.0, %v3986
        %v3988 = vpop.f32.mrb[0].mxu0
        %v3989 = vadd.f32 0.0, %v3988
        %v3990 = vpop.f32.mrb[0].mxu0
        %v3991 = vadd.f32 0.0, %v3990
        %v3992 = vpop.f32.mrb[0].mxu0
        %v3993 = vadd.f32 0.0, %v3992
        %3994 = vdwg.mxu0
        %3995 = vmatprep.subr.bf16.mxu0 %v3453
        %3996 = vmatpush1.bf16.msra.mxu0 %v3452
        %3997 = vmatprep.subr.bf16.mxu0 %v3469
        %3998 = vmatpush1.bf16.msra.mxu0 %v3468
        %3999 = vmatprep.subr.bf16.mxu0 %v3485
        %4000 = vmatpush1.bf16.msra.mxu0 %v3484
        %4001 = vmatprep.subr.bf16.mxu0 %v3501
        %4002 = vmatpush1.bf16.msra.mxu0 %v3500
        %4003 = vmatprep.subr.bf16.mxu0 %v3517
        %4004 = vmatpush1.bf16.msra.mxu0 %v3516
        %4005 = vmatprep.subr.bf16.mxu0 %v3533
        %4006 = vmatpush1.bf16.msra.mxu0 %v3532
        %4007 = vmatprep.subr.bf16.mxu0 %v3549
        %4008 = vmatpush1.bf16.msra.mxu0 %v3548
        %4009 = vmatprep.subr.bf16.mxu0 %v3565
        %4010 = vmatpush1.bf16.msra.mxu0 %v3564
        %4011 = vmatprep.subr.bf16.mxu0 0
        %4012 = vmatpush1.bf16.msra.mxu0 0
        %4013 = vmatprep.subr.bf16.mxu0 0
        %4014 = vmatpush1.bf16.msra.mxu0 0
        %4015 = vmatprep.subr.bf16.mxu0 0
        %4016 = vmatpush1.bf16.msra.mxu0 0
        %4017 = vmatprep.subr.bf16.mxu0 0
        %4018 = vmatpush1.bf16.msra.mxu0 0
        %4019 = vmatprep.subr.bf16.mxu0 0
        %4020 = vmatpush1.bf16.msra.mxu0 0
        %4021 = vmatprep.subr.bf16.mxu0 0
        %4022 = vmatpush1.bf16.msra.mxu0 0
        %4023 = vmatprep.subr.bf16.mxu0 0
        %4024 = vmatpush1.bf16.msra.mxu0 0
        %4025 = vmatprep.subr.bf16.mxu0 0
        %4026 = vmatpush1.bf16.msra.mxu0 0
        %4027 = vmatprep.mubr.bf16.mxu0 0
        %4028 = vmatmul.mubr.bf16.gmra.mrb[0].mxu0 %v650
        %v4029 = vpop.f32.mrb[0].mxu0
        %v4030 = vadd.f32 0.0, %v4029
        %v4031 = vpop.f32.mrb[0].mxu0
        %v4032 = vadd.f32 0.0, %v4031
        %v4033 = vpop.f32.mrb[0].mxu0
        %v4034 = vadd.f32 0.0, %v4033
        %v4035 = vpop.f32.mrb[0].mxu0
        %v4036 = vadd.f32 0.0, %v4035
        %4037 = vdwg.mxu0
        %v4038 = vpack.c.bf16 %v3733, %v3729
        %v4039 = vpack.c.bf16 %v3735, %v3731
        %v4040 = vpack.c.bf16 %v3776, %v3772
        %v4041 = vpack.c.bf16 %v3778, %v3774
        %v4042 = vpack.c.bf16 %v3819, %v3815
        %v4043 = vpack.c.bf16 %v3821, %v3817
        %v4044 = vpack.c.bf16 %v3862, %v3858
        %v4045 = vpack.c.bf16 %v3864, %v3860
        %v4046 = vpack.c.bf16 %v3905, %v3901
        %v4047 = vpack.c.bf16 %v3907, %v3903
        %v4048 = vpack.c.bf16 %v3948, %v3944
        %v4049 = vpack.c.bf16 %v3950, %v3946
        %v4050 = vpack.c.bf16 %v3991, %v3987
        %v4051 = vpack.c.bf16 %v3993, %v3989
        %v4052 = vpack.c.bf16 %v4034, %v4030
        %v4053 = vpack.c.bf16 %v4036, %v4032
        %v4054 = vmul.bf16 %v2910, %v4038
        %v4055 = vmul.bf16 %v2911, %v4039
        %v4056 = vmul.bf16 %v2912, %v4040
        %v4057 = vmul.bf16 %v2913, %v4041
        %v4058 = vmul.bf16 %v2914, %v4042
        %v4059 = vmul.bf16 %v2915, %v4043
        %v4060 = vmul.bf16 %v2916, %v4044
        %v4061 = vmul.bf16 %v2917, %v4045
        %v4062 = vmul.bf16 %v2918, %v4046
        %v4063 = vmul.bf16 %v2919, %v4047
        %v4064 = vmul.bf16 %v2920, %v4048
        %v4065 = vmul.bf16 %v2921, %v4049
        %v4066 = vmul.bf16 %v2922, %v4050
        %v4067 = vmul.bf16 %v2923, %v4051
        %v4068 = vmul.bf16 %v2924, %v4052
        %v4069 = vmul.bf16 %v2925, %v4053
        %v4070 = vld [vmem:[#allocation7 + $0xc00] sm:$0xff]
        %v4071 = vld [vmem:[#allocation7 + $0xc08] sm:$0xff]
        %v4072 = vld [vmem:[#allocation7 + $0xc10] sm:$0xff]
        %v4073 = vld [vmem:[#allocation7 + $0xc18] sm:$0xff]
        %v4074 = vld [vmem:[#allocation7 + $0xc20] sm:$0xff]
        %v4075 = vld [vmem:[#allocation7 + $0xc28] sm:$0xff]
        %v4076 = vld [vmem:[#allocation7 + $0xc30] sm:$0xff]
        %v4077 = vld [vmem:[#allocation7 + $0xc38] sm:$0xff]
        %v4078 = vld [vmem:[#allocation7 + $0xc40] sm:$0xff]
        %v4079 = vld [vmem:[#allocation7 + $0xc48] sm:$0xff]
        %v4080 = vld [vmem:[#allocation7 + $0xc50] sm:$0xff]
        %v4081 = vld [vmem:[#allocation7 + $0xc58] sm:$0xff]
        %v4082 = vld [vmem:[#allocation7 + $0xc60] sm:$0xff]
        %v4083 = vld [vmem:[#allocation7 + $0xc68] sm:$0xff]
        %v4084 = vld [vmem:[#allocation7 + $0xc70] sm:$0xff]
        %v4085 = vld [vmem:[#allocation7 + $0xc78] sm:$0xff]
        %v4086 = vld [vmem:[#allocation7 + $0xc80] sm:$0xff]
        %v4087 = vld [vmem:[#allocation7 + $0xc88] sm:$0xff]
        %v4088 = vld [vmem:[#allocation7 + $0xc90] sm:$0xff]
        %v4089 = vld [vmem:[#allocation7 + $0xc98] sm:$0xff]
        %v4090 = vld [vmem:[#allocation7 + $0xca0] sm:$0xff]
        %v4091 = vld [vmem:[#allocation7 + $0xca8] sm:$0xff]
        %v4092 = vld [vmem:[#allocation7 + $0xcb0] sm:$0xff]
        %v4093 = vld [vmem:[#allocation7 + $0xcb8] sm:$0xff]
        %v4094 = vld [vmem:[#allocation7 + $0xcc0] sm:$0xff]
        %v4095 = vld [vmem:[#allocation7 + $0xcc8] sm:$0xff]
        %v4096 = vld [vmem:[#allocation7 + $0xcd0] sm:$0xff]
        %v4097 = vld [vmem:[#allocation7 + $0xcd8] sm:$0xff]
        %v4098 = vld [vmem:[#allocation7 + $0xce0] sm:$0xff]
        %v4099 = vld [vmem:[#allocation7 + $0xce8] sm:$0xff]
        %v4100 = vld [vmem:[#allocation7 + $0xcf0] sm:$0xff]
        %v4101 = vld [vmem:[#allocation7 + $0xcf8] sm:$0xff]
        %v4102 = vld [vmem:[#allocation7 + $0xd00] sm:$0xff]
        %v4103 = vld [vmem:[#allocation7 + $0xd08] sm:$0xff]
        %v4104 = vld [vmem:[#allocation7 + $0xd10] sm:$0xff]
        %v4105 = vld [vmem:[#allocation7 + $0xd18] sm:$0xff]
        %v4106 = vld [vmem:[#allocation7 + $0xd20] sm:$0xff]
        %v4107 = vld [vmem:[#allocation7 + $0xd28] sm:$0xff]
        %v4108 = vld [vmem:[#allocation7 + $0xd30] sm:$0xff]
        %v4109 = vld [vmem:[#allocation7 + $0xd38] sm:$0xff]
        %v4110 = vld [vmem:[#allocation7 + $0xd40] sm:$0xff]
        %v4111 = vld [vmem:[#allocation7 + $0xd48] sm:$0xff]
        %v4112 = vld [vmem:[#allocation7 + $0xd50] sm:$0xff]
        %v4113 = vld [vmem:[#allocation7 + $0xd58] sm:$0xff]
        %v4114 = vld [vmem:[#allocation7 + $0xd60] sm:$0xff]
        %v4115 = vld [vmem:[#allocation7 + $0xd68] sm:$0xff]
        %v4116 = vld [vmem:[#allocation7 + $0xd70] sm:$0xff]
        %v4117 = vld [vmem:[#allocation7 + $0xd78] sm:$0xff]
        %v4118 = vld [vmem:[#allocation7 + $0xd80] sm:$0xff]
        %v4119 = vld [vmem:[#allocation7 + $0xd88] sm:$0xff]
        %v4120 = vld [vmem:[#allocation7 + $0xd90] sm:$0xff]
        %v4121 = vld [vmem:[#allocation7 + $0xd98] sm:$0xff]
        %v4122 = vld [vmem:[#allocation7 + $0xda0] sm:$0xff]
        %v4123 = vld [vmem:[#allocation7 + $0xda8] sm:$0xff]
        %v4124 = vld [vmem:[#allocation7 + $0xdb0] sm:$0xff]
        %v4125 = vld [vmem:[#allocation7 + $0xdb8] sm:$0xff]
        %v4126 = vld [vmem:[#allocation7 + $0xdc0] sm:$0xff]
        %v4127 = vld [vmem:[#allocation7 + $0xdc8] sm:$0xff]
        %v4128 = vld [vmem:[#allocation7 + $0xdd0] sm:$0xff]
        %v4129 = vld [vmem:[#allocation7 + $0xdd8] sm:$0xff]
        %v4130 = vld [vmem:[#allocation7 + $0xde0] sm:$0xff]
        %v4131 = vld [vmem:[#allocation7 + $0xde8] sm:$0xff]
        %v4132 = vld [vmem:[#allocation7 + $0xdf0] sm:$0xff]
        %v4133 = vld [vmem:[#allocation7 + $0xdf8] sm:$0xff]
        %v4134 = vld [vmem:[#allocation7 + $0xe00] sm:$0xff]
        %v4135 = vld [vmem:[#allocation7 + $0xe08] sm:$0xff]
        %v4136 = vld [vmem:[#allocation7 + $0xe10] sm:$0xff]
        %v4137 = vld [vmem:[#allocation7 + $0xe18] sm:$0xff]
        %v4138 = vld [vmem:[#allocation7 + $0xe20] sm:$0xff]
        %v4139 = vld [vmem:[#allocation7 + $0xe28] sm:$0xff]
        %v4140 = vld [vmem:[#allocation7 + $0xe30] sm:$0xff]
        %v4141 = vld [vmem:[#allocation7 + $0xe38] sm:$0xff]
        %v4142 = vld [vmem:[#allocation7 + $0xe40] sm:$0xff]
        %v4143 = vld [vmem:[#allocation7 + $0xe48] sm:$0xff]
        %v4144 = vld [vmem:[#allocation7 + $0xe50] sm:$0xff]
        %v4145 = vld [vmem:[#allocation7 + $0xe58] sm:$0xff]
        %v4146 = vld [vmem:[#allocation7 + $0xe60] sm:$0xff]
        %v4147 = vld [vmem:[#allocation7 + $0xe68] sm:$0xff]
        %v4148 = vld [vmem:[#allocation7 + $0xe70] sm:$0xff]
        %v4149 = vld [vmem:[#allocation7 + $0xe78] sm:$0xff]
        %v4150 = vld [vmem:[#allocation7 + $0xe80] sm:$0xff]
        %v4151 = vld [vmem:[#allocation7 + $0xe88] sm:$0xff]
        %v4152 = vld [vmem:[#allocation7 + $0xe90] sm:$0xff]
        %v4153 = vld [vmem:[#allocation7 + $0xe98] sm:$0xff]
        %v4154 = vld [vmem:[#allocation7 + $0xea0] sm:$0xff]
        %v4155 = vld [vmem:[#allocation7 + $0xea8] sm:$0xff]
        %v4156 = vld [vmem:[#allocation7 + $0xeb0] sm:$0xff]
        %v4157 = vld [vmem:[#allocation7 + $0xeb8] sm:$0xff]
        %v4158 = vld [vmem:[#allocation7 + $0xec0] sm:$0xff]
        %v4159 = vld [vmem:[#allocation7 + $0xec8] sm:$0xff]
        %v4160 = vld [vmem:[#allocation7 + $0xed0] sm:$0xff]
        %v4161 = vld [vmem:[#allocation7 + $0xed8] sm:$0xff]
        %v4162 = vld [vmem:[#allocation7 + $0xee0] sm:$0xff]
        %v4163 = vld [vmem:[#allocation7 + $0xee8] sm:$0xff]
        %v4164 = vld [vmem:[#allocation7 + $0xef0] sm:$0xff]
        %v4165 = vld [vmem:[#allocation7 + $0xef8] sm:$0xff]
        %v4166 = vld [vmem:[#allocation7 + $0xf00] sm:$0xff]
        %v4167 = vld [vmem:[#allocation7 + $0xf08] sm:$0xff]
        %v4168 = vld [vmem:[#allocation7 + $0xf10] sm:$0xff]
        %v4169 = vld [vmem:[#allocation7 + $0xf18] sm:$0xff]
        %v4170 = vld [vmem:[#allocation7 + $0xf20] sm:$0xff]
        %v4171 = vld [vmem:[#allocation7 + $0xf28] sm:$0xff]
        %v4172 = vld [vmem:[#allocation7 + $0xf30] sm:$0xff]
        %v4173 = vld [vmem:[#allocation7 + $0xf38] sm:$0xff]
        %v4174 = vld [vmem:[#allocation7 + $0xf40] sm:$0xff]
        %v4175 = vld [vmem:[#allocation7 + $0xf48] sm:$0xff]
        %v4176 = vld [vmem:[#allocation7 + $0xf50] sm:$0xff]
        %v4177 = vld [vmem:[#allocation7 + $0xf58] sm:$0xff]
        %v4178 = vld [vmem:[#allocation7 + $0xf60] sm:$0xff]
        %v4179 = vld [vmem:[#allocation7 + $0xf68] sm:$0xff]
        %v4180 = vld [vmem:[#allocation7 + $0xf70] sm:$0xff]
        %v4181 = vld [vmem:[#allocation7 + $0xf78] sm:$0xff]
        %v4182 = vld [vmem:[#allocation7 + $0xf80] sm:$0xff]
        %v4183 = vld [vmem:[#allocation7 + $0xf88] sm:$0xff]
        %v4184 = vld [vmem:[#allocation7 + $0xf90] sm:$0xff]
        %v4185 = vld [vmem:[#allocation7 + $0xf98] sm:$0xff]
        %v4186 = vld [vmem:[#allocation7 + $0xfa0] sm:$0xff]
        %v4187 = vld [vmem:[#allocation7 + $0xfa8] sm:$0xff]
        %v4188 = vld [vmem:[#allocation7 + $0xfb0] sm:$0xff]
        %v4189 = vld [vmem:[#allocation7 + $0xfb8] sm:$0xff]
        %v4190 = vld [vmem:[#allocation7 + $0xfc0] sm:$0xff]
        %v4191 = vld [vmem:[#allocation7 + $0xfc8] sm:$0xff]
        %v4192 = vld [vmem:[#allocation7 + $0xfd0] sm:$0xff]
        %v4193 = vld [vmem:[#allocation7 + $0xfd8] sm:$0xff]
        %v4194 = vld [vmem:[#allocation7 + $0xfe0] sm:$0xff]
        %v4195 = vld [vmem:[#allocation7 + $0xfe8] sm:$0xff]
        %v4196 = vld [vmem:[#allocation7 + $0xff0] sm:$0xff]
        %v4197 = vld [vmem:[#allocation7 + $0xff8] sm:$0xff]
        %v4326 = vunpack.c.l.b16 %v4070
        %v4327 = vunpack.c.h.b16 %v4070
        %v4328 = vunpack.c.l.b16 %v4071
        %v4329 = vunpack.c.h.b16 %v4071
        %v4330 = vunpack.c.l.b16 %v4072
        %v4331 = vunpack.c.h.b16 %v4072
        %v4332 = vunpack.c.l.b16 %v4073
        %v4333 = vunpack.c.h.b16 %v4073
        %v4334 = vunpack.c.l.b16 %v4074
        %v4335 = vunpack.c.h.b16 %v4074
        %v4336 = vunpack.c.l.b16 %v4075
        %v4337 = vunpack.c.h.b16 %v4075
        %v4338 = vunpack.c.l.b16 %v4076
        %v4339 = vunpack.c.h.b16 %v4076
        %v4340 = vunpack.c.l.b16 %v4077
        %v4341 = vunpack.c.h.b16 %v4077
        %v4342 = vunpack.c.l.b16 %v4078
        %v4343 = vunpack.c.h.b16 %v4078
        %v4344 = vunpack.c.l.b16 %v4079
        %v4345 = vunpack.c.h.b16 %v4079
        %v4346 = vunpack.c.l.b16 %v4080
        %v4347 = vunpack.c.h.b16 %v4080
        %v4348 = vunpack.c.l.b16 %v4081
        %v4349 = vunpack.c.h.b16 %v4081
        %v4350 = vunpack.c.l.b16 %v4082
        %v4351 = vunpack.c.h.b16 %v4082
        %v4352 = vunpack.c.l.b16 %v4083
        %v4353 = vunpack.c.h.b16 %v4083
        %v4354 = vunpack.c.l.b16 %v4084
        %v4355 = vunpack.c.h.b16 %v4084
        %v4356 = vunpack.c.l.b16 %v4085
        %v4357 = vunpack.c.h.b16 %v4085
        %v4358 = vunpack.c.l.b16 %v4086
        %v4359 = vunpack.c.h.b16 %v4086
        %v4360 = vunpack.c.l.b16 %v4087
        %v4361 = vunpack.c.h.b16 %v4087
        %v4362 = vunpack.c.l.b16 %v4088
        %v4363 = vunpack.c.h.b16 %v4088
        %v4364 = vunpack.c.l.b16 %v4089
        %v4365 = vunpack.c.h.b16 %v4089
        %v4366 = vunpack.c.l.b16 %v4090
        %v4367 = vunpack.c.h.b16 %v4090
        %v4368 = vunpack.c.l.b16 %v4091
        %v4369 = vunpack.c.h.b16 %v4091
        %v4370 = vunpack.c.l.b16 %v4092
        %v4371 = vunpack.c.h.b16 %v4092
        %v4372 = vunpack.c.l.b16 %v4093
        %v4373 = vunpack.c.h.b16 %v4093
        %v4374 = vunpack.c.l.b16 %v4094
        %v4375 = vunpack.c.h.b16 %v4094
        %v4376 = vunpack.c.l.b16 %v4095
        %v4377 = vunpack.c.h.b16 %v4095
        %v4378 = vunpack.c.l.b16 %v4096
        %v4379 = vunpack.c.h.b16 %v4096
        %v4380 = vunpack.c.l.b16 %v4097
        %v4381 = vunpack.c.h.b16 %v4097
        %v4382 = vunpack.c.l.b16 %v4098
        %v4383 = vunpack.c.h.b16 %v4098
        %v4384 = vunpack.c.l.b16 %v4099
        %v4385 = vunpack.c.h.b16 %v4099
        %v4386 = vunpack.c.l.b16 %v4100
        %v4387 = vunpack.c.h.b16 %v4100
        %v4388 = vunpack.c.l.b16 %v4101
        %v4389 = vunpack.c.h.b16 %v4101
        %v4390 = vunpack.c.l.b16 %v4102
        %v4391 = vunpack.c.h.b16 %v4102
        %v4392 = vunpack.c.l.b16 %v4103
        %v4393 = vunpack.c.h.b16 %v4103
        %v4394 = vunpack.c.l.b16 %v4104
        %v4395 = vunpack.c.h.b16 %v4104
        %v4396 = vunpack.c.l.b16 %v4105
        %v4397 = vunpack.c.h.b16 %v4105
        %v4398 = vunpack.c.l.b16 %v4106
        %v4399 = vunpack.c.h.b16 %v4106
        %v4400 = vunpack.c.l.b16 %v4107
        %v4401 = vunpack.c.h.b16 %v4107
        %v4402 = vunpack.c.l.b16 %v4108
        %v4403 = vunpack.c.h.b16 %v4108
        %v4404 = vunpack.c.l.b16 %v4109
        %v4405 = vunpack.c.h.b16 %v4109
        %v4406 = vunpack.c.l.b16 %v4110
        %v4407 = vunpack.c.h.b16 %v4110
        %v4408 = vunpack.c.l.b16 %v4111
        %v4409 = vunpack.c.h.b16 %v4111
        %v4410 = vunpack.c.l.b16 %v4112
        %v4411 = vunpack.c.h.b16 %v4112
        %v4412 = vunpack.c.l.b16 %v4113
        %v4413 = vunpack.c.h.b16 %v4113
        %v4414 = vunpack.c.l.b16 %v4114
        %v4415 = vunpack.c.h.b16 %v4114
        %v4416 = vunpack.c.l.b16 %v4115
        %v4417 = vunpack.c.h.b16 %v4115
        %v4418 = vunpack.c.l.b16 %v4116
        %v4419 = vunpack.c.h.b16 %v4116
        %v4420 = vunpack.c.l.b16 %v4117
        %v4421 = vunpack.c.h.b16 %v4117
        %v4422 = vunpack.c.l.b16 %v4118
        %v4423 = vunpack.c.h.b16 %v4118
        %v4424 = vunpack.c.l.b16 %v4119
        %v4425 = vunpack.c.h.b16 %v4119
        %v4426 = vunpack.c.l.b16 %v4120
        %v4427 = vunpack.c.h.b16 %v4120
        %v4428 = vunpack.c.l.b16 %v4121
        %v4429 = vunpack.c.h.b16 %v4121
        %v4430 = vunpack.c.l.b16 %v4122
        %v4431 = vunpack.c.h.b16 %v4122
        %v4432 = vunpack.c.l.b16 %v4123
        %v4433 = vunpack.c.h.b16 %v4123
        %v4434 = vunpack.c.l.b16 %v4124
        %v4435 = vunpack.c.h.b16 %v4124
        %v4436 = vunpack.c.l.b16 %v4125
        %v4437 = vunpack.c.h.b16 %v4125
        %v4438 = vunpack.c.l.b16 %v4126
        %v4439 = vunpack.c.h.b16 %v4126
        %v4440 = vunpack.c.l.b16 %v4127
        %v4441 = vunpack.c.h.b16 %v4127
        %v4442 = vunpack.c.l.b16 %v4128
        %v4443 = vunpack.c.h.b16 %v4128
        %v4444 = vunpack.c.l.b16 %v4129
        %v4445 = vunpack.c.h.b16 %v4129
        %v4446 = vunpack.c.l.b16 %v4130
        %v4447 = vunpack.c.h.b16 %v4130
        %v4448 = vunpack.c.l.b16 %v4131
        %v4449 = vunpack.c.h.b16 %v4131
        %v4450 = vunpack.c.l.b16 %v4132
        %v4451 = vunpack.c.h.b16 %v4132
        %v4452 = vunpack.c.l.b16 %v4133
        %v4453 = vunpack.c.h.b16 %v4133
        %v4454 = vunpack.c.l.b16 %v4134
        %v4455 = vunpack.c.h.b16 %v4134
        %v4456 = vunpack.c.l.b16 %v4135
        %v4457 = vunpack.c.h.b16 %v4135
        %v4458 = vunpack.c.l.b16 %v4136
        %v4459 = vunpack.c.h.b16 %v4136
        %v4460 = vunpack.c.l.b16 %v4137
        %v4461 = vunpack.c.h.b16 %v4137
        %v4462 = vunpack.c.l.b16 %v4138
        %v4463 = vunpack.c.h.b16 %v4138
        %v4464 = vunpack.c.l.b16 %v4139
        %v4465 = vunpack.c.h.b16 %v4139
        %v4466 = vunpack.c.l.b16 %v4140
        %v4467 = vunpack.c.h.b16 %v4140
        %v4468 = vunpack.c.l.b16 %v4141
        %v4469 = vunpack.c.h.b16 %v4141
        %v4470 = vunpack.c.l.b16 %v4142
        %v4471 = vunpack.c.h.b16 %v4142
        %v4472 = vunpack.c.l.b16 %v4143
        %v4473 = vunpack.c.h.b16 %v4143
        %v4474 = vunpack.c.l.b16 %v4144
        %v4475 = vunpack.c.h.b16 %v4144
        %v4476 = vunpack.c.l.b16 %v4145
        %v4477 = vunpack.c.h.b16 %v4145
        %v4478 = vunpack.c.l.b16 %v4146
        %v4479 = vunpack.c.h.b16 %v4146
        %v4480 = vunpack.c.l.b16 %v4147
        %v4481 = vunpack.c.h.b16 %v4147
        %v4482 = vunpack.c.l.b16 %v4148
        %v4483 = vunpack.c.h.b16 %v4148
        %v4484 = vunpack.c.l.b16 %v4149
        %v4485 = vunpack.c.h.b16 %v4149
        %v4486 = vunpack.c.l.b16 %v4150
        %v4487 = vunpack.c.h.b16 %v4150
        %v4488 = vunpack.c.l.b16 %v4151
        %v4489 = vunpack.c.h.b16 %v4151
        %v4490 = vunpack.c.l.b16 %v4152
        %v4491 = vunpack.c.h.b16 %v4152
        %v4492 = vunpack.c.l.b16 %v4153
        %v4493 = vunpack.c.h.b16 %v4153
        %v4494 = vunpack.c.l.b16 %v4154
        %v4495 = vunpack.c.h.b16 %v4154
        %v4496 = vunpack.c.l.b16 %v4155
        %v4497 = vunpack.c.h.b16 %v4155
        %v4498 = vunpack.c.l.b16 %v4156
        %v4499 = vunpack.c.h.b16 %v4156
        %v4500 = vunpack.c.l.b16 %v4157
        %v4501 = vunpack.c.h.b16 %v4157
        %v4502 = vunpack.c.l.b16 %v4158
        %v4503 = vunpack.c.h.b16 %v4158
        %v4504 = vunpack.c.l.b16 %v4159
        %v4505 = vunpack.c.h.b16 %v4159
        %v4506 = vunpack.c.l.b16 %v4160
        %v4507 = vunpack.c.h.b16 %v4160
        %v4508 = vunpack.c.l.b16 %v4161
        %v4509 = vunpack.c.h.b16 %v4161
        %v4510 = vunpack.c.l.b16 %v4162
        %v4511 = vunpack.c.h.b16 %v4162
        %v4512 = vunpack.c.l.b16 %v4163
        %v4513 = vunpack.c.h.b16 %v4163
        %v4514 = vunpack.c.l.b16 %v4164
        %v4515 = vunpack.c.h.b16 %v4164
        %v4516 = vunpack.c.l.b16 %v4165
        %v4517 = vunpack.c.h.b16 %v4165
        %v4518 = vunpack.c.l.b16 %v4166
        %v4519 = vunpack.c.h.b16 %v4166
        %v4520 = vunpack.c.l.b16 %v4167
        %v4521 = vunpack.c.h.b16 %v4167
        %v4522 = vunpack.c.l.b16 %v4168
        %v4523 = vunpack.c.h.b16 %v4168
        %v4524 = vunpack.c.l.b16 %v4169
        %v4525 = vunpack.c.h.b16 %v4169
        %v4526 = vunpack.c.l.b16 %v4170
        %v4527 = vunpack.c.h.b16 %v4170
        %v4528 = vunpack.c.l.b16 %v4171
        %v4529 = vunpack.c.h.b16 %v4171
        %v4530 = vunpack.c.l.b16 %v4172
        %v4531 = vunpack.c.h.b16 %v4172
        %v4532 = vunpack.c.l.b16 %v4173
        %v4533 = vunpack.c.h.b16 %v4173
        %v4534 = vunpack.c.l.b16 %v4174
        %v4535 = vunpack.c.h.b16 %v4174
        %v4536 = vunpack.c.l.b16 %v4175
        %v4537 = vunpack.c.h.b16 %v4175
        %v4538 = vunpack.c.l.b16 %v4176
        %v4539 = vunpack.c.h.b16 %v4176
        %v4540 = vunpack.c.l.b16 %v4177
        %v4541 = vunpack.c.h.b16 %v4177
        %v4542 = vunpack.c.l.b16 %v4178
        %v4543 = vunpack.c.h.b16 %v4178
        %v4544 = vunpack.c.l.b16 %v4179
        %v4545 = vunpack.c.h.b16 %v4179
        %v4546 = vunpack.c.l.b16 %v4180
        %v4547 = vunpack.c.h.b16 %v4180
        %v4548 = vunpack.c.l.b16 %v4181
        %v4549 = vunpack.c.h.b16 %v4181
        %v4550 = vunpack.c.l.b16 %v4182
        %v4551 = vunpack.c.h.b16 %v4182
        %v4552 = vunpack.c.l.b16 %v4183
        %v4553 = vunpack.c.h.b16 %v4183
        %v4554 = vunpack.c.l.b16 %v4184
        %v4555 = vunpack.c.h.b16 %v4184
        %v4556 = vunpack.c.l.b16 %v4185
        %v4557 = vunpack.c.h.b16 %v4185
        %v4558 = vunpack.c.l.b16 %v4186
        %v4559 = vunpack.c.h.b16 %v4186
        %v4560 = vunpack.c.l.b16 %v4187
        %v4561 = vunpack.c.h.b16 %v4187
        %v4562 = vunpack.c.l.b16 %v4188
        %v4563 = vunpack.c.h.b16 %v4188
        %v4564 = vunpack.c.l.b16 %v4189
        %v4565 = vunpack.c.h.b16 %v4189
        %v4566 = vunpack.c.l.b16 %v4190
        %v4567 = vunpack.c.h.b16 %v4190
        %v4568 = vunpack.c.l.b16 %v4191
        %v4569 = vunpack.c.h.b16 %v4191
        %v4570 = vunpack.c.l.b16 %v4192
        %v4571 = vunpack.c.h.b16 %v4192
        %v4572 = vunpack.c.l.b16 %v4193
        %v4573 = vunpack.c.h.b16 %v4193
        %v4574 = vunpack.c.l.b16 %v4194
        %v4575 = vunpack.c.h.b16 %v4194
        %v4576 = vunpack.c.l.b16 %v4195
        %v4577 = vunpack.c.h.b16 %v4195
        %v4578 = vunpack.c.l.b16 %v4196
        %v4579 = vunpack.c.h.b16 %v4196
        %v4580 = vunpack.c.l.b16 %v4197
        %v4581 = vunpack.c.h.b16 %v4197
        %v4582 = vpack.c.b16 %v4342, %v4326
        %v4583 = vpack.c.b16 %v4343, %v4327
        %v4584 = vpack.c.b16 %v4344, %v4328
        %v4585 = vpack.c.b16 %v4345, %v4329
        %v4586 = vpack.c.b16 %v4346, %v4330
        %v4587 = vpack.c.b16 %v4347, %v4331
        %v4588 = vpack.c.b16 %v4348, %v4332
        %v4589 = vpack.c.b16 %v4349, %v4333
        %v4590 = vpack.c.b16 %v4350, %v4334
        %v4591 = vpack.c.b16 %v4351, %v4335
        %v4592 = vpack.c.b16 %v4352, %v4336
        %v4593 = vpack.c.b16 %v4353, %v4337
        %v4594 = vpack.c.b16 %v4354, %v4338
        %v4595 = vpack.c.b16 %v4355, %v4339
        %v4596 = vpack.c.b16 %v4356, %v4340
        %v4597 = vpack.c.b16 %v4357, %v4341
        %v4598 = vpack.c.b16 %v4374, %v4358
        %v4599 = vpack.c.b16 %v4375, %v4359
        %v4600 = vpack.c.b16 %v4376, %v4360
        %v4601 = vpack.c.b16 %v4377, %v4361
        %v4602 = vpack.c.b16 %v4378, %v4362
        %v4603 = vpack.c.b16 %v4379, %v4363
        %v4604 = vpack.c.b16 %v4380, %v4364
        %v4605 = vpack.c.b16 %v4381, %v4365
        %v4606 = vpack.c.b16 %v4382, %v4366
        %v4607 = vpack.c.b16 %v4383, %v4367
        %v4608 = vpack.c.b16 %v4384, %v4368
        %v4609 = vpack.c.b16 %v4385, %v4369
        %v4610 = vpack.c.b16 %v4386, %v4370
        %v4611 = vpack.c.b16 %v4387, %v4371
        %v4612 = vpack.c.b16 %v4388, %v4372
        %v4613 = vpack.c.b16 %v4389, %v4373
        %v4614 = vpack.c.b16 %v4406, %v4390
        %v4615 = vpack.c.b16 %v4407, %v4391
        %v4616 = vpack.c.b16 %v4408, %v4392
        %v4617 = vpack.c.b16 %v4409, %v4393
        %v4618 = vpack.c.b16 %v4410, %v4394
        %v4619 = vpack.c.b16 %v4411, %v4395
        %v4620 = vpack.c.b16 %v4412, %v4396
        %v4621 = vpack.c.b16 %v4413, %v4397
        %v4622 = vpack.c.b16 %v4414, %v4398
        %v4623 = vpack.c.b16 %v4415, %v4399
        %v4624 = vpack.c.b16 %v4416, %v4400
        %v4625 = vpack.c.b16 %v4417, %v4401
        %v4626 = vpack.c.b16 %v4418, %v4402
        %v4627 = vpack.c.b16 %v4419, %v4403
        %v4628 = vpack.c.b16 %v4420, %v4404
        %v4629 = vpack.c.b16 %v4421, %v4405
        %v4630 = vpack.c.b16 %v4438, %v4422
        %v4631 = vpack.c.b16 %v4439, %v4423
        %v4632 = vpack.c.b16 %v4440, %v4424
        %v4633 = vpack.c.b16 %v4441, %v4425
        %v4634 = vpack.c.b16 %v4442, %v4426
        %v4635 = vpack.c.b16 %v4443, %v4427
        %v4636 = vpack.c.b16 %v4444, %v4428
        %v4637 = vpack.c.b16 %v4445, %v4429
        %v4638 = vpack.c.b16 %v4446, %v4430
        %v4639 = vpack.c.b16 %v4447, %v4431
        %v4640 = vpack.c.b16 %v4448, %v4432
        %v4641 = vpack.c.b16 %v4449, %v4433
        %v4642 = vpack.c.b16 %v4450, %v4434
        %v4643 = vpack.c.b16 %v4451, %v4435
        %v4644 = vpack.c.b16 %v4452, %v4436
        %v4645 = vpack.c.b16 %v4453, %v4437
        %v4646 = vpack.c.b16 %v4470, %v4454
        %v4647 = vpack.c.b16 %v4471, %v4455
        %v4648 = vpack.c.b16 %v4472, %v4456
        %v4649 = vpack.c.b16 %v4473, %v4457
        %v4650 = vpack.c.b16 %v4474, %v4458
        %v4651 = vpack.c.b16 %v4475, %v4459
        %v4652 = vpack.c.b16 %v4476, %v4460
        %v4653 = vpack.c.b16 %v4477, %v4461
        %v4654 = vpack.c.b16 %v4478, %v4462
        %v4655 = vpack.c.b16 %v4479, %v4463
        %v4656 = vpack.c.b16 %v4480, %v4464
        %v4657 = vpack.c.b16 %v4481, %v4465
        %v4658 = vpack.c.b16 %v4482, %v4466
        %v4659 = vpack.c.b16 %v4483, %v4467
        %v4660 = vpack.c.b16 %v4484, %v4468
        %v4661 = vpack.c.b16 %v4485, %v4469
        %v4662 = vpack.c.b16 %v4502, %v4486
        %v4663 = vpack.c.b16 %v4503, %v4487
        %v4664 = vpack.c.b16 %v4504, %v4488
        %v4665 = vpack.c.b16 %v4505, %v4489
        %v4666 = vpack.c.b16 %v4506, %v4490
        %v4667 = vpack.c.b16 %v4507, %v4491
        %v4668 = vpack.c.b16 %v4508, %v4492
        %v4669 = vpack.c.b16 %v4509, %v4493
        %v4670 = vpack.c.b16 %v4510, %v4494
        %v4671 = vpack.c.b16 %v4511, %v4495
        %v4672 = vpack.c.b16 %v4512, %v4496
        %v4673 = vpack.c.b16 %v4513, %v4497
        %v4674 = vpack.c.b16 %v4514, %v4498
        %v4675 = vpack.c.b16 %v4515, %v4499
        %v4676 = vpack.c.b16 %v4516, %v4500
        %v4677 = vpack.c.b16 %v4517, %v4501
        %v4678 = vpack.c.b16 %v4534, %v4518
        %v4679 = vpack.c.b16 %v4535, %v4519
        %v4680 = vpack.c.b16 %v4536, %v4520
        %v4681 = vpack.c.b16 %v4537, %v4521
        %v4682 = vpack.c.b16 %v4538, %v4522
        %v4683 = vpack.c.b16 %v4539, %v4523
        %v4684 = vpack.c.b16 %v4540, %v4524
        %v4685 = vpack.c.b16 %v4541, %v4525
        %v4686 = vpack.c.b16 %v4542, %v4526
        %v4687 = vpack.c.b16 %v4543, %v4527
        %v4688 = vpack.c.b16 %v4544, %v4528
        %v4689 = vpack.c.b16 %v4545, %v4529
        %v4690 = vpack.c.b16 %v4546, %v4530
        %v4691 = vpack.c.b16 %v4547, %v4531
        %v4692 = vpack.c.b16 %v4548, %v4532
        %v4693 = vpack.c.b16 %v4549, %v4533
        %v4694 = vpack.c.b16 %v4566, %v4550
        %v4695 = vpack.c.b16 %v4567, %v4551
        %v4696 = vpack.c.b16 %v4568, %v4552
        %v4697 = vpack.c.b16 %v4569, %v4553
        %v4698 = vpack.c.b16 %v4570, %v4554
        %v4699 = vpack.c.b16 %v4571, %v4555
        %v4700 = vpack.c.b16 %v4572, %v4556
        %v4701 = vpack.c.b16 %v4573, %v4557
        %v4702 = vpack.c.b16 %v4574, %v4558
        %v4703 = vpack.c.b16 %v4575, %v4559
        %v4704 = vpack.c.b16 %v4576, %v4560
        %v4705 = vpack.c.b16 %v4577, %v4561
        %v4706 = vpack.c.b16 %v4578, %v4562
        %v4707 = vpack.c.b16 %v4579, %v4563
        %v4708 = vpack.c.b16 %v4580, %v4564
        %v4709 = vpack.c.b16 %v4581, %v4565
        %4838 = vmatprep.subr.bf16.mxu0 %v4583
        %4839 = vmatpush1.bf16.msra.mxu0 %v4582
        %4840 = vmatprep.subr.bf16.mxu0 %v4599
        %4841 = vmatpush1.bf16.msra.mxu0 %v4598
        %4842 = vmatprep.subr.bf16.mxu0 %v4615
        %4843 = vmatpush1.bf16.msra.mxu0 %v4614
        %4844 = vmatprep.subr.bf16.mxu0 %v4631
        %4845 = vmatpush1.bf16.msra.mxu0 %v4630
        %4846 = vmatprep.subr.bf16.mxu0 %v4647
        %4847 = vmatpush1.bf16.msra.mxu0 %v4646
        %4848 = vmatprep.subr.bf16.mxu0 %v4663
        %4849 = vmatpush1.bf16.msra.mxu0 %v4662
        %4850 = vmatprep.subr.bf16.mxu0 %v4679
        %4851 = vmatpush1.bf16.msra.mxu0 %v4678
        %4852 = vmatprep.subr.bf16.mxu0 %v4695
        %4853 = vmatpush1.bf16.msra.mxu0 %v4694
        %4854 = vmatprep.subr.bf16.mxu0 0
        %4855 = vmatpush1.bf16.msra.mxu0 0
        %4856 = vmatprep.subr.bf16.mxu0 0
        %4857 = vmatpush1.bf16.msra.mxu0 0
        %4858 = vmatprep.subr.bf16.mxu0 0
        %4859 = vmatpush1.bf16.msra.mxu0 0
        %4860 = vmatprep.subr.bf16.mxu0 0
        %4861 = vmatpush1.bf16.msra.mxu0 0
        %4862 = vmatprep.subr.bf16.mxu0 0
        %4863 = vmatpush1.bf16.msra.mxu0 0
        %4864 = vmatprep.subr.bf16.mxu0 0
        %4865 = vmatpush1.bf16.msra.mxu0 0
        %4866 = vmatprep.subr.bf16.mxu0 0
        %4867 = vmatpush1.bf16.msra.mxu0 0
        %4868 = vmatprep.subr.bf16.mxu0 0
        %4869 = vmatpush1.bf16.msra.mxu0 0
        %4870 = vmatprep.mubr.bf16.mxu0 0
        %4871 = vmatmul.mubr.bf16.gmra.mrb[0].mxu0 %v651
        %v4872 = vpop.f32.mrb[0].mxu0
        %v4873 = vadd.f32 0.0, %v4872
        %v4874 = vpop.f32.mrb[0].mxu0
        %v4875 = vadd.f32 0.0, %v4874
        %v4876 = vpop.f32.mrb[0].mxu0
        %v4877 = vadd.f32 0.0, %v4876
        %v4878 = vpop.f32.mrb[0].mxu0
        %v4879 = vadd.f32 0.0, %v4878
        %4880 = vdwg.mxu0
        %4881 = vmatprep.subr.bf16.mxu0 %v4585
        %4882 = vmatpush1.bf16.msra.mxu0 %v4584
        %4883 = vmatprep.subr.bf16.mxu0 %v4601
        %4884 = vmatpush1.bf16.msra.mxu0 %v4600
        %4885 = vmatprep.subr.bf16.mxu0 %v4617
        %4886 = vmatpush1.bf16.msra.mxu0 %v4616
        %4887 = vmatprep.subr.bf16.mxu0 %v4633
        %4888 = vmatpush1.bf16.msra.mxu0 %v4632
        %4889 = vmatprep.subr.bf16.mxu0 %v4649
        %4890 = vmatpush1.bf16.msra.mxu0 %v4648
        %4891 = vmatprep.subr.bf16.mxu0 %v4665
        %4892 = vmatpush1.bf16.msra.mxu0 %v4664
        %4893 = vmatprep.subr.bf16.mxu0 %v4681
        %4894 = vmatpush1.bf16.msra.mxu0 %v4680
        %4895 = vmatprep.subr.bf16.mxu0 %v4697
        %4896 = vmatpush1.bf16.msra.mxu0 %v4696
        %4897 = vmatprep.subr.bf16.mxu0 0
        %4898 = vmatpush1.bf16.msra.mxu0 0
        %4899 = vmatprep.subr.bf16.mxu0 0
        %4900 = vmatpush1.bf16.msra.mxu0 0
        %4901 = vmatprep.subr.bf16.mxu0 0
        %4902 = vmatpush1.bf16.msra.mxu0 0
        %4903 = vmatprep.subr.bf16.mxu0 0
        %4904 = vmatpush1.bf16.msra.mxu0 0
        %4905 = vmatprep.subr.bf16.mxu0 0
        %4906 = vmatpush1.bf16.msra.mxu0 0
        %4907 = vmatprep.subr.bf16.mxu0 0
        %4908 = vmatpush1.bf16.msra.mxu0 0
        %4909 = vmatprep.subr.bf16.mxu0 0
        %4910 = vmatpush1.bf16.msra.mxu0 0
        %4911 = vmatprep.subr.bf16.mxu0 0
        %4912 = vmatpush1.bf16.msra.mxu0 0
        %4913 = vmatprep.mubr.bf16.mxu0 0
        %4914 = vmatmul.mubr.bf16.gmra.mrb[0].mxu0 %v651
        %v4915 = vpop.f32.mrb[0].mxu0
        %v4916 = vadd.f32 0.0, %v4915
        %v4917 = vpop.f32.mrb[0].mxu0
        %v4918 = vadd.f32 0.0, %v4917
        %v4919 = vpop.f32.mrb[0].mxu0
        %v4920 = vadd.f32 0.0, %v4919
        %v4921 = vpop.f32.mrb[0].mxu0
        %v4922 = vadd.f32 0.0, %v4921
        %4923 = vdwg.mxu0
        %4924 = vmatprep.subr.bf16.mxu0 %v4587
        %4925 = vmatpush1.bf16.msra.mxu0 %v4586
        %4926 = vmatprep.subr.bf16.mxu0 %v4603
        %4927 = vmatpush1.bf16.msra.mxu0 %v4602
        %4928 = vmatprep.subr.bf16.mxu0 %v4619
        %4929 = vmatpush1.bf16.msra.mxu0 %v4618
        %4930 = vmatprep.subr.bf16.mxu0 %v4635
        %4931 = vmatpush1.bf16.msra.mxu0 %v4634
        %4932 = vmatprep.subr.bf16.mxu0 %v4651
        %4933 = vmatpush1.bf16.msra.mxu0 %v4650
        %4934 = vmatprep.subr.bf16.mxu0 %v4667
        %4935 = vmatpush1.bf16.msra.mxu0 %v4666
        %4936 = vmatprep.subr.bf16.mxu0 %v4683
        %4937 = vmatpush1.bf16.msra.mxu0 %v4682
        %4938 = vmatprep.subr.bf16.mxu0 %v4699
        %4939 = vmatpush1.bf16.msra.mxu0 %v4698
        %4940 = vmatprep.subr.bf16.mxu0 0
        %4941 = vmatpush1.bf16.msra.mxu0 0
        %4942 = vmatprep.subr.bf16.mxu0 0
        %4943 = vmatpush1.bf16.msra.mxu0 0
        %4944 = vmatprep.subr.bf16.mxu0 0
        %4945 = vmatpush1.bf16.msra.mxu0 0
        %4946 = vmatprep.subr.bf16.mxu0 0
        %4947 = vmatpush1.bf16.msra.mxu0 0
        %4948 = vmatprep.subr.bf16.mxu0 0
        %4949 = vmatpush1.bf16.msra.mxu0 0
        %4950 = vmatprep.subr.bf16.mxu0 0
        %4951 = vmatpush1.bf16.msra.mxu0 0
        %4952 = vmatprep.subr.bf16.mxu0 0
        %4953 = vmatpush1.bf16.msra.mxu0 0
        %4954 = vmatprep.subr.bf16.mxu0 0
        %4955 = vmatpush1.bf16.msra.mxu0 0
        %4956 = vmatprep.mubr.bf16.mxu0 0
        %4957 = vmatmul.mubr.bf16.gmra.mrb[0].mxu0 %v651
        %v4958 = vpop.f32.mrb[0].mxu0
        %v4959 = vadd.f32 0.0, %v4958
        %v4960 = vpop.f32.mrb[0].mxu0
        %v4961 = vadd.f32 0.0, %v4960
        %v4962 = vpop.f32.mrb[0].mxu0
        %v4963 = vadd.f32 0.0, %v4962
        %v4964 = vpop.f32.mrb[0].mxu0
        %v4965 = vadd.f32 0.0, %v4964
        %4966 = vdwg.mxu0
        %4967 = vmatprep.subr.bf16.mxu0 %v4589
        %4968 = vmatpush1.bf16.msra.mxu0 %v4588
        %4969 = vmatprep.subr.bf16.mxu0 %v4605
        %4970 = vmatpush1.bf16.msra.mxu0 %v4604
        %4971 = vmatprep.subr.bf16.mxu0 %v4621
        %4972 = vmatpush1.bf16.msra.mxu0 %v4620
        %4973 = vmatprep.subr.bf16.mxu0 %v4637
        %4974 = vmatpush1.bf16.msra.mxu0 %v4636
        %4975 = vmatprep.subr.bf16.mxu0 %v4653
        %4976 = vmatpush1.bf16.msra.mxu0 %v4652
        %4977 = vmatprep.subr.bf16.mxu0 %v4669
        %4978 = vmatpush1.bf16.msra.mxu0 %v4668
        %4979 = vmatprep.subr.bf16.mxu0 %v4685
        %4980 = vmatpush1.bf16.msra.mxu0 %v4684
        %4981 = vmatprep.subr.bf16.mxu0 %v4701
        %4982 = vmatpush1.bf16.msra.mxu0 %v4700
        %4983 = vmatprep.subr.bf16.mxu0 0
        %4984 = vmatpush1.bf16.msra.mxu0 0
        %4985 = vmatprep.subr.bf16.mxu0 0
        %4986 = vmatpush1.bf16.msra.mxu0 0
        %4987 = vmatprep.subr.bf16.mxu0 0
        %4988 = vmatpush1.bf16.msra.mxu0 0
        %4989 = vmatprep.subr.bf16.mxu0 0
        %4990 = vmatpush1.bf16.msra.mxu0 0
        %4991 = vmatprep.subr.bf16.mxu0 0
        %4992 = vmatpush1.bf16.msra.mxu0 0
        %4993 = vmatprep.subr.bf16.mxu0 0
        %4994 = vmatpush1.bf16.msra.mxu0 0
        %4995 = vmatprep.subr.bf16.mxu0 0
        %4996 = vmatpush1.bf16.msra.mxu0 0
        %4997 = vmatprep.subr.bf16.mxu0 0
        %4998 = vmatpush1.bf16.msra.mxu0 0
        %4999 = vmatprep.mubr.bf16.mxu0 0
        %5000 = vmatmul.mubr.bf16.gmra.mrb[0].mxu0 %v651
        %v5001 = vpop.f32.mrb[0].mxu0
        %v5002 = vadd.f32 0.0, %v5001
        %v5003 = vpop.f32.mrb[0].mxu0
        %v5004 = vadd.f32 0.0, %v5003
        %v5005 = vpop.f32.mrb[0].mxu0
        %v5006 = vadd.f32 0.0, %v5005
        %v5007 = vpop.f32.mrb[0].mxu0
        %v5008 = vadd.f32 0.0, %v5007
        %5009 = vdwg.mxu0
        %5010 = vmatprep.subr.bf16.mxu0 %v4591
        %5011 = vmatpush1.bf16.msra.mxu0 %v4590
        %5012 = vmatprep.subr.bf16.mxu0 %v4607
        %5013 = vmatpush1.bf16.msra.mxu0 %v4606
        %5014 = vmatprep.subr.bf16.mxu0 %v4623
        %5015 = vmatpush1.bf16.msra.mxu0 %v4622
        %5016 = vmatprep.subr.bf16.mxu0 %v4639
        %5017 = vmatpush1.bf16.msra.mxu0 %v4638
        %5018 = vmatprep.subr.bf16.mxu0 %v4655
        %5019 = vmatpush1.bf16.msra.mxu0 %v4654
        %5020 = vmatprep.subr.bf16.mxu0 %v4671
        %5021 = vmatpush1.bf16.msra.mxu0 %v4670
        %5022 = vmatprep.subr.bf16.mxu0 %v4687
        %5023 = vmatpush1.bf16.msra.mxu0 %v4686
        %5024 = vmatprep.subr.bf16.mxu0 %v4703
        %5025 = vmatpush1.bf16.msra.mxu0 %v4702
        %5026 = vmatprep.subr.bf16.mxu0 0
        %5027 = vmatpush1.bf16.msra.mxu0 0
        %5028 = vmatprep.subr.bf16.mxu0 0
        %5029 = vmatpush1.bf16.msra.mxu0 0
        %5030 = vmatprep.subr.bf16.mxu0 0
        %5031 = vmatpush1.bf16.msra.mxu0 0
        %5032 = vmatprep.subr.bf16.mxu0 0
        %5033 = vmatpush1.bf16.msra.mxu0 0
        %5034 = vmatprep.subr.bf16.mxu0 0
        %5035 = vmatpush1.bf16.msra.mxu0 0
        %5036 = vmatprep.subr.bf16.mxu0 0
        %5037 = vmatpush1.bf16.msra.mxu0 0
        %5038 = vmatprep.subr.bf16.mxu0 0
        %5039 = vmatpush1.bf16.msra.mxu0 0
        %5040 = vmatprep.subr.bf16.mxu0 0
        %5041 = vmatpush1.bf16.msra.mxu0 0
        %5042 = vmatprep.mubr.bf16.mxu0 0
        %5043 = vmatmul.mubr.bf16.gmra.mrb[0].mxu0 %v651
        %v5044 = vpop.f32.mrb[0].mxu0
        %v5045 = vadd.f32 0.0, %v5044
        %v5046 = vpop.f32.mrb[0].mxu0
        %v5047 = vadd.f32 0.0, %v5046
        %v5048 = vpop.f32.mrb[0].mxu0
        %v5049 = vadd.f32 0.0, %v5048
        %v5050 = vpop.f32.mrb[0].mxu0
        %v5051 = vadd.f32 0.0, %v5050
        %5052 = vdwg.mxu0
        %5053 = vmatprep.subr.bf16.mxu0 %v4593
        %5054 = vmatpush1.bf16.msra.mxu0 %v4592
        %5055 = vmatprep.subr.bf16.mxu0 %v4609
        %5056 = vmatpush1.bf16.msra.mxu0 %v4608
        %5057 = vmatprep.subr.bf16.mxu0 %v4625
        %5058 = vmatpush1.bf16.msra.mxu0 %v4624
        %5059 = vmatprep.subr.bf16.mxu0 %v4641
        %5060 = vmatpush1.bf16.msra.mxu0 %v4640
        %5061 = vmatprep.subr.bf16.mxu0 %v4657
        %5062 = vmatpush1.bf16.msra.mxu0 %v4656
        %5063 = vmatprep.subr.bf16.mxu0 %v4673
        %5064 = vmatpush1.bf16.msra.mxu0 %v4672
        %5065 = vmatprep.subr.bf16.mxu0 %v4689
        %5066 = vmatpush1.bf16.msra.mxu0 %v4688
        %5067 = vmatprep.subr.bf16.mxu0 %v4705
        %5068 = vmatpush1.bf16.msra.mxu0 %v4704
        %5069 = vmatprep.subr.bf16.mxu0 0
        %5070 = vmatpush1.bf16.msra.mxu0 0
        %5071 = vmatprep.subr.bf16.mxu0 0
        %5072 = vmatpush1.bf16.msra.mxu0 0
        %5073 = vmatprep.subr.bf16.mxu0 0
        %5074 = vmatpush1.bf16.msra.mxu0 0
        %5075 = vmatprep.subr.bf16.mxu0 0
        %5076 = vmatpush1.bf16.msra.mxu0 0
        %5077 = vmatprep.subr.bf16.mxu0 0
        %5078 = vmatpush1.bf16.msra.mxu0 0
        %5079 = vmatprep.subr.bf16.mxu0 0
        %5080 = vmatpush1.bf16.msra.mxu0 0
        %5081 = vmatprep.subr.bf16.mxu0 0
        %5082 = vmatpush1.bf16.msra.mxu0 0
        %5083 = vmatprep.subr.bf16.mxu0 0
        %5084 = vmatpush1.bf16.msra.mxu0 0
        %5085 = vmatprep.mubr.bf16.mxu0 0
        %5086 = vmatmul.mubr.bf16.gmra.mrb[0].mxu0 %v651
        %v5087 = vpop.f32.mrb[0].mxu0
        %v5088 = vadd.f32 0.0, %v5087
        %v5089 = vpop.f32.mrb[0].mxu0
        %v5090 = vadd.f32 0.0, %v5089
        %v5091 = vpop.f32.mrb[0].mxu0
        %v5092 = vadd.f32 0.0, %v5091
        %v5093 = vpop.f32.mrb[0].mxu0
        %v5094 = vadd.f32 0.0, %v5093
        %5095 = vdwg.mxu0
        %5096 = vmatprep.subr.bf16.mxu0 %v4595
        %5097 = vmatpush1.bf16.msra.mxu0 %v4594
        %5098 = vmatprep.subr.bf16.mxu0 %v4611
        %5099 = vmatpush1.bf16.msra.mxu0 %v4610
        %5100 = vmatprep.subr.bf16.mxu0 %v4627
        %5101 = vmatpush1.bf16.msra.mxu0 %v4626
        %5102 = vmatprep.subr.bf16.mxu0 %v4643
        %5103 = vmatpush1.bf16.msra.mxu0 %v4642
        %5104 = vmatprep.subr.bf16.mxu0 %v4659
        %5105 = vmatpush1.bf16.msra.mxu0 %v4658
        %5106 = vmatprep.subr.bf16.mxu0 %v4675
        %5107 = vmatpush1.bf16.msra.mxu0 %v4674
        %5108 = vmatprep.subr.bf16.mxu0 %v4691
        %5109 = vmatpush1.bf16.msra.mxu0 %v4690
        %5110 = vmatprep.subr.bf16.mxu0 %v4707
        %5111 = vmatpush1.bf16.msra.mxu0 %v4706
        %5112 = vmatprep.subr.bf16.mxu0 0
        %5113 = vmatpush1.bf16.msra.mxu0 0
        %5114 = vmatprep.subr.bf16.mxu0 0
        %5115 = vmatpush1.bf16.msra.mxu0 0
        %5116 = vmatprep.subr.bf16.mxu0 0
        %5117 = vmatpush1.bf16.msra.mxu0 0
        %5118 = vmatprep.subr.bf16.mxu0 0
        %5119 = vmatpush1.bf16.msra.mxu0 0
        %5120 = vmatprep.subr.bf16.mxu0 0
        %5121 = vmatpush1.bf16.msra.mxu0 0
        %5122 = vmatprep.subr.bf16.mxu0 0
        %5123 = vmatpush1.bf16.msra.mxu0 0
        %5124 = vmatprep.subr.bf16.mxu0 0
        %5125 = vmatpush1.bf16.msra.mxu0 0
        %5126 = vmatprep.subr.bf16.mxu0 0
        %5127 = vmatpush1.bf16.msra.mxu0 0
        %5128 = vmatprep.mubr.bf16.mxu0 0
        %5129 = vmatmul.mubr.bf16.gmra.mrb[0].mxu0 %v651
        %v5130 = vpop.f32.mrb[0].mxu0
        %v5131 = vadd.f32 0.0, %v5130
        %v5132 = vpop.f32.mrb[0].mxu0
        %v5133 = vadd.f32 0.0, %v5132
        %v5134 = vpop.f32.mrb[0].mxu0
        %v5135 = vadd.f32 0.0, %v5134
        %v5136 = vpop.f32.mrb[0].mxu0
        %v5137 = vadd.f32 0.0, %v5136
        %5138 = vdwg.mxu0
        %5139 = vmatprep.subr.bf16.mxu0 %v4597
        %5140 = vmatpush1.bf16.msra.mxu0 %v4596
        %5141 = vmatprep.subr.bf16.mxu0 %v4613
        %5142 = vmatpush1.bf16.msra.mxu0 %v4612
        %5143 = vmatprep.subr.bf16.mxu0 %v4629
        %5144 = vmatpush1.bf16.msra.mxu0 %v4628
        %5145 = vmatprep.subr.bf16.mxu0 %v4645
        %5146 = vmatpush1.bf16.msra.mxu0 %v4644
        %5147 = vmatprep.subr.bf16.mxu0 %v4661
        %5148 = vmatpush1.bf16.msra.mxu0 %v4660
        %5149 = vmatprep.subr.bf16.mxu0 %v4677
        %5150 = vmatpush1.bf16.msra.mxu0 %v4676
        %5151 = vmatprep.subr.bf16.mxu0 %v4693
        %5152 = vmatpush1.bf16.msra.mxu0 %v4692
        %5153 = vmatprep.subr.bf16.mxu0 %v4709
        %5154 = vmatpush1.bf16.msra.mxu0 %v4708
        %5155 = vmatprep.subr.bf16.mxu0 0
        %5156 = vmatpush1.bf16.msra.mxu0 0
        %5157 = vmatprep.subr.bf16.mxu0 0
        %5158 = vmatpush1.bf16.msra.mxu0 0
        %5159 = vmatprep.subr.bf16.mxu0 0
        %5160 = vmatpush1.bf16.msra.mxu0 0
        %5161 = vmatprep.subr.bf16.mxu0 0
        %5162 = vmatpush1.bf16.msra.mxu0 0
        %5163 = vmatprep.subr.bf16.mxu0 0
        %5164 = vmatpush1.bf16.msra.mxu0 0
        %5165 = vmatprep.subr.bf16.mxu0 0
        %5166 = vmatpush1.bf16.msra.mxu0 0
        %5167 = vmatprep.subr.bf16.mxu0 0
        %5168 = vmatpush1.bf16.msra.mxu0 0
        %5169 = vmatprep.subr.bf16.mxu0 0
        %5170 = vmatpush1.bf16.msra.mxu0 0
        %5171 = vmatprep.mubr.bf16.mxu0 0
        %5172 = vmatmul.mubr.bf16.gmra.mrb[0].mxu0 %v651
        %v5173 = vpop.f32.mrb[0].mxu0
        %v5174 = vadd.f32 0.0, %v5173
        %v5175 = vpop.f32.mrb[0].mxu0
        %v5176 = vadd.f32 0.0, %v5175
        %v5177 = vpop.f32.mrb[0].mxu0
        %v5178 = vadd.f32 0.0, %v5177
        %v5179 = vpop.f32.mrb[0].mxu0
        %v5180 = vadd.f32 0.0, %v5179
        %5181 = vdwg.mxu0
        %v5182 = vpack.c.bf16 %v4877, %v4873
        %v5183 = vpack.c.bf16 %v4879, %v4875
        %v5184 = vpack.c.bf16 %v4920, %v4916
        %v5185 = vpack.c.bf16 %v4922, %v4918
        %v5186 = vpack.c.bf16 %v4963, %v4959
        %v5187 = vpack.c.bf16 %v4965, %v4961
        %v5188 = vpack.c.bf16 %v5006, %v5002
        %v5189 = vpack.c.bf16 %v5008, %v5004
        %v5190 = vpack.c.bf16 %v5049, %v5045
        %v5191 = vpack.c.bf16 %v5051, %v5047
        %v5192 = vpack.c.bf16 %v5092, %v5088
        %v5193 = vpack.c.bf16 %v5094, %v5090
        %v5194 = vpack.c.bf16 %v5135, %v5131
        %v5195 = vpack.c.bf16 %v5137, %v5133
        %v5196 = vpack.c.bf16 %v5178, %v5174
        %v5197 = vpack.c.bf16 %v5180, %v5176
        %v5198 = vmul.bf16 %v4054, %v5182
        %v5199 = vmul.bf16 %v4055, %v5183
        %v5200 = vmul.bf16 %v4056, %v5184
        %v5201 = vmul.bf16 %v4057, %v5185
        %v5202 = vmul.bf16 %v4058, %v5186
        %v5203 = vmul.bf16 %v4059, %v5187
        %v5204 = vmul.bf16 %v4060, %v5188
        %v5205 = vmul.bf16 %v4061, %v5189
        %v5206 = vmul.bf16 %v4062, %v5190
        %v5207 = vmul.bf16 %v4063, %v5191
        %v5208 = vmul.bf16 %v4064, %v5192
        %v5209 = vmul.bf16 %v4065, %v5193
        %v5210 = vmul.bf16 %v4066, %v5194
        %v5211 = vmul.bf16 %v4067, %v5195
        %v5212 = vmul.bf16 %v4068, %v5196
        %v5213 = vmul.bf16 %v4069, %v5197
        %v5214 = vld [vmem:[#allocation7 + $0x1000] sm:$0xff]
        %v5215 = vld [vmem:[#allocation7 + $0x1008] sm:$0xff]
        %v5216 = vld [vmem:[#allocation7 + $0x1010] sm:$0xff]
        %v5217 = vld [vmem:[#allocation7 + $0x1018] sm:$0xff]
        %v5218 = vld [vmem:[#allocation7 + $0x1020] sm:$0xff]
        %v5219 = vld [vmem:[#allocation7 + $0x1028] sm:$0xff]
        %v5220 = vld [vmem:[#allocation7 + $0x1030] sm:$0xff]
        %v5221 = vld [vmem:[#allocation7 + $0x1038] sm:$0xff]
        %v5222 = vld [vmem:[#allocation7 + $0x1040] sm:$0xff]
        %v5223 = vld [vmem:[#allocation7 + $0x1048] sm:$0xff]
        %v5224 = vld [vmem:[#allocation7 + $0x1050] sm:$0xff]
        %v5225 = vld [vmem:[#allocation7 + $0x1058] sm:$0xff]
        %v5226 = vld [vmem:[#allocation7 + $0x1060] sm:$0xff]
        %v5227 = vld [vmem:[#allocation7 + $0x1068] sm:$0xff]
        %v5228 = vld [vmem:[#allocation7 + $0x1070] sm:$0xff]
        %v5229 = vld [vmem:[#allocation7 + $0x1078] sm:$0xff]
        %v5230 = vld [vmem:[#allocation7 + $0x1080] sm:$0xff]
        %v5231 = vld [vmem:[#allocation7 + $0x1088] sm:$0xff]
        %v5232 = vld [vmem:[#allocation7 + $0x1090] sm:$0xff]
        %v5233 = vld [vmem:[#allocation7 + $0x1098] sm:$0xff]
        %v5234 = vld [vmem:[#allocation7 + $0x10a0] sm:$0xff]
        %v5235 = vld [vmem:[#allocation7 + $0x10a8] sm:$0xff]
        %v5236 = vld [vmem:[#allocation7 + $0x10b0] sm:$0xff]
        %v5237 = vld [vmem:[#allocation7 + $0x10b8] sm:$0xff]
        %v5238 = vld [vmem:[#allocation7 + $0x10c0] sm:$0xff]
        %v5239 = vld [vmem:[#allocation7 + $0x10c8] sm:$0xff]
        %v5240 = vld [vmem:[#allocation7 + $0x10d0] sm:$0xff]
        %v5241 = vld [vmem:[#allocation7 + $0x10d8] sm:$0xff]
        %v5242 = vld [vmem:[#allocation7 + $0x10e0] sm:$0xff]
        %v5243 = vld [vmem:[#allocation7 + $0x10e8] sm:$0xff]
        %v5244 = vld [vmem:[#allocation7 + $0x10f0] sm:$0xff]
        %v5245 = vld [vmem:[#allocation7 + $0x10f8] sm:$0xff]
        %v5246 = vld [vmem:[#allocation7 + $0x1100] sm:$0xff]
        %v5247 = vld [vmem:[#allocation7 + $0x1108] sm:$0xff]
        %v5248 = vld [vmem:[#allocation7 + $0x1110] sm:$0xff]
        %v5249 = vld [vmem:[#allocation7 + $0x1118] sm:$0xff]
        %v5250 = vld [vmem:[#allocation7 + $0x1120] sm:$0xff]
        %v5251 = vld [vmem:[#allocation7 + $0x1128] sm:$0xff]
        %v5252 = vld [vmem:[#allocation7 + $0x1130] sm:$0xff]
        %v5253 = vld [vmem:[#allocation7 + $0x1138] sm:$0xff]
        %v5254 = vld [vmem:[#allocation7 + $0x1140] sm:$0xff]
        %v5255 = vld [vmem:[#allocation7 + $0x1148] sm:$0xff]
        %v5256 = vld [vmem:[#allocation7 + $0x1150] sm:$0xff]
        %v5257 = vld [vmem:[#allocation7 + $0x1158] sm:$0xff]
        %v5258 = vld [vmem:[#allocation7 + $0x1160] sm:$0xff]
        %v5259 = vld [vmem:[#allocation7 + $0x1168] sm:$0xff]
        %v5260 = vld [vmem:[#allocation7 + $0x1170] sm:$0xff]
        %v5261 = vld [vmem:[#allocation7 + $0x1178] sm:$0xff]
        %v5262 = vld [vmem:[#allocation7 + $0x1180] sm:$0xff]
        %v5263 = vld [vmem:[#allocation7 + $0x1188] sm:$0xff]
        %v5264 = vld [vmem:[#allocation7 + $0x1190] sm:$0xff]
        %v5265 = vld [vmem:[#allocation7 + $0x1198] sm:$0xff]
        %v5266 = vld [vmem:[#allocation7 + $0x11a0] sm:$0xff]
        %v5267 = vld [vmem:[#allocation7 + $0x11a8] sm:$0xff]
        %v5268 = vld [vmem:[#allocation7 + $0x11b0] sm:$0xff]
        %v5269 = vld [vmem:[#allocation7 + $0x11b8] sm:$0xff]
        %v5270 = vld [vmem:[#allocation7 + $0x11c0] sm:$0xff]
        %v5271 = vld [vmem:[#allocation7 + $0x11c8] sm:$0xff]
        %v5272 = vld [vmem:[#allocation7 + $0x11d0] sm:$0xff]
        %v5273 = vld [vmem:[#allocation7 + $0x11d8] sm:$0xff]
        %v5274 = vld [vmem:[#allocation7 + $0x11e0] sm:$0xff]
        %v5275 = vld [vmem:[#allocation7 + $0x11e8] sm:$0xff]
        %v5276 = vld [vmem:[#allocation7 + $0x11f0] sm:$0xff]
        %v5277 = vld [vmem:[#allocation7 + $0x11f8] sm:$0xff]
        %v5278 = vld [vmem:[#allocation7 + $0x1200] sm:$0xff]
        %v5279 = vld [vmem:[#allocation7 + $0x1208] sm:$0xff]
        %v5280 = vld [vmem:[#allocation7 + $0x1210] sm:$0xff]
        %v5281 = vld [vmem:[#allocation7 + $0x1218] sm:$0xff]
        %v5282 = vld [vmem:[#allocation7 + $0x1220] sm:$0xff]
        %v5283 = vld [vmem:[#allocation7 + $0x1228] sm:$0xff]
        %v5284 = vld [vmem:[#allocation7 + $0x1230] sm:$0xff]
        %v5285 = vld [vmem:[#allocation7 + $0x1238] sm:$0xff]
        %v5286 = vld [vmem:[#allocation7 + $0x1240] sm:$0xff]
        %v5287 = vld [vmem:[#allocation7 + $0x1248] sm:$0xff]
        %v5288 = vld [vmem:[#allocation7 + $0x1250] sm:$0xff]
        %v5289 = vld [vmem:[#allocation7 + $0x1258] sm:$0xff]
        %v5290 = vld [vmem:[#allocation7 + $0x1260] sm:$0xff]
        %v5291 = vld [vmem:[#allocation7 + $0x1268] sm:$0xff]
        %v5292 = vld [vmem:[#allocation7 + $0x1270] sm:$0xff]
        %v5293 = vld [vmem:[#allocation7 + $0x1278] sm:$0xff]
        %v5294 = vld [vmem:[#allocation7 + $0x1280] sm:$0xff]
        %v5295 = vld [vmem:[#allocation7 + $0x1288] sm:$0xff]
        %v5296 = vld [vmem:[#allocation7 + $0x1290] sm:$0xff]
        %v5297 = vld [vmem:[#allocation7 + $0x1298] sm:$0xff]
        %v5298 = vld [vmem:[#allocation7 + $0x12a0] sm:$0xff]
        %v5299 = vld [vmem:[#allocation7 + $0x12a8] sm:$0xff]
        %v5300 = vld [vmem:[#allocation7 + $0x12b0] sm:$0xff]
        %v5301 = vld [vmem:[#allocation7 + $0x12b8] sm:$0xff]
        %v5302 = vld [vmem:[#allocation7 + $0x12c0] sm:$0xff]
        %v5303 = vld [vmem:[#allocation7 + $0x12c8] sm:$0xff]
        %v5304 = vld [vmem:[#allocation7 + $0x12d0] sm:$0xff]
        %v5305 = vld [vmem:[#allocation7 + $0x12d8] sm:$0xff]
        %v5306 = vld [vmem:[#allocation7 + $0x12e0] sm:$0xff]
        %v5307 = vld [vmem:[#allocation7 + $0x12e8] sm:$0xff]
        %v5308 = vld [vmem:[#allocation7 + $0x12f0] sm:$0xff]
        %v5309 = vld [vmem:[#allocation7 + $0x12f8] sm:$0xff]
        %v5310 = vld [vmem:[#allocation7 + $0x1300] sm:$0xff]
        %v5311 = vld [vmem:[#allocation7 + $0x1308] sm:$0xff]
        %v5312 = vld [vmem:[#allocation7 + $0x1310] sm:$0xff]
        %v5313 = vld [vmem:[#allocation7 + $0x1318] sm:$0xff]
        %v5314 = vld [vmem:[#allocation7 + $0x1320] sm:$0xff]
        %v5315 = vld [vmem:[#allocation7 + $0x1328] sm:$0xff]
        %v5316 = vld [vmem:[#allocation7 + $0x1330] sm:$0xff]
        %v5317 = vld [vmem:[#allocation7 + $0x1338] sm:$0xff]
        %v5318 = vld [vmem:[#allocation7 + $0x1340] sm:$0xff]
        %v5319 = vld [vmem:[#allocation7 + $0x1348] sm:$0xff]
        %v5320 = vld [vmem:[#allocation7 + $0x1350] sm:$0xff]
        %v5321 = vld [vmem:[#allocation7 + $0x1358] sm:$0xff]
        %v5322 = vld [vmem:[#allocation7 + $0x1360] sm:$0xff]
        %v5323 = vld [vmem:[#allocation7 + $0x1368] sm:$0xff]
        %v5324 = vld [vmem:[#allocation7 + $0x1370] sm:$0xff]
        %v5325 = vld [vmem:[#allocation7 + $0x1378] sm:$0xff]
        %v5326 = vld [vmem:[#allocation7 + $0x1380] sm:$0xff]
        %v5327 = vld [vmem:[#allocation7 + $0x1388] sm:$0xff]
        %v5328 = vld [vmem:[#allocation7 + $0x1390] sm:$0xff]
        %v5329 = vld [vmem:[#allocation7 + $0x1398] sm:$0xff]
        %v5330 = vld [vmem:[#allocation7 + $0x13a0] sm:$0xff]
        %v5331 = vld [vmem:[#allocation7 + $0x13a8] sm:$0xff]
        %v5332 = vld [vmem:[#allocation7 + $0x13b0] sm:$0xff]
        %v5333 = vld [vmem:[#allocation7 + $0x13b8] sm:$0xff]
        %v5334 = vld [vmem:[#allocation7 + $0x13c0] sm:$0xff]
        %v5335 = vld [vmem:[#allocation7 + $0x13c8] sm:$0xff]
        %v5336 = vld [vmem:[#allocation7 + $0x13d0] sm:$0xff]
        %v5337 = vld [vmem:[#allocation7 + $0x13d8] sm:$0xff]
        %v5338 = vld [vmem:[#allocation7 + $0x13e0] sm:$0xff]
        %v5339 = vld [vmem:[#allocation7 + $0x13e8] sm:$0xff]
        %v5340 = vld [vmem:[#allocation7 + $0x13f0] sm:$0xff]
        %v5341 = vld [vmem:[#allocation7 + $0x13f8] sm:$0xff]
        %v5470 = vunpack.c.l.b16 %v5214
        %v5471 = vunpack.c.h.b16 %v5214
        %v5472 = vunpack.c.l.b16 %v5215
        %v5473 = vunpack.c.h.b16 %v5215
        %v5474 = vunpack.c.l.b16 %v5216
        %v5475 = vunpack.c.h.b16 %v5216
        %v5476 = vunpack.c.l.b16 %v5217
        %v5477 = vunpack.c.h.b16 %v5217
        %v5478 = vunpack.c.l.b16 %v5218
        %v5479 = vunpack.c.h.b16 %v5218
        %v5480 = vunpack.c.l.b16 %v5219
        %v5481 = vunpack.c.h.b16 %v5219
        %v5482 = vunpack.c.l.b16 %v5220
        %v5483 = vunpack.c.h.b16 %v5220
        %v5484 = vunpack.c.l.b16 %v5221
        %v5485 = vunpack.c.h.b16 %v5221
        %v5486 = vunpack.c.l.b16 %v5222
        %v5487 = vunpack.c.h.b16 %v5222
        %v5488 = vunpack.c.l.b16 %v5223
        %v5489 = vunpack.c.h.b16 %v5223
        %v5490 = vunpack.c.l.b16 %v5224
        %v5491 = vunpack.c.h.b16 %v5224
        %v5492 = vunpack.c.l.b16 %v5225
        %v5493 = vunpack.c.h.b16 %v5225
        %v5494 = vunpack.c.l.b16 %v5226
        %v5495 = vunpack.c.h.b16 %v5226
        %v5496 = vunpack.c.l.b16 %v5227
        %v5497 = vunpack.c.h.b16 %v5227
        %v5498 = vunpack.c.l.b16 %v5228
        %v5499 = vunpack.c.h.b16 %v5228
        %v5500 = vunpack.c.l.b16 %v5229
        %v5501 = vunpack.c.h.b16 %v5229
        %v5502 = vunpack.c.l.b16 %v5230
        %v5503 = vunpack.c.h.b16 %v5230
        %v5504 = vunpack.c.l.b16 %v5231
        %v5505 = vunpack.c.h.b16 %v5231
        %v5506 = vunpack.c.l.b16 %v5232
        %v5507 = vunpack.c.h.b16 %v5232
        %v5508 = vunpack.c.l.b16 %v5233
        %v5509 = vunpack.c.h.b16 %v5233
        %v5510 = vunpack.c.l.b16 %v5234
        %v5511 = vunpack.c.h.b16 %v5234
        %v5512 = vunpack.c.l.b16 %v5235
        %v5513 = vunpack.c.h.b16 %v5235
        %v5514 = vunpack.c.l.b16 %v5236
        %v5515 = vunpack.c.h.b16 %v5236
        %v5516 = vunpack.c.l.b16 %v5237
        %v5517 = vunpack.c.h.b16 %v5237
        %v5518 = vunpack.c.l.b16 %v5238
        %v5519 = vunpack.c.h.b16 %v5238
        %v5520 = vunpack.c.l.b16 %v5239
        %v5521 = vunpack.c.h.b16 %v5239
        %v5522 = vunpack.c.l.b16 %v5240
        %v5523 = vunpack.c.h.b16 %v5240
        %v5524 = vunpack.c.l.b16 %v5241
        %v5525 = vunpack.c.h.b16 %v5241
        %v5526 = vunpack.c.l.b16 %v5242
        %v5527 = vunpack.c.h.b16 %v5242
        %v5528 = vunpack.c.l.b16 %v5243
        %v5529 = vunpack.c.h.b16 %v5243
        %v5530 = vunpack.c.l.b16 %v5244
        %v5531 = vunpack.c.h.b16 %v5244
        %v5532 = vunpack.c.l.b16 %v5245
        %v5533 = vunpack.c.h.b16 %v5245
        %v5534 = vunpack.c.l.b16 %v5246
        %v5535 = vunpack.c.h.b16 %v5246
        %v5536 = vunpack.c.l.b16 %v5247
        %v5537 = vunpack.c.h.b16 %v5247
        %v5538 = vunpack.c.l.b16 %v5248
        %v5539 = vunpack.c.h.b16 %v5248
        %v5540 = vunpack.c.l.b16 %v5249
        %v5541 = vunpack.c.h.b16 %v5249
        %v5542 = vunpack.c.l.b16 %v5250
        %v5543 = vunpack.c.h.b16 %v5250
        %v5544 = vunpack.c.l.b16 %v5251
        %v5545 = vunpack.c.h.b16 %v5251
        %v5546 = vunpack.c.l.b16 %v5252
        %v5547 = vunpack.c.h.b16 %v5252
        %v5548 = vunpack.c.l.b16 %v5253
        %v5549 = vunpack.c.h.b16 %v5253
        %v5550 = vunpack.c.l.b16 %v5254
        %v5551 = vunpack.c.h.b16 %v5254
        %v5552 = vunpack.c.l.b16 %v5255
        %v5553 = vunpack.c.h.b16 %v5255
        %v5554 = vunpack.c.l.b16 %v5256
        %v5555 = vunpack.c.h.b16 %v5256
        %v5556 = vunpack.c.l.b16 %v5257
        %v5557 = vunpack.c.h.b16 %v5257
        %v5558 = vunpack.c.l.b16 %v5258
        %v5559 = vunpack.c.h.b16 %v5258
        %v5560 = vunpack.c.l.b16 %v5259
        %v5561 = vunpack.c.h.b16 %v5259
        %v5562 = vunpack.c.l.b16 %v5260
        %v5563 = vunpack.c.h.b16 %v5260
        %v5564 = vunpack.c.l.b16 %v5261
        %v5565 = vunpack.c.h.b16 %v5261
        %v5566 = vunpack.c.l.b16 %v5262
        %v5567 = vunpack.c.h.b16 %v5262
        %v5568 = vunpack.c.l.b16 %v5263
        %v5569 = vunpack.c.h.b16 %v5263
        %v5570 = vunpack.c.l.b16 %v5264
        %v5571 = vunpack.c.h.b16 %v5264
        %v5572 = vunpack.c.l.b16 %v5265
        %v5573 = vunpack.c.h.b16 %v5265
        %v5574 = vunpack.c.l.b16 %v5266
        %v5575 = vunpack.c.h.b16 %v5266
        %v5576 = vunpack.c.l.b16 %v5267
        %v5577 = vunpack.c.h.b16 %v5267
        %v5578 = vunpack.c.l.b16 %v5268
        %v5579 = vunpack.c.h.b16 %v5268
        %v5580 = vunpack.c.l.b16 %v5269
        %v5581 = vunpack.c.h.b16 %v5269
        %v5582 = vunpack.c.l.b16 %v5270
        %v5583 = vunpack.c.h.b16 %v5270
        %v5584 = vunpack.c.l.b16 %v5271
        %v5585 = vunpack.c.h.b16 %v5271
        %v5586 = vunpack.c.l.b16 %v5272
        %v5587 = vunpack.c.h.b16 %v5272
        %v5588 = vunpack.c.l.b16 %v5273
        %v5589 = vunpack.c.h.b16 %v5273
        %v5590 = vunpack.c.l.b16 %v5274
        %v5591 = vunpack.c.h.b16 %v5274
        %v5592 = vunpack.c.l.b16 %v5275
        %v5593 = vunpack.c.h.b16 %v5275
        %v5594 = vunpack.c.l.b16 %v5276
        %v5595 = vunpack.c.h.b16 %v5276
        %v5596 = vunpack.c.l.b16 %v5277
        %v5597 = vunpack.c.h.b16 %v5277
        %v5598 = vunpack.c.l.b16 %v5278
        %v5599 = vunpack.c.h.b16 %v5278
        %v5600 = vunpack.c.l.b16 %v5279
        %v5601 = vunpack.c.h.b16 %v5279
        %v5602 = vunpack.c.l.b16 %v5280
        %v5603 = vunpack.c.h.b16 %v5280
        %v5604 = vunpack.c.l.b16 %v5281
        %v5605 = vunpack.c.h.b16 %v5281
        %v5606 = vunpack.c.l.b16 %v5282
        %v5607 = vunpack.c.h.b16 %v5282
        %v5608 = vunpack.c.l.b16 %v5283
        %v5609 = vunpack.c.h.b16 %v5283
        %v5610 = vunpack.c.l.b16 %v5284
        %v5611 = vunpack.c.h.b16 %v5284
        %v5612 = vunpack.c.l.b16 %v5285
        %v5613 = vunpack.c.h.b16 %v5285
        %v5614 = vunpack.c.l.b16 %v5286
        %v5615 = vunpack.c.h.b16 %v5286
        %v5616 = vunpack.c.l.b16 %v5287
        %v5617 = vunpack.c.h.b16 %v5287
        %v5618 = vunpack.c.l.b16 %v5288
        %v5619 = vunpack.c.h.b16 %v5288
        %v5620 = vunpack.c.l.b16 %v5289
        %v5621 = vunpack.c.h.b16 %v5289
        %v5622 = vunpack.c.l.b16 %v5290
        %v5623 = vunpack.c.h.b16 %v5290
        %v5624 = vunpack.c.l.b16 %v5291
        %v5625 = vunpack.c.h.b16 %v5291
        %v5626 = vunpack.c.l.b16 %v5292
        %v5627 = vunpack.c.h.b16 %v5292
        %v5628 = vunpack.c.l.b16 %v5293
        %v5629 = vunpack.c.h.b16 %v5293
        %v5630 = vunpack.c.l.b16 %v5294
        %v5631 = vunpack.c.h.b16 %v5294
        %v5632 = vunpack.c.l.b16 %v5295
        %v5633 = vunpack.c.h.b16 %v5295
        %v5634 = vunpack.c.l.b16 %v5296
        %v5635 = vunpack.c.h.b16 %v5296
        %v5636 = vunpack.c.l.b16 %v5297
        %v5637 = vunpack.c.h.b16 %v5297
        %v5638 = vunpack.c.l.b16 %v5298
        %v5639 = vunpack.c.h.b16 %v5298
        %v5640 = vunpack.c.l.b16 %v5299
        %v5641 = vunpack.c.h.b16 %v5299
        %v5642 = vunpack.c.l.b16 %v5300
        %v5643 = vunpack.c.h.b16 %v5300
        %v5644 = vunpack.c.l.b16 %v5301
        %v5645 = vunpack.c.h.b16 %v5301
        %v5646 = vunpack.c.l.b16 %v5302
        %v5647 = vunpack.c.h.b16 %v5302
        %v5648 = vunpack.c.l.b16 %v5303
        %v5649 = vunpack.c.h.b16 %v5303
        %v5650 = vunpack.c.l.b16 %v5304
        %v5651 = vunpack.c.h.b16 %v5304
        %v5652 = vunpack.c.l.b16 %v5305
        %v5653 = vunpack.c.h.b16 %v5305
        %v5654 = vunpack.c.l.b16 %v5306
        %v5655 = vunpack.c.h.b16 %v5306
        %v5656 = vunpack.c.l.b16 %v5307
        %v5657 = vunpack.c.h.b16 %v5307
        %v5658 = vunpack.c.l.b16 %v5308
        %v5659 = vunpack.c.h.b16 %v5308
        %v5660 = vunpack.c.l.b16 %v5309
        %v5661 = vunpack.c.h.b16 %v5309
        %v5662 = vunpack.c.l.b16 %v5310
        %v5663 = vunpack.c.h.b16 %v5310
        %v5664 = vunpack.c.l.b16 %v5311
        %v5665 = vunpack.c.h.b16 %v5311
        %v5666 = vunpack.c.l.b16 %v5312
        %v5667 = vunpack.c.h.b16 %v5312
        %v5668 = vunpack.c.l.b16 %v5313
        %v5669 = vunpack.c.h.b16 %v5313
        %v5670 = vunpack.c.l.b16 %v5314
        %v5671 = vunpack.c.h.b16 %v5314
        %v5672 = vunpack.c.l.b16 %v5315
        %v5673 = vunpack.c.h.b16 %v5315
        %v5674 = vunpack.c.l.b16 %v5316
        %v5675 = vunpack.c.h.b16 %v5316
        %v5676 = vunpack.c.l.b16 %v5317
        %v5677 = vunpack.c.h.b16 %v5317
        %v5678 = vunpack.c.l.b16 %v5318
        %v5679 = vunpack.c.h.b16 %v5318
        %v5680 = vunpack.c.l.b16 %v5319
        %v5681 = vunpack.c.h.b16 %v5319
        %v5682 = vunpack.c.l.b16 %v5320
        %v5683 = vunpack.c.h.b16 %v5320
        %v5684 = vunpack.c.l.b16 %v5321
        %v5685 = vunpack.c.h.b16 %v5321
        %v5686 = vunpack.c.l.b16 %v5322
        %v5687 = vunpack.c.h.b16 %v5322
        %v5688 = vunpack.c.l.b16 %v5323
        %v5689 = vunpack.c.h.b16 %v5323
        %v5690 = vunpack.c.l.b16 %v5324
        %v5691 = vunpack.c.h.b16 %v5324
        %v5692 = vunpack.c.l.b16 %v5325
        %v5693 = vunpack.c.h.b16 %v5325
        %v5694 = vunpack.c.l.b16 %v5326
        %v5695 = vunpack.c.h.b16 %v5326
        %v5696 = vunpack.c.l.b16 %v5327
        %v5697 = vunpack.c.h.b16 %v5327
        %v5698 = vunpack.c.l.b16 %v5328
        %v5699 = vunpack.c.h.b16 %v5328
        %v5700 = vunpack.c.l.b16 %v5329
        %v5701 = vunpack.c.h.b16 %v5329
        %v5702 = vunpack.c.l.b16 %v5330
        %v5703 = vunpack.c.h.b16 %v5330
        %v5704 = vunpack.c.l.b16 %v5331
        %v5705 = vunpack.c.h.b16 %v5331
        %v5706 = vunpack.c.l.b16 %v5332
        %v5707 = vunpack.c.h.b16 %v5332
        %v5708 = vunpack.c.l.b16 %v5333
        %v5709 = vunpack.c.h.b16 %v5333
        %v5710 = vunpack.c.l.b16 %v5334
        %v5711 = vunpack.c.h.b16 %v5334
        %v5712 = vunpack.c.l.b16 %v5335
        %v5713 = vunpack.c.h.b16 %v5335
        %v5714 = vunpack.c.l.b16 %v5336
        %v5715 = vunpack.c.h.b16 %v5336
        %v5716 = vunpack.c.l.b16 %v5337
        %v5717 = vunpack.c.h.b16 %v5337
        %v5718 = vunpack.c.l.b16 %v5338
        %v5719 = vunpack.c.h.b16 %v5338
        %v5720 = vunpack.c.l.b16 %v5339
        %v5721 = vunpack.c.h.b16 %v5339
        %v5722 = vunpack.c.l.b16 %v5340
        %v5723 = vunpack.c.h.b16 %v5340
        %v5724 = vunpack.c.l.b16 %v5341
        %v5725 = vunpack.c.h.b16 %v5341
        %v5726 = vpack.c.b16 %v5486, %v5470
        %v5727 = vpack.c.b16 %v5487, %v5471
        %v5728 = vpack.c.b16 %v5488, %v5472
        %v5729 = vpack.c.b16 %v5489, %v5473
        %v5730 = vpack.c.b16 %v5490, %v5474
        %v5731 = vpack.c.b16 %v5491, %v5475
        %v5732 = vpack.c.b16 %v5492, %v5476
        %v5733 = vpack.c.b16 %v5493, %v5477
        %v5734 = vpack.c.b16 %v5494, %v5478
        %v5735 = vpack.c.b16 %v5495, %v5479
        %v5736 = vpack.c.b16 %v5496, %v5480
        %v5737 = vpack.c.b16 %v5497, %v5481
        %v5738 = vpack.c.b16 %v5498, %v5482
        %v5739 = vpack.c.b16 %v5499, %v5483
        %v5740 = vpack.c.b16 %v5500, %v5484
        %v5741 = vpack.c.b16 %v5501, %v5485
        %v5742 = vpack.c.b16 %v5518, %v5502
        %v5743 = vpack.c.b16 %v5519, %v5503
        %v5744 = vpack.c.b16 %v5520, %v5504
        %v5745 = vpack.c.b16 %v5521, %v5505
        %v5746 = vpack.c.b16 %v5522, %v5506
        %v5747 = vpack.c.b16 %v5523, %v5507
        %v5748 = vpack.c.b16 %v5524, %v5508
        %v5749 = vpack.c.b16 %v5525, %v5509
        %v5750 = vpack.c.b16 %v5526, %v5510
        %v5751 = vpack.c.b16 %v5527, %v5511
        %v5752 = vpack.c.b16 %v5528, %v5512
        %v5753 = vpack.c.b16 %v5529, %v5513
        %v5754 = vpack.c.b16 %v5530, %v5514
        %v5755 = vpack.c.b16 %v5531, %v5515
        %v5756 = vpack.c.b16 %v5532, %v5516
        %v5757 = vpack.c.b16 %v5533, %v5517
        %v5758 = vpack.c.b16 %v5550, %v5534
        %v5759 = vpack.c.b16 %v5551, %v5535
        %v5760 = vpack.c.b16 %v5552, %v5536
        %v5761 = vpack.c.b16 %v5553, %v5537
        %v5762 = vpack.c.b16 %v5554, %v5538
        %v5763 = vpack.c.b16 %v5555, %v5539
        %v5764 = vpack.c.b16 %v5556, %v5540
        %v5765 = vpack.c.b16 %v5557, %v5541
        %v5766 = vpack.c.b16 %v5558, %v5542
        %v5767 = vpack.c.b16 %v5559, %v5543
        %v5768 = vpack.c.b16 %v5560, %v5544
        %v5769 = vpack.c.b16 %v5561, %v5545
        %v5770 = vpack.c.b16 %v5562, %v5546
        %v5771 = vpack.c.b16 %v5563, %v5547
        %v5772 = vpack.c.b16 %v5564, %v5548
        %v5773 = vpack.c.b16 %v5565, %v5549
        %v5774 = vpack.c.b16 %v5582, %v5566
        %v5775 = vpack.c.b16 %v5583, %v5567
        %v5776 = vpack.c.b16 %v5584, %v5568
        %v5777 = vpack.c.b16 %v5585, %v5569
        %v5778 = vpack.c.b16 %v5586, %v5570
        %v5779 = vpack.c.b16 %v5587, %v5571
        %v5780 = vpack.c.b16 %v5588, %v5572
        %v5781 = vpack.c.b16 %v5589, %v5573
        %v5782 = vpack.c.b16 %v5590, %v5574
        %v5783 = vpack.c.b16 %v5591, %v5575
        %v5784 = vpack.c.b16 %v5592, %v5576
        %v5785 = vpack.c.b16 %v5593, %v5577
        %v5786 = vpack.c.b16 %v5594, %v5578
        %v5787 = vpack.c.b16 %v5595, %v5579
        %v5788 = vpack.c.b16 %v5596, %v5580
        %v5789 = vpack.c.b16 %v5597, %v5581
        %v5790 = vpack.c.b16 %v5614, %v5598
        %v5791 = vpack.c.b16 %v5615, %v5599
        %v5792 = vpack.c.b16 %v5616, %v5600
        %v5793 = vpack.c.b16 %v5617, %v5601
        %v5794 = vpack.c.b16 %v5618, %v5602
        %v5795 = vpack.c.b16 %v5619, %v5603
        %v5796 = vpack.c.b16 %v5620, %v5604
        %v5797 = vpack.c.b16 %v5621, %v5605
        %v5798 = vpack.c.b16 %v5622, %v5606
        %v5799 = vpack.c.b16 %v5623, %v5607
        %v5800 = vpack.c.b16 %v5624, %v5608
        %v5801 = vpack.c.b16 %v5625, %v5609
        %v5802 = vpack.c.b16 %v5626, %v5610
        %v5803 = vpack.c.b16 %v5627, %v5611
        %v5804 = vpack.c.b16 %v5628, %v5612
        %v5805 = vpack.c.b16 %v5629, %v5613
        %v5806 = vpack.c.b16 %v5646, %v5630
        %v5807 = vpack.c.b16 %v5647, %v5631
        %v5808 = vpack.c.b16 %v5648, %v5632
        %v5809 = vpack.c.b16 %v5649, %v5633
        %v5810 = vpack.c.b16 %v5650, %v5634
        %v5811 = vpack.c.b16 %v5651, %v5635
        %v5812 = vpack.c.b16 %v5652, %v5636
        %v5813 = vpack.c.b16 %v5653, %v5637
        %v5814 = vpack.c.b16 %v5654, %v5638
        %v5815 = vpack.c.b16 %v5655, %v5639
        %v5816 = vpack.c.b16 %v5656, %v5640
        %v5817 = vpack.c.b16 %v5657, %v5641
        %v5818 = vpack.c.b16 %v5658, %v5642
        %v5819 = vpack.c.b16 %v5659, %v5643
        %v5820 = vpack.c.b16 %v5660, %v5644
        %v5821 = vpack.c.b16 %v5661, %v5645
        %v5822 = vpack.c.b16 %v5678, %v5662
        %v5823 = vpack.c.b16 %v5679, %v5663
        %v5824 = vpack.c.b16 %v5680, %v5664
        %v5825 = vpack.c.b16 %v5681, %v5665
        %v5826 = vpack.c.b16 %v5682, %v5666
        %v5827 = vpack.c.b16 %v5683, %v5667
        %v5828 = vpack.c.b16 %v5684, %v5668
        %v5829 = vpack.c.b16 %v5685, %v5669
        %v5830 = vpack.c.b16 %v5686, %v5670
        %v5831 = vpack.c.b16 %v5687, %v5671
        %v5832 = vpack.c.b16 %v5688, %v5672
        %v5833 = vpack.c.b16 %v5689, %v5673
        %v5834 = vpack.c.b16 %v5690, %v5674
        %v5835 = vpack.c.b16 %v5691, %v5675
        %v5836 = vpack.c.b16 %v5692, %v5676
        %v5837 = vpack.c.b16 %v5693, %v5677
        %v5838 = vpack.c.b16 %v5710, %v5694
        %v5839 = vpack.c.b16 %v5711, %v5695
        %v5840 = vpack.c.b16 %v5712, %v5696
        %v5841 = vpack.c.b16 %v5713, %v5697
        %v5842 = vpack.c.b16 %v5714, %v5698
        %v5843 = vpack.c.b16 %v5715, %v5699
        %v5844 = vpack.c.b16 %v5716, %v5700
        %v5845 = vpack.c.b16 %v5717, %v5701
        %v5846 = vpack.c.b16 %v5718, %v5702
        %v5847 = vpack.c.b16 %v5719, %v5703
        %v5848 = vpack.c.b16 %v5720, %v5704
        %v5849 = vpack.c.b16 %v5721, %v5705
        %v5850 = vpack.c.b16 %v5722, %v5706
        %v5851 = vpack.c.b16 %v5723, %v5707
        %v5852 = vpack.c.b16 %v5724, %v5708
        %v5853 = vpack.c.b16 %v5725, %v5709
        %5982 = vmatprep.subr.bf16.mxu0 %v5727
        %5983 = vmatpush1.bf16.msra.mxu0 %v5726
        %5984 = vmatprep.subr.bf16.mxu0 %v5743
        %5985 = vmatpush1.bf16.msra.mxu0 %v5742
        %5986 = vmatprep.subr.bf16.mxu0 %v5759
        %5987 = vmatpush1.bf16.msra.mxu0 %v5758
        %5988 = vmatprep.subr.bf16.mxu0 %v5775
        %5989 = vmatpush1.bf16.msra.mxu0 %v5774
        %5990 = vmatprep.subr.bf16.mxu0 %v5791
        %5991 = vmatpush1.bf16.msra.mxu0 %v5790
        %5992 = vmatprep.subr.bf16.mxu0 %v5807
        %5993 = vmatpush1.bf16.msra.mxu0 %v5806
        %5994 = vmatprep.subr.bf16.mxu0 %v5823
        %5995 = vmatpush1.bf16.msra.mxu0 %v5822
        %5996 = vmatprep.subr.bf16.mxu0 %v5839
        %5997 = vmatpush1.bf16.msra.mxu0 %v5838
        %5998 = vmatprep.subr.bf16.mxu0 0
        %5999 = vmatpush1.bf16.msra.mxu0 0
        %6000 = vmatprep.subr.bf16.mxu0 0
        %6001 = vmatpush1.bf16.msra.mxu0 0
        %6002 = vmatprep.subr.bf16.mxu0 0
        %6003 = vmatpush1.bf16.msra.mxu0 0
        %6004 = vmatprep.subr.bf16.mxu0 0
        %6005 = vmatpush1.bf16.msra.mxu0 0
        %6006 = vmatprep.subr.bf16.mxu0 0
        %6007 = vmatpush1.bf16.msra.mxu0 0
        %6008 = vmatprep.subr.bf16.mxu0 0
        %6009 = vmatpush1.bf16.msra.mxu0 0
        %6010 = vmatprep.subr.bf16.mxu0 0
        %6011 = vmatpush1.bf16.msra.mxu0 0
        %6012 = vmatprep.subr.bf16.mxu0 0
        %6013 = vmatpush1.bf16.msra.mxu0 0
        %6014 = vmatprep.mubr.bf16.mxu0 0
        %6015 = vmatmul.mubr.bf16.gmra.mrb[0].mxu0 %v652
        %v6016 = vpop.f32.mrb[0].mxu0
        %v6017 = vadd.f32 0.0, %v6016
        %v6018 = vpop.f32.mrb[0].mxu0
        %v6019 = vadd.f32 0.0, %v6018
        %v6020 = vpop.f32.mrb[0].mxu0
        %v6021 = vadd.f32 0.0, %v6020
        %v6022 = vpop.f32.mrb[0].mxu0
        %v6023 = vadd.f32 0.0, %v6022
        %6024 = vdwg.mxu0
        %6025 = vmatprep.subr.bf16.mxu0 %v5729
        %6026 = vmatpush1.bf16.msra.mxu0 %v5728
        %6027 = vmatprep.subr.bf16.mxu0 %v5745
        %6028 = vmatpush1.bf16.msra.mxu0 %v5744
        %6029 = vmatprep.subr.bf16.mxu0 %v5761
        %6030 = vmatpush1.bf16.msra.mxu0 %v5760
        %6031 = vmatprep.subr.bf16.mxu0 %v5777
        %6032 = vmatpush1.bf16.msra.mxu0 %v5776
        %6033 = vmatprep.subr.bf16.mxu0 %v5793
        %6034 = vmatpush1.bf16.msra.mxu0 %v5792
        %6035 = vmatprep.subr.bf16.mxu0 %v5809
        %6036 = vmatpush1.bf16.msra.mxu0 %v5808
        %6037 = vmatprep.subr.bf16.mxu0 %v5825
        %6038 = vmatpush1.bf16.msra.mxu0 %v5824
        %6039 = vmatprep.subr.bf16.mxu0 %v5841
        %6040 = vmatpush1.bf16.msra.mxu0 %v5840
        %6041 = vmatprep.subr.bf16.mxu0 0
        %6042 = vmatpush1.bf16.msra.mxu0 0
        %6043 = vmatprep.subr.bf16.mxu0 0
        %6044 = vmatpush1.bf16.msra.mxu0 0
        %6045 = vmatprep.subr.bf16.mxu0 0
        %6046 = vmatpush1.bf16.msra.mxu0 0
        %6047 = vmatprep.subr.bf16.mxu0 0
        %6048 = vmatpush1.bf16.msra.mxu0 0
        %6049 = vmatprep.subr.bf16.mxu0 0
        %6050 = vmatpush1.bf16.msra.mxu0 0
        %6051 = vmatprep.subr.bf16.mxu0 0
        %6052 = vmatpush1.bf16.msra.mxu0 0
        %6053 = vmatprep.subr.bf16.mxu0 0
        %6054 = vmatpush1.bf16.msra.mxu0 0
        %6055 = vmatprep.subr.bf16.mxu0 0
        %6056 = vmatpush1.bf16.msra.mxu0 0
        %6057 = vmatprep.mubr.bf16.mxu0 0
        %6058 = vmatmul.mubr.bf16.gmra.mrb[0].mxu0 %v652
        %v6059 = vpop.f32.mrb[0].mxu0
        %v6060 = vadd.f32 0.0, %v6059
        %v6061 = vpop.f32.mrb[0].mxu0
        %v6062 = vadd.f32 0.0, %v6061
        %v6063 = vpop.f32.mrb[0].mxu0
        %v6064 = vadd.f32 0.0, %v6063
        %v6065 = vpop.f32.mrb[0].mxu0
        %v6066 = vadd.f32 0.0, %v6065
        %6067 = vdwg.mxu0
        %6068 = vmatprep.subr.bf16.mxu0 %v5731
        %6069 = vmatpush1.bf16.msra.mxu0 %v5730
        %6070 = vmatprep.subr.bf16.mxu0 %v5747
        %6071 = vmatpush1.bf16.msra.mxu0 %v5746
        %6072 = vmatprep.subr.bf16.mxu0 %v5763
        %6073 = vmatpush1.bf16.msra.mxu0 %v5762
        %6074 = vmatprep.subr.bf16.mxu0 %v5779
        %6075 = vmatpush1.bf16.msra.mxu0 %v5778
        %6076 = vmatprep.subr.bf16.mxu0 %v5795
        %6077 = vmatpush1.bf16.msra.mxu0 %v5794
        %6078 = vmatprep.subr.bf16.mxu0 %v5811
        %6079 = vmatpush1.bf16.msra.mxu0 %v5810
        %6080 = vmatprep.subr.bf16.mxu0 %v5827
        %6081 = vmatpush1.bf16.msra.mxu0 %v5826
        %6082 = vmatprep.subr.bf16.mxu0 %v5843
        %6083 = vmatpush1.bf16.msra.mxu0 %v5842
        %6084 = vmatprep.subr.bf16.mxu0 0
        %6085 = vmatpush1.bf16.msra.mxu0 0
        %6086 = vmatprep.subr.bf16.mxu0 0
        %6087 = vmatpush1.bf16.msra.mxu0 0
        %6088 = vmatprep.subr.bf16.mxu0 0
        %6089 = vmatpush1.bf16.msra.mxu0 0
        %6090 = vmatprep.subr.bf16.mxu0 0
        %6091 = vmatpush1.bf16.msra.mxu0 0
        %6092 = vmatprep.subr.bf16.mxu0 0
        %6093 = vmatpush1.bf16.msra.mxu0 0
        %6094 = vmatprep.subr.bf16.mxu0 0
        %6095 = vmatpush1.bf16.msra.mxu0 0
        %6096 = vmatprep.subr.bf16.mxu0 0
        %6097 = vmatpush1.bf16.msra.mxu0 0
        %6098 = vmatprep.subr.bf16.mxu0 0
        %6099 = vmatpush1.bf16.msra.mxu0 0
        %6100 = vmatprep.mubr.bf16.mxu0 0
        %6101 = vmatmul.mubr.bf16.gmra.mrb[0].mxu0 %v652
        %v6102 = vpop.f32.mrb[0].mxu0
        %v6103 = vadd.f32 0.0, %v6102
        %v6104 = vpop.f32.mrb[0].mxu0
        %v6105 = vadd.f32 0.0, %v6104
        %v6106 = vpop.f32.mrb[0].mxu0
        %v6107 = vadd.f32 0.0, %v6106
        %v6108 = vpop.f32.mrb[0].mxu0
        %v6109 = vadd.f32 0.0, %v6108
        %6110 = vdwg.mxu0
        %6111 = vmatprep.subr.bf16.mxu0 %v5733
        %6112 = vmatpush1.bf16.msra.mxu0 %v5732
        %6113 = vmatprep.subr.bf16.mxu0 %v5749
        %6114 = vmatpush1.bf16.msra.mxu0 %v5748
        %6115 = vmatprep.subr.bf16.mxu0 %v5765
        %6116 = vmatpush1.bf16.msra.mxu0 %v5764
        %6117 = vmatprep.subr.bf16.mxu0 %v5781
        %6118 = vmatpush1.bf16.msra.mxu0 %v5780
        %6119 = vmatprep.subr.bf16.mxu0 %v5797
        %6120 = vmatpush1.bf16.msra.mxu0 %v5796
        %6121 = vmatprep.subr.bf16.mxu0 %v5813
        %6122 = vmatpush1.bf16.msra.mxu0 %v5812
        %6123 = vmatprep.subr.bf16.mxu0 %v5829
        %6124 = vmatpush1.bf16.msra.mxu0 %v5828
        %6125 = vmatprep.subr.bf16.mxu0 %v5845
        %6126 = vmatpush1.bf16.msra.mxu0 %v5844
        %6127 = vmatprep.subr.bf16.mxu0 0
        %6128 = vmatpush1.bf16.msra.mxu0 0
        %6129 = vmatprep.subr.bf16.mxu0 0
        %6130 = vmatpush1.bf16.msra.mxu0 0
        %6131 = vmatprep.subr.bf16.mxu0 0
        %6132 = vmatpush1.bf16.msra.mxu0 0
        %6133 = vmatprep.subr.bf16.mxu0 0
        %6134 = vmatpush1.bf16.msra.mxu0 0
        %6135 = vmatprep.subr.bf16.mxu0 0
        %6136 = vmatpush1.bf16.msra.mxu0 0
        %6137 = vmatprep.subr.bf16.mxu0 0
        %6138 = vmatpush1.bf16.msra.mxu0 0
        %6139 = vmatprep.subr.bf16.mxu0 0
        %6140 = vmatpush1.bf16.msra.mxu0 0
        %6141 = vmatprep.subr.bf16.mxu0 0
        %6142 = vmatpush1.bf16.msra.mxu0 0
        %6143 = vmatprep.mubr.bf16.mxu0 0
        %6144 = vmatmul.mubr.bf16.gmra.mrb[0].mxu0 %v652
        %v6145 = vpop.f32.mrb[0].mxu0
        %v6146 = vadd.f32 0.0, %v6145
        %v6147 = vpop.f32.mrb[0].mxu0
        %v6148 = vadd.f32 0.0, %v6147
        %v6149 = vpop.f32.mrb[0].mxu0
        %v6150 = vadd.f32 0.0, %v6149
        %v6151 = vpop.f32.mrb[0].mxu0
        %v6152 = vadd.f32 0.0, %v6151
        %6153 = vdwg.mxu0
        %6154 = vmatprep.subr.bf16.mxu0 %v5735
        %6155 = vmatpush1.bf16.msra.mxu0 %v5734
        %6156 = vmatprep.subr.bf16.mxu0 %v5751
        %6157 = vmatpush1.bf16.msra.mxu0 %v5750
        %6158 = vmatprep.subr.bf16.mxu0 %v5767
        %6159 = vmatpush1.bf16.msra.mxu0 %v5766
        %6160 = vmatprep.subr.bf16.mxu0 %v5783
        %6161 = vmatpush1.bf16.msra.mxu0 %v5782
        %6162 = vmatprep.subr.bf16.mxu0 %v5799
        %6163 = vmatpush1.bf16.msra.mxu0 %v5798
        %6164 = vmatprep.subr.bf16.mxu0 %v5815
        %6165 = vmatpush1.bf16.msra.mxu0 %v5814
        %6166 = vmatprep.subr.bf16.mxu0 %v5831
        %6167 = vmatpush1.bf16.msra.mxu0 %v5830
        %6168 = vmatprep.subr.bf16.mxu0 %v5847
        %6169 = vmatpush1.bf16.msra.mxu0 %v5846
        %6170 = vmatprep.subr.bf16.mxu0 0
        %6171 = vmatpush1.bf16.msra.mxu0 0
        %6172 = vmatprep.subr.bf16.mxu0 0
        %6173 = vmatpush1.bf16.msra.mxu0 0
        %6174 = vmatprep.subr.bf16.mxu0 0
        %6175 = vmatpush1.bf16.msra.mxu0 0
        %6176 = vmatprep.subr.bf16.mxu0 0
        %6177 = vmatpush1.bf16.msra.mxu0 0
        %6178 = vmatprep.subr.bf16.mxu0 0
        %6179 = vmatpush1.bf16.msra.mxu0 0
        %6180 = vmatprep.subr.bf16.mxu0 0
        %6181 = vmatpush1.bf16.msra.mxu0 0
        %6182 = vmatprep.subr.bf16.mxu0 0
        %6183 = vmatpush1.bf16.msra.mxu0 0
        %6184 = vmatprep.subr.bf16.mxu0 0
        %6185 = vmatpush1.bf16.msra.mxu0 0
        %6186 = vmatprep.mubr.bf16.mxu0 0
        %6187 = vmatmul.mubr.bf16.gmra.mrb[0].mxu0 %v652
        %v6188 = vpop.f32.mrb[0].mxu0
        %v6189 = vadd.f32 0.0, %v6188
        %v6190 = vpop.f32.mrb[0].mxu0
        %v6191 = vadd.f32 0.0, %v6190
        %v6192 = vpop.f32.mrb[0].mxu0
        %v6193 = vadd.f32 0.0, %v6192
        %v6194 = vpop.f32.mrb[0].mxu0
        %v6195 = vadd.f32 0.0, %v6194
        %6196 = vdwg.mxu0
        %6197 = vmatprep.subr.bf16.mxu0 %v5737
        %6198 = vmatpush1.bf16.msra.mxu0 %v5736
        %6199 = vmatprep.subr.bf16.mxu0 %v5753
        %6200 = vmatpush1.bf16.msra.mxu0 %v5752
        %6201 = vmatprep.subr.bf16.mxu0 %v5769
        %6202 = vmatpush1.bf16.msra.mxu0 %v5768
        %6203 = vmatprep.subr.bf16.mxu0 %v5785
        %6204 = vmatpush1.bf16.msra.mxu0 %v5784
        %6205 = vmatprep.subr.bf16.mxu0 %v5801
        %6206 = vmatpush1.bf16.msra.mxu0 %v5800
        %6207 = vmatprep.subr.bf16.mxu0 %v5817
        %6208 = vmatpush1.bf16.msra.mxu0 %v5816
        %6209 = vmatprep.subr.bf16.mxu0 %v5833
        %6210 = vmatpush1.bf16.msra.mxu0 %v5832
        %6211 = vmatprep.subr.bf16.mxu0 %v5849
        %6212 = vmatpush1.bf16.msra.mxu0 %v5848
        %6213 = vmatprep.subr.bf16.mxu0 0
        %6214 = vmatpush1.bf16.msra.mxu0 0
        %6215 = vmatprep.subr.bf16.mxu0 0
        %6216 = vmatpush1.bf16.msra.mxu0 0
        %6217 = vmatprep.subr.bf16.mxu0 0
        %6218 = vmatpush1.bf16.msra.mxu0 0
        %6219 = vmatprep.subr.bf16.mxu0 0
        %6220 = vmatpush1.bf16.msra.mxu0 0
        %6221 = vmatprep.subr.bf16.mxu0 0
        %6222 = vmatpush1.bf16.msra.mxu0 0
        %6223 = vmatprep.subr.bf16.mxu0 0
        %6224 = vmatpush1.bf16.msra.mxu0 0
        %6225 = vmatprep.subr.bf16.mxu0 0
        %6226 = vmatpush1.bf16.msra.mxu0 0
        %6227 = vmatprep.subr.bf16.mxu0 0
        %6228 = vmatpush1.bf16.msra.mxu0 0
        %6229 = vmatprep.mubr.bf16.mxu0 0
        %6230 = vmatmul.mubr.bf16.gmra.mrb[0].mxu0 %v652
        %v6231 = vpop.f32.mrb[0].mxu0
        %v6232 = vadd.f32 0.0, %v6231
        %v6233 = vpop.f32.mrb[0].mxu0
        %v6234 = vadd.f32 0.0, %v6233
        %v6235 = vpop.f32.mrb[0].mxu0
        %v6236 = vadd.f32 0.0, %v6235
        %v6237 = vpop.f32.mrb[0].mxu0
        %v6238 = vadd.f32 0.0, %v6237
        %6239 = vdwg.mxu0
        %6240 = vmatprep.subr.bf16.mxu0 %v5739
        %6241 = vmatpush1.bf16.msra.mxu0 %v5738
        %6242 = vmatprep.subr.bf16.mxu0 %v5755
        %6243 = vmatpush1.bf16.msra.mxu0 %v5754
        %6244 = vmatprep.subr.bf16.mxu0 %v5771
        %6245 = vmatpush1.bf16.msra.mxu0 %v5770
        %6246 = vmatprep.subr.bf16.mxu0 %v5787
        %6247 = vmatpush1.bf16.msra.mxu0 %v5786
        %6248 = vmatprep.subr.bf16.mxu0 %v5803
        %6249 = vmatpush1.bf16.msra.mxu0 %v5802
        %6250 = vmatprep.subr.bf16.mxu0 %v5819
        %6251 = vmatpush1.bf16.msra.mxu0 %v5818
        %6252 = vmatprep.subr.bf16.mxu0 %v5835
        %6253 = vmatpush1.bf16.msra.mxu0 %v5834
        %6254 = vmatprep.subr.bf16.mxu0 %v5851
        %6255 = vmatpush1.bf16.msra.mxu0 %v5850
        %6256 = vmatprep.subr.bf16.mxu0 0
        %6257 = vmatpush1.bf16.msra.mxu0 0
        %6258 = vmatprep.subr.bf16.mxu0 0
        %6259 = vmatpush1.bf16.msra.mxu0 0
        %6260 = vmatprep.subr.bf16.mxu0 0
        %6261 = vmatpush1.bf16.msra.mxu0 0
        %6262 = vmatprep.subr.bf16.mxu0 0
        %6263 = vmatpush1.bf16.msra.mxu0 0
        %6264 = vmatprep.subr.bf16.mxu0 0
        %6265 = vmatpush1.bf16.msra.mxu0 0
        %6266 = vmatprep.subr.bf16.mxu0 0
        %6267 = vmatpush1.bf16.msra.mxu0 0
        %6268 = vmatprep.subr.bf16.mxu0 0
        %6269 = vmatpush1.bf16.msra.mxu0 0
        %6270 = vmatprep.subr.bf16.mxu0 0
        %6271 = vmatpush1.bf16.msra.mxu0 0
        %6272 = vmatprep.mubr.bf16.mxu0 0
        %6273 = vmatmul.mubr.bf16.gmra.mrb[0].mxu0 %v652
        %v6274 = vpop.f32.mrb[0].mxu0
        %v6275 = vadd.f32 0.0, %v6274
        %v6276 = vpop.f32.mrb[0].mxu0
        %v6277 = vadd.f32 0.0, %v6276
        %v6278 = vpop.f32.mrb[0].mxu0
        %v6279 = vadd.f32 0.0, %v6278
        %v6280 = vpop.f32.mrb[0].mxu0
        %v6281 = vadd.f32 0.0, %v6280
        %6282 = vdwg.mxu0
        %6283 = vmatprep.subr.bf16.mxu0 %v5741
        %6284 = vmatpush1.bf16.msra.mxu0 %v5740
        %6285 = vmatprep.subr.bf16.mxu0 %v5757
        %6286 = vmatpush1.bf16.msra.mxu0 %v5756
        %6287 = vmatprep.subr.bf16.mxu0 %v5773
        %6288 = vmatpush1.bf16.msra.mxu0 %v5772
        %6289 = vmatprep.subr.bf16.mxu0 %v5789
        %6290 = vmatpush1.bf16.msra.mxu0 %v5788
        %6291 = vmatprep.subr.bf16.mxu0 %v5805
        %6292 = vmatpush1.bf16.msra.mxu0 %v5804
        %6293 = vmatprep.subr.bf16.mxu0 %v5821
        %6294 = vmatpush1.bf16.msra.mxu0 %v5820
        %6295 = vmatprep.subr.bf16.mxu0 %v5837
        %6296 = vmatpush1.bf16.msra.mxu0 %v5836
        %6297 = vmatprep.subr.bf16.mxu0 %v5853
        %6298 = vmatpush1.bf16.msra.mxu0 %v5852
        %6299 = vmatprep.subr.bf16.mxu0 0
        %6300 = vmatpush1.bf16.msra.mxu0 0
        %6301 = vmatprep.subr.bf16.mxu0 0
        %6302 = vmatpush1.bf16.msra.mxu0 0
        %6303 = vmatprep.subr.bf16.mxu0 0
        %6304 = vmatpush1.bf16.msra.mxu0 0
        %6305 = vmatprep.subr.bf16.mxu0 0
        %6306 = vmatpush1.bf16.msra.mxu0 0
        %6307 = vmatprep.subr.bf16.mxu0 0
        %6308 = vmatpush1.bf16.msra.mxu0 0
        %6309 = vmatprep.subr.bf16.mxu0 0
        %6310 = vmatpush1.bf16.msra.mxu0 0
        %6311 = vmatprep.subr.bf16.mxu0 0
        %6312 = vmatpush1.bf16.msra.mxu0 0
        %6313 = vmatprep.subr.bf16.mxu0 0
        %6314 = vmatpush1.bf16.msra.mxu0 0
        %6315 = vmatprep.mubr.bf16.mxu0 0
        %6316 = vmatmul.mubr.bf16.gmra.mrb[0].mxu0 %v652
        %v6317 = vpop.f32.mrb[0].mxu0
        %v6318 = vadd.f32 0.0, %v6317
        %v6319 = vpop.f32.mrb[0].mxu0
        %v6320 = vadd.f32 0.0, %v6319
        %v6321 = vpop.f32.mrb[0].mxu0
        %v6322 = vadd.f32 0.0, %v6321
        %v6323 = vpop.f32.mrb[0].mxu0
        %v6324 = vadd.f32 0.0, %v6323
        %6325 = vdwg.mxu0
        %v6326 = vpack.c.bf16 %v6021, %v6017
        %v6327 = vpack.c.bf16 %v6023, %v6019
        %v6328 = vpack.c.bf16 %v6064, %v6060
        %v6329 = vpack.c.bf16 %v6066, %v6062
        %v6330 = vpack.c.bf16 %v6107, %v6103
        %v6331 = vpack.c.bf16 %v6109, %v6105
        %v6332 = vpack.c.bf16 %v6150, %v6146
        %v6333 = vpack.c.bf16 %v6152, %v6148
        %v6334 = vpack.c.bf16 %v6193, %v6189
        %v6335 = vpack.c.bf16 %v6195, %v6191
        %v6336 = vpack.c.bf16 %v6236, %v6232
        %v6337 = vpack.c.bf16 %v6238, %v6234
        %v6338 = vpack.c.bf16 %v6279, %v6275
        %v6339 = vpack.c.bf16 %v6281, %v6277
        %v6340 = vpack.c.bf16 %v6322, %v6318
        %v6341 = vpack.c.bf16 %v6324, %v6320
        %v6342 = vmul.bf16 %v5198, %v6326
        %v6343 = vmul.bf16 %v5199, %v6327
        %v6344 = vmul.bf16 %v5200, %v6328
        %v6345 = vmul.bf16 %v5201, %v6329
        %v6346 = vmul.bf16 %v5202, %v6330
        %v6347 = vmul.bf16 %v5203, %v6331
        %v6348 = vmul.bf16 %v5204, %v6332
        %v6349 = vmul.bf16 %v5205, %v6333
        %v6350 = vmul.bf16 %v5206, %v6334
        %v6351 = vmul.bf16 %v5207, %v6335
        %v6352 = vmul.bf16 %v5208, %v6336
        %v6353 = vmul.bf16 %v5209, %v6337
        %v6354 = vmul.bf16 %v5210, %v6338
        %v6355 = vmul.bf16 %v5211, %v6339
        %v6356 = vmul.bf16 %v5212, %v6340
        %v6357 = vmul.bf16 %v5213, %v6341
        %v6358 = vld [vmem:[#allocation7 + $0x1400] sm:$0xff]
        %v6359 = vld [vmem:[#allocation7 + $0x1408] sm:$0xff]
        %v6360 = vld [vmem:[#allocation7 + $0x1410] sm:$0xff]
        %v6361 = vld [vmem:[#allocation7 + $0x1418] sm:$0xff]
        %v6362 = vld [vmem:[#allocation7 + $0x1420] sm:$0xff]
        %v6363 = vld [vmem:[#allocation7 + $0x1428] sm:$0xff]
        %v6364 = vld [vmem:[#allocation7 + $0x1430] sm:$0xff]
        %v6365 = vld [vmem:[#allocation7 + $0x1438] sm:$0xff]
        %v6366 = vld [vmem:[#allocation7 + $0x1440] sm:$0xff]
        %v6367 = vld [vmem:[#allocation7 + $0x1448] sm:$0xff]
        %v6368 = vld [vmem:[#allocation7 + $0x1450] sm:$0xff]
        %v6369 = vld [vmem:[#allocation7 + $0x1458] sm:$0xff]
        %v6370 = vld [vmem:[#allocation7 + $0x1460] sm:$0xff]
        %v6371 = vld [vmem:[#allocation7 + $0x1468] sm:$0xff]
        %v6372 = vld [vmem:[#allocation7 + $0x1470] sm:$0xff]
        %v6373 = vld [vmem:[#allocation7 + $0x1478] sm:$0xff]
        %v6374 = vld [vmem:[#allocation7 + $0x1480] sm:$0xff]
        %v6375 = vld [vmem:[#allocation7 + $0x1488] sm:$0xff]
        %v6376 = vld [vmem:[#allocation7 + $0x1490] sm:$0xff]
        %v6377 = vld [vmem:[#allocation7 + $0x1498] sm:$0xff]
        %v6378 = vld [vmem:[#allocation7 + $0x14a0] sm:$0xff]
        %v6379 = vld [vmem:[#allocation7 + $0x14a8] sm:$0xff]
        %v6380 = vld [vmem:[#allocation7 + $0x14b0] sm:$0xff]
        %v6381 = vld [vmem:[#allocation7 + $0x14b8] sm:$0xff]
        %v6382 = vld [vmem:[#allocation7 + $0x14c0] sm:$0xff]
        %v6383 = vld [vmem:[#allocation7 + $0x14c8] sm:$0xff]
        %v6384 = vld [vmem:[#allocation7 + $0x14d0] sm:$0xff]
        %v6385 = vld [vmem:[#allocation7 + $0x14d8] sm:$0xff]
        %v6386 = vld [vmem:[#allocation7 + $0x14e0] sm:$0xff]
        %v6387 = vld [vmem:[#allocation7 + $0x14e8] sm:$0xff]
        %v6388 = vld [vmem:[#allocation7 + $0x14f0] sm:$0xff]
        %v6389 = vld [vmem:[#allocation7 + $0x14f8] sm:$0xff]
        %v6390 = vld [vmem:[#allocation7 + $0x1500] sm:$0xff]
        %v6391 = vld [vmem:[#allocation7 + $0x1508] sm:$0xff]
        %v6392 = vld [vmem:[#allocation7 + $0x1510] sm:$0xff]
        %v6393 = vld [vmem:[#allocation7 + $0x1518] sm:$0xff]
        %v6394 = vld [vmem:[#allocation7 + $0x1520] sm:$0xff]
        %v6395 = vld [vmem:[#allocation7 + $0x1528] sm:$0xff]
        %v6396 = vld [vmem:[#allocation7 + $0x1530] sm:$0xff]
        %v6397 = vld [vmem:[#allocation7 + $0x1538] sm:$0xff]
        %v6398 = vld [vmem:[#allocation7 + $0x1540] sm:$0xff]
        %v6399 = vld [vmem:[#allocation7 + $0x1548] sm:$0xff]
        %v6400 = vld [vmem:[#allocation7 + $0x1550] sm:$0xff]
        %v6401 = vld [vmem:[#allocation7 + $0x1558] sm:$0xff]
        %v6402 = vld [vmem:[#allocation7 + $0x1560] sm:$0xff]
        %v6403 = vld [vmem:[#allocation7 + $0x1568] sm:$0xff]
        %v6404 = vld [vmem:[#allocation7 + $0x1570] sm:$0xff]
        %v6405 = vld [vmem:[#allocation7 + $0x1578] sm:$0xff]
        %v6406 = vld [vmem:[#allocation7 + $0x1580] sm:$0xff]
        %v6407 = vld [vmem:[#allocation7 + $0x1588] sm:$0xff]
        %v6408 = vld [vmem:[#allocation7 + $0x1590] sm:$0xff]
        %v6409 = vld [vmem:[#allocation7 + $0x1598] sm:$0xff]
        %v6410 = vld [vmem:[#allocation7 + $0x15a0] sm:$0xff]
        %v6411 = vld [vmem:[#allocation7 + $0x15a8] sm:$0xff]
        %v6412 = vld [vmem:[#allocation7 + $0x15b0] sm:$0xff]
        %v6413 = vld [vmem:[#allocation7 + $0x15b8] sm:$0xff]
        %v6414 = vld [vmem:[#allocation7 + $0x15c0] sm:$0xff]
        %v6415 = vld [vmem:[#allocation7 + $0x15c8] sm:$0xff]
        %v6416 = vld [vmem:[#allocation7 + $0x15d0] sm:$0xff]
        %v6417 = vld [vmem:[#allocation7 + $0x15d8] sm:$0xff]
        %v6418 = vld [vmem:[#allocation7 + $0x15e0] sm:$0xff]
        %v6419 = vld [vmem:[#allocation7 + $0x15e8] sm:$0xff]
        %v6420 = vld [vmem:[#allocation7 + $0x15f0] sm:$0xff]
        %v6421 = vld [vmem:[#allocation7 + $0x15f8] sm:$0xff]
        %v6422 = vld [vmem:[#allocation7 + $0x1600] sm:$0xff]
        %v6423 = vld [vmem:[#allocation7 + $0x1608] sm:$0xff]
        %v6424 = vld [vmem:[#allocation7 + $0x1610] sm:$0xff]
        %v6425 = vld [vmem:[#allocation7 + $0x1618] sm:$0xff]
        %v6426 = vld [vmem:[#allocation7 + $0x1620] sm:$0xff]
        %v6427 = vld [vmem:[#allocation7 + $0x1628] sm:$0xff]
        %v6428 = vld [vmem:[#allocation7 + $0x1630] sm:$0xff]
        %v6429 = vld [vmem:[#allocation7 + $0x1638] sm:$0xff]
        %v6430 = vld [vmem:[#allocation7 + $0x1640] sm:$0xff]
        %v6431 = vld [vmem:[#allocation7 + $0x1648] sm:$0xff]
        %v6432 = vld [vmem:[#allocation7 + $0x1650] sm:$0xff]
        %v6433 = vld [vmem:[#allocation7 + $0x1658] sm:$0xff]
        %v6434 = vld [vmem:[#allocation7 + $0x1660] sm:$0xff]
        %v6435 = vld [vmem:[#allocation7 + $0x1668] sm:$0xff]
        %v6436 = vld [vmem:[#allocation7 + $0x1670] sm:$0xff]
        %v6437 = vld [vmem:[#allocation7 + $0x1678] sm:$0xff]
        %v6438 = vld [vmem:[#allocation7 + $0x1680] sm:$0xff]
        %v6439 = vld [vmem:[#allocation7 + $0x1688] sm:$0xff]
        %v6440 = vld [vmem:[#allocation7 + $0x1690] sm:$0xff]
        %v6441 = vld [vmem:[#allocation7 + $0x1698] sm:$0xff]
        %v6442 = vld [vmem:[#allocation7 + $0x16a0] sm:$0xff]
        %v6443 = vld [vmem:[#allocation7 + $0x16a8] sm:$0xff]
        %v6444 = vld [vmem:[#allocation7 + $0x16b0] sm:$0xff]
        %v6445 = vld [vmem:[#allocation7 + $0x16b8] sm:$0xff]
        %v6446 = vld [vmem:[#allocation7 + $0x16c0] sm:$0xff]
        %v6447 = vld [vmem:[#allocation7 + $0x16c8] sm:$0xff]
        %v6448 = vld [vmem:[#allocation7 + $0x16d0] sm:$0xff]
        %v6449 = vld [vmem:[#allocation7 + $0x16d8] sm:$0xff]
        %v6450 = vld [vmem:[#allocation7 + $0x16e0] sm:$0xff]
        %v6451 = vld [vmem:[#allocation7 + $0x16e8] sm:$0xff]
        %v6452 = vld [vmem:[#allocation7 + $0x16f0] sm:$0xff]
        %v6453 = vld [vmem:[#allocation7 + $0x16f8] sm:$0xff]
        %v6454 = vld [vmem:[#allocation7 + $0x1700] sm:$0xff]
        %v6455 = vld [vmem:[#allocation7 + $0x1708] sm:$0xff]
        %v6456 = vld [vmem:[#allocation7 + $0x1710] sm:$0xff]
        %v6457 = vld [vmem:[#allocation7 + $0x1718] sm:$0xff]
        %v6458 = vld [vmem:[#allocation7 + $0x1720] sm:$0xff]
        %v6459 = vld [vmem:[#allocation7 + $0x1728] sm:$0xff]
        %v6460 = vld [vmem:[#allocation7 + $0x1730] sm:$0xff]
        %v6461 = vld [vmem:[#allocation7 + $0x1738] sm:$0xff]
        %v6462 = vld [vmem:[#allocation7 + $0x1740] sm:$0xff]
        %v6463 = vld [vmem:[#allocation7 + $0x1748] sm:$0xff]
        %v6464 = vld [vmem:[#allocation7 + $0x1750] sm:$0xff]
        %v6465 = vld [vmem:[#allocation7 + $0x1758] sm:$0xff]
        %v6466 = vld [vmem:[#allocation7 + $0x1760] sm:$0xff]
        %v6467 = vld [vmem:[#allocation7 + $0x1768] sm:$0xff]
        %v6468 = vld [vmem:[#allocation7 + $0x1770] sm:$0xff]
        %v6469 = vld [vmem:[#allocation7 + $0x1778] sm:$0xff]
        %v6470 = vld [vmem:[#allocation7 + $0x1780] sm:$0xff]
        %v6471 = vld [vmem:[#allocation7 + $0x1788] sm:$0xff]
        %v6472 = vld [vmem:[#allocation7 + $0x1790] sm:$0xff]
        %v6473 = vld [vmem:[#allocation7 + $0x1798] sm:$0xff]
        %v6474 = vld [vmem:[#allocation7 + $0x17a0] sm:$0xff]
        %v6475 = vld [vmem:[#allocation7 + $0x17a8] sm:$0xff]
        %v6476 = vld [vmem:[#allocation7 + $0x17b0] sm:$0xff]
        %v6477 = vld [vmem:[#allocation7 + $0x17b8] sm:$0xff]
        %v6478 = vld [vmem:[#allocation7 + $0x17c0] sm:$0xff]
        %v6479 = vld [vmem:[#allocation7 + $0x17c8] sm:$0xff]
        %v6480 = vld [vmem:[#allocation7 + $0x17d0] sm:$0xff]
        %v6481 = vld [vmem:[#allocation7 + $0x17d8] sm:$0xff]
        %v6482 = vld [vmem:[#allocation7 + $0x17e0] sm:$0xff]
        %v6483 = vld [vmem:[#allocation7 + $0x17e8] sm:$0xff]
        %v6484 = vld [vmem:[#allocation7 + $0x17f0] sm:$0xff]
        %v6485 = vld [vmem:[#allocation7 + $0x17f8] sm:$0xff]
        %v6614 = vunpack.c.l.b16 %v6358
        %v6615 = vunpack.c.h.b16 %v6358
        %v6616 = vunpack.c.l.b16 %v6359
        %v6617 = vunpack.c.h.b16 %v6359
        %v6618 = vunpack.c.l.b16 %v6360
        %v6619 = vunpack.c.h.b16 %v6360
        %v6620 = vunpack.c.l.b16 %v6361
        %v6621 = vunpack.c.h.b16 %v6361
        %v6622 = vunpack.c.l.b16 %v6362
        %v6623 = vunpack.c.h.b16 %v6362
        %v6624 = vunpack.c.l.b16 %v6363
        %v6625 = vunpack.c.h.b16 %v6363
        %v6626 = vunpack.c.l.b16 %v6364
        %v6627 = vunpack.c.h.b16 %v6364
        %v6628 = vunpack.c.l.b16 %v6365
        %v6629 = vunpack.c.h.b16 %v6365
        %v6630 = vunpack.c.l.b16 %v6366
        %v6631 = vunpack.c.h.b16 %v6366
        %v6632 = vunpack.c.l.b16 %v6367
        %v6633 = vunpack.c.h.b16 %v6367
        %v6634 = vunpack.c.l.b16 %v6368
        %v6635 = vunpack.c.h.b16 %v6368
        %v6636 = vunpack.c.l.b16 %v6369
        %v6637 = vunpack.c.h.b16 %v6369
        %v6638 = vunpack.c.l.b16 %v6370
        %v6639 = vunpack.c.h.b16 %v6370
        %v6640 = vunpack.c.l.b16 %v6371
        %v6641 = vunpack.c.h.b16 %v6371
        %v6642 = vunpack.c.l.b16 %v6372
        %v6643 = vunpack.c.h.b16 %v6372
        %v6644 = vunpack.c.l.b16 %v6373
        %v6645 = vunpack.c.h.b16 %v6373
        %v6646 = vunpack.c.l.b16 %v6374
        %v6647 = vunpack.c.h.b16 %v6374
        %v6648 = vunpack.c.l.b16 %v6375
        %v6649 = vunpack.c.h.b16 %v6375
        %v6650 = vunpack.c.l.b16 %v6376
        %v6651 = vunpack.c.h.b16 %v6376
        %v6652 = vunpack.c.l.b16 %v6377
        %v6653 = vunpack.c.h.b16 %v6377
        %v6654 = vunpack.c.l.b16 %v6378
        %v6655 = vunpack.c.h.b16 %v6378
        %v6656 = vunpack.c.l.b16 %v6379
        %v6657 = vunpack.c.h.b16 %v6379
        %v6658 = vunpack.c.l.b16 %v6380
        %v6659 = vunpack.c.h.b16 %v6380
        %v6660 = vunpack.c.l.b16 %v6381
        %v6661 = vunpack.c.h.b16 %v6381
        %v6662 = vunpack.c.l.b16 %v6382
        %v6663 = vunpack.c.h.b16 %v6382
        %v6664 = vunpack.c.l.b16 %v6383
        %v6665 = vunpack.c.h.b16 %v6383
        %v6666 = vunpack.c.l.b16 %v6384
        %v6667 = vunpack.c.h.b16 %v6384
        %v6668 = vunpack.c.l.b16 %v6385
        %v6669 = vunpack.c.h.b16 %v6385
        %v6670 = vunpack.c.l.b16 %v6386
        %v6671 = vunpack.c.h.b16 %v6386
        %v6672 = vunpack.c.l.b16 %v6387
        %v6673 = vunpack.c.h.b16 %v6387
        %v6674 = vunpack.c.l.b16 %v6388
        %v6675 = vunpack.c.h.b16 %v6388
        %v6676 = vunpack.c.l.b16 %v6389
        %v6677 = vunpack.c.h.b16 %v6389
        %v6678 = vunpack.c.l.b16 %v6390
        %v6679 = vunpack.c.h.b16 %v6390
        %v6680 = vunpack.c.l.b16 %v6391
        %v6681 = vunpack.c.h.b16 %v6391
        %v6682 = vunpack.c.l.b16 %v6392
        %v6683 = vunpack.c.h.b16 %v6392
        %v6684 = vunpack.c.l.b16 %v6393
        %v6685 = vunpack.c.h.b16 %v6393
        %v6686 = vunpack.c.l.b16 %v6394
        %v6687 = vunpack.c.h.b16 %v6394
        %v6688 = vunpack.c.l.b16 %v6395
        %v6689 = vunpack.c.h.b16 %v6395
        %v6690 = vunpack.c.l.b16 %v6396
        %v6691 = vunpack.c.h.b16 %v6396
        %v6692 = vunpack.c.l.b16 %v6397
        %v6693 = vunpack.c.h.b16 %v6397
        %v6694 = vunpack.c.l.b16 %v6398
        %v6695 = vunpack.c.h.b16 %v6398
        %v6696 = vunpack.c.l.b16 %v6399
        %v6697 = vunpack.c.h.b16 %v6399
        %v6698 = vunpack.c.l.b16 %v6400
        %v6699 = vunpack.c.h.b16 %v6400
        %v6700 = vunpack.c.l.b16 %v6401
        %v6701 = vunpack.c.h.b16 %v6401
        %v6702 = vunpack.c.l.b16 %v6402
        %v6703 = vunpack.c.h.b16 %v6402
        %v6704 = vunpack.c.l.b16 %v6403
        %v6705 = vunpack.c.h.b16 %v6403
        %v6706 = vunpack.c.l.b16 %v6404
        %v6707 = vunpack.c.h.b16 %v6404
        %v6708 = vunpack.c.l.b16 %v6405
        %v6709 = vunpack.c.h.b16 %v6405
        %v6710 = vunpack.c.l.b16 %v6406
        %v6711 = vunpack.c.h.b16 %v6406
        %v6712 = vunpack.c.l.b16 %v6407
        %v6713 = vunpack.c.h.b16 %v6407
        %v6714 = vunpack.c.l.b16 %v6408
        %v6715 = vunpack.c.h.b16 %v6408
        %v6716 = vunpack.c.l.b16 %v6409
        %v6717 = vunpack.c.h.b16 %v6409
        %v6718 = vunpack.c.l.b16 %v6410
        %v6719 = vunpack.c.h.b16 %v6410
        %v6720 = vunpack.c.l.b16 %v6411
        %v6721 = vunpack.c.h.b16 %v6411
        %v6722 = vunpack.c.l.b16 %v6412
        %v6723 = vunpack.c.h.b16 %v6412
        %v6724 = vunpack.c.l.b16 %v6413
        %v6725 = vunpack.c.h.b16 %v6413
        %v6726 = vunpack.c.l.b16 %v6414
        %v6727 = vunpack.c.h.b16 %v6414
        %v6728 = vunpack.c.l.b16 %v6415
        %v6729 = vunpack.c.h.b16 %v6415
        %v6730 = vunpack.c.l.b16 %v6416
        %v6731 = vunpack.c.h.b16 %v6416
        %v6732 = vunpack.c.l.b16 %v6417
        %v6733 = vunpack.c.h.b16 %v6417
        %v6734 = vunpack.c.l.b16 %v6418
        %v6735 = vunpack.c.h.b16 %v6418
        %v6736 = vunpack.c.l.b16 %v6419
        %v6737 = vunpack.c.h.b16 %v6419
        %v6738 = vunpack.c.l.b16 %v6420
        %v6739 = vunpack.c.h.b16 %v6420
        %v6740 = vunpack.c.l.b16 %v6421
        %v6741 = vunpack.c.h.b16 %v6421
        %v6742 = vunpack.c.l.b16 %v6422
        %v6743 = vunpack.c.h.b16 %v6422
        %v6744 = vunpack.c.l.b16 %v6423
        %v6745 = vunpack.c.h.b16 %v6423
        %v6746 = vunpack.c.l.b16 %v6424
        %v6747 = vunpack.c.h.b16 %v6424
        %v6748 = vunpack.c.l.b16 %v6425
        %v6749 = vunpack.c.h.b16 %v6425
        %v6750 = vunpack.c.l.b16 %v6426
        %v6751 = vunpack.c.h.b16 %v6426
        %v6752 = vunpack.c.l.b16 %v6427
        %v6753 = vunpack.c.h.b16 %v6427
        %v6754 = vunpack.c.l.b16 %v6428
        %v6755 = vunpack.c.h.b16 %v6428
        %v6756 = vunpack.c.l.b16 %v6429
        %v6757 = vunpack.c.h.b16 %v6429
        %v6758 = vunpack.c.l.b16 %v6430
        %v6759 = vunpack.c.h.b16 %v6430
        %v6760 = vunpack.c.l.b16 %v6431
        %v6761 = vunpack.c.h.b16 %v6431
        %v6762 = vunpack.c.l.b16 %v6432
        %v6763 = vunpack.c.h.b16 %v6432
        %v6764 = vunpack.c.l.b16 %v6433
        %v6765 = vunpack.c.h.b16 %v6433
        %v6766 = vunpack.c.l.b16 %v6434
        %v6767 = vunpack.c.h.b16 %v6434
        %v6768 = vunpack.c.l.b16 %v6435
        %v6769 = vunpack.c.h.b16 %v6435
        %v6770 = vunpack.c.l.b16 %v6436
        %v6771 = vunpack.c.h.b16 %v6436
        %v6772 = vunpack.c.l.b16 %v6437
        %v6773 = vunpack.c.h.b16 %v6437
        %v6774 = vunpack.c.l.b16 %v6438
        %v6775 = vunpack.c.h.b16 %v6438
        %v6776 = vunpack.c.l.b16 %v6439
        %v6777 = vunpack.c.h.b16 %v6439
        %v6778 = vunpack.c.l.b16 %v6440
        %v6779 = vunpack.c.h.b16 %v6440
        %v6780 = vunpack.c.l.b16 %v6441
        %v6781 = vunpack.c.h.b16 %v6441
        %v6782 = vunpack.c.l.b16 %v6442
        %v6783 = vunpack.c.h.b16 %v6442
        %v6784 = vunpack.c.l.b16 %v6443
        %v6785 = vunpack.c.h.b16 %v6443
        %v6786 = vunpack.c.l.b16 %v6444
        %v6787 = vunpack.c.h.b16 %v6444
        %v6788 = vunpack.c.l.b16 %v6445
        %v6789 = vunpack.c.h.b16 %v6445
        %v6790 = vunpack.c.l.b16 %v6446
        %v6791 = vunpack.c.h.b16 %v6446
        %v6792 = vunpack.c.l.b16 %v6447
        %v6793 = vunpack.c.h.b16 %v6447
        %v6794 = vunpack.c.l.b16 %v6448
        %v6795 = vunpack.c.h.b16 %v6448
        %v6796 = vunpack.c.l.b16 %v6449
        %v6797 = vunpack.c.h.b16 %v6449
        %v6798 = vunpack.c.l.b16 %v6450
        %v6799 = vunpack.c.h.b16 %v6450
        %v6800 = vunpack.c.l.b16 %v6451
        %v6801 = vunpack.c.h.b16 %v6451
        %v6802 = vunpack.c.l.b16 %v6452
        %v6803 = vunpack.c.h.b16 %v6452
        %v6804 = vunpack.c.l.b16 %v6453
        %v6805 = vunpack.c.h.b16 %v6453
        %v6806 = vunpack.c.l.b16 %v6454
        %v6807 = vunpack.c.h.b16 %v6454
        %v6808 = vunpack.c.l.b16 %v6455
        %v6809 = vunpack.c.h.b16 %v6455
        %v6810 = vunpack.c.l.b16 %v6456
        %v6811 = vunpack.c.h.b16 %v6456
        %v6812 = vunpack.c.l.b16 %v6457
        %v6813 = vunpack.c.h.b16 %v6457
        %v6814 = vunpack.c.l.b16 %v6458
        %v6815 = vunpack.c.h.b16 %v6458
        %v6816 = vunpack.c.l.b16 %v6459
        %v6817 = vunpack.c.h.b16 %v6459
        %v6818 = vunpack.c.l.b16 %v6460
        %v6819 = vunpack.c.h.b16 %v6460
        %v6820 = vunpack.c.l.b16 %v6461
        %v6821 = vunpack.c.h.b16 %v6461
        %v6822 = vunpack.c.l.b16 %v6462
        %v6823 = vunpack.c.h.b16 %v6462
        %v6824 = vunpack.c.l.b16 %v6463
        %v6825 = vunpack.c.h.b16 %v6463
        %v6826 = vunpack.c.l.b16 %v6464
        %v6827 = vunpack.c.h.b16 %v6464
        %v6828 = vunpack.c.l.b16 %v6465
        %v6829 = vunpack.c.h.b16 %v6465
        %v6830 = vunpack.c.l.b16 %v6466
        %v6831 = vunpack.c.h.b16 %v6466
        %v6832 = vunpack.c.l.b16 %v6467
        %v6833 = vunpack.c.h.b16 %v6467
        %v6834 = vunpack.c.l.b16 %v6468
        %v6835 = vunpack.c.h.b16 %v6468
        %v6836 = vunpack.c.l.b16 %v6469
        %v6837 = vunpack.c.h.b16 %v6469
        %v6838 = vunpack.c.l.b16 %v6470
        %v6839 = vunpack.c.h.b16 %v6470
        %v6840 = vunpack.c.l.b16 %v6471
        %v6841 = vunpack.c.h.b16 %v6471
        %v6842 = vunpack.c.l.b16 %v6472
        %v6843 = vunpack.c.h.b16 %v6472
        %v6844 = vunpack.c.l.b16 %v6473
        %v6845 = vunpack.c.h.b16 %v6473
        %v6846 = vunpack.c.l.b16 %v6474
        %v6847 = vunpack.c.h.b16 %v6474
        %v6848 = vunpack.c.l.b16 %v6475
        %v6849 = vunpack.c.h.b16 %v6475
        %v6850 = vunpack.c.l.b16 %v6476
        %v6851 = vunpack.c.h.b16 %v6476
        %v6852 = vunpack.c.l.b16 %v6477
        %v6853 = vunpack.c.h.b16 %v6477
        %v6854 = vunpack.c.l.b16 %v6478
        %v6855 = vunpack.c.h.b16 %v6478
        %v6856 = vunpack.c.l.b16 %v6479
        %v6857 = vunpack.c.h.b16 %v6479
        %v6858 = vunpack.c.l.b16 %v6480
        %v6859 = vunpack.c.h.b16 %v6480
        %v6860 = vunpack.c.l.b16 %v6481
        %v6861 = vunpack.c.h.b16 %v6481
        %v6862 = vunpack.c.l.b16 %v6482
        %v6863 = vunpack.c.h.b16 %v6482
        %v6864 = vunpack.c.l.b16 %v6483
        %v6865 = vunpack.c.h.b16 %v6483
        %v6866 = vunpack.c.l.b16 %v6484
        %v6867 = vunpack.c.h.b16 %v6484
        %v6868 = vunpack.c.l.b16 %v6485
        %v6869 = vunpack.c.h.b16 %v6485
        %v6870 = vpack.c.b16 %v6630, %v6614
        %v6871 = vpack.c.b16 %v6631, %v6615
        %v6872 = vpack.c.b16 %v6632, %v6616
        %v6873 = vpack.c.b16 %v6633, %v6617
        %v6874 = vpack.c.b16 %v6634, %v6618
        %v6875 = vpack.c.b16 %v6635, %v6619
        %v6876 = vpack.c.b16 %v6636, %v6620
        %v6877 = vpack.c.b16 %v6637, %v6621
        %v6878 = vpack.c.b16 %v6638, %v6622
        %v6879 = vpack.c.b16 %v6639, %v6623
        %v6880 = vpack.c.b16 %v6640, %v6624
        %v6881 = vpack.c.b16 %v6641, %v6625
        %v6882 = vpack.c.b16 %v6642, %v6626
        %v6883 = vpack.c.b16 %v6643, %v6627
        %v6884 = vpack.c.b16 %v6644, %v6628
        %v6885 = vpack.c.b16 %v6645, %v6629
        %v6886 = vpack.c.b16 %v6662, %v6646
        %v6887 = vpack.c.b16 %v6663, %v6647
        %v6888 = vpack.c.b16 %v6664, %v6648
        %v6889 = vpack.c.b16 %v6665, %v6649
        %v6890 = vpack.c.b16 %v6666, %v6650
        %v6891 = vpack.c.b16 %v6667, %v6651
        %v6892 = vpack.c.b16 %v6668, %v6652
        %v6893 = vpack.c.b16 %v6669, %v6653
        %v6894 = vpack.c.b16 %v6670, %v6654
        %v6895 = vpack.c.b16 %v6671, %v6655
        %v6896 = vpack.c.b16 %v6672, %v6656
        %v6897 = vpack.c.b16 %v6673, %v6657
        %v6898 = vpack.c.b16 %v6674, %v6658
        %v6899 = vpack.c.b16 %v6675, %v6659
        %v6900 = vpack.c.b16 %v6676, %v6660
        %v6901 = vpack.c.b16 %v6677, %v6661
        %v6902 = vpack.c.b16 %v6694, %v6678
        %v6903 = vpack.c.b16 %v6695, %v6679
        %v6904 = vpack.c.b16 %v6696, %v6680
        %v6905 = vpack.c.b16 %v6697, %v6681
        %v6906 = vpack.c.b16 %v6698, %v6682
        %v6907 = vpack.c.b16 %v6699, %v6683
        %v6908 = vpack.c.b16 %v6700, %v6684
        %v6909 = vpack.c.b16 %v6701, %v6685
        %v6910 = vpack.c.b16 %v6702, %v6686
        %v6911 = vpack.c.b16 %v6703, %v6687
        %v6912 = vpack.c.b16 %v6704, %v6688
        %v6913 = vpack.c.b16 %v6705, %v6689
        %v6914 = vpack.c.b16 %v6706, %v6690
        %v6915 = vpack.c.b16 %v6707, %v6691
        %v6916 = vpack.c.b16 %v6708, %v6692
        %v6917 = vpack.c.b16 %v6709, %v6693
        %v6918 = vpack.c.b16 %v6726, %v6710
        %v6919 = vpack.c.b16 %v6727, %v6711
        %v6920 = vpack.c.b16 %v6728, %v6712
        %v6921 = vpack.c.b16 %v6729, %v6713
        %v6922 = vpack.c.b16 %v6730, %v6714
        %v6923 = vpack.c.b16 %v6731, %v6715
        %v6924 = vpack.c.b16 %v6732, %v6716
        %v6925 = vpack.c.b16 %v6733, %v6717
        %v6926 = vpack.c.b16 %v6734, %v6718
        %v6927 = vpack.c.b16 %v6735, %v6719
        %v6928 = vpack.c.b16 %v6736, %v6720
        %v6929 = vpack.c.b16 %v6737, %v6721
        %v6930 = vpack.c.b16 %v6738, %v6722
        %v6931 = vpack.c.b16 %v6739, %v6723
        %v6932 = vpack.c.b16 %v6740, %v6724
        %v6933 = vpack.c.b16 %v6741, %v6725
        %v6934 = vpack.c.b16 %v6758, %v6742
        %v6935 = vpack.c.b16 %v6759, %v6743
        %v6936 = vpack.c.b16 %v6760, %v6744
        %v6937 = vpack.c.b16 %v6761, %v6745
        %v6938 = vpack.c.b16 %v6762, %v6746
        %v6939 = vpack.c.b16 %v6763, %v6747
        %v6940 = vpack.c.b16 %v6764, %v6748
        %v6941 = vpack.c.b16 %v6765, %v6749
        %v6942 = vpack.c.b16 %v6766, %v6750
        %v6943 = vpack.c.b16 %v6767, %v6751
        %v6944 = vpack.c.b16 %v6768, %v6752
        %v6945 = vpack.c.b16 %v6769, %v6753
        %v6946 = vpack.c.b16 %v6770, %v6754
        %v6947 = vpack.c.b16 %v6771, %v6755
        %v6948 = vpack.c.b16 %v6772, %v6756
        %v6949 = vpack.c.b16 %v6773, %v6757
        %v6950 = vpack.c.b16 %v6790, %v6774
        %v6951 = vpack.c.b16 %v6791, %v6775
        %v6952 = vpack.c.b16 %v6792, %v6776
        %v6953 = vpack.c.b16 %v6793, %v6777
        %v6954 = vpack.c.b16 %v6794, %v6778
        %v6955 = vpack.c.b16 %v6795, %v6779
        %v6956 = vpack.c.b16 %v6796, %v6780
        %v6957 = vpack.c.b16 %v6797, %v6781
        %v6958 = vpack.c.b16 %v6798, %v6782
        %v6959 = vpack.c.b16 %v6799, %v6783
        %v6960 = vpack.c.b16 %v6800, %v6784
        %v6961 = vpack.c.b16 %v6801, %v6785
        %v6962 = vpack.c.b16 %v6802, %v6786
        %v6963 = vpack.c.b16 %v6803, %v6787
        %v6964 = vpack.c.b16 %v6804, %v6788
        %v6965 = vpack.c.b16 %v6805, %v6789
        %v6966 = vpack.c.b16 %v6822, %v6806
        %v6967 = vpack.c.b16 %v6823, %v6807
        %v6968 = vpack.c.b16 %v6824, %v6808
        %v6969 = vpack.c.b16 %v6825, %v6809
        %v6970 = vpack.c.b16 %v6826, %v6810
        %v6971 = vpack.c.b16 %v6827, %v6811
        %v6972 = vpack.c.b16 %v6828, %v6812
        %v6973 = vpack.c.b16 %v6829, %v6813
        %v6974 = vpack.c.b16 %v6830, %v6814
        %v6975 = vpack.c.b16 %v6831, %v6815
        %v6976 = vpack.c.b16 %v6832, %v6816
        %v6977 = vpack.c.b16 %v6833, %v6817
        %v6978 = vpack.c.b16 %v6834, %v6818
        %v6979 = vpack.c.b16 %v6835, %v6819
        %v6980 = vpack.c.b16 %v6836, %v6820
        %v6981 = vpack.c.b16 %v6837, %v6821
        %v6982 = vpack.c.b16 %v6854, %v6838
        %v6983 = vpack.c.b16 %v6855, %v6839
        %v6984 = vpack.c.b16 %v6856, %v6840
        %v6985 = vpack.c.b16 %v6857, %v6841
        %v6986 = vpack.c.b16 %v6858, %v6842
        %v6987 = vpack.c.b16 %v6859, %v6843
        %v6988 = vpack.c.b16 %v6860, %v6844
        %v6989 = vpack.c.b16 %v6861, %v6845
        %v6990 = vpack.c.b16 %v6862, %v6846
        %v6991 = vpack.c.b16 %v6863, %v6847
        %v6992 = vpack.c.b16 %v6864, %v6848
        %v6993 = vpack.c.b16 %v6865, %v6849
        %v6994 = vpack.c.b16 %v6866, %v6850
        %v6995 = vpack.c.b16 %v6867, %v6851
        %v6996 = vpack.c.b16 %v6868, %v6852
        %v6997 = vpack.c.b16 %v6869, %v6853
        %7126 = vmatprep.subr.bf16.mxu0 %v6871
        %7127 = vmatpush1.bf16.msra.mxu0 %v6870
        %7128 = vmatprep.subr.bf16.mxu0 %v6887
        %7129 = vmatpush1.bf16.msra.mxu0 %v6886
        %7130 = vmatprep.subr.bf16.mxu0 %v6903
        %7131 = vmatpush1.bf16.msra.mxu0 %v6902
        %7132 = vmatprep.subr.bf16.mxu0 %v6919
        %7133 = vmatpush1.bf16.msra.mxu0 %v6918
        %7134 = vmatprep.subr.bf16.mxu0 %v6935
        %7135 = vmatpush1.bf16.msra.mxu0 %v6934
        %7136 = vmatprep.subr.bf16.mxu0 %v6951
        %7137 = vmatpush1.bf16.msra.mxu0 %v6950
        %7138 = vmatprep.subr.bf16.mxu0 %v6967
        %7139 = vmatpush1.bf16.msra.mxu0 %v6966
        %7140 = vmatprep.subr.bf16.mxu0 %v6983
        %7141 = vmatpush1.bf16.msra.mxu0 %v6982
        %7142 = vmatprep.subr.bf16.mxu0 0
        %7143 = vmatpush1.bf16.msra.mxu0 0
        %7144 = vmatprep.subr.bf16.mxu0 0
        %7145 = vmatpush1.bf16.msra.mxu0 0
        %7146 = vmatprep.subr.bf16.mxu0 0
        %7147 = vmatpush1.bf16.msra.mxu0 0
        %7148 = vmatprep.subr.bf16.mxu0 0
        %7149 = vmatpush1.bf16.msra.mxu0 0
        %7150 = vmatprep.subr.bf16.mxu0 0
        %7151 = vmatpush1.bf16.msra.mxu0 0
        %7152 = vmatprep.subr.bf16.mxu0 0
        %7153 = vmatpush1.bf16.msra.mxu0 0
        %7154 = vmatprep.subr.bf16.mxu0 0
        %7155 = vmatpush1.bf16.msra.mxu0 0
        %7156 = vmatprep.subr.bf16.mxu0 0
        %7157 = vmatpush1.bf16.msra.mxu0 0
        %7158 = vmatprep.mubr.bf16.mxu0 0
        %7159 = vmatmul.mubr.bf16.gmra.mrb[0].mxu0 %v653
        %v7160 = vpop.f32.mrb[0].mxu0
        %v7161 = vadd.f32 0.0, %v7160
        %v7162 = vpop.f32.mrb[0].mxu0
        %v7163 = vadd.f32 0.0, %v7162
        %v7164 = vpop.f32.mrb[0].mxu0
        %v7165 = vadd.f32 0.0, %v7164
        %v7166 = vpop.f32.mrb[0].mxu0
        %v7167 = vadd.f32 0.0, %v7166
        %7168 = vdwg.mxu0
        %7169 = vmatprep.subr.bf16.mxu0 %v6873
        %7170 = vmatpush1.bf16.msra.mxu0 %v6872
        %7171 = vmatprep.subr.bf16.mxu0 %v6889
        %7172 = vmatpush1.bf16.msra.mxu0 %v6888
        %7173 = vmatprep.subr.bf16.mxu0 %v6905
        %7174 = vmatpush1.bf16.msra.mxu0 %v6904
        %7175 = vmatprep.subr.bf16.mxu0 %v6921
        %7176 = vmatpush1.bf16.msra.mxu0 %v6920
        %7177 = vmatprep.subr.bf16.mxu0 %v6937
        %7178 = vmatpush1.bf16.msra.mxu0 %v6936
        %7179 = vmatprep.subr.bf16.mxu0 %v6953
        %7180 = vmatpush1.bf16.msra.mxu0 %v6952
        %7181 = vmatprep.subr.bf16.mxu0 %v6969
        %7182 = vmatpush1.bf16.msra.mxu0 %v6968
        %7183 = vmatprep.subr.bf16.mxu0 %v6985
        %7184 = vmatpush1.bf16.msra.mxu0 %v6984
        %7185 = vmatprep.subr.bf16.mxu0 0
        %7186 = vmatpush1.bf16.msra.mxu0 0
        %7187 = vmatprep.subr.bf16.mxu0 0
        %7188 = vmatpush1.bf16.msra.mxu0 0
        %7189 = vmatprep.subr.bf16.mxu0 0
        %7190 = vmatpush1.bf16.msra.mxu0 0
        %7191 = vmatprep.subr.bf16.mxu0 0
        %7192 = vmatpush1.bf16.msra.mxu0 0
        %7193 = vmatprep.subr.bf16.mxu0 0
        %7194 = vmatpush1.bf16.msra.mxu0 0
        %7195 = vmatprep.subr.bf16.mxu0 0
        %7196 = vmatpush1.bf16.msra.mxu0 0
        %7197 = vmatprep.subr.bf16.mxu0 0
        %7198 = vmatpush1.bf16.msra.mxu0 0
        %7199 = vmatprep.subr.bf16.mxu0 0
        %7200 = vmatpush1.bf16.msra.mxu0 0
        %7201 = vmatprep.mubr.bf16.mxu0 0
        %7202 = vmatmul.mubr.bf16.gmra.mrb[0].mxu0 %v653
        %v7203 = vpop.f32.mrb[0].mxu0
        %v7204 = vadd.f32 0.0, %v7203
        %v7205 = vpop.f32.mrb[0].mxu0
        %v7206 = vadd.f32 0.0, %v7205
        %v7207 = vpop.f32.mrb[0].mxu0
        %v7208 = vadd.f32 0.0, %v7207
        %v7209 = vpop.f32.mrb[0].mxu0
        %v7210 = vadd.f32 0.0, %v7209
        %7211 = vdwg.mxu0
        %7212 = vmatprep.subr.bf16.mxu0 %v6875
        %7213 = vmatpush1.bf16.msra.mxu0 %v6874
        %7214 = vmatprep.subr.bf16.mxu0 %v6891
        %7215 = vmatpush1.bf16.msra.mxu0 %v6890
        %7216 = vmatprep.subr.bf16.mxu0 %v6907
        %7217 = vmatpush1.bf16.msra.mxu0 %v6906
        %7218 = vmatprep.subr.bf16.mxu0 %v6923
        %7219 = vmatpush1.bf16.msra.mxu0 %v6922
        %7220 = vmatprep.subr.bf16.mxu0 %v6939
        %7221 = vmatpush1.bf16.msra.mxu0 %v6938
        %7222 = vmatprep.subr.bf16.mxu0 %v6955
        %7223 = vmatpush1.bf16.msra.mxu0 %v6954
        %7224 = vmatprep.subr.bf16.mxu0 %v6971
        %7225 = vmatpush1.bf16.msra.mxu0 %v6970
        %7226 = vmatprep.subr.bf16.mxu0 %v6987
        %7227 = vmatpush1.bf16.msra.mxu0 %v6986
        %7228 = vmatprep.subr.bf16.mxu0 0
        %7229 = vmatpush1.bf16.msra.mxu0 0
        %7230 = vmatprep.subr.bf16.mxu0 0
        %7231 = vmatpush1.bf16.msra.mxu0 0
        %7232 = vmatprep.subr.bf16.mxu0 0
        %7233 = vmatpush1.bf16.msra.mxu0 0
        %7234 = vmatprep.subr.bf16.mxu0 0
        %7235 = vmatpush1.bf16.msra.mxu0 0
        %7236 = vmatprep.subr.bf16.mxu0 0
        %7237 = vmatpush1.bf16.msra.mxu0 0
        %7238 = vmatprep.subr.bf16.mxu0 0
        %7239 = vmatpush1.bf16.msra.mxu0 0
        %7240 = vmatprep.subr.bf16.mxu0 0
        %7241 = vmatpush1.bf16.msra.mxu0 0
        %7242 = vmatprep.subr.bf16.mxu0 0
        %7243 = vmatpush1.bf16.msra.mxu0 0
        %7244 = vmatprep.mubr.bf16.mxu0 0
        %7245 = vmatmul.mubr.bf16.gmra.mrb[0].mxu0 %v653
        %v7246 = vpop.f32.mrb[0].mxu0
        %v7247 = vadd.f32 0.0, %v7246
        %v7248 = vpop.f32.mrb[0].mxu0
        %v7249 = vadd.f32 0.0, %v7248
        %v7250 = vpop.f32.mrb[0].mxu0
        %v7251 = vadd.f32 0.0, %v7250
        %v7252 = vpop.f32.mrb[0].mxu0
        %v7253 = vadd.f32 0.0, %v7252
        %7254 = vdwg.mxu0
        %7255 = vmatprep.subr.bf16.mxu0 %v6877
        %7256 = vmatpush1.bf16.msra.mxu0 %v6876
        %7257 = vmatprep.subr.bf16.mxu0 %v6893
        %7258 = vmatpush1.bf16.msra.mxu0 %v6892
        %7259 = vmatprep.subr.bf16.mxu0 %v6909
        %7260 = vmatpush1.bf16.msra.mxu0 %v6908
        %7261 = vmatprep.subr.bf16.mxu0 %v6925
        %7262 = vmatpush1.bf16.msra.mxu0 %v6924
        %7263 = vmatprep.subr.bf16.mxu0 %v6941
        %7264 = vmatpush1.bf16.msra.mxu0 %v6940
        %7265 = vmatprep.subr.bf16.mxu0 %v6957
        %7266 = vmatpush1.bf16.msra.mxu0 %v6956
        %7267 = vmatprep.subr.bf16.mxu0 %v6973
        %7268 = vmatpush1.bf16.msra.mxu0 %v6972
        %7269 = vmatprep.subr.bf16.mxu0 %v6989
        %7270 = vmatpush1.bf16.msra.mxu0 %v6988
        %7271 = vmatprep.subr.bf16.mxu0 0
        %7272 = vmatpush1.bf16.msra.mxu0 0
        %7273 = vmatprep.subr.bf16.mxu0 0
        %7274 = vmatpush1.bf16.msra.mxu0 0
        %7275 = vmatprep.subr.bf16.mxu0 0
        %7276 = vmatpush1.bf16.msra.mxu0 0
        %7277 = vmatprep.subr.bf16.mxu0 0
        %7278 = vmatpush1.bf16.msra.mxu0 0
        %7279 = vmatprep.subr.bf16.mxu0 0
        %7280 = vmatpush1.bf16.msra.mxu0 0
        %7281 = vmatprep.subr.bf16.mxu0 0
        %7282 = vmatpush1.bf16.msra.mxu0 0
        %7283 = vmatprep.subr.bf16.mxu0 0
        %7284 = vmatpush1.bf16.msra.mxu0 0
        %7285 = vmatprep.subr.bf16.mxu0 0
        %7286 = vmatpush1.bf16.msra.mxu0 0
        %7287 = vmatprep.mubr.bf16.mxu0 0
        %7288 = vmatmul.mubr.bf16.gmra.mrb[0].mxu0 %v653
        %v7289 = vpop.f32.mrb[0].mxu0
        %v7290 = vadd.f32 0.0, %v7289
        %v7291 = vpop.f32.mrb[0].mxu0
        %v7292 = vadd.f32 0.0, %v7291
        %v7293 = vpop.f32.mrb[0].mxu0
        %v7294 = vadd.f32 0.0, %v7293
        %v7295 = vpop.f32.mrb[0].mxu0
        %v7296 = vadd.f32 0.0, %v7295
        %7297 = vdwg.mxu0
        %7298 = vmatprep.subr.bf16.mxu0 %v6879
        %7299 = vmatpush1.bf16.msra.mxu0 %v6878
        %7300 = vmatprep.subr.bf16.mxu0 %v6895
        %7301 = vmatpush1.bf16.msra.mxu0 %v6894
        %7302 = vmatprep.subr.bf16.mxu0 %v6911
        %7303 = vmatpush1.bf16.msra.mxu0 %v6910
        %7304 = vmatprep.subr.bf16.mxu0 %v6927
        %7305 = vmatpush1.bf16.msra.mxu0 %v6926
        %7306 = vmatprep.subr.bf16.mxu0 %v6943
        %7307 = vmatpush1.bf16.msra.mxu0 %v6942
        %7308 = vmatprep.subr.bf16.mxu0 %v6959
        %7309 = vmatpush1.bf16.msra.mxu0 %v6958
        %7310 = vmatprep.subr.bf16.mxu0 %v6975
        %7311 = vmatpush1.bf16.msra.mxu0 %v6974
        %7312 = vmatprep.subr.bf16.mxu0 %v6991
        %7313 = vmatpush1.bf16.msra.mxu0 %v6990
        %7314 = vmatprep.subr.bf16.mxu0 0
        %7315 = vmatpush1.bf16.msra.mxu0 0
        %7316 = vmatprep.subr.bf16.mxu0 0
        %7317 = vmatpush1.bf16.msra.mxu0 0
        %7318 = vmatprep.subr.bf16.mxu0 0
        %7319 = vmatpush1.bf16.msra.mxu0 0
        %7320 = vmatprep.subr.bf16.mxu0 0
        %7321 = vmatpush1.bf16.msra.mxu0 0
        %7322 = vmatprep.subr.bf16.mxu0 0
        %7323 = vmatpush1.bf16.msra.mxu0 0
        %7324 = vmatprep.subr.bf16.mxu0 0
        %7325 = vmatpush1.bf16.msra.mxu0 0
        %7326 = vmatprep.subr.bf16.mxu0 0
        %7327 = vmatpush1.bf16.msra.mxu0 0
        %7328 = vmatprep.subr.bf16.mxu0 0
        %7329 = vmatpush1.bf16.msra.mxu0 0
        %7330 = vmatprep.mubr.bf16.mxu0 0
        %7331 = vmatmul.mubr.bf16.gmra.mrb[0].mxu0 %v653
        %v7332 = vpop.f32.mrb[0].mxu0
        %v7333 = vadd.f32 0.0, %v7332
        %v7334 = vpop.f32.mrb[0].mxu0
        %v7335 = vadd.f32 0.0, %v7334
        %v7336 = vpop.f32.mrb[0].mxu0
        %v7337 = vadd.f32 0.0, %v7336
        %v7338 = vpop.f32.mrb[0].mxu0
        %v7339 = vadd.f32 0.0, %v7338
        %7340 = vdwg.mxu0
        %7341 = vmatprep.subr.bf16.mxu0 %v6881
        %7342 = vmatpush1.bf16.msra.mxu0 %v6880
        %7343 = vmatprep.subr.bf16.mxu0 %v6897
        %7344 = vmatpush1.bf16.msra.mxu0 %v6896
        %7345 = vmatprep.subr.bf16.mxu0 %v6913
        %7346 = vmatpush1.bf16.msra.mxu0 %v6912
        %7347 = vmatprep.subr.bf16.mxu0 %v6929
        %7348 = vmatpush1.bf16.msra.mxu0 %v6928
        %7349 = vmatprep.subr.bf16.mxu0 %v6945
        %7350 = vmatpush1.bf16.msra.mxu0 %v6944
        %7351 = vmatprep.subr.bf16.mxu0 %v6961
        %7352 = vmatpush1.bf16.msra.mxu0 %v6960
        %7353 = vmatprep.subr.bf16.mxu0 %v6977
        %7354 = vmatpush1.bf16.msra.mxu0 %v6976
        %7355 = vmatprep.subr.bf16.mxu0 %v6993
        %7356 = vmatpush1.bf16.msra.mxu0 %v6992
        %7357 = vmatprep.subr.bf16.mxu0 0
        %7358 = vmatpush1.bf16.msra.mxu0 0
        %7359 = vmatprep.subr.bf16.mxu0 0
        %7360 = vmatpush1.bf16.msra.mxu0 0
        %7361 = vmatprep.subr.bf16.mxu0 0
        %7362 = vmatpush1.bf16.msra.mxu0 0
        %7363 = vmatprep.subr.bf16.mxu0 0
        %7364 = vmatpush1.bf16.msra.mxu0 0
        %7365 = vmatprep.subr.bf16.mxu0 0
        %7366 = vmatpush1.bf16.msra.mxu0 0
        %7367 = vmatprep.subr.bf16.mxu0 0
        %7368 = vmatpush1.bf16.msra.mxu0 0
        %7369 = vmatprep.subr.bf16.mxu0 0
        %7370 = vmatpush1.bf16.msra.mxu0 0
        %7371 = vmatprep.subr.bf16.mxu0 0
        %7372 = vmatpush1.bf16.msra.mxu0 0
        %7373 = vmatprep.mubr.bf16.mxu0 0
        %7374 = vmatmul.mubr.bf16.gmra.mrb[0].mxu0 %v653
        %v7375 = vpop.f32.mrb[0].mxu0
        %v7376 = vadd.f32 0.0, %v7375
        %v7377 = vpop.f32.mrb[0].mxu0
        %v7378 = vadd.f32 0.0, %v7377
        %v7379 = vpop.f32.mrb[0].mxu0
        %v7380 = vadd.f32 0.0, %v7379
        %v7381 = vpop.f32.mrb[0].mxu0
        %v7382 = vadd.f32 0.0, %v7381
        %7383 = vdwg.mxu0
        %7384 = vmatprep.subr.bf16.mxu0 %v6883
        %7385 = vmatpush1.bf16.msra.mxu0 %v6882
        %7386 = vmatprep.subr.bf16.mxu0 %v6899
        %7387 = vmatpush1.bf16.msra.mxu0 %v6898
        %7388 = vmatprep.subr.bf16.mxu0 %v6915
        %7389 = vmatpush1.bf16.msra.mxu0 %v6914
        %7390 = vmatprep.subr.bf16.mxu0 %v6931
        %7391 = vmatpush1.bf16.msra.mxu0 %v6930
        %7392 = vmatprep.subr.bf16.mxu0 %v6947
        %7393 = vmatpush1.bf16.msra.mxu0 %v6946
        %7394 = vmatprep.subr.bf16.mxu0 %v6963
        %7395 = vmatpush1.bf16.msra.mxu0 %v6962
        %7396 = vmatprep.subr.bf16.mxu0 %v6979
        %7397 = vmatpush1.bf16.msra.mxu0 %v6978
        %7398 = vmatprep.subr.bf16.mxu0 %v6995
        %7399 = vmatpush1.bf16.msra.mxu0 %v6994
        %7400 = vmatprep.subr.bf16.mxu0 0
        %7401 = vmatpush1.bf16.msra.mxu0 0
        %7402 = vmatprep.subr.bf16.mxu0 0
        %7403 = vmatpush1.bf16.msra.mxu0 0
        %7404 = vmatprep.subr.bf16.mxu0 0
        %7405 = vmatpush1.bf16.msra.mxu0 0
        %7406 = vmatprep.subr.bf16.mxu0 0
        %7407 = vmatpush1.bf16.msra.mxu0 0
        %7408 = vmatprep.subr.bf16.mxu0 0
        %7409 = vmatpush1.bf16.msra.mxu0 0
        %7410 = vmatprep.subr.bf16.mxu0 0
        %7411 = vmatpush1.bf16.msra.mxu0 0
        %7412 = vmatprep.subr.bf16.mxu0 0
        %7413 = vmatpush1.bf16.msra.mxu0 0
        %7414 = vmatprep.subr.bf16.mxu0 0
        %7415 = vmatpush1.bf16.msra.mxu0 0
        %7416 = vmatprep.mubr.bf16.mxu0 0
        %7417 = vmatmul.mubr.bf16.gmra.mrb[0].mxu0 %v653
        %v7418 = vpop.f32.mrb[0].mxu0
        %v7419 = vadd.f32 0.0, %v7418
        %v7420 = vpop.f32.mrb[0].mxu0
        %v7421 = vadd.f32 0.0, %v7420
        %v7422 = vpop.f32.mrb[0].mxu0
        %v7423 = vadd.f32 0.0, %v7422
        %v7424 = vpop.f32.mrb[0].mxu0
        %v7425 = vadd.f32 0.0, %v7424
        %7426 = vdwg.mxu0
        %7427 = vmatprep.subr.bf16.mxu0 %v6885
        %7428 = vmatpush1.bf16.msra.mxu0 %v6884
        %7429 = vmatprep.subr.bf16.mxu0 %v6901
        %7430 = vmatpush1.bf16.msra.mxu0 %v6900
        %7431 = vmatprep.subr.bf16.mxu0 %v6917
        %7432 = vmatpush1.bf16.msra.mxu0 %v6916
        %7433 = vmatprep.subr.bf16.mxu0 %v6933
        %7434 = vmatpush1.bf16.msra.mxu0 %v6932
        %7435 = vmatprep.subr.bf16.mxu0 %v6949
        %7436 = vmatpush1.bf16.msra.mxu0 %v6948
        %7437 = vmatprep.subr.bf16.mxu0 %v6965
        %7438 = vmatpush1.bf16.msra.mxu0 %v6964
        %7439 = vmatprep.subr.bf16.mxu0 %v6981
        %7440 = vmatpush1.bf16.msra.mxu0 %v6980
        %7441 = vmatprep.subr.bf16.mxu0 %v6997
        %7442 = vmatpush1.bf16.msra.mxu0 %v6996
        %7443 = vmatprep.subr.bf16.mxu0 0
        %7444 = vmatpush1.bf16.msra.mxu0 0
        %7445 = vmatprep.subr.bf16.mxu0 0
        %7446 = vmatpush1.bf16.msra.mxu0 0
        %7447 = vmatprep.subr.bf16.mxu0 0
        %7448 = vmatpush1.bf16.msra.mxu0 0
        %7449 = vmatprep.subr.bf16.mxu0 0
        %7450 = vmatpush1.bf16.msra.mxu0 0
        %7451 = vmatprep.subr.bf16.mxu0 0
        %7452 = vmatpush1.bf16.msra.mxu0 0
        %7453 = vmatprep.subr.bf16.mxu0 0
        %7454 = vmatpush1.bf16.msra.mxu0 0
        %7455 = vmatprep.subr.bf16.mxu0 0
        %7456 = vmatpush1.bf16.msra.mxu0 0
        %7457 = vmatprep.subr.bf16.mxu0 0
        %7458 = vmatpush1.bf16.msra.mxu0 0
        %7459 = vmatprep.mubr.bf16.mxu0 0
        %7460 = vmatmul.mubr.bf16.gmra.mrb[0].mxu0 %v653
        %v7461 = vpop.f32.mrb[0].mxu0
        %v7462 = vadd.f32 0.0, %v7461
        %v7463 = vpop.f32.mrb[0].mxu0
        %v7464 = vadd.f32 0.0, %v7463
        %v7465 = vpop.f32.mrb[0].mxu0
        %v7466 = vadd.f32 0.0, %v7465
        %v7467 = vpop.f32.mrb[0].mxu0
        %v7468 = vadd.f32 0.0, %v7467
        %7469 = vdwg.mxu0
        %v7470 = vpack.c.bf16 %v7165, %v7161
        %v7471 = vpack.c.bf16 %v7167, %v7163
        %v7472 = vpack.c.bf16 %v7208, %v7204
        %v7473 = vpack.c.bf16 %v7210, %v7206
        %v7474 = vpack.c.bf16 %v7251, %v7247
        %v7475 = vpack.c.bf16 %v7253, %v7249
        %v7476 = vpack.c.bf16 %v7294, %v7290
        %v7477 = vpack.c.bf16 %v7296, %v7292
        %v7478 = vpack.c.bf16 %v7337, %v7333
        %v7479 = vpack.c.bf16 %v7339, %v7335
        %v7480 = vpack.c.bf16 %v7380, %v7376
        %v7481 = vpack.c.bf16 %v7382, %v7378
        %v7482 = vpack.c.bf16 %v7423, %v7419
        %v7483 = vpack.c.bf16 %v7425, %v7421
        %v7484 = vpack.c.bf16 %v7466, %v7462
        %v7485 = vpack.c.bf16 %v7468, %v7464
        %v7486 = vmul.bf16 %v6342, %v7470
        %v7487 = vmul.bf16 %v6343, %v7471
        %v7488 = vmul.bf16 %v6344, %v7472
        %v7489 = vmul.bf16 %v6345, %v7473
        %v7490 = vmul.bf16 %v6346, %v7474
        %v7491 = vmul.bf16 %v6347, %v7475
        %v7492 = vmul.bf16 %v6348, %v7476
        %v7493 = vmul.bf16 %v6349, %v7477
        %v7494 = vmul.bf16 %v6350, %v7478
        %v7495 = vmul.bf16 %v6351, %v7479
        %v7496 = vmul.bf16 %v6352, %v7480
        %v7497 = vmul.bf16 %v6353, %v7481
        %v7498 = vmul.bf16 %v6354, %v7482
        %v7499 = vmul.bf16 %v6355, %v7483
        %v7500 = vmul.bf16 %v6356, %v7484
        %v7501 = vmul.bf16 %v6357, %v7485
        %v7502 = vld [vmem:[%s4] sm:$0xf]
        %v7503 = vld [vmem:[%s4 + $0x4] sm:$0xf]
        %v7504 = vld [vmem:[%s4 + $0x8] sm:$0xf]
        %v7505 = vld [vmem:[%s4 + $0xc] sm:$0xf]
        %v7506 = vld [vmem:[%s4 + $0x10] sm:$0xf]
        %v7507 = vld [vmem:[%s4 + $0x14] sm:$0xf]
        %v7508 = vld [vmem:[%s4 + $0x18] sm:$0xf]
        %v7509 = vld [vmem:[%s4 + $0x1c] sm:$0xf]
        %v7510 = vld [vmem:[%s4 + $0x20] sm:$0xf]
        %v7511 = vld [vmem:[%s4 + $0x24] sm:$0xf]
        %v7512 = vld [vmem:[%s4 + $0x28] sm:$0xf]
        %v7513 = vld [vmem:[%s4 + $0x2c] sm:$0xf]
        %v7514 = vld [vmem:[%s4 + $0x30] sm:$0xf]
        %v7515 = vld [vmem:[%s4 + $0x34] sm:$0xf]
        %v7516 = vld [vmem:[%s4 + $0x38] sm:$0xf]
        %v7517 = vld [vmem:[%s4 + $0x3c] sm:$0xf]
        %v7518 = vld [vmem:[%s4 + $0x40] sm:$0xf]
        %v7519 = vld [vmem:[%s4 + $0x44] sm:$0xf]
        %v7520 = vld [vmem:[%s4 + $0x48] sm:$0xf]
        %v7521 = vld [vmem:[%s4 + $0x4c] sm:$0xf]
        %v7522 = vld [vmem:[%s4 + $0x50] sm:$0xf]
        %v7523 = vld [vmem:[%s4 + $0x54] sm:$0xf]
        %v7524 = vld [vmem:[%s4 + $0x58] sm:$0xf]
        %v7525 = vld [vmem:[%s4 + $0x5c] sm:$0xf]
        %v7526 = vld [vmem:[%s4 + $0x60] sm:$0xf]
        %v7527 = vld [vmem:[%s4 + $0x64] sm:$0xf]
        %v7528 = vld [vmem:[%s4 + $0x68] sm:$0xf]
        %v7529 = vld [vmem:[%s4 + $0x6c] sm:$0xf]
        %v7530 = vld [vmem:[%s4 + $0x70] sm:$0xf]
        %v7531 = vld [vmem:[%s4 + $0x74] sm:$0xf]
        %v7532 = vld [vmem:[%s4 + $0x78] sm:$0xf]
        %v7533 = vld [vmem:[%s4 + $0x7c] sm:$0xf]
        %v7534 = vld [vmem:[%s4 + $0x80] sm:$0xf]
        %v7535 = vld [vmem:[%s4 + $0x84] sm:$0xf]
        %v7536 = vld [vmem:[%s4 + $0x88] sm:$0xf]
        %v7537 = vld [vmem:[%s4 + $0x8c] sm:$0xf]
        %v7538 = vld [vmem:[%s4 + $0x90] sm:$0xf]
        %v7539 = vld [vmem:[%s4 + $0x94] sm:$0xf]
        %v7540 = vld [vmem:[%s4 + $0x98] sm:$0xf]
        %v7541 = vld [vmem:[%s4 + $0x9c] sm:$0xf]
        %v7542 = vld [vmem:[%s4 + $0xa0] sm:$0xf]
        %v7543 = vld [vmem:[%s4 + $0xa4] sm:$0xf]
        %v7544 = vld [vmem:[%s4 + $0xa8] sm:$0xf]
        %v7545 = vld [vmem:[%s4 + $0xac] sm:$0xf]
        %v7546 = vld [vmem:[%s4 + $0xb0] sm:$0xf]
        %v7547 = vld [vmem:[%s4 + $0xb4] sm:$0xf]
        %v7548 = vld [vmem:[%s4 + $0xb8] sm:$0xf]
        %v7549 = vld [vmem:[%s4 + $0xbc] sm:$0xf]
        %v7550 = vld [vmem:[%s4 + $0xc0] sm:$0xf]
        %v7551 = vld [vmem:[%s4 + $0xc4] sm:$0xf]
        %v7552 = vld [vmem:[%s4 + $0xc8] sm:$0xf]
        %v7553 = vld [vmem:[%s4 + $0xcc] sm:$0xf]
        %v7554 = vld [vmem:[%s4 + $0xd0] sm:$0xf]
        %v7555 = vld [vmem:[%s4 + $0xd4] sm:$0xf]
        %v7556 = vld [vmem:[%s4 + $0xd8] sm:$0xf]
        %v7557 = vld [vmem:[%s4 + $0xdc] sm:$0xf]
        %v7558 = vld [vmem:[%s4 + $0xe0] sm:$0xf]
        %v7559 = vld [vmem:[%s4 + $0xe4] sm:$0xf]
        %v7560 = vld [vmem:[%s4 + $0xe8] sm:$0xf]
        %v7561 = vld [vmem:[%s4 + $0xec] sm:$0xf]
        %v7562 = vld [vmem:[%s4 + $0xf0] sm:$0xf]
        %v7563 = vld [vmem:[%s4 + $0xf4] sm:$0xf]
        %v7564 = vld [vmem:[%s4 + $0xf8] sm:$0xf]
        %v7565 = vld [vmem:[%s4 + $0xfc] sm:$0xf]
        %v7566 = vld [vmem:[%s4 + $0x100] sm:$0xf]
        %v7567 = vld [vmem:[%s4 + $0x104] sm:$0xf]
        %v7568 = vld [vmem:[%s4 + $0x108] sm:$0xf]
        %v7569 = vld [vmem:[%s4 + $0x10c] sm:$0xf]
        %v7570 = vld [vmem:[%s4 + $0x110] sm:$0xf]
        %v7571 = vld [vmem:[%s4 + $0x114] sm:$0xf]
        %v7572 = vld [vmem:[%s4 + $0x118] sm:$0xf]
        %v7573 = vld [vmem:[%s4 + $0x11c] sm:$0xf]
        %v7574 = vld [vmem:[%s4 + $0x120] sm:$0xf]
        %v7575 = vld [vmem:[%s4 + $0x124] sm:$0xf]
        %v7576 = vld [vmem:[%s4 + $0x128] sm:$0xf]
        %v7577 = vld [vmem:[%s4 + $0x12c] sm:$0xf]
        %v7578 = vld [vmem:[%s4 + $0x130] sm:$0xf]
        %v7579 = vld [vmem:[%s4 + $0x134] sm:$0xf]
        %v7580 = vld [vmem:[%s4 + $0x138] sm:$0xf]
        %v7581 = vld [vmem:[%s4 + $0x13c] sm:$0xf]
        %v7582 = vld [vmem:[%s4 + $0x140] sm:$0xf]
        %v7583 = vld [vmem:[%s4 + $0x144] sm:$0xf]
        %v7584 = vld [vmem:[%s4 + $0x148] sm:$0xf]
        %v7585 = vld [vmem:[%s4 + $0x14c] sm:$0xf]
        %v7586 = vld [vmem:[%s4 + $0x150] sm:$0xf]
        %v7587 = vld [vmem:[%s4 + $0x154] sm:$0xf]
        %v7588 = vld [vmem:[%s4 + $0x158] sm:$0xf]
        %v7589 = vld [vmem:[%s4 + $0x15c] sm:$0xf]
        %v7590 = vld [vmem:[%s4 + $0x160] sm:$0xf]
        %v7591 = vld [vmem:[%s4 + $0x164] sm:$0xf]
        %v7592 = vld [vmem:[%s4 + $0x168] sm:$0xf]
        %v7593 = vld [vmem:[%s4 + $0x16c] sm:$0xf]
        %v7594 = vld [vmem:[%s4 + $0x170] sm:$0xf]
        %v7595 = vld [vmem:[%s4 + $0x174] sm:$0xf]
        %v7596 = vld [vmem:[%s4 + $0x178] sm:$0xf]
        %v7597 = vld [vmem:[%s4 + $0x17c] sm:$0xf]
        %v7598 = vld [vmem:[%s4 + $0x180] sm:$0xf]
        %v7599 = vld [vmem:[%s4 + $0x184] sm:$0xf]
        %v7600 = vld [vmem:[%s4 + $0x188] sm:$0xf]
        %v7601 = vld [vmem:[%s4 + $0x18c] sm:$0xf]
        %v7602 = vld [vmem:[%s4 + $0x190] sm:$0xf]
        %v7603 = vld [vmem:[%s4 + $0x194] sm:$0xf]
        %v7604 = vld [vmem:[%s4 + $0x198] sm:$0xf]
        %v7605 = vld [vmem:[%s4 + $0x19c] sm:$0xf]
        %v7606 = vld [vmem:[%s4 + $0x1a0] sm:$0xf]
        %v7607 = vld [vmem:[%s4 + $0x1a4] sm:$0xf]
        %v7608 = vld [vmem:[%s4 + $0x1a8] sm:$0xf]
        %v7609 = vld [vmem:[%s4 + $0x1ac] sm:$0xf]
        %v7610 = vld [vmem:[%s4 + $0x1b0] sm:$0xf]
        %v7611 = vld [vmem:[%s4 + $0x1b4] sm:$0xf]
        %v7612 = vld [vmem:[%s4 + $0x1b8] sm:$0xf]
        %v7613 = vld [vmem:[%s4 + $0x1bc] sm:$0xf]
        %v7614 = vld [vmem:[%s4 + $0x1c0] sm:$0xf]
        %v7615 = vld [vmem:[%s4 + $0x1c4] sm:$0xf]
        %v7616 = vld [vmem:[%s4 + $0x1c8] sm:$0xf]
        %v7617 = vld [vmem:[%s4 + $0x1cc] sm:$0xf]
        %v7618 = vld [vmem:[%s4 + $0x1d0] sm:$0xf]
        %v7619 = vld [vmem:[%s4 + $0x1d4] sm:$0xf]
        %v7620 = vld [vmem:[%s4 + $0x1d8] sm:$0xf]
        %v7621 = vld [vmem:[%s4 + $0x1dc] sm:$0xf]
        %v7622 = vld [vmem:[%s4 + $0x1e0] sm:$0xf]
        %v7623 = vld [vmem:[%s4 + $0x1e4] sm:$0xf]
        %v7624 = vld [vmem:[%s4 + $0x1e8] sm:$0xf]
        %v7625 = vld [vmem:[%s4 + $0x1ec] sm:$0xf]
        %v7626 = vld [vmem:[%s4 + $0x1f0] sm:$0xf]
        %v7627 = vld [vmem:[%s4 + $0x1f4] sm:$0xf]
        %v7628 = vld [vmem:[%s4 + $0x1f8] sm:$0xf]
        %v7629 = vld [vmem:[%s4 + $0x1fc] sm:$0xf]
        %v7630 = vld [vmem:[%s4 + $0x200] sm:$0xf]
        %v7631 = vld [vmem:[%s4 + $0x204] sm:$0xf]
        %v7632 = vld [vmem:[%s4 + $0x208] sm:$0xf]
        %v7633 = vld [vmem:[%s4 + $0x20c] sm:$0xf]
        %v7634 = vld [vmem:[%s4 + $0x210] sm:$0xf]
        %v7635 = vld [vmem:[%s4 + $0x214] sm:$0xf]
        %v7636 = vld [vmem:[%s4 + $0x218] sm:$0xf]
        %v7637 = vld [vmem:[%s4 + $0x21c] sm:$0xf]
        %v7638 = vld [vmem:[%s4 + $0x220] sm:$0xf]
        %v7639 = vld [vmem:[%s4 + $0x224] sm:$0xf]
        %v7640 = vld [vmem:[%s4 + $0x228] sm:$0xf]
        %v7641 = vld [vmem:[%s4 + $0x22c] sm:$0xf]
        %v7642 = vld [vmem:[%s4 + $0x230] sm:$0xf]
        %v7643 = vld [vmem:[%s4 + $0x234] sm:$0xf]
        %v7644 = vld [vmem:[%s4 + $0x238] sm:$0xf]
        %v7645 = vld [vmem:[%s4 + $0x23c] sm:$0xf]
        %v7646 = vld [vmem:[%s4 + $0x240] sm:$0xf]
        %v7647 = vld [vmem:[%s4 + $0x244] sm:$0xf]
        %v7648 = vld [vmem:[%s4 + $0x248] sm:$0xf]
        %v7649 = vld [vmem:[%s4 + $0x24c] sm:$0xf]
        %v7650 = vld [vmem:[%s4 + $0x250] sm:$0xf]
        %v7651 = vld [vmem:[%s4 + $0x254] sm:$0xf]
        %v7652 = vld [vmem:[%s4 + $0x258] sm:$0xf]
        %v7653 = vld [vmem:[%s4 + $0x25c] sm:$0xf]
        %v7654 = vld [vmem:[%s4 + $0x260] sm:$0xf]
        %v7655 = vld [vmem:[%s4 + $0x264] sm:$0xf]
        %v7656 = vld [vmem:[%s4 + $0x268] sm:$0xf]
        %v7657 = vld [vmem:[%s4 + $0x26c] sm:$0xf]
        %v7658 = vld [vmem:[%s4 + $0x270] sm:$0xf]
        %v7659 = vld [vmem:[%s4 + $0x274] sm:$0xf]
        %v7660 = vld [vmem:[%s4 + $0x278] sm:$0xf]
        %v7661 = vld [vmem:[%s4 + $0x27c] sm:$0xf]
        %v7662 = vld [vmem:[%s4 + $0x280] sm:$0xf]
        %v7663 = vld [vmem:[%s4 + $0x284] sm:$0xf]
        %v7664 = vld [vmem:[%s4 + $0x288] sm:$0xf]
        %v7665 = vld [vmem:[%s4 + $0x28c] sm:$0xf]
        %v7666 = vld [vmem:[%s4 + $0x290] sm:$0xf]
        %v7667 = vld [vmem:[%s4 + $0x294] sm:$0xf]
        %v7668 = vld [vmem:[%s4 + $0x298] sm:$0xf]
        %v7669 = vld [vmem:[%s4 + $0x29c] sm:$0xf]
        %v7670 = vld [vmem:[%s4 + $0x2a0] sm:$0xf]
        %v7671 = vld [vmem:[%s4 + $0x2a4] sm:$0xf]
        %v7672 = vld [vmem:[%s4 + $0x2a8] sm:$0xf]
        %v7673 = vld [vmem:[%s4 + $0x2ac] sm:$0xf]
        %v7674 = vld [vmem:[%s4 + $0x2b0] sm:$0xf]
        %v7675 = vld [vmem:[%s4 + $0x2b4] sm:$0xf]
        %v7676 = vld [vmem:[%s4 + $0x2b8] sm:$0xf]
        %v7677 = vld [vmem:[%s4 + $0x2bc] sm:$0xf]
        %v7678 = vld [vmem:[%s4 + $0x2c0] sm:$0xf]
        %v7679 = vld [vmem:[%s4 + $0x2c4] sm:$0xf]
        %v7680 = vld [vmem:[%s4 + $0x2c8] sm:$0xf]
        %v7681 = vld [vmem:[%s4 + $0x2cc] sm:$0xf]
        %v7682 = vld [vmem:[%s4 + $0x2d0] sm:$0xf]
        %v7683 = vld [vmem:[%s4 + $0x2d4] sm:$0xf]
        %v7684 = vld [vmem:[%s4 + $0x2d8] sm:$0xf]
        %v7685 = vld [vmem:[%s4 + $0x2dc] sm:$0xf]
        %v7686 = vld [vmem:[%s4 + $0x2e0] sm:$0xf]
        %v7687 = vld [vmem:[%s4 + $0x2e4] sm:$0xf]
        %v7688 = vld [vmem:[%s4 + $0x2e8] sm:$0xf]
        %v7689 = vld [vmem:[%s4 + $0x2ec] sm:$0xf]
        %v7690 = vld [vmem:[%s4 + $0x2f0] sm:$0xf]
        %v7691 = vld [vmem:[%s4 + $0x2f4] sm:$0xf]
        %v7692 = vld [vmem:[%s4 + $0x2f8] sm:$0xf]
        %v7693 = vld [vmem:[%s4 + $0x2fc] sm:$0xf]
        %v7694 = vld [vmem:[%s4 + $0x300] sm:$0xf]
        %v7695 = vld [vmem:[%s4 + $0x304] sm:$0xf]
        %v7696 = vld [vmem:[%s4 + $0x308] sm:$0xf]
        %v7697 = vld [vmem:[%s4 + $0x30c] sm:$0xf]
        %v7698 = vld [vmem:[%s4 + $0x310] sm:$0xf]
        %v7699 = vld [vmem:[%s4 + $0x314] sm:$0xf]
        %v7700 = vld [vmem:[%s4 + $0x318] sm:$0xf]
        %v7701 = vld [vmem:[%s4 + $0x31c] sm:$0xf]
        %v7702 = vld [vmem:[%s4 + $0x320] sm:$0xf]
        %v7703 = vld [vmem:[%s4 + $0x324] sm:$0xf]
        %v7704 = vld [vmem:[%s4 + $0x328] sm:$0xf]
        %v7705 = vld [vmem:[%s4 + $0x32c] sm:$0xf]
        %v7706 = vld [vmem:[%s4 + $0x330] sm:$0xf]
        %v7707 = vld [vmem:[%s4 + $0x334] sm:$0xf]
        %v7708 = vld [vmem:[%s4 + $0x338] sm:$0xf]
        %v7709 = vld [vmem:[%s4 + $0x33c] sm:$0xf]
        %v7710 = vld [vmem:[%s4 + $0x340] sm:$0xf]
        %v7711 = vld [vmem:[%s4 + $0x344] sm:$0xf]
        %v7712 = vld [vmem:[%s4 + $0x348] sm:$0xf]
        %v7713 = vld [vmem:[%s4 + $0x34c] sm:$0xf]
        %v7714 = vld [vmem:[%s4 + $0x350] sm:$0xf]
        %v7715 = vld [vmem:[%s4 + $0x354] sm:$0xf]
        %v7716 = vld [vmem:[%s4 + $0x358] sm:$0xf]
        %v7717 = vld [vmem:[%s4 + $0x35c] sm:$0xf]
        %v7718 = vld [vmem:[%s4 + $0x360] sm:$0xf]
        %v7719 = vld [vmem:[%s4 + $0x364] sm:$0xf]
        %v7720 = vld [vmem:[%s4 + $0x368] sm:$0xf]
        %v7721 = vld [vmem:[%s4 + $0x36c] sm:$0xf]
        %v7722 = vld [vmem:[%s4 + $0x370] sm:$0xf]
        %v7723 = vld [vmem:[%s4 + $0x374] sm:$0xf]
        %v7724 = vld [vmem:[%s4 + $0x378] sm:$0xf]
        %v7725 = vld [vmem:[%s4 + $0x37c] sm:$0xf]
        %v7726 = vld [vmem:[%s4 + $0x380] sm:$0xf]
        %v7727 = vld [vmem:[%s4 + $0x384] sm:$0xf]
        %v7728 = vld [vmem:[%s4 + $0x388] sm:$0xf]
        %v7729 = vld [vmem:[%s4 + $0x38c] sm:$0xf]
        %v7730 = vld [vmem:[%s4 + $0x390] sm:$0xf]
        %v7731 = vld [vmem:[%s4 + $0x394] sm:$0xf]
        %v7732 = vld [vmem:[%s4 + $0x398] sm:$0xf]
        %v7733 = vld [vmem:[%s4 + $0x39c] sm:$0xf]
        %v7734 = vld [vmem:[%s4 + $0x3a0] sm:$0xf]
        %v7735 = vld [vmem:[%s4 + $0x3a4] sm:$0xf]
        %v7736 = vld [vmem:[%s4 + $0x3a8] sm:$0xf]
        %v7737 = vld [vmem:[%s4 + $0x3ac] sm:$0xf]
        %v7738 = vld [vmem:[%s4 + $0x3b0] sm:$0xf]
        %v7739 = vld [vmem:[%s4 + $0x3b4] sm:$0xf]
        %v7740 = vld [vmem:[%s4 + $0x3b8] sm:$0xf]
        %v7741 = vld [vmem:[%s4 + $0x3bc] sm:$0xf]
        %v7742 = vld [vmem:[%s4 + $0x3c0] sm:$0xf]
        %v7743 = vld [vmem:[%s4 + $0x3c4] sm:$0xf]
        %v7744 = vld [vmem:[%s4 + $0x3c8] sm:$0xf]
        %v7745 = vld [vmem:[%s4 + $0x3cc] sm:$0xf]
        %v7746 = vld [vmem:[%s4 + $0x3d0] sm:$0xf]
        %v7747 = vld [vmem:[%s4 + $0x3d4] sm:$0xf]
        %v7748 = vld [vmem:[%s4 + $0x3d8] sm:$0xf]
        %v7749 = vld [vmem:[%s4 + $0x3dc] sm:$0xf]
        %v7750 = vld [vmem:[%s4 + $0x3e0] sm:$0xf]
        %v7751 = vld [vmem:[%s4 + $0x3e4] sm:$0xf]
        %v7752 = vld [vmem:[%s4 + $0x3e8] sm:$0xf]
        %v7753 = vld [vmem:[%s4 + $0x3ec] sm:$0xf]
        %v7754 = vld [vmem:[%s4 + $0x3f0] sm:$0xf]
        %v7755 = vld [vmem:[%s4 + $0x3f4] sm:$0xf]
        %v7756 = vld [vmem:[%s4 + $0x3f8] sm:$0xf]
        %v7757 = vld [vmem:[%s4 + $0x3fc] sm:$0xf]
        %v8014 = vunpack.c.l.b16 %v7502
        %v8015 = vunpack.c.l.b16 %v7503
        %v8016 = vunpack.c.l.b16 %v7504
        %v8017 = vunpack.c.l.b16 %v7505
        %v8018 = vunpack.c.l.b16 %v7506
        %v8019 = vunpack.c.l.b16 %v7507
        %v8020 = vunpack.c.l.b16 %v7508
        %v8021 = vunpack.c.l.b16 %v7509
        %v8022 = vunpack.c.l.b16 %v7510
        %v8023 = vunpack.c.l.b16 %v7511
        %v8024 = vunpack.c.l.b16 %v7512
        %v8025 = vunpack.c.l.b16 %v7513
        %v8026 = vunpack.c.l.b16 %v7514
        %v8027 = vunpack.c.l.b16 %v7515
        %v8028 = vunpack.c.l.b16 %v7516
        %v8029 = vunpack.c.l.b16 %v7517
        %v8030 = vunpack.c.l.b16 %v7518
        %v8031 = vunpack.c.l.b16 %v7519
        %v8032 = vunpack.c.l.b16 %v7520
        %v8033 = vunpack.c.l.b16 %v7521
        %v8034 = vunpack.c.l.b16 %v7522
        %v8035 = vunpack.c.l.b16 %v7523
        %v8036 = vunpack.c.l.b16 %v7524
        %v8037 = vunpack.c.l.b16 %v7525
        %v8038 = vunpack.c.l.b16 %v7526
        %v8039 = vunpack.c.l.b16 %v7527
        %v8040 = vunpack.c.l.b16 %v7528
        %v8041 = vunpack.c.l.b16 %v7529
        %v8042 = vunpack.c.l.b16 %v7530
        %v8043 = vunpack.c.l.b16 %v7531
        %v8044 = vunpack.c.l.b16 %v7532
        %v8045 = vunpack.c.l.b16 %v7533
        %v8046 = vunpack.c.l.b16 %v7534
        %v8047 = vunpack.c.l.b16 %v7535
        %v8048 = vunpack.c.l.b16 %v7536
        %v8049 = vunpack.c.l.b16 %v7537
        %v8050 = vunpack.c.l.b16 %v7538
        %v8051 = vunpack.c.l.b16 %v7539
        %v8052 = vunpack.c.l.b16 %v7540
        %v8053 = vunpack.c.l.b16 %v7541
        %v8054 = vunpack.c.l.b16 %v7542
        %v8055 = vunpack.c.l.b16 %v7543
        %v8056 = vunpack.c.l.b16 %v7544
        %v8057 = vunpack.c.l.b16 %v7545
        %v8058 = vunpack.c.l.b16 %v7546
        %v8059 = vunpack.c.l.b16 %v7547
        %v8060 = vunpack.c.l.b16 %v7548
        %v8061 = vunpack.c.l.b16 %v7549
        %v8062 = vunpack.c.l.b16 %v7550
        %v8063 = vunpack.c.l.b16 %v7551
        %v8064 = vunpack.c.l.b16 %v7552
        %v8065 = vunpack.c.l.b16 %v7553
        %v8066 = vunpack.c.l.b16 %v7554
        %v8067 = vunpack.c.l.b16 %v7555
        %v8068 = vunpack.c.l.b16 %v7556
        %v8069 = vunpack.c.l.b16 %v7557
        %v8070 = vunpack.c.l.b16 %v7558
        %v8071 = vunpack.c.l.b16 %v7559
        %v8072 = vunpack.c.l.b16 %v7560
        %v8073 = vunpack.c.l.b16 %v7561
        %v8074 = vunpack.c.l.b16 %v7562
        %v8075 = vunpack.c.l.b16 %v7563
        %v8076 = vunpack.c.l.b16 %v7564
        %v8077 = vunpack.c.l.b16 %v7565
        %v8078 = vunpack.c.l.b16 %v7566
        %v8079 = vunpack.c.l.b16 %v7567
        %v8080 = vunpack.c.l.b16 %v7568
        %v8081 = vunpack.c.l.b16 %v7569
        %v8082 = vunpack.c.l.b16 %v7570
        %v8083 = vunpack.c.l.b16 %v7571
        %v8084 = vunpack.c.l.b16 %v7572
        %v8085 = vunpack.c.l.b16 %v7573
        %v8086 = vunpack.c.l.b16 %v7574
        %v8087 = vunpack.c.l.b16 %v7575
        %v8088 = vunpack.c.l.b16 %v7576
        %v8089 = vunpack.c.l.b16 %v7577
        %v8090 = vunpack.c.l.b16 %v7578
        %v8091 = vunpack.c.l.b16 %v7579
        %v8092 = vunpack.c.l.b16 %v7580
        %v8093 = vunpack.c.l.b16 %v7581
        %v8094 = vunpack.c.l.b16 %v7582
        %v8095 = vunpack.c.l.b16 %v7583
        %v8096 = vunpack.c.l.b16 %v7584
        %v8097 = vunpack.c.l.b16 %v7585
        %v8098 = vunpack.c.l.b16 %v7586
        %v8099 = vunpack.c.l.b16 %v7587
        %v8100 = vunpack.c.l.b16 %v7588
        %v8101 = vunpack.c.l.b16 %v7589
        %v8102 = vunpack.c.l.b16 %v7590
        %v8103 = vunpack.c.l.b16 %v7591
        %v8104 = vunpack.c.l.b16 %v7592
        %v8105 = vunpack.c.l.b16 %v7593
        %v8106 = vunpack.c.l.b16 %v7594
        %v8107 = vunpack.c.l.b16 %v7595
        %v8108 = vunpack.c.l.b16 %v7596
        %v8109 = vunpack.c.l.b16 %v7597
        %v8110 = vunpack.c.l.b16 %v7598
        %v8111 = vunpack.c.l.b16 %v7599
        %v8112 = vunpack.c.l.b16 %v7600
        %v8113 = vunpack.c.l.b16 %v7601
        %v8114 = vunpack.c.l.b16 %v7602
        %v8115 = vunpack.c.l.b16 %v7603
        %v8116 = vunpack.c.l.b16 %v7604
        %v8117 = vunpack.c.l.b16 %v7605
        %v8118 = vunpack.c.l.b16 %v7606
        %v8119 = vunpack.c.l.b16 %v7607
        %v8120 = vunpack.c.l.b16 %v7608
        %v8121 = vunpack.c.l.b16 %v7609
        %v8122 = vunpack.c.l.b16 %v7610
        %v8123 = vunpack.c.l.b16 %v7611
        %v8124 = vunpack.c.l.b16 %v7612
        %v8125 = vunpack.c.l.b16 %v7613
        %v8126 = vunpack.c.l.b16 %v7614
        %v8127 = vunpack.c.l.b16 %v7615
        %v8128 = vunpack.c.l.b16 %v7616
        %v8129 = vunpack.c.l.b16 %v7617
        %v8130 = vunpack.c.l.b16 %v7618
        %v8131 = vunpack.c.l.b16 %v7619
        %v8132 = vunpack.c.l.b16 %v7620
        %v8133 = vunpack.c.l.b16 %v7621
        %v8134 = vunpack.c.l.b16 %v7622
        %v8135 = vunpack.c.l.b16 %v7623
        %v8136 = vunpack.c.l.b16 %v7624
        %v8137 = vunpack.c.l.b16 %v7625
        %v8138 = vunpack.c.l.b16 %v7626
        %v8139 = vunpack.c.l.b16 %v7627
        %v8140 = vunpack.c.l.b16 %v7628
        %v8141 = vunpack.c.l.b16 %v7629
        %v8142 = vunpack.c.l.b16 %v7630
        %v8143 = vunpack.c.l.b16 %v7631
        %v8144 = vunpack.c.l.b16 %v7632
        %v8145 = vunpack.c.l.b16 %v7633
        %v8146 = vunpack.c.l.b16 %v7634
        %v8147 = vunpack.c.l.b16 %v7635
        %v8148 = vunpack.c.l.b16 %v7636
        %v8149 = vunpack.c.l.b16 %v7637
        %v8150 = vunpack.c.l.b16 %v7638
        %v8151 = vunpack.c.l.b16 %v7639
        %v8152 = vunpack.c.l.b16 %v7640
        %v8153 = vunpack.c.l.b16 %v7641
        %v8154 = vunpack.c.l.b16 %v7642
        %v8155 = vunpack.c.l.b16 %v7643
        %v8156 = vunpack.c.l.b16 %v7644
        %v8157 = vunpack.c.l.b16 %v7645
        %v8158 = vunpack.c.l.b16 %v7646
        %v8159 = vunpack.c.l.b16 %v7647
        %v8160 = vunpack.c.l.b16 %v7648
        %v8161 = vunpack.c.l.b16 %v7649
        %v8162 = vunpack.c.l.b16 %v7650
        %v8163 = vunpack.c.l.b16 %v7651
        %v8164 = vunpack.c.l.b16 %v7652
        %v8165 = vunpack.c.l.b16 %v7653
        %v8166 = vunpack.c.l.b16 %v7654
        %v8167 = vunpack.c.l.b16 %v7655
        %v8168 = vunpack.c.l.b16 %v7656
        %v8169 = vunpack.c.l.b16 %v7657
        %v8170 = vunpack.c.l.b16 %v7658
        %v8171 = vunpack.c.l.b16 %v7659
        %v8172 = vunpack.c.l.b16 %v7660
        %v8173 = vunpack.c.l.b16 %v7661
        %v8174 = vunpack.c.l.b16 %v7662
        %v8175 = vunpack.c.l.b16 %v7663
        %v8176 = vunpack.c.l.b16 %v7664
        %v8177 = vunpack.c.l.b16 %v7665
        %v8178 = vunpack.c.l.b16 %v7666
        %v8179 = vunpack.c.l.b16 %v7667
        %v8180 = vunpack.c.l.b16 %v7668
        %v8181 = vunpack.c.l.b16 %v7669
        %v8182 = vunpack.c.l.b16 %v7670
        %v8183 = vunpack.c.l.b16 %v7671
        %v8184 = vunpack.c.l.b16 %v7672
        %v8185 = vunpack.c.l.b16 %v7673
        %v8186 = vunpack.c.l.b16 %v7674
        %v8187 = vunpack.c.l.b16 %v7675
        %v8188 = vunpack.c.l.b16 %v7676
        %v8189 = vunpack.c.l.b16 %v7677
        %v8190 = vunpack.c.l.b16 %v7678
        %v8191 = vunpack.c.l.b16 %v7679
        %v8192 = vunpack.c.l.b16 %v7680
        %v8193 = vunpack.c.l.b16 %v7681
        %v8194 = vunpack.c.l.b16 %v7682
        %v8195 = vunpack.c.l.b16 %v7683
        %v8196 = vunpack.c.l.b16 %v7684
        %v8197 = vunpack.c.l.b16 %v7685
        %v8198 = vunpack.c.l.b16 %v7686
        %v8199 = vunpack.c.l.b16 %v7687
        %v8200 = vunpack.c.l.b16 %v7688
        %v8201 = vunpack.c.l.b16 %v7689
        %v8202 = vunpack.c.l.b16 %v7690
        %v8203 = vunpack.c.l.b16 %v7691
        %v8204 = vunpack.c.l.b16 %v7692
        %v8205 = vunpack.c.l.b16 %v7693
        %v8206 = vunpack.c.l.b16 %v7694
        %v8207 = vunpack.c.l.b16 %v7695
        %v8208 = vunpack.c.l.b16 %v7696
        %v8209 = vunpack.c.l.b16 %v7697
        %v8210 = vunpack.c.l.b16 %v7698
        %v8211 = vunpack.c.l.b16 %v7699
        %v8212 = vunpack.c.l.b16 %v7700
        %v8213 = vunpack.c.l.b16 %v7701
        %v8214 = vunpack.c.l.b16 %v7702
        %v8215 = vunpack.c.l.b16 %v7703
        %v8216 = vunpack.c.l.b16 %v7704
        %v8217 = vunpack.c.l.b16 %v7705
        %v8218 = vunpack.c.l.b16 %v7706
        %v8219 = vunpack.c.l.b16 %v7707
        %v8220 = vunpack.c.l.b16 %v7708
        %v8221 = vunpack.c.l.b16 %v7709
        %v8222 = vunpack.c.l.b16 %v7710
        %v8223 = vunpack.c.l.b16 %v7711
        %v8224 = vunpack.c.l.b16 %v7712
        %v8225 = vunpack.c.l.b16 %v7713
        %v8226 = vunpack.c.l.b16 %v7714
        %v8227 = vunpack.c.l.b16 %v7715
        %v8228 = vunpack.c.l.b16 %v7716
        %v8229 = vunpack.c.l.b16 %v7717
        %v8230 = vunpack.c.l.b16 %v7718
        %v8231 = vunpack.c.l.b16 %v7719
        %v8232 = vunpack.c.l.b16 %v7720
        %v8233 = vunpack.c.l.b16 %v7721
        %v8234 = vunpack.c.l.b16 %v7722
        %v8235 = vunpack.c.l.b16 %v7723
        %v8236 = vunpack.c.l.b16 %v7724
        %v8237 = vunpack.c.l.b16 %v7725
        %v8238 = vunpack.c.l.b16 %v7726
        %v8239 = vunpack.c.l.b16 %v7727
        %v8240 = vunpack.c.l.b16 %v7728
        %v8241 = vunpack.c.l.b16 %v7729
        %v8242 = vunpack.c.l.b16 %v7730
        %v8243 = vunpack.c.l.b16 %v7731
        %v8244 = vunpack.c.l.b16 %v7732
        %v8245 = vunpack.c.l.b16 %v7733
        %v8246 = vunpack.c.l.b16 %v7734
        %v8247 = vunpack.c.l.b16 %v7735
        %v8248 = vunpack.c.l.b16 %v7736
        %v8249 = vunpack.c.l.b16 %v7737
        %v8250 = vunpack.c.l.b16 %v7738
        %v8251 = vunpack.c.l.b16 %v7739
        %v8252 = vunpack.c.l.b16 %v7740
        %v8253 = vunpack.c.l.b16 %v7741
        %v8254 = vunpack.c.l.b16 %v7742
        %v8255 = vunpack.c.l.b16 %v7743
        %v8256 = vunpack.c.l.b16 %v7744
        %v8257 = vunpack.c.l.b16 %v7745
        %v8258 = vunpack.c.l.b16 %v7746
        %v8259 = vunpack.c.l.b16 %v7747
        %v8260 = vunpack.c.l.b16 %v7748
        %v8261 = vunpack.c.l.b16 %v7749
        %v8262 = vunpack.c.l.b16 %v7750
        %v8263 = vunpack.c.l.b16 %v7751
        %v8264 = vunpack.c.l.b16 %v7752
        %v8265 = vunpack.c.l.b16 %v7753
        %v8266 = vunpack.c.l.b16 %v7754
        %v8267 = vunpack.c.l.b16 %v7755
        %v8268 = vunpack.c.l.b16 %v7756
        %v8269 = vunpack.c.l.b16 %v7757
        %v8270 = vpack.c.b16 %v8015, %v8014
        %v8271 = vpack.c.b16 %v8017, %v8016
        %v8272 = vpack.c.b16 %v8019, %v8018
        %v8273 = vpack.c.b16 %v8021, %v8020
        %v8274 = vpack.c.b16 %v8023, %v8022
        %v8275 = vpack.c.b16 %v8025, %v8024
        %v8276 = vpack.c.b16 %v8027, %v8026
        %v8277 = vpack.c.b16 %v8029, %v8028
        %v8278 = vpack.c.b16 %v8031, %v8030
        %v8279 = vpack.c.b16 %v8033, %v8032
        %v8280 = vpack.c.b16 %v8035, %v8034
        %v8281 = vpack.c.b16 %v8037, %v8036
        %v8282 = vpack.c.b16 %v8039, %v8038
        %v8283 = vpack.c.b16 %v8041, %v8040
        %v8284 = vpack.c.b16 %v8043, %v8042
        %v8285 = vpack.c.b16 %v8045, %v8044
        %v8286 = vpack.c.b16 %v8047, %v8046
        %v8287 = vpack.c.b16 %v8049, %v8048
        %v8288 = vpack.c.b16 %v8051, %v8050
        %v8289 = vpack.c.b16 %v8053, %v8052
        %v8290 = vpack.c.b16 %v8055, %v8054
        %v8291 = vpack.c.b16 %v8057, %v8056
        %v8292 = vpack.c.b16 %v8059, %v8058
        %v8293 = vpack.c.b16 %v8061, %v8060
        %v8294 = vpack.c.b16 %v8063, %v8062
        %v8295 = vpack.c.b16 %v8065, %v8064
        %v8296 = vpack.c.b16 %v8067, %v8066
        %v8297 = vpack.c.b16 %v8069, %v8068
        %v8298 = vpack.c.b16 %v8071, %v8070
        %v8299 = vpack.c.b16 %v8073, %v8072
        %v8300 = vpack.c.b16 %v8075, %v8074
        %v8301 = vpack.c.b16 %v8077, %v8076
        %v8302 = vpack.c.b16 %v8079, %v8078
        %v8303 = vpack.c.b16 %v8081, %v8080
        %v8304 = vpack.c.b16 %v8083, %v8082
        %v8305 = vpack.c.b16 %v8085, %v8084
        %v8306 = vpack.c.b16 %v8087, %v8086
        %v8307 = vpack.c.b16 %v8089, %v8088
        %v8308 = vpack.c.b16 %v8091, %v8090
        %v8309 = vpack.c.b16 %v8093, %v8092
        %v8310 = vpack.c.b16 %v8095, %v8094
        %v8311 = vpack.c.b16 %v8097, %v8096
        %v8312 = vpack.c.b16 %v8099, %v8098
        %v8313 = vpack.c.b16 %v8101, %v8100
        %v8314 = vpack.c.b16 %v8103, %v8102
        %v8315 = vpack.c.b16 %v8105, %v8104
        %v8316 = vpack.c.b16 %v8107, %v8106
        %v8317 = vpack.c.b16 %v8109, %v8108
        %v8318 = vpack.c.b16 %v8111, %v8110
        %v8319 = vpack.c.b16 %v8113, %v8112
        %v8320 = vpack.c.b16 %v8115, %v8114
        %v8321 = vpack.c.b16 %v8117, %v8116
        %v8322 = vpack.c.b16 %v8119, %v8118
        %v8323 = vpack.c.b16 %v8121, %v8120
        %v8324 = vpack.c.b16 %v8123, %v8122
        %v8325 = vpack.c.b16 %v8125, %v8124
        %v8326 = vpack.c.b16 %v8127, %v8126
        %v8327 = vpack.c.b16 %v8129, %v8128
        %v8328 = vpack.c.b16 %v8131, %v8130
        %v8329 = vpack.c.b16 %v8133, %v8132
        %v8330 = vpack.c.b16 %v8135, %v8134
        %v8331 = vpack.c.b16 %v8137, %v8136
        %v8332 = vpack.c.b16 %v8139, %v8138
        %v8333 = vpack.c.b16 %v8141, %v8140
        %v8334 = vpack.c.b16 %v8143, %v8142
        %v8335 = vpack.c.b16 %v8145, %v8144
        %v8336 = vpack.c.b16 %v8147, %v8146
        %v8337 = vpack.c.b16 %v8149, %v8148
        %v8338 = vpack.c.b16 %v8151, %v8150
        %v8339 = vpack.c.b16 %v8153, %v8152
        %v8340 = vpack.c.b16 %v8155, %v8154
        %v8341 = vpack.c.b16 %v8157, %v8156
        %v8342 = vpack.c.b16 %v8159, %v8158
        %v8343 = vpack.c.b16 %v8161, %v8160
        %v8344 = vpack.c.b16 %v8163, %v8162
        %v8345 = vpack.c.b16 %v8165, %v8164
        %v8346 = vpack.c.b16 %v8167, %v8166
        %v8347 = vpack.c.b16 %v8169, %v8168
        %v8348 = vpack.c.b16 %v8171, %v8170
        %v8349 = vpack.c.b16 %v8173, %v8172
        %v8350 = vpack.c.b16 %v8175, %v8174
        %v8351 = vpack.c.b16 %v8177, %v8176
        %v8352 = vpack.c.b16 %v8179, %v8178
        %v8353 = vpack.c.b16 %v8181, %v8180
        %v8354 = vpack.c.b16 %v8183, %v8182
        %v8355 = vpack.c.b16 %v8185, %v8184
        %v8356 = vpack.c.b16 %v8187, %v8186
        %v8357 = vpack.c.b16 %v8189, %v8188
        %v8358 = vpack.c.b16 %v8191, %v8190
        %v8359 = vpack.c.b16 %v8193, %v8192
        %v8360 = vpack.c.b16 %v8195, %v8194
        %v8361 = vpack.c.b16 %v8197, %v8196
        %v8362 = vpack.c.b16 %v8199, %v8198
        %v8363 = vpack.c.b16 %v8201, %v8200
        %v8364 = vpack.c.b16 %v8203, %v8202
        %v8365 = vpack.c.b16 %v8205, %v8204
        %v8366 = vpack.c.b16 %v8207, %v8206
        %v8367 = vpack.c.b16 %v8209, %v8208
        %v8368 = vpack.c.b16 %v8211, %v8210
        %v8369 = vpack.c.b16 %v8213, %v8212
        %v8370 = vpack.c.b16 %v8215, %v8214
        %v8371 = vpack.c.b16 %v8217, %v8216
        %v8372 = vpack.c.b16 %v8219, %v8218
        %v8373 = vpack.c.b16 %v8221, %v8220
        %v8374 = vpack.c.b16 %v8223, %v8222
        %v8375 = vpack.c.b16 %v8225, %v8224
        %v8376 = vpack.c.b16 %v8227, %v8226
        %v8377 = vpack.c.b16 %v8229, %v8228
        %v8378 = vpack.c.b16 %v8231, %v8230
        %v8379 = vpack.c.b16 %v8233, %v8232
        %v8380 = vpack.c.b16 %v8235, %v8234
        %v8381 = vpack.c.b16 %v8237, %v8236
        %v8382 = vpack.c.b16 %v8239, %v8238
        %v8383 = vpack.c.b16 %v8241, %v8240
        %v8384 = vpack.c.b16 %v8243, %v8242
        %v8385 = vpack.c.b16 %v8245, %v8244
        %v8386 = vpack.c.b16 %v8247, %v8246
        %v8387 = vpack.c.b16 %v8249, %v8248
        %v8388 = vpack.c.b16 %v8251, %v8250
        %v8389 = vpack.c.b16 %v8253, %v8252
        %v8390 = vpack.c.b16 %v8255, %v8254
        %v8391 = vpack.c.b16 %v8257, %v8256
        %v8392 = vpack.c.b16 %v8259, %v8258
        %v8393 = vpack.c.b16 %v8261, %v8260
        %v8394 = vpack.c.b16 %v8263, %v8262
        %v8395 = vpack.c.b16 %v8265, %v8264
        %v8396 = vpack.c.b16 %v8267, %v8266
        %v8397 = vpack.c.b16 %v8269, %v8268
        %8526 = vmatprep.subr.bf16.mxu0 0
        %8527 = vmatpush1.bf16.msra.mxu0 %v8270
        %8528 = vmatprep.subr.bf16.mxu0 0
        %8529 = vmatpush1.bf16.msra.mxu0 %v8271
        %8530 = vmatprep.subr.bf16.mxu0 0
        %8531 = vmatpush1.bf16.msra.mxu0 %v8272
        %8532 = vmatprep.subr.bf16.mxu0 0
        %8533 = vmatpush1.bf16.msra.mxu0 %v8273
        %8534 = vmatprep.subr.bf16.mxu0 0
        %8535 = vmatpush1.bf16.msra.mxu0 %v8274
        %8536 = vmatprep.subr.bf16.mxu0 0
        %8537 = vmatpush1.bf16.msra.mxu0 %v8275
        %8538 = vmatprep.subr.bf16.mxu0 0
        %8539 = vmatpush1.bf16.msra.mxu0 %v8276
        %8540 = vmatprep.subr.bf16.mxu0 0
        %8541 = vmatpush1.bf16.msra.mxu0 %v8277
        %8542 = vmatprep.subr.bf16.mxu0 0
        %8543 = vmatpush1.bf16.msra.mxu0 %v8278
        %8544 = vmatprep.subr.bf16.mxu0 0
        %8545 = vmatpush1.bf16.msra.mxu0 %v8279
        %8546 = vmatprep.subr.bf16.mxu0 0
        %8547 = vmatpush1.bf16.msra.mxu0 %v8280
        %8548 = vmatprep.subr.bf16.mxu0 0
        %8549 = vmatpush1.bf16.msra.mxu0 %v8281
        %8550 = vmatprep.subr.bf16.mxu0 0
        %8551 = vmatpush1.bf16.msra.mxu0 %v8282
        %8552 = vmatprep.subr.bf16.mxu0 0
        %8553 = vmatpush1.bf16.msra.mxu0 %v8283
        %8554 = vmatprep.subr.bf16.mxu0 0
        %8555 = vmatpush1.bf16.msra.mxu0 %v8284
        %8556 = vmatprep.subr.bf16.mxu0 0
        %8557 = vmatpush1.bf16.msra.mxu0 %v8285
        %8558 = vmatprep.mubr.bf16.mxu0 %v7487
        %8559 = vmatmul.mubr.bf16.gmra.mrb[0].mxu0 %v7486
        %v8560 = vpop.f32.mrb[0].mxu0
        %v8561 = vadd.f32 0.0, %v8560
        %v8562 = vpop.f32.mrb[0].mxu0
        %v8563 = vpop.f32.mrb[0].mxu0
        %v8564 = vadd.f32 0.0, %v8563
        %v8565 = vpop.f32.mrb[0].mxu0
        %8566 = vdwg.mxu0
        %8567 = vmatprep.subr.bf16.mxu0 0
        %8568 = vmatpush1.bf16.msra.mxu0 %v8286
        %8569 = vmatprep.subr.bf16.mxu0 0
        %8570 = vmatpush1.bf16.msra.mxu0 %v8287
        %8571 = vmatprep.subr.bf16.mxu0 0
        %8572 = vmatpush1.bf16.msra.mxu0 %v8288
        %8573 = vmatprep.subr.bf16.mxu0 0
        %8574 = vmatpush1.bf16.msra.mxu0 %v8289
        %8575 = vmatprep.subr.bf16.mxu0 0
        %8576 = vmatpush1.bf16.msra.mxu0 %v8290
        %8577 = vmatprep.subr.bf16.mxu0 0
        %8578 = vmatpush1.bf16.msra.mxu0 %v8291
        %8579 = vmatprep.subr.bf16.mxu0 0
        %8580 = vmatpush1.bf16.msra.mxu0 %v8292
        %8581 = vmatprep.subr.bf16.mxu0 0
        %8582 = vmatpush1.bf16.msra.mxu0 %v8293
        %8583 = vmatprep.subr.bf16.mxu0 0
        %8584 = vmatpush1.bf16.msra.mxu0 %v8294
        %8585 = vmatprep.subr.bf16.mxu0 0
        %8586 = vmatpush1.bf16.msra.mxu0 %v8295
        %8587 = vmatprep.subr.bf16.mxu0 0
        %8588 = vmatpush1.bf16.msra.mxu0 %v8296
        %8589 = vmatprep.subr.bf16.mxu0 0
        %8590 = vmatpush1.bf16.msra.mxu0 %v8297
        %8591 = vmatprep.subr.bf16.mxu0 0
        %8592 = vmatpush1.bf16.msra.mxu0 %v8298
        %8593 = vmatprep.subr.bf16.mxu0 0
        %8594 = vmatpush1.bf16.msra.mxu0 %v8299
        %8595 = vmatprep.subr.bf16.mxu0 0
        %8596 = vmatpush1.bf16.msra.mxu0 %v8300
        %8597 = vmatprep.subr.bf16.mxu0 0
        %8598 = vmatpush1.bf16.msra.mxu0 %v8301
        %8599 = vmatprep.mubr.bf16.mxu0 %v7489
        %8600 = vmatmul.mubr.bf16.gmra.mrb[0].mxu0 %v7488
        %v8601 = vpop.f32.mrb[0].mxu0
        %v8602 = vadd.f32 %v8561, %v8601
        %v8603 = vpop.f32.mrb[0].mxu0
        %v8604 = vpop.f32.mrb[0].mxu0
        %v8605 = vadd.f32 %v8564, %v8604
        %v8606 = vpop.f32.mrb[0].mxu0
        %8607 = vdwg.mxu0
        %8608 = vmatprep.subr.bf16.mxu0 0
        %8609 = vmatpush1.bf16.msra.mxu0 %v8302
        %8610 = vmatprep.subr.bf16.mxu0 0
        %8611 = vmatpush1.bf16.msra.mxu0 %v8303
        %8612 = vmatprep.subr.bf16.mxu0 0
        %8613 = vmatpush1.bf16.msra.mxu0 %v8304
        %8614 = vmatprep.subr.bf16.mxu0 0
        %8615 = vmatpush1.bf16.msra.mxu0 %v8305
        %8616 = vmatprep.subr.bf16.mxu0 0
        %8617 = vmatpush1.bf16.msra.mxu0 %v8306
        %8618 = vmatprep.subr.bf16.mxu0 0
        %8619 = vmatpush1.bf16.msra.mxu0 %v8307
        %8620 = vmatprep.subr.bf16.mxu0 0
        %8621 = vmatpush1.bf16.msra.mxu0 %v8308
        %8622 = vmatprep.subr.bf16.mxu0 0
        %8623 = vmatpush1.bf16.msra.mxu0 %v8309
        %8624 = vmatprep.subr.bf16.mxu0 0
        %8625 = vmatpush1.bf16.msra.mxu0 %v8310
        %8626 = vmatprep.subr.bf16.mxu0 0
        %8627 = vmatpush1.bf16.msra.mxu0 %v8311
        %8628 = vmatprep.subr.bf16.mxu0 0
        %8629 = vmatpush1.bf16.msra.mxu0 %v8312
        %8630 = vmatprep.subr.bf16.mxu0 0
        %8631 = vmatpush1.bf16.msra.mxu0 %v8313
        %8632 = vmatprep.subr.bf16.mxu0 0
        %8633 = vmatpush1.bf16.msra.mxu0 %v8314
        %8634 = vmatprep.subr.bf16.mxu0 0
        %8635 = vmatpush1.bf16.msra.mxu0 %v8315
        %8636 = vmatprep.subr.bf16.mxu0 0
        %8637 = vmatpush1.bf16.msra.mxu0 %v8316
        %8638 = vmatprep.subr.bf16.mxu0 0
        %8639 = vmatpush1.bf16.msra.mxu0 %v8317
        %8640 = vmatprep.mubr.bf16.mxu0 %v7491
        %8641 = vmatmul.mubr.bf16.gmra.mrb[0].mxu0 %v7490
        %v8642 = vpop.f32.mrb[0].mxu0
        %v8643 = vadd.f32 %v8602, %v8642
        %v8644 = vpop.f32.mrb[0].mxu0
        %v8645 = vpop.f32.mrb[0].mxu0
        %v8646 = vadd.f32 %v8605, %v8645
        %v8647 = vpop.f32.mrb[0].mxu0
        %8648 = vdwg.mxu0
        %8649 = vmatprep.subr.bf16.mxu0 0
        %8650 = vmatpush1.bf16.msra.mxu0 %v8318
        %8651 = vmatprep.subr.bf16.mxu0 0
        %8652 = vmatpush1.bf16.msra.mxu0 %v8319
        %8653 = vmatprep.subr.bf16.mxu0 0
        %8654 = vmatpush1.bf16.msra.mxu0 %v8320
        %8655 = vmatprep.subr.bf16.mxu0 0
        %8656 = vmatpush1.bf16.msra.mxu0 %v8321
        %8657 = vmatprep.subr.bf16.mxu0 0
        %8658 = vmatpush1.bf16.msra.mxu0 %v8322
        %8659 = vmatprep.subr.bf16.mxu0 0
        %8660 = vmatpush1.bf16.msra.mxu0 %v8323
        %8661 = vmatprep.subr.bf16.mxu0 0
        %8662 = vmatpush1.bf16.msra.mxu0 %v8324
        %8663 = vmatprep.subr.bf16.mxu0 0
        %8664 = vmatpush1.bf16.msra.mxu0 %v8325
        %8665 = vmatprep.subr.bf16.mxu0 0
        %8666 = vmatpush1.bf16.msra.mxu0 %v8326
        %8667 = vmatprep.subr.bf16.mxu0 0
        %8668 = vmatpush1.bf16.msra.mxu0 %v8327
        %8669 = vmatprep.subr.bf16.mxu0 0
        %8670 = vmatpush1.bf16.msra.mxu0 %v8328
        %8671 = vmatprep.subr.bf16.mxu0 0
        %8672 = vmatpush1.bf16.msra.mxu0 %v8329
        %8673 = vmatprep.subr.bf16.mxu0 0
        %8674 = vmatpush1.bf16.msra.mxu0 %v8330
        %8675 = vmatprep.subr.bf16.mxu0 0
        %8676 = vmatpush1.bf16.msra.mxu0 %v8331
        %8677 = vmatprep.subr.bf16.mxu0 0
        %8678 = vmatpush1.bf16.msra.mxu0 %v8332
        %8679 = vmatprep.subr.bf16.mxu0 0
        %8680 = vmatpush1.bf16.msra.mxu0 %v8333
        %8681 = vmatprep.mubr.bf16.mxu0 %v7493
        %8682 = vmatmul.mubr.bf16.gmra.mrb[0].mxu0 %v7492
        %v8683 = vpop.f32.mrb[0].mxu0
        %v8684 = vadd.f32 %v8643, %v8683
        %v8685 = vpop.f32.mrb[0].mxu0
        %v8686 = vpop.f32.mrb[0].mxu0
        %v8687 = vadd.f32 %v8646, %v8686
        %v8688 = vpop.f32.mrb[0].mxu0
        %8689 = vdwg.mxu0
        %8690 = vmatprep.subr.bf16.mxu0 0
        %8691 = vmatpush1.bf16.msra.mxu0 %v8334
        %8692 = vmatprep.subr.bf16.mxu0 0
        %8693 = vmatpush1.bf16.msra.mxu0 %v8335
        %8694 = vmatprep.subr.bf16.mxu0 0
        %8695 = vmatpush1.bf16.msra.mxu0 %v8336
        %8696 = vmatprep.subr.bf16.mxu0 0
        %8697 = vmatpush1.bf16.msra.mxu0 %v8337
        %8698 = vmatprep.subr.bf16.mxu0 0
        %8699 = vmatpush1.bf16.msra.mxu0 %v8338
        %8700 = vmatprep.subr.bf16.mxu0 0
        %8701 = vmatpush1.bf16.msra.mxu0 %v8339
        %8702 = vmatprep.subr.bf16.mxu0 0
        %8703 = vmatpush1.bf16.msra.mxu0 %v8340
        %8704 = vmatprep.subr.bf16.mxu0 0
        %8705 = vmatpush1.bf16.msra.mxu0 %v8341
        %8706 = vmatprep.subr.bf16.mxu0 0
        %8707 = vmatpush1.bf16.msra.mxu0 %v8342
        %8708 = vmatprep.subr.bf16.mxu0 0
        %8709 = vmatpush1.bf16.msra.mxu0 %v8343
        %8710 = vmatprep.subr.bf16.mxu0 0
        %8711 = vmatpush1.bf16.msra.mxu0 %v8344
        %8712 = vmatprep.subr.bf16.mxu0 0
        %8713 = vmatpush1.bf16.msra.mxu0 %v8345
        %8714 = vmatprep.subr.bf16.mxu0 0
        %8715 = vmatpush1.bf16.msra.mxu0 %v8346
        %8716 = vmatprep.subr.bf16.mxu0 0
        %8717 = vmatpush1.bf16.msra.mxu0 %v8347
        %8718 = vmatprep.subr.bf16.mxu0 0
        %8719 = vmatpush1.bf16.msra.mxu0 %v8348
        %8720 = vmatprep.subr.bf16.mxu0 0
        %8721 = vmatpush1.bf16.msra.mxu0 %v8349
        %8722 = vmatprep.mubr.bf16.mxu0 %v7495
        %8723 = vmatmul.mubr.bf16.gmra.mrb[0].mxu0 %v7494
        %v8724 = vpop.f32.mrb[0].mxu0
        %v8725 = vadd.f32 %v8684, %v8724
        %v8726 = vpop.f32.mrb[0].mxu0
        %v8727 = vpop.f32.mrb[0].mxu0
        %v8728 = vadd.f32 %v8687, %v8727
        %v8729 = vpop.f32.mrb[0].mxu0
        %8730 = vdwg.mxu0
        %8731 = vmatprep.subr.bf16.mxu0 0
        %8732 = vmatpush1.bf16.msra.mxu0 %v8350
        %8733 = vmatprep.subr.bf16.mxu0 0
        %8734 = vmatpush1.bf16.msra.mxu0 %v8351
        %8735 = vmatprep.subr.bf16.mxu0 0
        %8736 = vmatpush1.bf16.msra.mxu0 %v8352
        %8737 = vmatprep.subr.bf16.mxu0 0
        %8738 = vmatpush1.bf16.msra.mxu0 %v8353
        %8739 = vmatprep.subr.bf16.mxu0 0
        %8740 = vmatpush1.bf16.msra.mxu0 %v8354
        %8741 = vmatprep.subr.bf16.mxu0 0
        %8742 = vmatpush1.bf16.msra.mxu0 %v8355
        %8743 = vmatprep.subr.bf16.mxu0 0
        %8744 = vmatpush1.bf16.msra.mxu0 %v8356
        %8745 = vmatprep.subr.bf16.mxu0 0
        %8746 = vmatpush1.bf16.msra.mxu0 %v8357
        %8747 = vmatprep.subr.bf16.mxu0 0
        %8748 = vmatpush1.bf16.msra.mxu0 %v8358
        %8749 = vmatprep.subr.bf16.mxu0 0
        %8750 = vmatpush1.bf16.msra.mxu0 %v8359
        %8751 = vmatprep.subr.bf16.mxu0 0
        %8752 = vmatpush1.bf16.msra.mxu0 %v8360
        %8753 = vmatprep.subr.bf16.mxu0 0
        %8754 = vmatpush1.bf16.msra.mxu0 %v8361
        %8755 = vmatprep.subr.bf16.mxu0 0
        %8756 = vmatpush1.bf16.msra.mxu0 %v8362
        %8757 = vmatprep.subr.bf16.mxu0 0
        %8758 = vmatpush1.bf16.msra.mxu0 %v8363
        %8759 = vmatprep.subr.bf16.mxu0 0
        %8760 = vmatpush1.bf16.msra.mxu0 %v8364
        %8761 = vmatprep.subr.bf16.mxu0 0
        %8762 = vmatpush1.bf16.msra.mxu0 %v8365
        %8763 = vmatprep.mubr.bf16.mxu0 %v7497
        %8764 = vmatmul.mubr.bf16.gmra.mrb[0].mxu0 %v7496
        %v8765 = vpop.f32.mrb[0].mxu0
        %v8766 = vadd.f32 %v8725, %v8765
        %v8767 = vpop.f32.mrb[0].mxu0
        %v8768 = vpop.f32.mrb[0].mxu0
        %v8769 = vadd.f32 %v8728, %v8768
        %v8770 = vpop.f32.mrb[0].mxu0
        %8771 = vdwg.mxu0
        %8772 = vmatprep.subr.bf16.mxu0 0
        %8773 = vmatpush1.bf16.msra.mxu0 %v8366
        %8774 = vmatprep.subr.bf16.mxu0 0
        %8775 = vmatpush1.bf16.msra.mxu0 %v8367
        %8776 = vmatprep.subr.bf16.mxu0 0
        %8777 = vmatpush1.bf16.msra.mxu0 %v8368
        %8778 = vmatprep.subr.bf16.mxu0 0
        %8779 = vmatpush1.bf16.msra.mxu0 %v8369
        %8780 = vmatprep.subr.bf16.mxu0 0
        %8781 = vmatpush1.bf16.msra.mxu0 %v8370
        %8782 = vmatprep.subr.bf16.mxu0 0
        %8783 = vmatpush1.bf16.msra.mxu0 %v8371
        %8784 = vmatprep.subr.bf16.mxu0 0
        %8785 = vmatpush1.bf16.msra.mxu0 %v8372
        %8786 = vmatprep.subr.bf16.mxu0 0
        %8787 = vmatpush1.bf16.msra.mxu0 %v8373
        %8788 = vmatprep.subr.bf16.mxu0 0
        %8789 = vmatpush1.bf16.msra.mxu0 %v8374
        %8790 = vmatprep.subr.bf16.mxu0 0
        %8791 = vmatpush1.bf16.msra.mxu0 %v8375
        %8792 = vmatprep.subr.bf16.mxu0 0
        %8793 = vmatpush1.bf16.msra.mxu0 %v8376
        %8794 = vmatprep.subr.bf16.mxu0 0
        %8795 = vmatpush1.bf16.msra.mxu0 %v8377
        %8796 = vmatprep.subr.bf16.mxu0 0
        %8797 = vmatpush1.bf16.msra.mxu0 %v8378
        %8798 = vmatprep.subr.bf16.mxu0 0
        %8799 = vmatpush1.bf16.msra.mxu0 %v8379
        %8800 = vmatprep.subr.bf16.mxu0 0
        %8801 = vmatpush1.bf16.msra.mxu0 %v8380
        %8802 = vmatprep.subr.bf16.mxu0 0
        %8803 = vmatpush1.bf16.msra.mxu0 %v8381
        %8804 = vmatprep.mubr.bf16.mxu0 %v7499
        %8805 = vmatmul.mubr.bf16.gmra.mrb[0].mxu0 %v7498
        %v8806 = vpop.f32.mrb[0].mxu0
        %v8807 = vadd.f32 %v8766, %v8806
        %v8808 = vpop.f32.mrb[0].mxu0
        %v8809 = vpop.f32.mrb[0].mxu0
        %v8810 = vadd.f32 %v8769, %v8809
        %v8811 = vpop.f32.mrb[0].mxu0
        %8812 = vdwg.mxu0
        %8813 = vmatprep.subr.bf16.mxu0 0
        %8814 = vmatpush1.bf16.msra.mxu0 %v8382
        %8815 = vmatprep.subr.bf16.mxu0 0
        %8816 = vmatpush1.bf16.msra.mxu0 %v8383
        %8817 = vmatprep.subr.bf16.mxu0 0
        %8818 = vmatpush1.bf16.msra.mxu0 %v8384
        %8819 = vmatprep.subr.bf16.mxu0 0
        %8820 = vmatpush1.bf16.msra.mxu0 %v8385
        %8821 = vmatprep.subr.bf16.mxu0 0
        %8822 = vmatpush1.bf16.msra.mxu0 %v8386
        %8823 = vmatprep.subr.bf16.mxu0 0
        %8824 = vmatpush1.bf16.msra.mxu0 %v8387
        %8825 = vmatprep.subr.bf16.mxu0 0
        %8826 = vmatpush1.bf16.msra.mxu0 %v8388
        %8827 = vmatprep.subr.bf16.mxu0 0
        %8828 = vmatpush1.bf16.msra.mxu0 %v8389
        %8829 = vmatprep.subr.bf16.mxu0 0
        %8830 = vmatpush1.bf16.msra.mxu0 %v8390
        %8831 = vmatprep.subr.bf16.mxu0 0
        %8832 = vmatpush1.bf16.msra.mxu0 %v8391
        %8833 = vmatprep.subr.bf16.mxu0 0
        %8834 = vmatpush1.bf16.msra.mxu0 %v8392
        %8835 = vmatprep.subr.bf16.mxu0 0
        %8836 = vmatpush1.bf16.msra.mxu0 %v8393
        %8837 = vmatprep.subr.bf16.mxu0 0
        %8838 = vmatpush1.bf16.msra.mxu0 %v8394
        %8839 = vmatprep.subr.bf16.mxu0 0
        %8840 = vmatpush1.bf16.msra.mxu0 %v8395
        %8841 = vmatprep.subr.bf16.mxu0 0
        %8842 = vmatpush1.bf16.msra.mxu0 %v8396
        %8843 = vmatprep.subr.bf16.mxu0 0
        %8844 = vmatpush1.bf16.msra.mxu0 %v8397
        %8845 = vmatprep.mubr.bf16.mxu0 %v7501
        %8846 = vmatmul.mubr.bf16.gmra.mrb[0].mxu0 %v7500
        %v8847 = vpop.f32.mrb[0].mxu0
        %v8848 = vadd.f32 %v8807, %v8847
        %v8849 = vpop.f32.mrb[0].mxu0
        %v8850 = vpop.f32.mrb[0].mxu0
        %v8851 = vadd.f32 %v8810, %v8850
        %v8852 = vpop.f32.mrb[0].mxu0
        %8853 = vdwg.mxu0
        %v8854 = vmul.f32 %v8848, 0.5
        %v8855 = vmul.f32 %v8851, 0.5
        %v8856 = vmul.f32 %v8848, 0.70710677
        %v8857 = vmul.f32 %v8851, 0.70710677
        %v8858 = verf.f32.pop %v8856
        %v8859 = verf.f32.pop %v8857
        %v8860 = vadd.f32 %v8858, 1.0
        %v8861 = vadd.f32 %v8859, 1.0
        %v8862 = vmul.f32 %v8854, %v8860
        %v8863 = vmul.f32 %v8855, %v8861
        %v8864 = vld [vmem:[#allocation8] sm:$0x1]
        %v8866 = vlaneseq
        %v8867 = vshrl.u32 %v8866, 7
        %v8868 = vsub.s32 0, %v8867
        %v8869 = vrot.slane %v8864, %v8868
        %v8871 = vmul.f32 %v8862, %v8869
        %v8872 = vmul.f32 %v8863, %v8869
        %vm8873 = vcmask 261120
        %v8874 = vsel %vm8873, %v8871, 0.0
        %8875 = vadd.xlane.f32.xlu0 %v8874
        %v8876 = vpop.xlane.xlu0 %8875
        %v8877 = vsel %vm8873, %v8872, 0.0
        %8878 = vadd.xlane.f32.xlu0 %v8877
        %v8879 = vpop.xlane.xlu0 %8878
        %v8880 = vld [vmem:[#allocation2] sm:$0x1]
        %v8882 = vlaneseq
        %v8883 = vshrl.u32 %v8882, 7
        %v8884 = vsub.s32 0, %v8883
        %v8885 = vrot.slane %v8880, %v8884
        %v8887 = vadd.f32 %v8876, %v8885
        %v8888 = vadd.f32 %v8879, %v8885
        %v8889 = vxor.u32 %v8887, 2147483648
        %v8890 = vxor.u32 %v8888, 2147483648
        %v8891 = vmul.f32 %v8889, 1.442695
        %v8892 = vpow.pop %v8891
        %v8893 = vmul.f32 %v8890, 1.442695
        %v8894 = vpow.pop %v8893
        %v8895 = vadd.f32 %v8892, 1.0
        %v8896 = vadd.f32 %v8894, 1.0
        %v8897 = vrcp.pop %v8895
        %v8898 = vmul.f32 1.0, %v8897
        %v8899 = vrcp.pop %v8896
        %v8900 = vmul.f32 1.0, %v8899
        %vm8901 = vcmask 7168
        %8902 = vst.msk [vmem:[%s337] sm:$0xff] %vm8901, %v8898
        %8903 = vst.msk [vmem:[%s337 + $0x8] sm:$0xff] %vm8901, %v8900
        %s8904 = smul.u32 2, %s23
        %p8905 = scmp.lt.s32.totalorder %s8904, 3
        %s8906 = scalar_select %p8905, %s8904, 3
        %s8907 = smul.addr %s8906, 8
        %s8908 = scalar_lea.vmem %s7, %s8907
        // Predicated region
        $region65: #{tpu_custom_call.1} parent=47 // pred_check
          %p8909 = pneg %p193
        $region66: #{tpu_custom_call.1} parent=47 // pred_check_branch
          %8911 = sbr.rel (%p8909) target = $region68
        $region67: #{tpu_custom_call.1} parent=47 // pred_region
          %s8912 = smul.u32 2, %s23
        $region68: #{tpu_custom_call.1} parent=47 // pred_fallthru
          _
      $region48: #{tpu_custom_call.1} parent=5 // pred_fallthru
        _
      %p8913 = scmp.le.s32.totalorder 2, %s18
      // Predicated region
      $region69: #{tpu_custom_call.1} parent=5 // pred_check
        %p8914 = pneg %p8913
      $region70: #{tpu_custom_call.1} parent=5 // pred_check_branch
        %8916 = sbr.rel (%p8914) target = $region72
      $region71: #{tpu_custom_call.1} parent=5 // pred_region
        %s8917 = ssub.s32 %s18, 2
        // Predicated region
        $region73: #{tpu_custom_call.1} parent=71 // pred_check
          %p8918 = pneg %p199
        $region74: #{tpu_custom_call.1} parent=71 // pred_check_branch
          %8920 = sbr.rel (%p8918) target = $region76
        $region75: #{tpu_custom_call.1} parent=71 // pred_region
          %s8921 = smul.u32 2, %s24
          %p8922 = scmp.lt.s32.totalorder %s8921, 3
          %s8923 = scalar_select %p8922, %s8921, 3
          %s8924 = smul.addr %s8923, 8
          %s8925 = scalar_lea.vmem %s7, %s8924
        $region76: #{tpu_custom_call.1} parent=71 // pred_fallthru
          _
      $region72: #{tpu_custom_call.1} parent=5 // pred_fallthru
        _
    $region6: #{tpu_custom_call.1} parent=1 // loop_footer
      %s22 = sadd.s32 1, %s18
    $region7: #{tpu_custom_call.1} parent=1 // loop_footer_branch
      %17 = sbr.rel target = $region3
    $region8: #{tpu_custom_call.1} parent=1 // loop_exit
      _
    %8926 = vsyncpa [#allocation4], 1
    %s8927 = scalar_lea.sflag [#allocation4], 1
    %8928 = vsyncpa %s8927, 1
    %8929 = vsyncpa [#allocation6], 1
    %8930 = vsyncpa [#allocation9], 1

</llo_original>
